<compile_context>
chip_gen: v7x
topology: tpu7x:2x2x1
jax: 0.10.0
libtpu: 0.0.40
codegen_flags: <defaults>
</compile_context>

<pallas_src>
import functools

import jax
import jax.numpy as jnp
from jax import lax
from jax.experimental import pallas as pl
from jax.experimental.pallas import tpu as pltpu


TB = 8  # images processed per grid step

_dot = functools.partial(jnp.dot, preferred_element_type=jnp.float32)


def lenet_kernel(x_ref, sel_a_ref, w1b_ref, b1_ref, sx1e_ref, sx1o_ref,
                 sy1e_ref, sy1o_ref,
                 sel_b_ref, w2b_ref, b2_ref, sx2e_ref, sx2o_ref,
                 sy2e_ref, sy2o_ref,
                 sel_f_ref, wf1_ref, bf1_ref, wf2_ref, bf2_ref,
                 o_ref):
    xf = x_ref[...]                                    # (TB*28, 28) rows=(b,h) lanes=x

    # ---- conv1: 1 -> 10, k=5  => (TB*24, 24*10) -----------------------------
    c1 = b1_ref[...]                                   # (1, 240) broadcast over rows
    for ky in range(5):
        rows = _dot(sel_a_ref[ky], xf)                 # (TB*24, 28)  rows (b, y+ky)
        c1 = c1 + _dot(rows, w1b_ref[ky])              # banded (kx, co) contraction

    # ---- max_pool2d(2) + relu  => (TB*12, 12*10) ----------------------------
    px = jnp.maximum(_dot(c1, sx1e_ref[...]), _dot(c1, sx1o_ref[...]))    # pool W
    h1 = jnp.maximum(_dot(sy1e_ref[...], px), _dot(sy1o_ref[...], px))    # pool H
    h1 = jnp.maximum(h1, 0.0)

    # ---- conv2: 10 -> 20, k=5  => (TB*8, 8*20)   (Dropout2d == identity) ----
    c2 = b2_ref[...]                                   # (1, 160)
    for ky in range(5):
        rows = _dot(sel_b_ref[ky], h1)                 # (TB*8, 120)
        c2 = c2 + _dot(rows, w2b_ref[ky])              # (TB*8, 160)

    # ---- max_pool2d(2) + relu  => (TB*4, 4*20) ------------------------------
    px2 = jnp.maximum(_dot(c2, sx2e_ref[...]), _dot(c2, sx2o_ref[...]))
    h2 = jnp.maximum(_dot(sy2e_ref[...], px2), _dot(sy2o_ref[...], px2))
    h2 = jnp.maximum(h2, 0.0)                          # (TB*4, 80)

    # ---- fc1 (320 -> 50) + relu   (dropout == identity) ---------------------
    acc = bf1_ref[...]                                 # (1, 50)
    for y4 in range(4):
        rows = _dot(sel_f_ref[y4], h2)                 # (TB, 80)
        acc = acc + _dot(rows, wf1_ref[y4])            # (TB, 50)
    h = jnp.maximum(acc, 0.0)

    # ---- fc2 (50 -> 10) + log_softmax ---------------------------------------
    logits = _dot(h, wf2_ref[...]) + bf2_ref[...]      # (TB, 10)
    mx = jnp.max(logits, axis=-1, keepdims=True)
    lse = mx + jnp.log(jnp.sum(jnp.exp(logits - mx), axis=-1, keepdims=True))
    o_ref[...] = logits - lse


# --------------------------- plain-JAX constant glue ---------------------------

def _band_weights(w, in_w, out_w):
    # w: (C_out, C_in, 5, 5) PyTorch OIHW.
    # Returns (5, in_w*C_in, out_w*C_out) with
    #   B[ky, x*C_in+ci, xo*C_out+co] = w[co, ci, ky, x-xo]  for 0 <= x-xo < 5.
    co_n, ci_n = w.shape[0], w.shape[1]
    xin = jnp.arange(in_w)[:, None]
    xo = jnp.arange(out_w)[None, :]
    bands = []
    for ky in range(5):
        acc = jnp.zeros((in_w, ci_n, out_w, co_n), jnp.float32)
        for kx in range(5):
            m = (xin == xo + kx).astype(jnp.float32)                 # (in_w, out_w)
            wk = jnp.transpose(w[:, :, ky, kx]).astype(jnp.float32)  # (ci, co)
            acc = acc + m[:, None, :, None] * wk[None, :, None, :]
        bands.append(acc.reshape(in_w * ci_n, out_w * co_n))
    return jnp.stack(bands, axis=0)


def _pool_x_select(in_x, c, offset):
    # (in_x*c, (in_x//2)*c): selects lane x = 2*xo + offset for every channel.
    xin = jnp.arange(in_x)[:, None]
    xo = jnp.arange(in_x // 2)[None, :]
    m = (xin == 2 * xo + offset).astype(jnp.float32)
    s = m[:, None, :, None] * jnp.eye(c, dtype=jnp.float32)[None, :, None, :]
    return s.reshape(in_x * c, (in_x // 2) * c)


def _pool_y_select(rows_out, offset):
    # (rows_out, 2*rows_out): selects row 2*r + offset (batch-block structure preserved).
    r = jnp.arange(rows_out)[:, None]
    c = jnp.arange(2 * rows_out)[None, :]
    return (c == 2 * r + offset).astype(jnp.float32)


def _shift_select(tb, rows_out, rows_in):
    # (5, tb*rows_out, tb*rows_in): S[ky, b*rows_out+y, b*rows_in+h] = (h == y+ky).
    r = jnp.arange(tb * rows_out)
    c = jnp.arange(tb * rows_in)
    same_b = (r[:, None] // rows_out) == (c[None, :] // rows_in)
    ry = r[:, None] % rows_out
    ch = c[None, :] % rows_in
    return jnp.stack(
        [(same_b & (ch == ry + ky)).astype(jnp.float32) for ky in range(5)], axis=0)


def _fc_select(tb):
    # (4, tb, tb*4): S[y4, b, b*4+y] = (y == y4).
    r = jnp.arange(tb)
    c = jnp.arange(tb * 4)
    same_b = r[:, None] == (c[None, :] // 4)
    return jnp.stack(
        [(same_b & ((c[None, :] % 4) == y4)).astype(jnp.float32) for y4 in range(4)],
        axis=0)


def lenet_forward(x_nchw, params, tb=TB):
    (w1, b1, w2, b2, wf1, bf1, wf2, bf2) = params
    n = x_nchw.shape[0]
    n_pad = ((n + tb - 1) // tb) * tb

    x = x_nchw.astype(jnp.float32).reshape(n, 28, 28)
    if n_pad != n:
        x = jnp.concatenate([x, jnp.zeros((n_pad - n, 28, 28), jnp.float32)], axis=0)
    x_rows = x.reshape(n_pad * 28, 28)            # rows = (image, h), lanes = w

    # conv1 constants
    sel_a = _shift_select(tb, 24, 28)             # (5, tb*24, tb*28)
    w1b = _band_weights(w1, 28, 24)               # (5, 28, 240)
    b1l = jnp.tile(b1.astype(jnp.float32), 24).reshape(1, 240)
    sx1e, sx1o = _pool_x_select(24, 10, 0), _pool_x_select(24, 10, 1)     # (240, 120)
    sy1e, sy1o = _pool_y_select(tb * 12, 0), _pool_y_select(tb * 12, 1)   # (tb*12, tb*24)

    # conv2 constants
    sel_b = _shift_select(tb, 8, 12)              # (5, tb*8, tb*12)
    w2b = _band_weights(w2, 12, 8)                # (5, 120, 160)
    b2l = jnp.tile(b2.astype(jnp.float32), 8).reshape(1, 160)
    sx2e, sx2o = _pool_x_select(8, 20, 0), _pool_x_select(8, 20, 1)       # (160, 80)
    sy2e, sy2o = _pool_y_select(tb * 4, 0), _pool_y_select(tb * 4, 1)     # (tb*4, tb*8)

    # fc constants
    sel_f = _fc_select(tb)                        # (4, tb, tb*4)
    wf1p = jnp.transpose(wf1.reshape(50, 20, 4, 4),
                         (2, 3, 1, 0)).reshape(4, 80, 50).astype(jnp.float32)
    bf1l = bf1.reshape(1, 50).astype(jnp.float32)
    wf2k = jnp.transpose(wf2).astype(jnp.float32)            # (50, 10)
    bf2l = bf2.reshape(1, 10).astype(jnp.float32)

    operands = [x_rows, sel_a, w1b, b1l, sx1e, sx1o, sy1e, sy1o,
                sel_b, w2b, b2l, sx2e, sx2o, sy2e, sy2o,
                sel_f, wf1p, bf1l, wf2k, bf2l]

    def const_spec(a):
        return pl.BlockSpec(a.shape, lambda b: (0,) * a.ndim)

    in_specs = [pl.BlockSpec((tb * 28, 28), lambda b: (b, 0))]
    in_specs += [const_spec(a) for a in operands[1:]]

    out = pl.pallas_call(
        lenet_kernel,
        out_shape=jax.ShapeDtypeStruct((n_pad, 10), jnp.float32),
        grid=(n_pad // tb,),
        in_specs=in_specs,
        out_specs=pl.BlockSpec((tb, 10), lambda b: (b, 0)),
        compiler_params=pltpu.CompilerParams(
            dimension_semantics=("parallel",)),
    )(*operands)
    return out[:n]


def init_params(key):
    ks = jax.random.split(key, 8)

    def u(k, shape, fan_in):
        bound = 1.0 / (fan_in ** 0.5)
        return jax.random.uniform(k, shape, jnp.float32, -bound, bound)

    w1 = u(ks[0], (10, 1, 5, 5), 25)
    b1 = u(ks[1], (10,), 25)
    w2 = u(ks[2], (20, 10, 5, 5), 250)
    b2 = u(ks[3], (20,), 250)
    wf1 = u(ks[4], (50, 320), 320)
    bf1 = u(ks[5], (50,), 320)
    wf2 = u(ks[6], (10, 50), 50)
    bf2 = u(ks[7], (10,), 50)
    return (w1, b1, w2, b2, wf1, bf1, wf2, bf2)


def reference_forward(x, params):
    # Pure-JAX reference with PyTorch (eval-mode) semantics at HIGHEST precision.
    (w1, b1, w2, b2, wf1, bf1, wf2, bf2) = params
    dn = ("NCHW", "OIHW", "NCHW")

    def pool(t):
        return lax.reduce_window(t, -jnp.inf, lax.max, (1, 1, 2, 2), (1, 1, 2, 2), "VALID")

    t = lax.conv_general_dilated(x, w1, (1, 1), "VALID", dimension_numbers=dn,
                                 precision=lax.Precision.HIGHEST)
    t = t + b1[None, :, None, None]
    t = jax.nn.relu(pool(t))
    t = lax.conv_general_dilated(t, w2, (1, 1), "VALID", dimension_numbers=dn,
                                 precision=lax.Precision.HIGHEST)
    t = t + b2[None, :, None, None]
    t = jax.nn.relu(pool(t))
    t = t.reshape(t.shape[0], 320)
    t = jax.nn.relu(jnp.dot(t, wf1.T, precision=lax.Precision.HIGHEST) + bf1)
    t = jnp.dot(t, wf2.T, precision=lax.Precision.HIGHEST) + bf2
    return jax.nn.log_softmax(t, axis=1)


if __name__ == "__main__":
    key = jax.random.PRNGKey(0)
    kx, kp = jax.random.split(key)
    n = 16
    x = jax.random.normal(kx, (n, 1, 28, 28), dtype=jnp.float32)
    params = init_params(kp)

    out = jax.block_until_ready(lenet_forward(x, params))
    ref = jax.block_until_ready(reference_forward(x, params))

    assert out.shape == (n, 10)
    # log_softmax rows must exponentiate-sum to 1
    assert jnp.allclose(jnp.sum(jnp.exp(out), axis=1), 1.0, atol=1e-4)
    # Kernel uses default (bf16-pass) MXU precision, so compare against the
    # HIGHEST-precision reference with a correspondingly looser tolerance.
    err = float(jnp.max(jnp.abs(out - ref)))
    assert jnp.allclose(out, ref, atol=3e-2, rtol=3e-2), f"max abs err {err}"
    print("KERNEL_OK")
</pallas_src>

<mosaic_0001>
module attributes {stable_mosaic.version = 11 : i64} {
  func.func @lenet_kernel(%arg0: i32, %arg1: memref<224x28xf32, #tpu.memory_space<vmem>>, %arg2: memref<5x192x224xf32, #tpu.memory_space<vmem>>, %arg3: memref<5x28x240xf32, #tpu.memory_space<vmem>>, %arg4: memref<1x240xf32, #tpu.memory_space<vmem>>, %arg5: memref<240x120xf32, #tpu.memory_space<vmem>>, %arg6: memref<240x120xf32, #tpu.memory_space<vmem>>, %arg7: memref<96x192xf32, #tpu.memory_space<vmem>>, %arg8: memref<96x192xf32, #tpu.memory_space<vmem>>, %arg9: memref<5x64x96xf32, #tpu.memory_space<vmem>>, %arg10: memref<5x120x160xf32, #tpu.memory_space<vmem>>, %arg11: memref<1x160xf32, #tpu.memory_space<vmem>>, %arg12: memref<160x80xf32, #tpu.memory_space<vmem>>, %arg13: memref<160x80xf32, #tpu.memory_space<vmem>>, %arg14: memref<32x64xf32, #tpu.memory_space<vmem>>, %arg15: memref<32x64xf32, #tpu.memory_space<vmem>>, %arg16: memref<4x8x32xf32, #tpu.memory_space<vmem>>, %arg17: memref<4x80x50xf32, #tpu.memory_space<vmem>>, %arg18: memref<1x50xf32, #tpu.memory_space<vmem>>, %arg19: memref<50x10xf32, #tpu.memory_space<vmem>>, %arg20: memref<1x10xf32, #tpu.memory_space<vmem>>, %arg21: memref<8x10xf32, #tpu.memory_space<vmem>>) attributes {dimension_semantics = [#tpu.dimension_semantics<parallel>], iteration_bounds = array<i64: 2>, scalar_prefetch = 0 : i64, scratch_operands = 0 : i64, tpu.core_type = #tpu.core_type<tc>, window_params = [{transform_indices = @transform_0, window_bounds = array<i64: 224, 28>}, {pipeline_mode = #tpu.pipeline_mode<synchronous>, transform_indices = @transform_1, window_bounds = array<i64: 5, 192, 224>}, {pipeline_mode = #tpu.pipeline_mode<synchronous>, transform_indices = @transform_2, window_bounds = array<i64: 5, 28, 240>}, {pipeline_mode = #tpu.pipeline_mode<synchronous>, transform_indices = @transform_3, window_bounds = array<i64: 1, 240>}, {pipeline_mode = #tpu.pipeline_mode<synchronous>, transform_indices = @transform_4, window_bounds = array<i64: 240, 120>}, {pipeline_mode = #tpu.pipeline_mode<synchronous>, transform_indices = @transform_5, window_bounds = array<i64: 240, 120>}, {pipeline_mode = #tpu.pipeline_mode<synchronous>, transform_indices = @transform_6, window_bounds = array<i64: 96, 192>}, {pipeline_mode = #tpu.pipeline_mode<synchronous>, transform_indices = @transform_7, window_bounds = array<i64: 96, 192>}, {pipeline_mode = #tpu.pipeline_mode<synchronous>, transform_indices = @transform_8, window_bounds = array<i64: 5, 64, 96>}, {pipeline_mode = #tpu.pipeline_mode<synchronous>, transform_indices = @transform_9, window_bounds = array<i64: 5, 120, 160>}, {pipeline_mode = #tpu.pipeline_mode<synchronous>, transform_indices = @transform_10, window_bounds = array<i64: 1, 160>}, {pipeline_mode = #tpu.pipeline_mode<synchronous>, transform_indices = @transform_11, window_bounds = array<i64: 160, 80>}, {pipeline_mode = #tpu.pipeline_mode<synchronous>, transform_indices = @transform_12, window_bounds = array<i64: 160, 80>}, {pipeline_mode = #tpu.pipeline_mode<synchronous>, transform_indices = @transform_13, window_bounds = array<i64: 32, 64>}, {pipeline_mode = #tpu.pipeline_mode<synchronous>, transform_indices = @transform_14, window_bounds = array<i64: 32, 64>}, {pipeline_mode = #tpu.pipeline_mode<synchronous>, transform_indices = @transform_15, window_bounds = array<i64: 4, 8, 32>}, {pipeline_mode = #tpu.pipeline_mode<synchronous>, transform_indices = @transform_16, window_bounds = array<i64: 4, 80, 50>}, {pipeline_mode = #tpu.pipeline_mode<synchronous>, transform_indices = @transform_17, window_bounds = array<i64: 1, 50>}, {pipeline_mode = #tpu.pipeline_mode<synchronous>, transform_indices = @transform_18, window_bounds = array<i64: 50, 10>}, {pipeline_mode = #tpu.pipeline_mode<synchronous>, transform_indices = @transform_19, window_bounds = array<i64: 1, 10>}, {transform_indices = @transform_20, window_bounds = array<i64: 8, 10>}]} {
    %c0 = arith.constant 0 : index
    %c0_0 = arith.constant 0 : index
    %0 = vector.load %arg1[%c0, %c0_0] : memref<224x28xf32, #tpu.memory_space<vmem>>, vector<224x28xf32>
    %c0_1 = arith.constant 0 : index
    %c0_2 = arith.constant 0 : index
    %1 = vector.load %arg4[%c0_1, %c0_2] : memref<1x240xf32, #tpu.memory_space<vmem>>, vector<1x240xf32>
    %c0_3 = arith.constant 0 : index
    %c0_4 = arith.constant 0 : index
    %c0_5 = arith.constant 0 : index
    %2 = vector.load %arg2[%c0_3, %c0_4, %c0_5] : memref<5x192x224xf32, #tpu.memory_space<vmem>>, vector<1x192x224xf32>
    %3 = vector.shape_cast %2 : vector<1x192x224xf32> to vector<192x224xf32>
    %cst = arith.constant dense<0.000000e+00> : vector<192x28xf32>
    %4 = tpu.matmul %3, %0, %cst {dimension_numbers = #tpu.dot_dimension_numbers<[1], [0], [0], [1], [0, 0, 1, 1], [], []>} : vector<192x224xf32>, vector<224x28xf32>, vector<192x28xf32> -> vector<192x28xf32>
    %c0_6 = arith.constant 0 : index
    %c0_7 = arith.constant 0 : index
    %c0_8 = arith.constant 0 : index
    %5 = vector.load %arg3[%c0_6, %c0_7, %c0_8] : memref<5x28x240xf32, #tpu.memory_space<vmem>>, vector<1x28x240xf32>
    %6 = vector.shape_cast %5 : vector<1x28x240xf32> to vector<28x240xf32>
    %cst_9 = arith.constant dense<0.000000e+00> : vector<192x240xf32>
    %7 = tpu.matmul %4, %6, %cst_9 {dimension_numbers = #tpu.dot_dimension_numbers<[1], [0], [0], [1], [0, 0, 1, 1], [], []>} : vector<192x28xf32>, vector<28x240xf32>, vector<192x240xf32> -> vector<192x240xf32>
    %8 = vector.broadcast %1 : vector<1x240xf32> to vector<192x240xf32>
    %9 = arith.addf %8, %7 : vector<192x240xf32>
    %c1 = arith.constant 1 : index
    %c0_10 = arith.constant 0 : index
    %c0_11 = arith.constant 0 : index
    %10 = vector.load %arg2[%c1, %c0_10, %c0_11] : memref<5x192x224xf32, #tpu.memory_space<vmem>>, vector<1x192x224xf32>
    %11 = vector.shape_cast %10 : vector<1x192x224xf32> to vector<192x224xf32>
    %cst_12 = arith.constant dense<0.000000e+00> : vector<192x28xf32>
    %12 = tpu.matmul %11, %0, %cst_12 {dimension_numbers = #tpu.dot_dimension_numbers<[1], [0], [0], [1], [0, 0, 1, 1], [], []>} : vector<192x224xf32>, vector<224x28xf32>, vector<192x28xf32> -> vector<192x28xf32>
    %c1_13 = arith.constant 1 : index
    %c0_14 = arith.constant 0 : index
    %c0_15 = arith.constant 0 : index
    %13 = vector.load %arg3[%c1_13, %c0_14, %c0_15] : memref<5x28x240xf32, #tpu.memory_space<vmem>>, vector<1x28x240xf32>
    %14 = vector.shape_cast %13 : vector<1x28x240xf32> to vector<28x240xf32>
    %cst_16 = arith.constant dense<0.000000e+00> : vector<192x240xf32>
    %15 = tpu.matmul %12, %14, %cst_16 {dimension_numbers = #tpu.dot_dimension_numbers<[1], [0], [0], [1], [0, 0, 1, 1], [], []>} : vector<192x28xf32>, vector<28x240xf32>, vector<192x240xf32> -> vector<192x240xf32>
    %16 = arith.addf %9, %15 : vector<192x240xf32>
    %c2 = arith.constant 2 : index
    %c0_17 = arith.constant 0 : index
    %c0_18 = arith.constant 0 : index
    %17 = vector.load %arg2[%c2, %c0_17, %c0_18] : memref<5x192x224xf32, #tpu.memory_space<vmem>>, vector<1x192x224xf32>
    %18 = vector.shape_cast %17 : vector<1x192x224xf32> to vector<192x224xf32>
    %cst_19 = arith.constant dense<0.000000e+00> : vector<192x28xf32>
    %19 = tpu.matmul %18, %0, %cst_19 {dimension_numbers = #tpu.dot_dimension_numbers<[1], [0], [0], [1], [0, 0, 1, 1], [], []>} : vector<192x224xf32>, vector<224x28xf32>, vector<192x28xf32> -> vector<192x28xf32>
    %c2_20 = arith.constant 2 : index
    %c0_21 = arith.constant 0 : index
    %c0_22 = arith.constant 0 : index
    %20 = vector.load %arg3[%c2_20, %c0_21, %c0_22] : memref<5x28x240xf32, #tpu.memory_space<vmem>>, vector<1x28x240xf32>
    %21 = vector.shape_cast %20 : vector<1x28x240xf32> to vector<28x240xf32>
    %cst_23 = arith.constant dense<0.000000e+00> : vector<192x240xf32>
    %22 = tpu.matmul %19, %21, %cst_23 {dimension_numbers = #tpu.dot_dimension_numbers<[1], [0], [0], [1], [0, 0, 1, 1], [], []>} : vector<192x28xf32>, vector<28x240xf32>, vector<192x240xf32> -> vector<192x240xf32>
    %23 = arith.addf %16, %22 : vector<192x240xf32>
    %c3 = arith.constant 3 : index
    %c0_24 = arith.constant 0 : index
    %c0_25 = arith.constant 0 : index
    %24 = vector.load %arg2[%c3, %c0_24, %c0_25] : memref<5x192x224xf32, #tpu.memory_space<vmem>>, vector<1x192x224xf32>
    %25 = vector.shape_cast %24 : vector<1x192x224xf32> to vector<192x224xf32>
    %cst_26 = arith.constant dense<0.000000e+00> : vector<192x28xf32>
    %26 = tpu.matmul %25, %0, %cst_26 {dimension_numbers = #tpu.dot_dimension_numbers<[1], [0], [0], [1], [0, 0, 1, 1], [], []>} : vector<192x224xf32>, vector<224x28xf32>, vector<192x28xf32> -> vector<192x28xf32>
    %c3_27 = arith.constant 3 : index
    %c0_28 = arith.constant 0 : index
    %c0_29 = arith.constant 0 : index
    %27 = vector.load %arg3[%c3_27, %c0_28, %c0_29] : memref<5x28x240xf32, #tpu.memory_space<vmem>>, vector<1x28x240xf32>
    %28 = vector.shape_cast %27 : vector<1x28x240xf32> to vector<28x240xf32>
    %cst_30 = arith.constant dense<0.000000e+00> : vector<192x240xf32>
    %29 = tpu.matmul %26, %28, %cst_30 {dimension_numbers = #tpu.dot_dimension_numbers<[1], [0], [0], [1], [0, 0, 1, 1], [], []>} : vector<192x28xf32>, vector<28x240xf32>, vector<192x240xf32> -> vector<192x240xf32>
    %30 = arith.addf %23, %29 : vector<192x240xf32>
    %c4 = arith.constant 4 : index
    %c0_31 = arith.constant 0 : index
    %c0_32 = arith.constant 0 : index
    %31 = vector.load %arg2[%c4, %c0_31, %c0_32] : memref<5x192x224xf32, #tpu.memory_space<vmem>>, vector<1x192x224xf32>
    %32 = vector.shape_cast %31 : vector<1x192x224xf32> to vector<192x224xf32>
    %cst_33 = arith.constant dense<0.000000e+00> : vector<192x28xf32>
    %33 = tpu.matmul %32, %0, %cst_33 {dimension_numbers = #tpu.dot_dimension_numbers<[1], [0], [0], [1], [0, 0, 1, 1], [], []>} : vector<192x224xf32>, vector<224x28xf32>, vector<192x28xf32> -> vector<192x28xf32>
    %c4_34 = arith.constant 4 : index
    %c0_35 = arith.constant 0 : index
    %c0_36 = arith.constant 0 : index
    %34 = vector.load %arg3[%c4_34, %c0_35, %c0_36] : memref<5x28x240xf32, #tpu.memory_space<vmem>>, vector<1x28x240xf32>
    %35 = vector.shape_cast %34 : vector<1x28x240xf32> to vector<28x240xf32>
    %cst_37 = arith.constant dense<0.000000e+00> : vector<192x240xf32>
    %36 = tpu.matmul %33, %35, %cst_37 {dimension_numbers = #tpu.dot_dimension_numbers<[1], [0], [0], [1], [0, 0, 1, 1], [], []>} : vector<192x28xf32>, vector<28x240xf32>, vector<192x240xf32> -> vector<192x240xf32>
    %37 = arith.addf %30, %36 : vector<192x240xf32>
    %c0_38 = arith.constant 0 : index
    %c0_39 = arith.constant 0 : index
    %38 = vector.load %arg5[%c0_38, %c0_39] : memref<240x120xf32, #tpu.memory_space<vmem>>, vector<240x120xf32>
    %cst_40 = arith.constant dense<0.000000e+00> : vector<192x120xf32>
    %39 = tpu.matmul %37, %38, %cst_40 {dimension_numbers = #tpu.dot_dimension_numbers<[1], [0], [0], [1], [0, 0, 1, 1], [], []>} : vector<192x240xf32>, vector<240x120xf32>, vector<192x120xf32> -> vector<192x120xf32>
    %c0_41 = arith.constant 0 : index
    %c0_42 = arith.constant 0 : index
    %40 = vector.load %arg6[%c0_41, %c0_42] : memref<240x120xf32, #tpu.memory_space<vmem>>, vector<240x120xf32>
    %cst_43 = arith.constant dense<0.000000e+00> : vector<192x120xf32>
    %41 = tpu.matmul %37, %40, %cst_43 {dimension_numbers = #tpu.dot_dimension_numbers<[1], [0], [0], [1], [0, 0, 1, 1], [], []>} : vector<192x240xf32>, vector<240x120xf32>, vector<192x120xf32> -> vector<192x120xf32>
    %42 = arith.maximumf %39, %41 : vector<192x120xf32>
    %c0_44 = arith.constant 0 : index
    %c0_45 = arith.constant 0 : index
    %43 = vector.load %arg7[%c0_44, %c0_45] : memref<96x192xf32, #tpu.memory_space<vmem>>, vector<96x192xf32>
    %cst_46 = arith.constant dense<0.000000e+00> : vector<96x120xf32>
    %44 = tpu.matmul %43, %42, %cst_46 {dimension_numbers = #tpu.dot_dimension_numbers<[1], [0], [0], [1], [0, 0, 1, 1], [], []>} : vector<96x192xf32>, vector<192x120xf32>, vector<96x120xf32> -> vector<96x120xf32>
    %c0_47 = arith.constant 0 : index
    %c0_48 = arith.constant 0 : index
    %45 = vector.load %arg8[%c0_47, %c0_48] : memref<96x192xf32, #tpu.memory_space<vmem>>, vector<96x192xf32>
    %cst_49 = arith.constant dense<0.000000e+00> : vector<96x120xf32>
    %46 = tpu.matmul %45, %42, %cst_49 {dimension_numbers = #tpu.dot_dimension_numbers<[1], [0], [0], [1], [0, 0, 1, 1], [], []>} : vector<96x192xf32>, vector<192x120xf32>, vector<96x120xf32> -> vector<96x120xf32>
    %47 = arith.maximumf %44, %46 : vector<96x120xf32>
    %cst_50 = arith.constant 0.000000e+00 : f32
    %48 = vector.broadcast %cst_50 : f32 to vector<96x120xf32>
    %49 = arith.maximumf %47, %48 : vector<96x120xf32>
    %c0_51 = arith.constant 0 : index
    %c0_52 = arith.constant 0 : index
    %50 = vector.load %arg11[%c0_51, %c0_52] : memref<1x160xf32, #tpu.memory_space<vmem>>, vector<1x160xf32>
    %c0_53 = arith.constant 0 : index
    %c0_54 = arith.constant 0 : index
    %c0_55 = arith.constant 0 : index
    %51 = vector.load %arg9[%c0_53, %c0_54, %c0_55] : memref<5x64x96xf32, #tpu.memory_space<vmem>>, vector<1x64x96xf32>
    %52 = vector.shape_cast %51 : vector<1x64x96xf32> to vector<64x96xf32>
    %cst_56 = arith.constant dense<0.000000e+00> : vector<64x120xf32>
    %53 = tpu.matmul %52, %49, %cst_56 {dimension_numbers = #tpu.dot_dimension_numbers<[1], [0], [0], [1], [0, 0, 1, 1], [], []>} : vector<64x96xf32>, vector<96x120xf32>, vector<64x120xf32> -> vector<64x120xf32>
    %c0_57 = arith.constant 0 : index
    %c0_58 = arith.constant 0 : index
    %c0_59 = arith.constant 0 : index
    %54 = vector.load %arg10[%c0_57, %c0_58, %c0_59] : memref<5x120x160xf32, #tpu.memory_space<vmem>>, vector<1x120x160xf32>
    %55 = vector.shape_cast %54 : vector<1x120x160xf32> to vector<120x160xf32>
    %cst_60 = arith.constant dense<0.000000e+00> : vector<64x160xf32>
    %56 = tpu.matmul %53, %55, %cst_60 {dimension_numbers = #tpu.dot_dimension_numbers<[1], [0], [0], [1], [0, 0, 1, 1], [], []>} : vector<64x120xf32>, vector<120x160xf32>, vector<64x160xf32> -> vector<64x160xf32>
    %57 = vector.broadcast %50 : vector<1x160xf32> to vector<64x160xf32>
    %58 = arith.addf %57, %56 : vector<64x160xf32>
    %c1_61 = arith.constant 1 : index
    %c0_62 = arith.constant 0 : index
    %c0_63 = arith.constant 0 : index
    %59 = vector.load %arg9[%c1_61, %c0_62, %c0_63] : memref<5x64x96xf32, #tpu.memory_space<vmem>>, vector<1x64x96xf32>
    %60 = vector.shape_cast %59 : vector<1x64x96xf32> to vector<64x96xf32>
    %cst_64 = arith.constant dense<0.000000e+00> : vector<64x120xf32>
    %61 = tpu.matmul %60, %49, %cst_64 {dimension_numbers = #tpu.dot_dimension_numbers<[1], [0], [0], [1], [0, 0, 1, 1], [], []>} : vector<64x96xf32>, vector<96x120xf32>, vector<64x120xf32> -> vector<64x120xf32>
    %c1_65 = arith.constant 1 : index
    %c0_66 = arith.constant 0 : index
    %c0_67 = arith.constant 0 : index
    %62 = vector.load %arg10[%c1_65, %c0_66, %c0_67] : memref<5x120x160xf32, #tpu.memory_space<vmem>>, vector<1x120x160xf32>
    %63 = vector.shape_cast %62 : vector<1x120x160xf32> to vector<120x160xf32>
    %cst_68 = arith.constant dense<0.000000e+00> : vector<64x160xf32>
    %64 = tpu.matmul %61, %63, %cst_68 {dimension_numbers = #tpu.dot_dimension_numbers<[1], [0], [0], [1], [0, 0, 1, 1], [], []>} : vector<64x120xf32>, vector<120x160xf32>, vector<64x160xf32> -> vector<64x160xf32>
    %65 = arith.addf %58, %64 : vector<64x160xf32>
    %c2_69 = arith.constant 2 : index
    %c0_70 = arith.constant 0 : index
    %c0_71 = arith.constant 0 : index
    %66 = vector.load %arg9[%c2_69, %c0_70, %c0_71] : memref<5x64x96xf32, #tpu.memory_space<vmem>>, vector<1x64x96xf32>
    %67 = vector.shape_cast %66 : vector<1x64x96xf32> to vector<64x96xf32>
    %cst_72 = arith.constant dense<0.000000e+00> : vector<64x120xf32>
    %68 = tpu.matmul %67, %49, %cst_72 {dimension_numbers = #tpu.dot_dimension_numbers<[1], [0], [0], [1], [0, 0, 1, 1], [], []>} : vector<64x96xf32>, vector<96x120xf32>, vector<64x120xf32> -> vector<64x120xf32>
    %c2_73 = arith.constant 2 : index
    %c0_74 = arith.constant 0 : index
    %c0_75 = arith.constant 0 : index
    %69 = vector.load %arg10[%c2_73, %c0_74, %c0_75] : memref<5x120x160xf32, #tpu.memory_space<vmem>>, vector<1x120x160xf32>
    %70 = vector.shape_cast %69 : vector<1x120x160xf32> to vector<120x160xf32>
    %cst_76 = arith.constant dense<0.000000e+00> : vector<64x160xf32>
    %71 = tpu.matmul %68, %70, %cst_76 {dimension_numbers = #tpu.dot_dimension_numbers<[1], [0], [0], [1], [0, 0, 1, 1], [], []>} : vector<64x120xf32>, vector<120x160xf32>, vector<64x160xf32> -> vector<64x160xf32>
    %72 = arith.addf %65, %71 : vector<64x160xf32>
    %c3_77 = arith.constant 3 : index
    %c0_78 = arith.constant 0 : index
    %c0_79 = arith.constant 0 : index
    %73 = vector.load %arg9[%c3_77, %c0_78, %c0_79] : memref<5x64x96xf32, #tpu.memory_space<vmem>>, vector<1x64x96xf32>
    %74 = vector.shape_cast %73 : vector<1x64x96xf32> to vector<64x96xf32>
    %cst_80 = arith.constant dense<0.000000e+00> : vector<64x120xf32>
    %75 = tpu.matmul %74, %49, %cst_80 {dimension_numbers = #tpu.dot_dimension_numbers<[1], [0], [0], [1], [0, 0, 1, 1], [], []>} : vector<64x96xf32>, vector<96x120xf32>, vector<64x120xf32> -> vector<64x120xf32>
    %c3_81 = arith.constant 3 : index
    %c0_82 = arith.constant 0 : index
    %c0_83 = arith.constant 0 : index
    %76 = vector.load %arg10[%c3_81, %c0_82, %c0_83] : memref<5x120x160xf32, #tpu.memory_space<vmem>>, vector<1x120x160xf32>
    %77 = vector.shape_cast %76 : vector<1x120x160xf32> to vector<120x160xf32>
    %cst_84 = arith.constant dense<0.000000e+00> : vector<64x160xf32>
    %78 = tpu.matmul %75, %77, %cst_84 {dimension_numbers = #tpu.dot_dimension_numbers<[1], [0], [0], [1], [0, 0, 1, 1], [], []>} : vector<64x120xf32>, vector<120x160xf32>, vector<64x160xf32> -> vector<64x160xf32>
    %79 = arith.addf %72, %78 : vector<64x160xf32>
    %c4_85 = arith.constant 4 : index
    %c0_86 = arith.constant 0 : index
    %c0_87 = arith.constant 0 : index
    %80 = vector.load %arg9[%c4_85, %c0_86, %c0_87] : memref<5x64x96xf32, #tpu.memory_space<vmem>>, vector<1x64x96xf32>
    %81 = vector.shape_cast %80 : vector<1x64x96xf32> to vector<64x96xf32>
    %cst_88 = arith.constant dense<0.000000e+00> : vector<64x120xf32>
    %82 = tpu.matmul %81, %49, %cst_88 {dimension_numbers = #tpu.dot_dimension_numbers<[1], [0], [0], [1], [0, 0, 1, 1], [], []>} : vector<64x96xf32>, vector<96x120xf32>, vector<64x120xf32> -> vector<64x120xf32>
    %c4_89 = arith.constant 4 : index
    %c0_90 = arith.constant 0 : index
    %c0_91 = arith.constant 0 : index
    %83 = vector.load %arg10[%c4_89, %c0_90, %c0_91] : memref<5x120x160xf32, #tpu.memory_space<vmem>>, vector<1x120x160xf32>
    %84 = vector.shape_cast %83 : vector<1x120x160xf32> to vector<120x160xf32>
    %cst_92 = arith.constant dense<0.000000e+00> : vector<64x160xf32>
    %85 = tpu.matmul %82, %84, %cst_92 {dimension_numbers = #tpu.dot_dimension_numbers<[1], [0], [0], [1], [0, 0, 1, 1], [], []>} : vector<64x120xf32>, vector<120x160xf32>, vector<64x160xf32> -> vector<64x160xf32>
    %86 = arith.addf %79, %85 : vector<64x160xf32>
    %c0_93 = arith.constant 0 : index
    %c0_94 = arith.constant 0 : index
    %87 = vector.load %arg12[%c0_93, %c0_94] : memref<160x80xf32, #tpu.memory_space<vmem>>, vector<160x80xf32>
    %cst_95 = arith.constant dense<0.000000e+00> : vector<64x80xf32>
    %88 = tpu.matmul %86, %87, %cst_95 {dimension_numbers = #tpu.dot_dimension_numbers<[1], [0], [0], [1], [0, 0, 1, 1], [], []>} : vector<64x160xf32>, vector<160x80xf32>, vector<64x80xf32> -> vector<64x80xf32>
    %c0_96 = arith.constant 0 : index
    %c0_97 = arith.constant 0 : index
    %89 = vector.load %arg13[%c0_96, %c0_97] : memref<160x80xf32, #tpu.memory_space<vmem>>, vector<160x80xf32>
    %cst_98 = arith.constant dense<0.000000e+00> : vector<64x80xf32>
    %90 = tpu.matmul %86, %89, %cst_98 {dimension_numbers = #tpu.dot_dimension_numbers<[1], [0], [0], [1], [0, 0, 1, 1], [], []>} : vector<64x160xf32>, vector<160x80xf32>, vector<64x80xf32> -> vector<64x80xf32>
    %91 = arith.maximumf %88, %90 : vector<64x80xf32>
    %c0_99 = arith.constant 0 : index
    %c0_100 = arith.constant 0 : index
    %92 = vector.load %arg14[%c0_99, %c0_100] : memref<32x64xf32, #tpu.memory_space<vmem>>, vector<32x64xf32>
    %cst_101 = arith.constant dense<0.000000e+00> : vector<32x80xf32>
    %93 = tpu.matmul %92, %91, %cst_101 {dimension_numbers = #tpu.dot_dimension_numbers<[1], [0], [0], [1], [0, 0, 1, 1], [], []>} : vector<32x64xf32>, vector<64x80xf32>, vector<32x80xf32> -> vector<32x80xf32>
    %c0_102 = arith.constant 0 : index
    %c0_103 = arith.constant 0 : index
    %94 = vector.load %arg15[%c0_102, %c0_103] : memref<32x64xf32, #tpu.memory_space<vmem>>, vector<32x64xf32>
    %cst_104 = arith.constant dense<0.000000e+00> : vector<32x80xf32>
    %95 = tpu.matmul %94, %91, %cst_104 {dimension_numbers = #tpu.dot_dimension_numbers<[1], [0], [0], [1], [0, 0, 1, 1], [], []>} : vector<32x64xf32>, vector<64x80xf32>, vector<32x80xf32> -> vector<32x80xf32>
    %96 = arith.maximumf %93, %95 : vector<32x80xf32>
    %cst_105 = arith.constant 0.000000e+00 : f32
    %97 = vector.broadcast %cst_105 : f32 to vector<32x80xf32>
    %98 = arith.maximumf %96, %97 : vector<32x80xf32>
    %c0_106 = arith.constant 0 : index
    %c0_107 = arith.constant 0 : index
    %99 = vector.load %arg18[%c0_106, %c0_107] : memref<1x50xf32, #tpu.memory_space<vmem>>, vector<1x50xf32>
    %c0_108 = arith.constant 0 : index
    %c0_109 = arith.constant 0 : index
    %c0_110 = arith.constant 0 : index
    %100 = vector.load %arg16[%c0_108, %c0_109, %c0_110] : memref<4x8x32xf32, #tpu.memory_space<vmem>>, vector<1x8x32xf32>
    %101 = vector.shape_cast %100 : vector<1x8x32xf32> to vector<8x32xf32>
    %cst_111 = arith.constant dense<0.000000e+00> : vector<8x80xf32>
    %102 = tpu.matmul %101, %98, %cst_111 {dimension_numbers = #tpu.dot_dimension_numbers<[1], [0], [0], [1], [0, 0, 1, 1], [], []>} : vector<8x32xf32>, vector<32x80xf32>, vector<8x80xf32> -> vector<8x80xf32>
    %c0_112 = arith.constant 0 : index
    %c0_113 = arith.constant 0 : index
    %c0_114 = arith.constant 0 : index
    %103 = vector.load %arg17[%c0_112, %c0_113, %c0_114] : memref<4x80x50xf32, #tpu.memory_space<vmem>>, vector<1x80x50xf32>
    %104 = vector.shape_cast %103 : vector<1x80x50xf32> to vector<80x50xf32>
    %cst_115 = arith.constant dense<0.000000e+00> : vector<8x50xf32>
    %105 = tpu.matmul %102, %104, %cst_115 {dimension_numbers = #tpu.dot_dimension_numbers<[1], [0], [0], [1], [0, 0, 1, 1], [], []>} : vector<8x80xf32>, vector<80x50xf32>, vector<8x50xf32> -> vector<8x50xf32>
    %106 = vector.broadcast %99 : vector<1x50xf32> to vector<8x50xf32>
    %107 = arith.addf %106, %105 : vector<8x50xf32>
    %c1_116 = arith.constant 1 : index
    %c0_117 = arith.constant 0 : index
    %c0_118 = arith.constant 0 : index
    %108 = vector.load %arg16[%c1_116, %c0_117, %c0_118] : memref<4x8x32xf32, #tpu.memory_space<vmem>>, vector<1x8x32xf32>
    %109 = vector.shape_cast %108 : vector<1x8x32xf32> to vector<8x32xf32>
    %cst_119 = arith.constant dense<0.000000e+00> : vector<8x80xf32>
    %110 = tpu.matmul %109, %98, %cst_119 {dimension_numbers = #tpu.dot_dimension_numbers<[1], [0], [0], [1], [0, 0, 1, 1], [], []>} : vector<8x32xf32>, vector<32x80xf32>, vector<8x80xf32> -> vector<8x80xf32>
    %c1_120 = arith.constant 1 : index
    %c0_121 = arith.constant 0 : index
    %c0_122 = arith.constant 0 : index
    %111 = vector.load %arg17[%c1_120, %c0_121, %c0_122] : memref<4x80x50xf32, #tpu.memory_space<vmem>>, vector<1x80x50xf32>
    %112 = vector.shape_cast %111 : vector<1x80x50xf32> to vector<80x50xf32>
    %cst_123 = arith.constant dense<0.000000e+00> : vector<8x50xf32>
    %113 = tpu.matmul %110, %112, %cst_123 {dimension_numbers = #tpu.dot_dimension_numbers<[1], [0], [0], [1], [0, 0, 1, 1], [], []>} : vector<8x80xf32>, vector<80x50xf32>, vector<8x50xf32> -> vector<8x50xf32>
    %114 = arith.addf %107, %113 : vector<8x50xf32>
    %c2_124 = arith.constant 2 : index
    %c0_125 = arith.constant 0 : index
    %c0_126 = arith.constant 0 : index
    %115 = vector.load %arg16[%c2_124, %c0_125, %c0_126] : memref<4x8x32xf32, #tpu.memory_space<vmem>>, vector<1x8x32xf32>
    %116 = vector.shape_cast %115 : vector<1x8x32xf32> to vector<8x32xf32>
    %cst_127 = arith.constant dense<0.000000e+00> : vector<8x80xf32>
    %117 = tpu.matmul %116, %98, %cst_127 {dimension_numbers = #tpu.dot_dimension_numbers<[1], [0], [0], [1], [0, 0, 1, 1], [], []>} : vector<8x32xf32>, vector<32x80xf32>, vector<8x80xf32> -> vector<8x80xf32>
    %c2_128 = arith.constant 2 : index
    %c0_129 = arith.constant 0 : index
    %c0_130 = arith.constant 0 : index
    %118 = vector.load %arg17[%c2_128, %c0_129, %c0_130] : memref<4x80x50xf32, #tpu.memory_space<vmem>>, vector<1x80x50xf32>
    %119 = vector.shape_cast %118 : vector<1x80x50xf32> to vector<80x50xf32>
    %cst_131 = arith.constant dense<0.000000e+00> : vector<8x50xf32>
    %120 = tpu.matmul %117, %119, %cst_131 {dimension_numbers = #tpu.dot_dimension_numbers<[1], [0], [0], [1], [0, 0, 1, 1], [], []>} : vector<8x80xf32>, vector<80x50xf32>, vector<8x50xf32> -> vector<8x50xf32>
    %121 = arith.addf %114, %120 : vector<8x50xf32>
    %c3_132 = arith.constant 3 : index
    %c0_133 = arith.constant 0 : index
    %c0_134 = arith.constant 0 : index
    %122 = vector.load %arg16[%c3_132, %c0_133, %c0_134] : memref<4x8x32xf32, #tpu.memory_space<vmem>>, vector<1x8x32xf32>
    %123 = vector.shape_cast %122 : vector<1x8x32xf32> to vector<8x32xf32>
    %cst_135 = arith.constant dense<0.000000e+00> : vector<8x80xf32>
    %124 = tpu.matmul %123, %98, %cst_135 {dimension_numbers = #tpu.dot_dimension_numbers<[1], [0], [0], [1], [0, 0, 1, 1], [], []>} : vector<8x32xf32>, vector<32x80xf32>, vector<8x80xf32> -> vector<8x80xf32>
    %c3_136 = arith.constant 3 : index
    %c0_137 = arith.constant 0 : index
    %c0_138 = arith.constant 0 : index
    %125 = vector.load %arg17[%c3_136, %c0_137, %c0_138] : memref<4x80x50xf32, #tpu.memory_space<vmem>>, vector<1x80x50xf32>
    %126 = vector.shape_cast %125 : vector<1x80x50xf32> to vector<80x50xf32>
    %cst_139 = arith.constant dense<0.000000e+00> : vector<8x50xf32>
    %127 = tpu.matmul %124, %126, %cst_139 {dimension_numbers = #tpu.dot_dimension_numbers<[1], [0], [0], [1], [0, 0, 1, 1], [], []>} : vector<8x80xf32>, vector<80x50xf32>, vector<8x50xf32> -> vector<8x50xf32>
    %128 = arith.addf %121, %127 : vector<8x50xf32>
    %cst_140 = arith.constant 0.000000e+00 : f32
    %129 = vector.broadcast %cst_140 : f32 to vector<8x50xf32>
    %130 = arith.maximumf %128, %129 : vector<8x50xf32>
    %c0_141 = arith.constant 0 : index
    %c0_142 = arith.constant 0 : index
    %131 = vector.load %arg19[%c0_141, %c0_142] : memref<50x10xf32, #tpu.memory_space<vmem>>, vector<50x10xf32>
    %cst_143 = arith.constant dense<0.000000e+00> : vector<8x10xf32>
    %132 = tpu.matmul %130, %131, %cst_143 {dimension_numbers = #tpu.dot_dimension_numbers<[1], [0], [0], [1], [0, 0, 1, 1], [], []>} : vector<8x50xf32>, vector<50x10xf32>, vector<8x10xf32> -> vector<8x10xf32>
    %c0_144 = arith.constant 0 : index
    %c0_145 = arith.constant 0 : index
    %133 = vector.load %arg20[%c0_144, %c0_145] : memref<1x10xf32, #tpu.memory_space<vmem>>, vector<1x10xf32>
    %134 = vector.broadcast %133 : vector<1x10xf32> to vector<8x10xf32>
    %135 = arith.addf %132, %134 : vector<8x10xf32>
    %cst_146 = arith.constant dense<0xFF800000> : vector<8xf32>
    %136 = vector.multi_reduction <maximumf>, %135, %cst_146 [1] : vector<8x10xf32> to vector<8xf32>
    %137 = vector.shape_cast %136 : vector<8xf32> to vector<8x1xf32>
    %138 = vector.broadcast %137 : vector<8x1xf32> to vector<8x10xf32>
    %139 = arith.subf %135, %138 : vector<8x10xf32>
    %140 = math.exp %139 : vector<8x10xf32>
    %cst_147 = arith.constant dense<0.000000e+00> : vector<8xf32>
    %141 = vector.multi_reduction <add>, %140, %cst_147 [1] : vector<8x10xf32> to vector<8xf32>
    %142 = vector.shape_cast %141 : vector<8xf32> to vector<8x1xf32>
    %143 = math.log %142 : vector<8x1xf32>
    %144 = arith.addf %137, %143 : vector<8x1xf32>
    %145 = vector.broadcast %144 : vector<8x1xf32> to vector<8x10xf32>
    %146 = arith.subf %135, %145 : vector<8x10xf32>
    %c0_148 = arith.constant 0 : index
    %c0_149 = arith.constant 0 : index
    %147 = vector.load %arg21[%c0_148, %c0_149] : memref<8x10xf32, #tpu.memory_space<vmem>>, vector<8x10xf32>
    tpu.vector_store %arg21[%c0_148, %c0_149], %146 {strides = array<i32>} : memref<8x10xf32, #tpu.memory_space<vmem>>, vector<8x10xf32>,
    return
  }
  func.func @transform_0(%arg0: i32) -> (i32, i32) {
    %c0_i32 = arith.constant 0 : i32
    %c0_i32_0 = arith.constant 0 : i32
    return %arg0, %c0_i32 : i32, i32
  }
  func.func @transform_1(%arg0: i32) -> (i32, i32, i32) {
    %c0_i32 = arith.constant 0 : i32
    %c0_i32_0 = arith.constant 0 : i32
    %c0_i32_1 = arith.constant 0 : i32
    %c0_i32_2 = arith.constant 0 : i32
    return %c0_i32, %c0_i32_0, %c0_i32_1 : i32, i32, i32
  }
  func.func @transform_2(%arg0: i32) -> (i32, i32, i32) {
    %c0_i32 = arith.constant 0 : i32
    %c0_i32_0 = arith.constant 0 : i32
    %c0_i32_1 = arith.constant 0 : i32
    %c0_i32_2 = arith.constant 0 : i32
    return %c0_i32, %c0_i32_0, %c0_i32_1 : i32, i32, i32
  }
  func.func @transform_3(%arg0: i32) -> (i32, i32) {
    %c0_i32 = arith.constant 0 : i32
    %c0_i32_0 = arith.constant 0 : i32
    %c0_i32_1 = arith.constant 0 : i32
    return %c0_i32, %c0_i32_0 : i32, i32
  }
  func.func @transform_4(%arg0: i32) -> (i32, i32) {
    %c0_i32 = arith.constant 0 : i32
    %c0_i32_0 = arith.constant 0 : i32
    %c0_i32_1 = arith.constant 0 : i32
    return %c0_i32, %c0_i32_0 : i32, i32
  }
  func.func @transform_5(%arg0: i32) -> (i32, i32) {
    %c0_i32 = arith.constant 0 : i32
    %c0_i32_0 = arith.constant 0 : i32
    %c0_i32_1 = arith.constant 0 : i32
    return %c0_i32, %c0_i32_0 : i32, i32
  }
  func.func @transform_6(%arg0: i32) -> (i32, i32) {
    %c0_i32 = arith.constant 0 : i32
    %c0_i32_0 = arith.constant 0 : i32
    %c0_i32_1 = arith.constant 0 : i32
    return %c0_i32, %c0_i32_0 : i32, i32
  }
  func.func @transform_7(%arg0: i32) -> (i32, i32) {
    %c0_i32 = arith.constant 0 : i32
    %c0_i32_0 = arith.constant 0 : i32
    %c0_i32_1 = arith.constant 0 : i32
    return %c0_i32, %c0_i32_0 : i32, i32
  }
  func.func @transform_8(%arg0: i32) -> (i32, i32, i32) {
    %c0_i32 = arith.constant 0 : i32
    %c0_i32_0 = arith.constant 0 : i32
    %c0_i32_1 = arith.constant 0 : i32
    %c0_i32_2 = arith.constant 0 : i32
    return %c0_i32, %c0_i32_0, %c0_i32_1 : i32, i32, i32
  }
  func.func @transform_9(%arg0: i32) -> (i32, i32, i32) {
    %c0_i32 = arith.constant 0 : i32
    %c0_i32_0 = arith.constant 0 : i32
    %c0_i32_1 = arith.constant 0 : i32
    %c0_i32_2 = arith.constant 0 : i32
    return %c0_i32, %c0_i32_0, %c0_i32_1 : i32, i32, i32
  }
  func.func @transform_10(%arg0: i32) -> (i32, i32) {
    %c0_i32 = arith.constant 0 : i32
    %c0_i32_0 = arith.constant 0 : i32
    %c0_i32_1 = arith.constant 0 : i32
    return %c0_i32, %c0_i32_0 : i32, i32
  }
  func.func @transform_11(%arg0: i32) -> (i32, i32) {
    %c0_i32 = arith.constant 0 : i32
    %c0_i32_0 = arith.constant 0 : i32
    %c0_i32_1 = arith.constant 0 : i32
    return %c0_i32, %c0_i32_0 : i32, i32
  }
  func.func @transform_12(%arg0: i32) -> (i32, i32) {
    %c0_i32 = arith.constant 0 : i32
    %c0_i32_0 = arith.constant 0 : i32
    %c0_i32_1 = arith.constant 0 : i32
    return %c0_i32, %c0_i32_0 : i32, i32
  }
  func.func @transform_13(%arg0: i32) -> (i32, i32) {
    %c0_i32 = arith.constant 0 : i32
    %c0_i32_0 = arith.constant 0 : i32
    %c0_i32_1 = arith.constant 0 : i32
    return %c0_i32, %c0_i32_0 : i32, i32
  }
  func.func @transform_14(%arg0: i32) -> (i32, i32) {
    %c0_i32 = arith.constant 0 : i32
    %c0_i32_0 = arith.constant 0 : i32
    %c0_i32_1 = arith.constant 0 : i32
    return %c0_i32, %c0_i32_0 : i32, i32
  }
  func.func @transform_15(%arg0: i32) -> (i32, i32, i32) {
    %c0_i32 = arith.constant 0 : i32
    %c0_i32_0 = arith.constant 0 : i32
    %c0_i32_1 = arith.constant 0 : i32
    %c0_i32_2 = arith.constant 0 : i32
    return %c0_i32, %c0_i32_0, %c0_i32_1 : i32, i32, i32
  }
  func.func @transform_16(%arg0: i32) -> (i32, i32, i32) {
    %c0_i32 = arith.constant 0 : i32
    %c0_i32_0 = arith.constant 0 : i32
    %c0_i32_1 = arith.constant 0 : i32
    %c0_i32_2 = arith.constant 0 : i32
    return %c0_i32, %c0_i32_0, %c0_i32_1 : i32, i32, i32
  }
  func.func @transform_17(%arg0: i32) -> (i32, i32) {
    %c0_i32 = arith.constant 0 : i32
    %c0_i32_0 = arith.constant 0 : i32
    %c0_i32_1 = arith.constant 0 : i32
    return %c0_i32, %c0_i32_0 : i32, i32
  }
  func.func @transform_18(%arg0: i32) -> (i32, i32) {
    %c0_i32 = arith.constant 0 : i32
    %c0_i32_0 = arith.constant 0 : i32
    %c0_i32_1 = arith.constant 0 : i32
    return %c0_i32, %c0_i32_0 : i32, i32
  }
  func.func @transform_19(%arg0: i32) -> (i32, i32) {
    %c0_i32 = arith.constant 0 : i32
    %c0_i32_0 = arith.constant 0 : i32
    %c0_i32_1 = arith.constant 0 : i32
    return %c0_i32, %c0_i32_0 : i32, i32
  }
  func.func @transform_20(%arg0: i32) -> (i32, i32) {
    %c0_i32 = arith.constant 0 : i32
    %c0_i32_0 = arith.constant 0 : i32
    return %arg0, %c0_i32 : i32, i32
  }
}

</mosaic_0001>

<llo_original>
// kernel: tpu_custom_call.1
$region0: #{tpu_custom_call.1}
  #allocation0 [shape = 'u32[]', space=smem, size = 0x4, offset = 0x4, fixed_abs, tag = 'smem constant byte address 0x4 - core index']
  #allocation1 [shape = 'u32[144,128]{1,0:T(1,128)}', space=vmem, size = 0x12000, scoped, tag = 'internal scratch']
  %s0 = inlined_call_operand.vmem [shape: f32[448,28], index: 0, kind: input, shape index: {}]
  %s1 = inlined_call_operand.vmem [shape: f32[5,192,224], index: 1, kind: input, shape index: {}]
  %s2 = inlined_call_operand.vmem [shape: f32[5,28,240], index: 2, kind: input, shape index: {}]
  %s3 = inlined_call_operand.hbm [shape: f32[1,240], index: 3, kind: input, shape index: {}]
  %s4 = inlined_call_operand.hbm [shape: f32[240,120], index: 4, kind: input, shape index: {}]
  %s5 = inlined_call_operand.hbm [shape: f32[240,120], index: 5, kind: input, shape index: {}]
  %s6 = inlined_call_operand.hbm [shape: f32[96,192], index: 6, kind: input, shape index: {}]
  %s7 = inlined_call_operand.hbm [shape: f32[96,192], index: 7, kind: input, shape index: {}]
  %s8 = inlined_call_operand.hbm [shape: f32[5,64,96], index: 8, kind: input, shape index: {}]
  %s9 = inlined_call_operand.vmem [shape: f32[5,120,160], index: 9, kind: input, shape index: {}]
  %s10 = inlined_call_operand.hbm [shape: f32[1,160], index: 10, kind: input, shape index: {}]
  %s11 = inlined_call_operand.vmem [shape: f32[160,80], index: 11, kind: input, shape index: {}]
  %s12 = inlined_call_operand.hbm [shape: f32[160,80], index: 12, kind: input, shape index: {}]
  %s13 = inlined_call_operand.hbm [shape: f32[32,64], index: 13, kind: input, shape index: {}]
  %s14 = inlined_call_operand.hbm [shape: f32[32,64], index: 14, kind: input, shape index: {}]
  %s15 = inlined_call_operand.hbm [shape: f32[4,8,32], index: 15, kind: input, shape index: {}]
  %s16 = inlined_call_operand.vmem [shape: f32[4,80,50], index: 16, kind: input, shape index: {}]
  %s17 = inlined_call_operand.vmem [shape: f32[1,50], index: 17, kind: input, shape index: {}]
  %s18 = inlined_call_operand.vmem [shape: f32[50,10], index: 18, kind: input, shape index: {}]
  %s19 = inlined_call_operand.vmem [shape: f32[1,10], index: 19, kind: input, shape index: {}]
  %s20 = inlined_call_operand.hbm [shape: f32[16,10], index: 20, kind: output, shape index: {}]
  %s21 = sld [smem:[#allocation0]]
  $region157: #{tpu_custom_call.1} parent=0
    _
  %s23 = ssub.s32 1, %s21
  %s24 = scalar_select 0, %s23, %s21
  $region1: #{tpu_custom_call.1} parent=0
    #allocation2 [shape = 'u8[1024]{0}', space=vmem, size = 0x400, scoped, tag = 'input window, operand 3, single buffered']
    #allocation3 [shape = 's32[2]{0}', space=sflag, size = 0x8, scoped, tag = 'scoped memory for tpu_custom_call.1']
    #allocation4 [shape = 's32[2]{0}', space=sflag, size = 0x8, scoped, tag = 'scoped memory for tpu_custom_call.1']
    #allocation5 [shape = 'u8[122880]{0}', space=vmem, size = 0x1e000, scoped, tag = 'input window, operand 4, single buffered']
    #allocation6 [shape = 's32[1]{0}', space=sflag, size = 0x4, scoped, tag = 'scoped memory for tpu_custom_call.1']
    #allocation7 [shape = 'u8[122880]{0}', space=vmem, size = 0x1e000, scoped, tag = 'input window, operand 5, single buffered']
    #allocation8 [shape = 'u8[98304]{0}', space=vmem, size = 0x18000, scoped, tag = 'input window, operand 6, single buffered']
    #allocation9 [shape = 's32[1]{0}', space=sflag, size = 0x4, scoped, tag = 'scoped memory for tpu_custom_call.1']
    #allocation10 [shape = 'u8[98304]{0}', space=vmem, size = 0x18000, scoped, tag = 'input window, operand 7, single buffered']
    #allocation11 [shape = 'u8[163840]{0}', space=vmem, size = 0x28000, scoped, tag = 'input window, operand 8, single buffered']
    #allocation12 [shape = 's32[1]{0}', space=sflag, size = 0x4, scoped, tag = 'scoped memory for tpu_custom_call.1']
    #allocation13 [shape = 'u8[1024]{0}', space=vmem, size = 0x400, scoped, tag = 'input window, operand 10, single buffered']
    #allocation14 [shape = 'u8[81920]{0}', space=vmem, size = 0x14000, scoped, tag = 'input window, operand 12, single buffered']
    #allocation15 [shape = 's32[1]{0}', space=sflag, size = 0x4, scoped, tag = 'scoped memory for tpu_custom_call.1']
    #allocation16 [shape = 'u8[16384]{0}', space=vmem, size = 0x4000, scoped, tag = 'input window, operand 13, single buffered']
    #allocation17 [shape = 'u8[16384]{0}', space=vmem, size = 0x4000, scoped, tag = 'input window, operand 14, single buffered']
    #allocation18 [shape = 's32[1]{0}', space=sflag, size = 0x4, scoped, tag = 'scoped memory for tpu_custom_call.1']
    #allocation19 [shape = 'u8[16384]{0}', space=vmem, size = 0x4000, scoped, tag = 'input window, operand 15, single buffered']
    #allocation20 [shape = 'u8[8192]{0}', space=vmem, size = 0x2000, scoped, tag = 'output window, operand 0']
    %25 = vsyncpa [#allocation3], 0
    %26 = vsyncpa [#allocation6], 0
    %27 = vsyncpa [#allocation9], 0
    %28 = vsyncpa [#allocation12], 0
    %29 = vsyncpa [#allocation15], 0
    %30 = vsyncpa [#allocation18], 0
    %31 = vsyncpa [#allocation4], 0
    %s32 = scalar_lea.sflag [#allocation4], 1
    %33 = vsyncpa %s32, 0
    loop: start=0, step=1, limit=4
    $region2: #{tpu_custom_call.1} parent=1 // loop_pre_header
      _
    $region3: #{tpu_custom_call.1} parent=1 // loop_header
      %s35 = sphi 0, %s39
      %p36 = scmp.ge.s32.totalorder %s35, 4
      %s45 = sphi 0, %s47
      %s48 = sphi 0, %s45
      %s49 = sphi 0, %s48
      %s65 = sphi 0, %s49
      %s69 = sphi 0, %s69
      %s71 = sphi 0, %s69
      %s72 = sphi 0, %s71
      %s86 = sphi 0, %s72
      %s90 = sphi 0, %s90
      %s92 = sphi 0, %s90
      %s93 = sphi 0, %s92
      %s107 = sphi 0, %s93
      %s111 = sphi 0, %s111
      %s113 = sphi 0, %s111
      %s114 = sphi 0, %s113
      %s128 = sphi 0, %s114
      %s132 = sphi 0, %s132
      %s134 = sphi 0, %s132
      %s135 = sphi 0, %s134
      %s149 = sphi 0, %s135
      %s153 = sphi 0, %s153
      %s155 = sphi 0, %s153
      %s156 = sphi 0, %s155
      %s170 = sphi 0, %s156
      %s174 = sphi 0, %s174
      %s176 = sphi 0, %s174
      %s177 = sphi 0, %s176
      %s191 = sphi 0, %s177
      %s195 = sphi 0, %s195
      %s197 = sphi 0, %s195
      %s198 = sphi 0, %s197
      %s212 = sphi 0, %s198
      %s216 = sphi 0, %s216
      %s218 = sphi 0, %s216
      %s219 = sphi 0, %s218
      %s233 = sphi 0, %s219
      %s237 = sphi 0, %s237
      %s239 = sphi 0, %s237
      %s240 = sphi 0, %s239
      %s254 = sphi 0, %s240
      %s258 = sphi 0, %s258
      %s260 = sphi 0, %s258
      %s261 = sphi 0, %s260
      %s275 = sphi 0, %s261
      %s279 = sphi 0, %s279
      %s281 = sphi 0, %s279
      %s282 = sphi 0, %s281
      %s296 = sphi 0, %s282
      %s300 = sphi 0, %s300
      %s302 = sphi 0, %s300
      %s303 = sphi 0, %s302
      %s317 = sphi 0, %s303
      %s321 = sphi 0, %s321
      %s323 = sphi 0, %s321
      %s324 = sphi 0, %s323
      %s338 = sphi 0, %s324
      %s342 = sphi 0, %s342
      %s344 = sphi 0, %s342
      %s345 = sphi 0, %s344
      %s359 = sphi 0, %s345
      %s363 = sphi 0, %s363
      %s365 = sphi 0, %s363
      %s366 = sphi 0, %s365
      %s380 = sphi 0, %s366
      %s384 = sphi 0, %s384
      %s386 = sphi 0, %s384
      %s387 = sphi 0, %s386
      %s401 = sphi 0, %s387
      %s405 = sphi 0, %s405
      %s407 = sphi 0, %s405
      %s408 = sphi 0, %s407
      %s422 = sphi 0, %s408
      %s426 = sphi 0, %s426
      %s428 = sphi 0, %s426
      %s429 = sphi 0, %s428
      %s443 = sphi 0, %s429
      %s447 = sphi 0, %s447
      %s449 = sphi 0, %s447
      %s450 = sphi 0, %s449
      %s464 = sphi 0, %s450
      %s470 = sphi 0, %s472
      %s473 = sphi 0, %s470
      %s474 = sphi 0, %s473
      %s490 = sphi 0, %s474
    $region4: #{tpu_custom_call.1} parent=1 // loop_header_branch
      %38 = sbr.rel (%p36) target = $region8
    $region5: #{tpu_custom_call.1} parent=1 // loop_body
      %s40 = ssub.s32 %s35, 1
      %s41 = ssub.s32 %s35, 2
      %s42 = sadd.s32 %s35, 1
      %s43 = ssub.s32 %s35, %s42
      %p44 = scmp.eq.s32.totalorder %s43, 0
      %s46 = sadd.s32 %s45, 1
      %s47 = scalar_select %p44, %s45, %s46
      %p50 = pneg %p44
      %p51 = scmp.eq.s32.totalorder %s35, 1
      %p52 = por %p50, %p51
      %p53 = scmp.ne.s32.totalorder %s45, %s48
      %p54 = scmp.eq.s32.totalorder %s35, 0
      %p55 = por %p53, %p54
      %p56 = scmp.ne.s32.totalorder %s45, %s48
      %p57 = scmp.eq.s32.totalorder %s40, 1
      %p58 = por %p56, %p57
      %p59 = scmp.ne.s32.totalorder %s48, %s49
      %p60 = scmp.eq.s32.totalorder %s40, 0
      %p61 = por %p59, %p60
      %p62 = scmp.ne.s32.totalorder %s48, %s49
      %p63 = scmp.eq.s32.totalorder %s41, 1
      %p64 = por %p62, %p63
      %p66 = scmp.ne.s32.totalorder %s49, %s65
      %p67 = scmp.eq.s32.totalorder %s41, 0
      %p68 = por %p66, %p67
      %s70 = sadd.s32 %s69, 1
      %p73 = scmp.eq.s32.totalorder %s35, 1
      %p74 = scmp.ne.s32.totalorder %s69, %s71
      %p75 = scmp.eq.s32.totalorder %s35, 0
      %p76 = por %p74, %p75
      %p77 = scmp.ne.s32.totalorder %s69, %s71
      %p78 = scmp.eq.s32.totalorder %s40, 1
      %p79 = por %p77, %p78
      %p80 = scmp.ne.s32.totalorder %s71, %s72
      %p81 = scmp.eq.s32.totalorder %s40, 0
      %p82 = por %p80, %p81
      %p83 = scmp.ne.s32.totalorder %s71, %s72
      %p84 = scmp.eq.s32.totalorder %s41, 1
      %p85 = por %p83, %p84
      %p87 = scmp.ne.s32.totalorder %s72, %s86
      %p88 = scmp.eq.s32.totalorder %s41, 0
      %p89 = por %p87, %p88
      %s91 = sadd.s32 %s90, 1
      %p94 = scmp.eq.s32.totalorder %s35, 1
      %p95 = scmp.ne.s32.totalorder %s90, %s92
      %p96 = scmp.eq.s32.totalorder %s35, 0
      %p97 = por %p95, %p96
      %p98 = scmp.ne.s32.totalorder %s90, %s92
      %p99 = scmp.eq.s32.totalorder %s40, 1
      %p100 = por %p98, %p99
      %p101 = scmp.ne.s32.totalorder %s92, %s93
      %p102 = scmp.eq.s32.totalorder %s40, 0
      %p103 = por %p101, %p102
      %p104 = scmp.ne.s32.totalorder %s92, %s93
      %p105 = scmp.eq.s32.totalorder %s41, 1
      %p106 = por %p104, %p105
      %p108 = scmp.ne.s32.totalorder %s93, %s107
      %p109 = scmp.eq.s32.totalorder %s41, 0
      %p110 = por %p108, %p109
      %s112 = sadd.s32 %s111, 1
      %p115 = scmp.eq.s32.totalorder %s35, 1
      %p116 = scmp.ne.s32.totalorder %s111, %s113
      %p117 = scmp.eq.s32.totalorder %s35, 0
      %p118 = por %p116, %p117
      %p119 = scmp.ne.s32.totalorder %s111, %s113
      %p120 = scmp.eq.s32.totalorder %s40, 1
      %p121 = por %p119, %p120
      %p122 = scmp.ne.s32.totalorder %s113, %s114
      %p123 = scmp.eq.s32.totalorder %s40, 0
      %p124 = por %p122, %p123
      %p125 = scmp.ne.s32.totalorder %s113, %s114
      %p126 = scmp.eq.s32.totalorder %s41, 1
      %p127 = por %p125, %p126
      %p129 = scmp.ne.s32.totalorder %s114, %s128
      %p130 = scmp.eq.s32.totalorder %s41, 0
      %p131 = por %p129, %p130
      %s133 = sadd.s32 %s132, 1
      %p136 = scmp.eq.s32.totalorder %s35, 1
      %p137 = scmp.ne.s32.totalorder %s132, %s134
      %p138 = scmp.eq.s32.totalorder %s35, 0
      %p139 = por %p137, %p138
      %p140 = scmp.ne.s32.totalorder %s132, %s134
      %p141 = scmp.eq.s32.totalorder %s40, 1
      %p142 = por %p140, %p141
      %p143 = scmp.ne.s32.totalorder %s134, %s135
      %p144 = scmp.eq.s32.totalorder %s40, 0
      %p145 = por %p143, %p144
      %p146 = scmp.ne.s32.totalorder %s134, %s135
      %p147 = scmp.eq.s32.totalorder %s41, 1
      %p148 = por %p146, %p147
      %p150 = scmp.ne.s32.totalorder %s135, %s149
      %p151 = scmp.eq.s32.totalorder %s41, 0
      %p152 = por %p150, %p151
      %s154 = sadd.s32 %s153, 1
      %p157 = scmp.eq.s32.totalorder %s35, 1
      %p158 = scmp.ne.s32.totalorder %s153, %s155
      %p159 = scmp.eq.s32.totalorder %s35, 0
      %p160 = por %p158, %p159
      %p161 = scmp.ne.s32.totalorder %s153, %s155
      %p162 = scmp.eq.s32.totalorder %s40, 1
      %p163 = por %p161, %p162
      %p164 = scmp.ne.s32.totalorder %s155, %s156
      %p165 = scmp.eq.s32.totalorder %s40, 0
      %p166 = por %p164, %p165
      %p167 = scmp.ne.s32.totalorder %s155, %s156
      %p168 = scmp.eq.s32.totalorder %s41, 1
      %p169 = por %p167, %p168
      %p171 = scmp.ne.s32.totalorder %s156, %s170
      %p172 = scmp.eq.s32.totalorder %s41, 0
      %p173 = por %p171, %p172
      %s175 = sadd.s32 %s174, 1
      %p178 = scmp.eq.s32.totalorder %s35, 1
      %p179 = scmp.ne.s32.totalorder %s174, %s176
      %p180 = scmp.eq.s32.totalorder %s35, 0
      %p181 = por %p179, %p180
      %p182 = scmp.ne.s32.totalorder %s174, %s176
      %p183 = scmp.eq.s32.totalorder %s40, 1
      %p184 = por %p182, %p183
      %p185 = scmp.ne.s32.totalorder %s176, %s177
      %p186 = scmp.eq.s32.totalorder %s40, 0
      %p187 = por %p185, %p186
      %p188 = scmp.ne.s32.totalorder %s176, %s177
      %p189 = scmp.eq.s32.totalorder %s41, 1
      %p190 = por %p188, %p189
      %p192 = scmp.ne.s32.totalorder %s177, %s191
      %p193 = scmp.eq.s32.totalorder %s41, 0
      %p194 = por %p192, %p193
      %s196 = sadd.s32 %s195, 1
      %p199 = scmp.eq.s32.totalorder %s35, 1
      %p200 = scmp.ne.s32.totalorder %s195, %s197
      %p201 = scmp.eq.s32.totalorder %s35, 0
      %p202 = por %p200, %p201
      %p203 = scmp.ne.s32.totalorder %s195, %s197
      %p204 = scmp.eq.s32.totalorder %s40, 1
      %p205 = por %p203, %p204
      %p206 = scmp.ne.s32.totalorder %s197, %s198
      %p207 = scmp.eq.s32.totalorder %s40, 0
      %p208 = por %p206, %p207
      %p209 = scmp.ne.s32.totalorder %s197, %s198
      %p210 = scmp.eq.s32.totalorder %s41, 1
      %p211 = por %p209, %p210
      %p213 = scmp.ne.s32.totalorder %s198, %s212
      %p214 = scmp.eq.s32.totalorder %s41, 0
      %p215 = por %p213, %p214
      %s217 = sadd.s32 %s216, 1
      %p220 = scmp.eq.s32.totalorder %s35, 1
      %p221 = scmp.ne.s32.totalorder %s216, %s218
      %p222 = scmp.eq.s32.totalorder %s35, 0
      %p223 = por %p221, %p222
      %p224 = scmp.ne.s32.totalorder %s216, %s218
      %p225 = scmp.eq.s32.totalorder %s40, 1
      %p226 = por %p224, %p225
      %p227 = scmp.ne.s32.totalorder %s218, %s219
      %p228 = scmp.eq.s32.totalorder %s40, 0
      %p229 = por %p227, %p228
      %p230 = scmp.ne.s32.totalorder %s218, %s219
      %p231 = scmp.eq.s32.totalorder %s41, 1
      %p232 = por %p230, %p231
      %p234 = scmp.ne.s32.totalorder %s219, %s233
      %p235 = scmp.eq.s32.totalorder %s41, 0
      %p236 = por %p234, %p235
      %s238 = sadd.s32 %s237, 1
      %p241 = scmp.eq.s32.totalorder %s35, 1
      %p242 = scmp.ne.s32.totalorder %s237, %s239
      %p243 = scmp.eq.s32.totalorder %s35, 0
      %p244 = por %p242, %p243
      %p245 = scmp.ne.s32.totalorder %s237, %s239
      %p246 = scmp.eq.s32.totalorder %s40, 1
      %p247 = por %p245, %p246
      %p248 = scmp.ne.s32.totalorder %s239, %s240
      %p249 = scmp.eq.s32.totalorder %s40, 0
      %p250 = por %p248, %p249
      %p251 = scmp.ne.s32.totalorder %s239, %s240
      %p252 = scmp.eq.s32.totalorder %s41, 1
      %p253 = por %p251, %p252
      %p255 = scmp.ne.s32.totalorder %s240, %s254
      %p256 = scmp.eq.s32.totalorder %s41, 0
      %p257 = por %p255, %p256
      %s259 = sadd.s32 %s258, 1
      %p262 = scmp.eq.s32.totalorder %s35, 1
      %p263 = scmp.ne.s32.totalorder %s258, %s260
      %p264 = scmp.eq.s32.totalorder %s35, 0
      %p265 = por %p263, %p264
      %p266 = scmp.ne.s32.totalorder %s258, %s260
      %p267 = scmp.eq.s32.totalorder %s40, 1
      %p268 = por %p266, %p267
      %p269 = scmp.ne.s32.totalorder %s260, %s261
      %p270 = scmp.eq.s32.totalorder %s40, 0
      %p271 = por %p269, %p270
      %p272 = scmp.ne.s32.totalorder %s260, %s261
      %p273 = scmp.eq.s32.totalorder %s41, 1
      %p274 = por %p272, %p273
      %p276 = scmp.ne.s32.totalorder %s261, %s275
      %p277 = scmp.eq.s32.totalorder %s41, 0
      %p278 = por %p276, %p277
      %s280 = sadd.s32 %s279, 1
      %p283 = scmp.eq.s32.totalorder %s35, 1
      %p284 = scmp.ne.s32.totalorder %s279, %s281
      %p285 = scmp.eq.s32.totalorder %s35, 0
      %p286 = por %p284, %p285
      %p287 = scmp.ne.s32.totalorder %s279, %s281
      %p288 = scmp.eq.s32.totalorder %s40, 1
      %p289 = por %p287, %p288
      %p290 = scmp.ne.s32.totalorder %s281, %s282
      %p291 = scmp.eq.s32.totalorder %s40, 0
      %p292 = por %p290, %p291
      %p293 = scmp.ne.s32.totalorder %s281, %s282
      %p294 = scmp.eq.s32.totalorder %s41, 1
      %p295 = por %p293, %p294
      %p297 = scmp.ne.s32.totalorder %s282, %s296
      %p298 = scmp.eq.s32.totalorder %s41, 0
      %p299 = por %p297, %p298
      %s301 = sadd.s32 %s300, 1
      %p304 = scmp.eq.s32.totalorder %s35, 1
      %p305 = scmp.ne.s32.totalorder %s300, %s302
      %p306 = scmp.eq.s32.totalorder %s35, 0
      %p307 = por %p305, %p306
      %p308 = scmp.ne.s32.totalorder %s300, %s302
      %p309 = scmp.eq.s32.totalorder %s40, 1
      %p310 = por %p308, %p309
      %p311 = scmp.ne.s32.totalorder %s302, %s303
      %p312 = scmp.eq.s32.totalorder %s40, 0
      %p313 = por %p311, %p312
      %p314 = scmp.ne.s32.totalorder %s302, %s303
      %p315 = scmp.eq.s32.totalorder %s41, 1
      %p316 = por %p314, %p315
      %p318 = scmp.ne.s32.totalorder %s303, %s317
      %p319 = scmp.eq.s32.totalorder %s41, 0
      %p320 = por %p318, %p319
      %s322 = sadd.s32 %s321, 1
      %p325 = scmp.eq.s32.totalorder %s35, 1
      %p326 = scmp.ne.s32.totalorder %s321, %s323
      %p327 = scmp.eq.s32.totalorder %s35, 0
      %p328 = por %p326, %p327
      %p329 = scmp.ne.s32.totalorder %s321, %s323
      %p330 = scmp.eq.s32.totalorder %s40, 1
      %p331 = por %p329, %p330
      %p332 = scmp.ne.s32.totalorder %s323, %s324
      %p333 = scmp.eq.s32.totalorder %s40, 0
      %p334 = por %p332, %p333
      %p335 = scmp.ne.s32.totalorder %s323, %s324
      %p336 = scmp.eq.s32.totalorder %s41, 1
      %p337 = por %p335, %p336
      %p339 = scmp.ne.s32.totalorder %s324, %s338
      %p340 = scmp.eq.s32.totalorder %s41, 0
      %p341 = por %p339, %p340
      %s343 = sadd.s32 %s342, 1
      %p346 = scmp.eq.s32.totalorder %s35, 1
      %p347 = scmp.ne.s32.totalorder %s342, %s344
      %p348 = scmp.eq.s32.totalorder %s35, 0
      %p349 = por %p347, %p348
      %p350 = scmp.ne.s32.totalorder %s342, %s344
      %p351 = scmp.eq.s32.totalorder %s40, 1
      %p352 = por %p350, %p351
      %p353 = scmp.ne.s32.totalorder %s344, %s345
      %p354 = scmp.eq.s32.totalorder %s40, 0
      %p355 = por %p353, %p354
      %p356 = scmp.ne.s32.totalorder %s344, %s345
      %p357 = scmp.eq.s32.totalorder %s41, 1
      %p358 = por %p356, %p357
      %p360 = scmp.ne.s32.totalorder %s345, %s359
      %p361 = scmp.eq.s32.totalorder %s41, 0
      %p362 = por %p360, %p361
      %s364 = sadd.s32 %s363, 1
      %p367 = scmp.eq.s32.totalorder %s35, 1
      %p368 = scmp.ne.s32.totalorder %s363, %s365
      %p369 = scmp.eq.s32.totalorder %s35, 0
      %p370 = por %p368, %p369
      %p371 = scmp.ne.s32.totalorder %s363, %s365
      %p372 = scmp.eq.s32.totalorder %s40, 1
      %p373 = por %p371, %p372
      %p374 = scmp.ne.s32.totalorder %s365, %s366
      %p375 = scmp.eq.s32.totalorder %s40, 0
      %p376 = por %p374, %p375
      %p377 = scmp.ne.s32.totalorder %s365, %s366
      %p378 = scmp.eq.s32.totalorder %s41, 1
      %p379 = por %p377, %p378
      %p381 = scmp.ne.s32.totalorder %s366, %s380
      %p382 = scmp.eq.s32.totalorder %s41, 0
      %p383 = por %p381, %p382
      %s385 = sadd.s32 %s384, 1
      %p388 = scmp.eq.s32.totalorder %s35, 1
      %p389 = scmp.ne.s32.totalorder %s384, %s386
      %p390 = scmp.eq.s32.totalorder %s35, 0
      %p391 = por %p389, %p390
      %p392 = scmp.ne.s32.totalorder %s384, %s386
      %p393 = scmp.eq.s32.totalorder %s40, 1
      %p394 = por %p392, %p393
      %p395 = scmp.ne.s32.totalorder %s386, %s387
      %p396 = scmp.eq.s32.totalorder %s40, 0
      %p397 = por %p395, %p396
      %p398 = scmp.ne.s32.totalorder %s386, %s387
      %p399 = scmp.eq.s32.totalorder %s41, 1
      %p400 = por %p398, %p399
      %p402 = scmp.ne.s32.totalorder %s387, %s401
      %p403 = scmp.eq.s32.totalorder %s41, 0
      %p404 = por %p402, %p403
      %s406 = sadd.s32 %s405, 1
      %p409 = scmp.eq.s32.totalorder %s35, 1
      %p410 = scmp.ne.s32.totalorder %s405, %s407
      %p411 = scmp.eq.s32.totalorder %s35, 0
      %p412 = por %p410, %p411
      %p413 = scmp.ne.s32.totalorder %s405, %s407
      %p414 = scmp.eq.s32.totalorder %s40, 1
      %p415 = por %p413, %p414
      %p416 = scmp.ne.s32.totalorder %s407, %s408
      %p417 = scmp.eq.s32.totalorder %s40, 0
      %p418 = por %p416, %p417
      %p419 = scmp.ne.s32.totalorder %s407, %s408
      %p420 = scmp.eq.s32.totalorder %s41, 1
      %p421 = por %p419, %p420
      %p423 = scmp.ne.s32.totalorder %s408, %s422
      %p424 = scmp.eq.s32.totalorder %s41, 0
      %p425 = por %p423, %p424
      %s427 = sadd.s32 %s426, 1
      %p430 = scmp.eq.s32.totalorder %s35, 1
      %p431 = scmp.ne.s32.totalorder %s426, %s428
      %p432 = scmp.eq.s32.totalorder %s35, 0
      %p433 = por %p431, %p432
      %p434 = scmp.ne.s32.totalorder %s426, %s428
      %p435 = scmp.eq.s32.totalorder %s40, 1
      %p436 = por %p434, %p435
      %p437 = scmp.ne.s32.totalorder %s428, %s429
      %p438 = scmp.eq.s32.totalorder %s40, 0
      %p439 = por %p437, %p438
      %p440 = scmp.ne.s32.totalorder %s428, %s429
      %p441 = scmp.eq.s32.totalorder %s41, 1
      %p442 = por %p440, %p441
      %p444 = scmp.ne.s32.totalorder %s429, %s443
      %p445 = scmp.eq.s32.totalorder %s41, 0
      %p446 = por %p444, %p445
      %s448 = sadd.s32 %s447, 1
      %p451 = scmp.eq.s32.totalorder %s35, 1
      %p452 = scmp.ne.s32.totalorder %s447, %s449
      %p453 = scmp.eq.s32.totalorder %s35, 0
      %p454 = por %p452, %p453
      %p455 = scmp.ne.s32.totalorder %s447, %s449
      %p456 = scmp.eq.s32.totalorder %s40, 1
      %p457 = por %p455, %p456
      %p458 = scmp.ne.s32.totalorder %s449, %s450
      %p459 = scmp.eq.s32.totalorder %s40, 0
      %p460 = por %p458, %p459
      %p461 = scmp.ne.s32.totalorder %s449, %s450
      %p462 = scmp.eq.s32.totalorder %s41, 1
      %p463 = por %p461, %p462
      %p465 = scmp.ne.s32.totalorder %s450, %s464
      %p466 = scmp.eq.s32.totalorder %s41, 0
      %p467 = por %p465, %p466
      %s468 = ssub.s32 %s35, %s42
      %p469 = scmp.eq.s32.totalorder %s468, 0
      %s471 = sadd.s32 %s470, 1
      %s472 = scalar_select %p469, %s470, %s471
      %p475 = pneg %p469
      %p476 = scmp.eq.s32.totalorder %s35, 1
      %p477 = por %p475, %p476
      %p478 = scmp.ne.s32.totalorder %s470, %s473
      %p479 = scmp.eq.s32.totalorder %s35, 0
      %p480 = por %p478, %p479
      %p481 = scmp.ne.s32.totalorder %s470, %s473
      %p482 = scmp.eq.s32.totalorder %s40, 1
      %p483 = por %p481, %p482
      %p484 = scmp.ne.s32.totalorder %s473, %s474
      %p485 = scmp.eq.s32.totalorder %s40, 0
      %p486 = por %p484, %p485
      %p487 = scmp.ne.s32.totalorder %s473, %s474
      %p488 = scmp.eq.s32.totalorder %s41, 1
      %p489 = por %p487, %p488
      %p491 = scmp.ne.s32.totalorder %s474, %s490
      %p492 = scmp.eq.s32.totalorder %s41, 0
      %p493 = por %p491, %p492
      %p494 = scmp.le.s32.totalorder 1, %s35
      %p495 = scmp.lt.s32.totalorder %s35, 3
      %p496 = pnand %p494, %p495
      %p497 = pneg %p496
      // Predicated region
      $region9: #{tpu_custom_call.1} parent=5 // pred_check
        _
      $region10: #{tpu_custom_call.1} parent=5 // pred_check_branch
        %499 = sbr.rel (%p496) target = $region12
      $region11: #{tpu_custom_call.1} parent=5 // pred_region
        %s500 = ssub.s32 %s35, 1
        // Predicated region
        $region13: #{tpu_custom_call.1} parent=11 // pred_check
          %p501 = pneg %p82
        $region14: #{tpu_custom_call.1} parent=11 // pred_check_branch
          %503 = sbr.rel (%p501) target = $region16
        $region15: #{tpu_custom_call.1} parent=11 // pred_region
          _
        $region16: #{tpu_custom_call.1} parent=11 // pred_fallthru
          _
        // Predicated region
        $region17: #{tpu_custom_call.1} parent=11 // pred_check
          %p504 = pneg %p103
        $region18: #{tpu_custom_call.1} parent=11 // pred_check_branch
          %506 = sbr.rel (%p504) target = $region20
        $region19: #{tpu_custom_call.1} parent=11 // pred_region
          _
        $region20: #{tpu_custom_call.1} parent=11 // pred_fallthru
          _
        // Predicated region
        $region21: #{tpu_custom_call.1} parent=11 // pred_check
          %p507 = pneg %p124
        $region22: #{tpu_custom_call.1} parent=11 // pred_check_branch
          %509 = sbr.rel (%p507) target = $region24
        $region23: #{tpu_custom_call.1} parent=11 // pred_region
          %s511 = ssub.s32 32, 32
          %512 = vsyncadd [#allocation3], %s511
          %s514 = sshll.u32 [#allocation2], 4
          %s515 = int_to_ptr.vmem [resolvable:$true] %s514
          %517 = dma.hbm_to_vmem [thread:$0]  %s3, 32, %s515, [#allocation3]
        $region24: #{tpu_custom_call.1} parent=11 // pred_fallthru
          _
        // Predicated region
        $region25: #{tpu_custom_call.1} parent=11 // pred_check
          %p518 = pneg %p145
        $region26: #{tpu_custom_call.1} parent=11 // pred_check_branch
          %520 = sbr.rel (%p518) target = $region28
        $region27: #{tpu_custom_call.1} parent=11 // pred_region
          %s522 = ssub.s32 3840, 3840
          %523 = vsyncadd [#allocation6], %s522
          %s524 = sshll.u32 [#allocation5], 4
          %s525 = int_to_ptr.vmem [resolvable:$true] %s524
          %530 = dma.hbm_to_vmem [thread:$0]  %s4, 3840, %s525, [#allocation6], 128, 128, 8
        $region28: #{tpu_custom_call.1} parent=11 // pred_fallthru
          _
        // Predicated region
        $region29: #{tpu_custom_call.1} parent=11 // pred_check
          %p531 = pneg %p166
        $region30: #{tpu_custom_call.1} parent=11 // pred_check_branch
          %533 = sbr.rel (%p531) target = $region32
        $region31: #{tpu_custom_call.1} parent=11 // pred_region
          %s535 = ssub.s32 3840, 3840
          %536 = vsyncadd [#allocation6], %s535
          %s537 = sshll.u32 [#allocation7], 4
          %s538 = int_to_ptr.vmem [resolvable:$true] %s537
          %543 = dma.hbm_to_vmem [thread:$0]  %s5, 3840, %s538, [#allocation6], 128, 128, 8
        $region32: #{tpu_custom_call.1} parent=11 // pred_fallthru
          _
        // Predicated region
        $region33: #{tpu_custom_call.1} parent=11 // pred_check
          %p544 = pneg %p187
        $region34: #{tpu_custom_call.1} parent=11 // pred_check_branch
          %546 = sbr.rel (%p544) target = $region36
        $region35: #{tpu_custom_call.1} parent=11 // pred_region
          %s548 = ssub.s32 3072, 3072
          %549 = vsyncadd [#allocation9], %s548
          %s550 = sshll.u32 [#allocation8], 4
          %s551 = int_to_ptr.vmem [resolvable:$true] %s550
          %556 = dma.hbm_to_vmem [thread:$0]  %s6, 3072, %s551, [#allocation9], 256, 256, 16
        $region36: #{tpu_custom_call.1} parent=11 // pred_fallthru
          _
        // Predicated region
        $region37: #{tpu_custom_call.1} parent=11 // pred_check
          %p557 = pneg %p208
        $region38: #{tpu_custom_call.1} parent=11 // pred_check_branch
          %559 = sbr.rel (%p557) target = $region40
        $region39: #{tpu_custom_call.1} parent=11 // pred_region
          %s561 = ssub.s32 3072, 3072
          %562 = vsyncadd [#allocation9], %s561
          %s563 = sshll.u32 [#allocation10], 4
          %s564 = int_to_ptr.vmem [resolvable:$true] %s563
          %569 = dma.hbm_to_vmem [thread:$0]  %s7, 3072, %s564, [#allocation9], 256, 256, 16
        $region40: #{tpu_custom_call.1} parent=11 // pred_fallthru
          _
        // Predicated region
        $region41: #{tpu_custom_call.1} parent=11 // pred_check
          %p570 = pneg %p229
        $region42: #{tpu_custom_call.1} parent=11 // pred_check_branch
          %572 = sbr.rel (%p570) target = $region44
        $region43: #{tpu_custom_call.1} parent=11 // pred_region
          %s574 = ssub.s32 5120, 5120
          %575 = vsyncadd [#allocation12], %s574
          %s576 = sshll.u32 [#allocation11], 4
          %s577 = int_to_ptr.vmem [resolvable:$true] %s576
          %582 = dma.hbm_to_vmem [thread:$0]  %s8, 5120, %s577, [#allocation12], 128, 128, 8
        $region44: #{tpu_custom_call.1} parent=11 // pred_fallthru
          _
        // Predicated region
        $region45: #{tpu_custom_call.1} parent=11 // pred_check
          %p583 = pneg %p250
        $region46: #{tpu_custom_call.1} parent=11 // pred_check_branch
          %585 = sbr.rel (%p583) target = $region48
        $region47: #{tpu_custom_call.1} parent=11 // pred_region
          _
        $region48: #{tpu_custom_call.1} parent=11 // pred_fallthru
          _
        // Predicated region
        $region49: #{tpu_custom_call.1} parent=11 // pred_check
          %p586 = pneg %p271
        $region50: #{tpu_custom_call.1} parent=11 // pred_check_branch
          %588 = sbr.rel (%p586) target = $region52
        $region51: #{tpu_custom_call.1} parent=11 // pred_region
          %s590 = ssub.s32 32, 32
          %591 = vsyncadd [#allocation12], %s590
          %s593 = sshll.u32 [#allocation13], 4
          %s594 = int_to_ptr.vmem [resolvable:$true] %s593
          %596 = dma.hbm_to_vmem [thread:$0]  %s10, 32, %s594, [#allocation12]
        $region52: #{tpu_custom_call.1} parent=11 // pred_fallthru
          _
        // Predicated region
        $region53: #{tpu_custom_call.1} parent=11 // pred_check
          %p597 = pneg %p292
        $region54: #{tpu_custom_call.1} parent=11 // pred_check_branch
          %599 = sbr.rel (%p597) target = $region56
        $region55: #{tpu_custom_call.1} parent=11 // pred_region
          _
        $region56: #{tpu_custom_call.1} parent=11 // pred_fallthru
          _
        // Predicated region
        $region57: #{tpu_custom_call.1} parent=11 // pred_check
          %p600 = pneg %p313
        $region58: #{tpu_custom_call.1} parent=11 // pred_check_branch
          %602 = sbr.rel (%p600) target = $region60
        $region59: #{tpu_custom_call.1} parent=11 // pred_region
          %s604 = ssub.s32 2560, 2560
          %605 = vsyncadd [#allocation15], %s604
          %s606 = sshll.u32 [#allocation14], 4
          %s607 = int_to_ptr.vmem [resolvable:$true] %s606
          %612 = dma.hbm_to_vmem [thread:$0]  %s12, 2560, %s607, [#allocation15], 128, 128, 8
        $region60: #{tpu_custom_call.1} parent=11 // pred_fallthru
          _
        // Predicated region
        $region61: #{tpu_custom_call.1} parent=11 // pred_check
          %p613 = pneg %p334
        $region62: #{tpu_custom_call.1} parent=11 // pred_check_branch
          %615 = sbr.rel (%p613) target = $region64
        $region63: #{tpu_custom_call.1} parent=11 // pred_region
          %s617 = ssub.s32 512, 512
          %618 = vsyncadd [#allocation15], %s617
          %s619 = sshll.u32 [#allocation16], 4
          %s620 = int_to_ptr.vmem [resolvable:$true] %s619
          %625 = dma.hbm_to_vmem [thread:$0]  %s13, 512, %s620, [#allocation15], 128, 128, 8
        $region64: #{tpu_custom_call.1} parent=11 // pred_fallthru
          _
        // Predicated region
        $region65: #{tpu_custom_call.1} parent=11 // pred_check
          %p626 = pneg %p355
        $region66: #{tpu_custom_call.1} parent=11 // pred_check_branch
          %628 = sbr.rel (%p626) target = $region68
        $region67: #{tpu_custom_call.1} parent=11 // pred_region
          %s630 = ssub.s32 512, 512
          %631 = vsyncadd [#allocation18], %s630
          %s632 = sshll.u32 [#allocation17], 4
          %s633 = int_to_ptr.vmem [resolvable:$true] %s632
          %638 = dma.hbm_to_vmem [thread:$0]  %s14, 512, %s633, [#allocation18], 128, 128, 8
        $region68: #{tpu_custom_call.1} parent=11 // pred_fallthru
          _
        // Predicated region
        $region69: #{tpu_custom_call.1} parent=11 // pred_check
          %p639 = pneg %p376
        $region70: #{tpu_custom_call.1} parent=11 // pred_check_branch
          %641 = sbr.rel (%p639) target = $region72
        $region71: #{tpu_custom_call.1} parent=11 // pred_region
          %s643 = ssub.s32 512, 512
          %644 = vsyncadd [#allocation18], %s643
          %s645 = sshll.u32 [#allocation19], 4
          %s646 = int_to_ptr.vmem [resolvable:$true] %s645
          %651 = dma.hbm_to_vmem [thread:$0]  %s15, 512, %s646, [#allocation18], 128, 128, 8
        $region72: #{tpu_custom_call.1} parent=11 // pred_fallthru
          _
        // Predicated region
        $region73: #{tpu_custom_call.1} parent=11 // pred_check
          %p652 = pneg %p397
        $region74: #{tpu_custom_call.1} parent=11 // pred_check_branch
          %654 = sbr.rel (%p652) target = $region76
        $region75: #{tpu_custom_call.1} parent=11 // pred_region
          _
        $region76: #{tpu_custom_call.1} parent=11 // pred_fallthru
          _
        // Predicated region
        $region77: #{tpu_custom_call.1} parent=11 // pred_check
          %p655 = pneg %p418
        $region78: #{tpu_custom_call.1} parent=11 // pred_check_branch
          %657 = sbr.rel (%p655) target = $region80
        $region79: #{tpu_custom_call.1} parent=11 // pred_region
          _
        $region80: #{tpu_custom_call.1} parent=11 // pred_fallthru
          _
        // Predicated region
        $region81: #{tpu_custom_call.1} parent=11 // pred_check
          %p658 = pneg %p439
        $region82: #{tpu_custom_call.1} parent=11 // pred_check_branch
          %660 = sbr.rel (%p658) target = $region84
        $region83: #{tpu_custom_call.1} parent=11 // pred_region
          _
        $region84: #{tpu_custom_call.1} parent=11 // pred_fallthru
          _
        // Predicated region
        $region85: #{tpu_custom_call.1} parent=11 // pred_check
          %p661 = pneg %p460
        $region86: #{tpu_custom_call.1} parent=11 // pred_check_branch
          %663 = sbr.rel (%p661) target = $region88
        $region87: #{tpu_custom_call.1} parent=11 // pred_region
          _
        $region88: #{tpu_custom_call.1} parent=11 // pred_fallthru
          _
      $region12: #{tpu_custom_call.1} parent=5 // pred_fallthru
        _
      %p664 = scmp.lt.s32.totalorder %s35, 2
      // Predicated region
      $region89: #{tpu_custom_call.1} parent=5 // pred_check
        %p665 = pneg %p664
      $region90: #{tpu_custom_call.1} parent=5 // pred_check_branch
        %667 = sbr.rel (%p665) target = $region92
      $region91: #{tpu_custom_call.1} parent=5 // pred_region
        // Predicated region
        $region93: #{tpu_custom_call.1} parent=91 // pred_check
          %p668 = pneg %p55
        $region94: #{tpu_custom_call.1} parent=91 // pred_check_branch
          %670 = sbr.rel (%p668) target = $region96
        $region95: #{tpu_custom_call.1} parent=91 // pred_region
          %s671 = smul.u32 28, %s35
          %p672 = scmp.lt.s32.totalorder %s671, 55
          %s673 = scalar_select %p672, %s671, 55
          %s674 = smul.addr %s673, 8
          %s675 = scalar_lea.vmem %s0, %s674
          %s676 = smul.u32 28, %s35
        $region96: #{tpu_custom_call.1} parent=91 // pred_fallthru
          _
      $region92: #{tpu_custom_call.1} parent=5 // pred_fallthru
        _
      %p677 = scmp.le.s32.totalorder 1, %s35
      %p678 = scmp.lt.s32.totalorder %s35, 3
      %p679 = pnand %p677, %p678
      %p680 = pneg %p679
      // Predicated region
      $region97: #{tpu_custom_call.1} parent=5 // pred_check
        _
      $region98: #{tpu_custom_call.1} parent=5 // pred_check_branch
        %682 = sbr.rel (%p679) target = $region100
      $region99: #{tpu_custom_call.1} parent=5 // pred_region
        %s683 = ssub.s32 %s35, 1
        // Predicated region
        $region101: #{tpu_custom_call.1} parent=99 // pred_check
          %p684 = pneg %p124
        $region102: #{tpu_custom_call.1} parent=99 // pred_check_branch
          %686 = sbr.rel (%p684) target = $region104
        $region103: #{tpu_custom_call.1} parent=99 // pred_region
          %687 = dma.done [#allocation3], 32
        $region104: #{tpu_custom_call.1} parent=99 // pred_fallthru
          _
        // Predicated region
        $region105: #{tpu_custom_call.1} parent=99 // pred_check
          %p688 = pneg %p145
        $region106: #{tpu_custom_call.1} parent=99 // pred_check_branch
          %690 = sbr.rel (%p688) target = $region108
        $region107: #{tpu_custom_call.1} parent=99 // pred_region
          %691 = dma.done [#allocation6], 3840
        $region108: #{tpu_custom_call.1} parent=99 // pred_fallthru
          _
        // Predicated region
        $region109: #{tpu_custom_call.1} parent=99 // pred_check
          %p692 = pneg %p166
        $region110: #{tpu_custom_call.1} parent=99 // pred_check_branch
          %694 = sbr.rel (%p692) target = $region112
        $region111: #{tpu_custom_call.1} parent=99 // pred_region
          %695 = dma.done [#allocation6], 3840
        $region112: #{tpu_custom_call.1} parent=99 // pred_fallthru
          _
        // Predicated region
        $region113: #{tpu_custom_call.1} parent=99 // pred_check
          %p696 = pneg %p187
        $region114: #{tpu_custom_call.1} parent=99 // pred_check_branch
          %698 = sbr.rel (%p696) target = $region116
        $region115: #{tpu_custom_call.1} parent=99 // pred_region
          %699 = dma.done [#allocation9], 3072
        $region116: #{tpu_custom_call.1} parent=99 // pred_fallthru
          _
        // Predicated region
        $region117: #{tpu_custom_call.1} parent=99 // pred_check
          %p700 = pneg %p208
        $region118: #{tpu_custom_call.1} parent=99 // pred_check_branch
          %702 = sbr.rel (%p700) target = $region120
        $region119: #{tpu_custom_call.1} parent=99 // pred_region
          %703 = dma.done [#allocation9], 3072
        $region120: #{tpu_custom_call.1} parent=99 // pred_fallthru
          _
        // Predicated region
        $region121: #{tpu_custom_call.1} parent=99 // pred_check
          %p704 = pneg %p229
        $region122: #{tpu_custom_call.1} parent=99 // pred_check_branch
          %706 = sbr.rel (%p704) target = $region124
        $region123: #{tpu_custom_call.1} parent=99 // pred_region
          %707 = dma.done [#allocation12], 5120
        $region124: #{tpu_custom_call.1} parent=99 // pred_fallthru
          _
        // Predicated region
        $region125: #{tpu_custom_call.1} parent=99 // pred_check
          %p708 = pneg %p271
        $region126: #{tpu_custom_call.1} parent=99 // pred_check_branch
          %710 = sbr.rel (%p708) target = $region128
        $region127: #{tpu_custom_call.1} parent=99 // pred_region
          %711 = dma.done [#allocation12], 32
        $region128: #{tpu_custom_call.1} parent=99 // pred_fallthru
          _
        // Predicated region
        $region129: #{tpu_custom_call.1} parent=99 // pred_check
          %p712 = pneg %p313
        $region130: #{tpu_custom_call.1} parent=99 // pred_check_branch
          %714 = sbr.rel (%p712) target = $region132
        $region131: #{tpu_custom_call.1} parent=99 // pred_region
          %715 = dma.done [#allocation15], 2560
        $region132: #{tpu_custom_call.1} parent=99 // pred_fallthru
          _
        // Predicated region
        $region133: #{tpu_custom_call.1} parent=99 // pred_check
          %p716 = pneg %p334
        $region134: #{tpu_custom_call.1} parent=99 // pred_check_branch
          %718 = sbr.rel (%p716) target = $region136
        $region135: #{tpu_custom_call.1} parent=99 // pred_region
          %719 = dma.done [#allocation15], 512
        $region136: #{tpu_custom_call.1} parent=99 // pred_fallthru
          _
        // Predicated region
        $region137: #{tpu_custom_call.1} parent=99 // pred_check
          %p720 = pneg %p355
        $region138: #{tpu_custom_call.1} parent=99 // pred_check_branch
          %722 = sbr.rel (%p720) target = $region140
        $region139: #{tpu_custom_call.1} parent=99 // pred_region
          %723 = dma.done [#allocation18], 512
        $region140: #{tpu_custom_call.1} parent=99 // pred_fallthru
          _
        // Predicated region
        $region141: #{tpu_custom_call.1} parent=99 // pred_check
          %p724 = pneg %p376
        $region142: #{tpu_custom_call.1} parent=99 // pred_check_branch
          %726 = sbr.rel (%p724) target = $region144
        $region143: #{tpu_custom_call.1} parent=99 // pred_region
          %727 = dma.done [#allocation18], 512
        $region144: #{tpu_custom_call.1} parent=99 // pred_fallthru
          _
        %s728 = smul.u32 28, %s40
        %p729 = scmp.lt.s32.totalorder %s728, 55
        %s730 = scalar_select %p729, %s728, 55
        %s731 = smul.addr %s730, 8
        %s732 = scalar_lea.vmem %s0, %s731
        %p733 = pneg %p61
        %p734 = pneg %p58
        %p735 = pneg %p82
        %p736 = pneg %p79
        %p737 = pneg %p103
        %p738 = pneg %p100
        %p739 = pneg %p124
        %p740 = pneg %p121
        %p741 = pneg %p145
        %p742 = pneg %p142
        %p743 = pneg %p166
        %p744 = pneg %p163
        %p745 = pneg %p187
        %p746 = pneg %p184
        %p747 = pneg %p208
        %p748 = pneg %p205
        %p749 = pneg %p229
        %p750 = pneg %p226
        %p751 = pneg %p250
        %p752 = pneg %p247
        %p753 = pneg %p271
        %p754 = pneg %p268
        %p755 = pneg %p292
        %p756 = pneg %p289
        %p757 = pneg %p313
        %p758 = pneg %p310
        %p759 = pneg %p334
        %p760 = pneg %p331
        %p761 = pneg %p355
        %p762 = pneg %p352
        %p763 = pneg %p376
        %p764 = pneg %p373
        %p765 = pneg %p397
        %p766 = pneg %p394
        %p767 = pneg %p418
        %p768 = pneg %p415
        %p769 = pneg %p439
        %p770 = pneg %p436
        %p771 = pneg %p460
        %p772 = pneg %p457
        %p773 = pneg %p486
        %p774 = pneg %p483
        %s775 = sand.u32 %s473, 1
        %s776 = scalar_lea.sflag [#allocation4], %s775
        %s777 = sand.u32 %s473, 1
        %s778 = smul.addr %s777, 8
        %s779 = scalar_lea.vmem [#allocation20], %s778
        %s780 = smul.u32 28, %s40
        %p781 = scmp.lt.s32.totalorder %s780, 55
        %s782 = scalar_select %p781, %s780, 55
        %s783 = smul.addr %s782, 8
        %s784 = scalar_lea.vmem %s0, %s783
        %s785 = smul.u32 28, %s40
        %v786 = vld [vmem:[%s784] sm:$0xff]
        %v787 = vld [vmem:[%s784 + $0x8] sm:$0xff]
        %v788 = vld [vmem:[%s784 + $0x10] sm:$0xff]
        %v789 = vld [vmem:[%s784 + $0x18] sm:$0xff]
        %v790 = vld [vmem:[%s784 + $0x20] sm:$0xff]
        %v791 = vld [vmem:[%s784 + $0x28] sm:$0xff]
        %v792 = vld [vmem:[%s784 + $0x30] sm:$0xff]
        %v793 = vld [vmem:[%s784 + $0x38] sm:$0xff]
        %v794 = vld [vmem:[%s784 + $0x40] sm:$0xff]
        %v795 = vld [vmem:[%s784 + $0x48] sm:$0xff]
        %v796 = vld [vmem:[%s784 + $0x50] sm:$0xff]
        %v797 = vld [vmem:[%s784 + $0x58] sm:$0xff]
        %v798 = vld [vmem:[%s784 + $0x60] sm:$0xff]
        %v799 = vld [vmem:[%s784 + $0x68] sm:$0xff]
        %v800 = vld [vmem:[%s784 + $0x70] sm:$0xff]
        %v801 = vld [vmem:[%s784 + $0x78] sm:$0xff]
        %v802 = vld [vmem:[%s784 + $0x80] sm:$0xff]
        %v803 = vld [vmem:[%s784 + $0x88] sm:$0xff]
        %v804 = vld [vmem:[%s784 + $0x90] sm:$0xff]
        %v805 = vld [vmem:[%s784 + $0x98] sm:$0xff]
        %v806 = vld [vmem:[%s784 + $0xa0] sm:$0xff]
        %v807 = vld [vmem:[%s784 + $0xa8] sm:$0xff]
        %v808 = vld [vmem:[%s784 + $0xb0] sm:$0xff]
        %v809 = vld [vmem:[%s784 + $0xb8] sm:$0xff]
        %v810 = vld [vmem:[%s784 + $0xc0] sm:$0xff]
        %v811 = vld [vmem:[%s784 + $0xc8] sm:$0xff]
        %v812 = vld [vmem:[%s784 + $0xd0] sm:$0xff]
        %v813 = vld [vmem:[%s784 + $0xd8] sm:$0xff]
        %v814 = vld [vmem:[#allocation2] sm:$0x3]
        %v815 = vld [vmem:[%s1] sm:$0xff]
        %v816 = vld [vmem:[%s1 + $0x8] sm:$0xff]
        %v817 = vld [vmem:[%s1 + $0x10] sm:$0xff]
        %v818 = vld [vmem:[%s1 + $0x18] sm:$0xff]
        %v819 = vld [vmem:[%s1 + $0x20] sm:$0xff]
        %v820 = vld [vmem:[%s1 + $0x28] sm:$0xff]
        %v821 = vld [vmem:[%s1 + $0x30] sm:$0xff]
        %v822 = vld [vmem:[%s1 + $0x38] sm:$0xff]
        %v823 = vld [vmem:[%s1 + $0x40] sm:$0xff]
        %v824 = vld [vmem:[%s1 + $0x48] sm:$0xff]
        %v825 = vld [vmem:[%s1 + $0x50] sm:$0xff]
        %v826 = vld [vmem:[%s1 + $0x58] sm:$0xff]
        %v827 = vld [vmem:[%s1 + $0x60] sm:$0xff]
        %v828 = vld [vmem:[%s1 + $0x68] sm:$0xff]
        %v829 = vld [vmem:[%s1 + $0x70] sm:$0xff]
        %v830 = vld [vmem:[%s1 + $0x78] sm:$0xff]
        %v831 = vld [vmem:[%s1 + $0x80] sm:$0xff]
        %v832 = vld [vmem:[%s1 + $0x88] sm:$0xff]
        %v833 = vld [vmem:[%s1 + $0x90] sm:$0xff]
        %v834 = vld [vmem:[%s1 + $0x98] sm:$0xff]
        %v835 = vld [vmem:[%s1 + $0xa0] sm:$0xff]
        %v836 = vld [vmem:[%s1 + $0xa8] sm:$0xff]
        %v837 = vld [vmem:[%s1 + $0xb0] sm:$0xff]
        %v838 = vld [vmem:[%s1 + $0xb8] sm:$0xff]
        %v839 = vld [vmem:[%s1 + $0xc0] sm:$0xff]
        %v840 = vld [vmem:[%s1 + $0xc8] sm:$0xff]
        %v841 = vld [vmem:[%s1 + $0xd0] sm:$0xff]
        %v842 = vld [vmem:[%s1 + $0xd8] sm:$0xff]
        %v843 = vld [vmem:[%s1 + $0xe0] sm:$0xff]
        %v844 = vld [vmem:[%s1 + $0xe8] sm:$0xff]
        %v845 = vld [vmem:[%s1 + $0xf0] sm:$0xff]
        %v846 = vld [vmem:[%s1 + $0xf8] sm:$0xff]
        %v847 = vld [vmem:[%s1 + $0x100] sm:$0xff]
        %v848 = vld [vmem:[%s1 + $0x108] sm:$0xff]
        %v849 = vld [vmem:[%s1 + $0x110] sm:$0xff]
        %v850 = vld [vmem:[%s1 + $0x118] sm:$0xff]
        %v851 = vld [vmem:[%s1 + $0x120] sm:$0xff]
        %v852 = vld [vmem:[%s1 + $0x128] sm:$0xff]
        %v853 = vld [vmem:[%s1 + $0x130] sm:$0xff]
        %v854 = vld [vmem:[%s1 + $0x138] sm:$0xff]
        %v855 = vld [vmem:[%s1 + $0x140] sm:$0xff]
        %v856 = vld [vmem:[%s1 + $0x148] sm:$0xff]
        %v857 = vld [vmem:[%s1 + $0x150] sm:$0xff]
        %v858 = vld [vmem:[%s1 + $0x158] sm:$0xff]
        %v859 = vld [vmem:[%s1 + $0x160] sm:$0xff]
        %v860 = vld [vmem:[%s1 + $0x168] sm:$0xff]
        %v861 = vld [vmem:[%s1 + $0x170] sm:$0xff]
        %v862 = vld [vmem:[%s1 + $0x178] sm:$0xff]
        %vm863 = vcmask 785408
        %v865 = vsel %vm863, %v816, 0
        %v868 = vsel %vm863, %v818, 0
        %v871 = vsel %vm863, %v820, 0
        %v874 = vsel %vm863, %v822, 0
        %v877 = vsel %vm863, %v824, 0
        %v880 = vsel %vm863, %v826, 0
        %v883 = vsel %vm863, %v828, 0
        %v886 = vsel %vm863, %v830, 0
        %v889 = vsel %vm863, %v832, 0
        %v892 = vsel %vm863, %v834, 0
        %v895 = vsel %vm863, %v836, 0
        %v898 = vsel %vm863, %v838, 0
        %v901 = vsel %vm863, %v840, 0
        %v904 = vsel %vm863, %v842, 0
        %v907 = vsel %vm863, %v844, 0
        %v910 = vsel %vm863, %v846, 0
        %v913 = vsel %vm863, %v848, 0
        %v916 = vsel %vm863, %v850, 0
        %v919 = vsel %vm863, %v852, 0
        %v922 = vsel %vm863, %v854, 0
        %v925 = vsel %vm863, %v856, 0
        %v928 = vsel %vm863, %v858, 0
        %v931 = vsel %vm863, %v860, 0
        %v934 = vsel %vm863, %v862, 0
        %936 = vmatprep.subr.mxu0 0.0
        %937 = vmatpush1.msra.mxu0 %v786
        %938 = vmatprep.subr.mxu0 0.0
        %939 = vmatpush1.msra.mxu0 %v787
        %940 = vmatprep.subr.mxu0 0.0
        %941 = vmatpush1.msra.mxu0 %v788
        %942 = vmatprep.subr.mxu0 0.0
        %943 = vmatpush1.msra.mxu0 %v789
        %944 = vmatprep.subr.mxu0 0.0
        %945 = vmatpush1.msra.mxu0 %v790
        %946 = vmatprep.subr.mxu0 0.0
        %947 = vmatpush1.msra.mxu0 %v791
        %948 = vmatprep.subr.mxu0 0.0
        %949 = vmatpush1.msra.mxu0 %v792
        %950 = vmatprep.subr.mxu0 0.0
        %951 = vmatpush1.msra.mxu0 %v793
        %952 = vmatprep.subr.mxu0 0.0
        %953 = vmatpush1.msra.mxu0 %v794
        %954 = vmatprep.subr.mxu0 0.0
        %955 = vmatpush1.msra.mxu0 %v795
        %956 = vmatprep.subr.mxu0 0.0
        %957 = vmatpush1.msra.mxu0 %v796
        %958 = vmatprep.subr.mxu0 0.0
        %959 = vmatpush1.msra.mxu0 %v797
        %960 = vmatprep.subr.mxu0 0.0
        %961 = vmatpush1.msra.mxu0 %v798
        %962 = vmatprep.subr.mxu0 0.0
        %963 = vmatpush1.msra.mxu0 %v799
        %964 = vmatprep.subr.mxu0 0.0
        %965 = vmatpush1.msra.mxu0 %v800
        %966 = vmatprep.subr.mxu0 0.0
        %967 = vmatpush1.msra.mxu0 %v801
        %968 = vmatprep.subr.mxu0 0.0
        %969 = vmatpush1.msra.mxu0 %v802
        %970 = vmatprep.subr.mxu0 0.0
        %971 = vmatpush1.msra.mxu0 %v803
        %972 = vmatprep.subr.mxu0 0.0
        %973 = vmatpush1.msra.mxu0 %v804
        %974 = vmatprep.subr.mxu0 0.0
        %975 = vmatpush1.msra.mxu0 %v805
        %976 = vmatprep.subr.mxu0 0.0
        %977 = vmatpush1.msra.mxu0 %v806
        %978 = vmatprep.subr.mxu0 0.0
        %979 = vmatpush1.msra.mxu0 %v807
        %980 = vmatprep.subr.mxu0 0.0
        %981 = vmatpush1.msra.mxu0 %v808
        %982 = vmatprep.subr.mxu0 0.0
        %983 = vmatpush1.msra.mxu0 %v809
        %984 = vmatprep.subr.mxu0 0.0
        %985 = vmatpush1.msra.mxu0 %v810
        %986 = vmatprep.subr.mxu0 0.0
        %987 = vmatpush1.msra.mxu0 %v811
        %988 = vmatprep.subr.mxu0 0.0
        %989 = vmatpush1.msra.mxu0 %v812
        %990 = vmatprep.subr.mxu0 0.0
        %991 = vmatpush1.msra.mxu0 %v813
        %992 = vmatprep.subr.mxu0 0.0
        %993 = vmatpush1.msra.mxu0 0.0
        %994 = vmatprep.subr.mxu0 0.0
        %995 = vmatpush1.msra.mxu0 0.0
        %996 = vmatprep.subr.mxu0 0.0
        %997 = vmatpush1.msra.mxu0 0.0
        %998 = vmatprep.subr.mxu0 0.0
        %999 = vmatpush1.msra.mxu0 0.0
        %1000 = vmatprep.mubr.f32.mxu0 %v865
        %1001 = vmatmul.mubr.f32.gmra.mrb[0].mxu0 %v815
        %v1002 = vpop.f32.mrb[0].mxu0
        %v1003 = vadd.f32 0.0, %v1002
        %v1004 = vpop.f32.mrb[0].mxu0
        %1005 = vmatprep.mubr.f32.mxu0 %v868
        %1006 = vmatmul.mubr.f32.gmra.mrb[0].mxu0 %v817
        %v1007 = vpop.f32.mrb[0].mxu0
        %v1008 = vadd.f32 0.0, %v1007
        %v1009 = vpop.f32.mrb[0].mxu0
        %1010 = vmatprep.mubr.f32.mxu0 %v871
        %1011 = vmatmul.mubr.f32.gmra.mrb[0].mxu0 %v819
        %v1012 = vpop.f32.mrb[0].mxu0
        %v1013 = vadd.f32 0.0, %v1012
        %v1014 = vpop.f32.mrb[0].mxu0
        %1015 = vmatprep.mubr.f32.mxu0 %v874
        %1016 = vmatmul.mubr.f32.gmra.mrb[0].mxu0 %v821
        %v1017 = vpop.f32.mrb[0].mxu0
        %v1018 = vadd.f32 0.0, %v1017
        %v1019 = vpop.f32.mrb[0].mxu0
        %1020 = vmatprep.mubr.f32.mxu0 %v877
        %1021 = vmatmul.mubr.f32.gmra.mrb[0].mxu0 %v823
        %v1022 = vpop.f32.mrb[0].mxu0
        %v1023 = vadd.f32 0.0, %v1022
        %v1024 = vpop.f32.mrb[0].mxu0
        %1025 = vmatprep.mubr.f32.mxu0 %v880
        %1026 = vmatmul.mubr.f32.gmra.mrb[0].mxu0 %v825
        %v1027 = vpop.f32.mrb[0].mxu0
        %v1028 = vadd.f32 0.0, %v1027
        %v1029 = vpop.f32.mrb[0].mxu0
        %1030 = vmatprep.mubr.f32.mxu0 %v883
        %1031 = vmatmul.mubr.f32.gmra.mrb[0].mxu0 %v827
        %v1032 = vpop.f32.mrb[0].mxu0
        %v1033 = vadd.f32 0.0, %v1032
        %v1034 = vpop.f32.mrb[0].mxu0
        %1035 = vmatprep.mubr.f32.mxu0 %v886
        %1036 = vmatmul.mubr.f32.gmra.mrb[0].mxu0 %v829
        %v1037 = vpop.f32.mrb[0].mxu0
        %v1038 = vadd.f32 0.0, %v1037
        %v1039 = vpop.f32.mrb[0].mxu0
        %1040 = vmatprep.mubr.f32.mxu0 %v889
        %1041 = vmatmul.mubr.f32.gmra.mrb[0].mxu0 %v831
        %v1042 = vpop.f32.mrb[0].mxu0
        %v1043 = vadd.f32 0.0, %v1042
        %v1044 = vpop.f32.mrb[0].mxu0
        %1045 = vmatprep.mubr.f32.mxu0 %v892
        %1046 = vmatmul.mubr.f32.gmra.mrb[0].mxu0 %v833
        %v1047 = vpop.f32.mrb[0].mxu0
        %v1048 = vadd.f32 0.0, %v1047
        %v1049 = vpop.f32.mrb[0].mxu0
        %1050 = vmatprep.mubr.f32.mxu0 %v895
        %1051 = vmatmul.mubr.f32.gmra.mrb[0].mxu0 %v835
        %v1052 = vpop.f32.mrb[0].mxu0
        %v1053 = vadd.f32 0.0, %v1052
        %v1054 = vpop.f32.mrb[0].mxu0
        %1055 = vmatprep.mubr.f32.mxu0 %v898
        %1056 = vmatmul.mubr.f32.gmra.mrb[0].mxu0 %v837
        %v1057 = vpop.f32.mrb[0].mxu0
        %v1058 = vadd.f32 0.0, %v1057
        %v1059 = vpop.f32.mrb[0].mxu0
        %1060 = vmatprep.mubr.f32.mxu0 %v901
        %1061 = vmatmul.mubr.f32.gmra.mrb[0].mxu0 %v839
        %v1062 = vpop.f32.mrb[0].mxu0
        %v1063 = vadd.f32 0.0, %v1062
        %v1064 = vpop.f32.mrb[0].mxu0
        %1065 = vmatprep.mubr.f32.mxu0 %v904
        %1066 = vmatmul.mubr.f32.gmra.mrb[0].mxu0 %v841
        %v1067 = vpop.f32.mrb[0].mxu0
        %v1068 = vadd.f32 0.0, %v1067
        %v1069 = vpop.f32.mrb[0].mxu0
        %1070 = vmatprep.mubr.f32.mxu0 %v907
        %1071 = vmatmul.mubr.f32.gmra.mrb[0].mxu0 %v843
        %v1072 = vpop.f32.mrb[0].mxu0
        %v1073 = vadd.f32 0.0, %v1072
        %v1074 = vpop.f32.mrb[0].mxu0
        %1075 = vmatprep.mubr.f32.mxu0 %v910
        %1076 = vmatmul.mubr.f32.gmra.mrb[0].mxu0 %v845
        %v1077 = vpop.f32.mrb[0].mxu0
        %v1078 = vadd.f32 0.0, %v1077
        %v1079 = vpop.f32.mrb[0].mxu0
        %1080 = vmatprep.mubr.f32.mxu0 %v913
        %1081 = vmatmul.mubr.f32.gmra.mrb[0].mxu0 %v847
        %v1082 = vpop.f32.mrb[0].mxu0
        %v1083 = vadd.f32 0.0, %v1082
        %v1084 = vpop.f32.mrb[0].mxu0
        %1085 = vmatprep.mubr.f32.mxu0 %v916
        %1086 = vmatmul.mubr.f32.gmra.mrb[0].mxu0 %v849
        %v1087 = vpop.f32.mrb[0].mxu0
        %v1088 = vadd.f32 0.0, %v1087
        %v1089 = vpop.f32.mrb[0].mxu0
        %1090 = vmatprep.mubr.f32.mxu0 %v919
        %1091 = vmatmul.mubr.f32.gmra.mrb[0].mxu0 %v851
        %v1092 = vpop.f32.mrb[0].mxu0
        %v1093 = vadd.f32 0.0, %v1092
        %v1094 = vpop.f32.mrb[0].mxu0
        %1095 = vmatprep.mubr.f32.mxu0 %v922
        %1096 = vmatmul.mubr.f32.gmra.mrb[0].mxu0 %v853
        %v1097 = vpop.f32.mrb[0].mxu0
        %v1098 = vadd.f32 0.0, %v1097
        %v1099 = vpop.f32.mrb[0].mxu0
        %1100 = vmatprep.mubr.f32.mxu0 %v925
        %1101 = vmatmul.mubr.f32.gmra.mrb[0].mxu0 %v855
        %v1102 = vpop.f32.mrb[0].mxu0
        %v1103 = vadd.f32 0.0, %v1102
        %v1104 = vpop.f32.mrb[0].mxu0
        %1105 = vmatprep.mubr.f32.mxu0 %v928
        %1106 = vmatmul.mubr.f32.gmra.mrb[0].mxu0 %v857
        %v1107 = vpop.f32.mrb[0].mxu0
        %v1108 = vadd.f32 0.0, %v1107
        %v1109 = vpop.f32.mrb[0].mxu0
        %1110 = vmatprep.mubr.f32.mxu0 %v931
        %1111 = vmatmul.mubr.f32.gmra.mrb[0].mxu0 %v859
        %v1112 = vpop.f32.mrb[0].mxu0
        %v1113 = vadd.f32 0.0, %v1112
        %v1114 = vpop.f32.mrb[0].mxu0
        %1115 = vmatprep.mubr.f32.mxu0 %v934
        %1116 = vmatmul.mubr.f32.gmra.mrb[0].mxu0 %v861
        %v1117 = vpop.f32.mrb[0].mxu0
        %v1118 = vadd.f32 0.0, %v1117
        %v1119 = vpop.f32.mrb[0].mxu0
        %1120 = vdwg.mxu0
        %v1121 = vld [vmem:[%s2] sm:$0xff]
        %v1122 = vld [vmem:[%s2 + $0x8] sm:$0xff]
        %v1123 = vld [vmem:[%s2 + $0x10] sm:$0xff]
        %v1124 = vld [vmem:[%s2 + $0x18] sm:$0xff]
        %v1125 = vld [vmem:[%s2 + $0x20] sm:$0xff]
        %v1126 = vld [vmem:[%s2 + $0x28] sm:$0xff]
        %v1127 = vld [vmem:[%s2 + $0x30] sm:$0xf]
        %v1128 = vld [vmem:[%s2 + $0x38] sm:$0xf]
        %vm1129 = vcmask 228352
        %v1131 = vsel %vm1129, %v1003, 0
        %v1134 = vsel %vm1129, %v1008, 0
        %v1137 = vsel %vm1129, %v1013, 0
        %v1140 = vsel %vm1129, %v1018, 0
        %v1143 = vsel %vm1129, %v1023, 0
        %v1146 = vsel %vm1129, %v1028, 0
        %v1149 = vsel %vm1129, %v1033, 0
        %v1152 = vsel %vm1129, %v1038, 0
        %v1155 = vsel %vm1129, %v1043, 0
        %v1158 = vsel %vm1129, %v1048, 0
        %v1161 = vsel %vm1129, %v1053, 0
        %v1164 = vsel %vm1129, %v1058, 0
        %v1167 = vsel %vm1129, %v1063, 0
        %v1170 = vsel %vm1129, %v1068, 0
        %v1173 = vsel %vm1129, %v1073, 0
        %v1176 = vsel %vm1129, %v1078, 0
        %v1179 = vsel %vm1129, %v1083, 0
        %v1182 = vsel %vm1129, %v1088, 0
        %v1185 = vsel %vm1129, %v1093, 0
        %v1188 = vsel %vm1129, %v1098, 0
        %v1191 = vsel %vm1129, %v1103, 0
        %v1194 = vsel %vm1129, %v1108, 0
        %v1197 = vsel %vm1129, %v1113, 0
        %v1200 = vsel %vm1129, %v1118, 0
        %vm1202 = vcmask 1043456
        %v1204 = vsel %vm1202, %v1127, 0
        %v1207 = vsel %vm1202, %v1128, 0
        %1209 = vmatprep.subr.mxu0 %v1122
        %1210 = vmatpush1.msra.mxu0 %v1121
        %1211 = vmatprep.subr.mxu0 %v1124
        %1212 = vmatpush1.msra.mxu0 %v1123
        %1213 = vmatprep.subr.mxu0 %v1126
        %1214 = vmatpush1.msra.mxu0 %v1125
        %1215 = vmatprep.subr.mxu0 %v1207
        %1216 = vmatpush1.msra.mxu0 %v1204
        %1217 = vmatprep.subr.mxu0 0.0
        %1218 = vmatpush1.msra.mxu0 0.0
        %1219 = vmatprep.subr.mxu0 0.0
        %1220 = vmatpush1.msra.mxu0 0.0
        %1221 = vmatprep.subr.mxu0 0.0
        %1222 = vmatpush1.msra.mxu0 0.0
        %1223 = vmatprep.subr.mxu0 0.0
        %1224 = vmatpush1.msra.mxu0 0.0
        %1225 = vmatprep.subr.mxu0 0.0
        %1226 = vmatpush1.msra.mxu0 0.0
        %1227 = vmatprep.subr.mxu0 0.0
        %1228 = vmatpush1.msra.mxu0 0.0
        %1229 = vmatprep.subr.mxu0 0.0
        %1230 = vmatpush1.msra.mxu0 0.0
        %1231 = vmatprep.subr.mxu0 0.0
        %1232 = vmatpush1.msra.mxu0 0.0
        %1233 = vmatprep.subr.mxu0 0.0
        %1234 = vmatpush1.msra.mxu0 0.0
        %1235 = vmatprep.subr.mxu0 0.0
        %1236 = vmatpush1.msra.mxu0 0.0
        %1237 = vmatprep.subr.mxu0 0.0
        %1238 = vmatpush1.msra.mxu0 0.0
        %1239 = vmatprep.subr.mxu0 0.0
        %1240 = vmatpush1.msra.mxu0 0.0
        %1241 = vmatprep.subr.mxu0 0.0
        %1242 = vmatpush1.msra.mxu0 0.0
        %1243 = vmatprep.subr.mxu0 0.0
        %1244 = vmatpush1.msra.mxu0 0.0
        %1245 = vmatprep.subr.mxu0 0.0
        %1246 = vmatpush1.msra.mxu0 0.0
        %1247 = vmatprep.subr.mxu0 0.0
        %1248 = vmatpush1.msra.mxu0 0.0
        %1249 = vmatprep.subr.mxu0 0.0
        %1250 = vmatpush1.msra.mxu0 0.0
        %1251 = vmatprep.subr.mxu0 0.0
        %1252 = vmatpush1.msra.mxu0 0.0
        %1253 = vmatprep.subr.mxu0 0.0
        %1254 = vmatpush1.msra.mxu0 0.0
        %1255 = vmatprep.subr.mxu0 0.0
        %1256 = vmatpush1.msra.mxu0 0.0
        %1257 = vmatprep.subr.mxu0 0.0
        %1258 = vmatpush1.msra.mxu0 0.0
        %1259 = vmatprep.subr.mxu0 0.0
        %1260 = vmatpush1.msra.mxu0 0.0
        %1261 = vmatprep.subr.mxu0 0.0
        %1262 = vmatpush1.msra.mxu0 0.0
        %1263 = vmatprep.subr.mxu0 0.0
        %1264 = vmatpush1.msra.mxu0 0.0
        %1265 = vmatprep.subr.mxu0 0.0
        %1266 = vmatpush1.msra.mxu0 0.0
        %1267 = vmatprep.subr.mxu0 0.0
        %1268 = vmatpush1.msra.mxu0 0.0
        %1269 = vmatprep.subr.mxu0 0.0
        %1270 = vmatpush1.msra.mxu0 0.0
        %1271 = vmatprep.subr.mxu0 0.0
        %1272 = vmatpush1.msra.mxu0 0.0
        %1273 = vmatprep.mubr.f32.mxu0 0.0
        %1274 = vmatmul.mubr.f32.gmra.mrb[0].mxu0 %v1131
        %v1275 = vpop.f32.mrb[0].mxu0
        %v1276 = vadd.f32 0.0, %v1275
        %v1277 = vpop.f32.mrb[0].mxu0
        %v1278 = vadd.f32 0.0, %v1277
        %1279 = vmatprep.mubr.f32.mxu0 0.0
        %1280 = vmatmul.mubr.f32.gmra.mrb[0].mxu0 %v1134
        %v1281 = vpop.f32.mrb[0].mxu0
        %v1282 = vadd.f32 0.0, %v1281
        %v1283 = vpop.f32.mrb[0].mxu0
        %v1284 = vadd.f32 0.0, %v1283
        %1285 = vmatprep.mubr.f32.mxu0 0.0
        %1286 = vmatmul.mubr.f32.gmra.mrb[0].mxu0 %v1137
        %v1287 = vpop.f32.mrb[0].mxu0
        %v1288 = vadd.f32 0.0, %v1287
        %v1289 = vpop.f32.mrb[0].mxu0
        %v1290 = vadd.f32 0.0, %v1289
        %1291 = vmatprep.mubr.f32.mxu0 0.0
        %1292 = vmatmul.mubr.f32.gmra.mrb[0].mxu0 %v1140
        %v1293 = vpop.f32.mrb[0].mxu0
        %v1294 = vadd.f32 0.0, %v1293
        %v1295 = vpop.f32.mrb[0].mxu0
        %v1296 = vadd.f32 0.0, %v1295
        %1297 = vmatprep.mubr.f32.mxu0 0.0
        %1298 = vmatmul.mubr.f32.gmra.mrb[0].mxu0 %v1143
        %v1299 = vpop.f32.mrb[0].mxu0
        %v1300 = vadd.f32 0.0, %v1299
        %v1301 = vpop.f32.mrb[0].mxu0
        %v1302 = vadd.f32 0.0, %v1301
        %1303 = vmatprep.mubr.f32.mxu0 0.0
        %1304 = vmatmul.mubr.f32.gmra.mrb[0].mxu0 %v1146
        %v1305 = vpop.f32.mrb[0].mxu0
        %v1306 = vadd.f32 0.0, %v1305
        %v1307 = vpop.f32.mrb[0].mxu0
        %v1308 = vadd.f32 0.0, %v1307
        %1309 = vmatprep.mubr.f32.mxu0 0.0
        %1310 = vmatmul.mubr.f32.gmra.mrb[0].mxu0 %v1149
        %v1311 = vpop.f32.mrb[0].mxu0
        %v1312 = vadd.f32 0.0, %v1311
        %v1313 = vpop.f32.mrb[0].mxu0
        %v1314 = vadd.f32 0.0, %v1313
        %1315 = vmatprep.mubr.f32.mxu0 0.0
        %1316 = vmatmul.mubr.f32.gmra.mrb[0].mxu0 %v1152
        %v1317 = vpop.f32.mrb[0].mxu0
        %v1318 = vadd.f32 0.0, %v1317
        %v1319 = vpop.f32.mrb[0].mxu0
        %v1320 = vadd.f32 0.0, %v1319
        %1321 = vmatprep.mubr.f32.mxu0 0.0
        %1322 = vmatmul.mubr.f32.gmra.mrb[0].mxu0 %v1155
        %v1323 = vpop.f32.mrb[0].mxu0
        %v1324 = vadd.f32 0.0, %v1323
        %v1325 = vpop.f32.mrb[0].mxu0
        %v1326 = vadd.f32 0.0, %v1325
        %1327 = vmatprep.mubr.f32.mxu0 0.0
        %1328 = vmatmul.mubr.f32.gmra.mrb[0].mxu0 %v1158
        %v1329 = vpop.f32.mrb[0].mxu0
        %v1330 = vadd.f32 0.0, %v1329
        %v1331 = vpop.f32.mrb[0].mxu0
        %v1332 = vadd.f32 0.0, %v1331
        %1333 = vmatprep.mubr.f32.mxu0 0.0
        %1334 = vmatmul.mubr.f32.gmra.mrb[0].mxu0 %v1161
        %v1335 = vpop.f32.mrb[0].mxu0
        %v1336 = vadd.f32 0.0, %v1335
        %v1337 = vpop.f32.mrb[0].mxu0
        %v1338 = vadd.f32 0.0, %v1337
        %1339 = vmatprep.mubr.f32.mxu0 0.0
        %1340 = vmatmul.mubr.f32.gmra.mrb[0].mxu0 %v1164
        %v1341 = vpop.f32.mrb[0].mxu0
        %v1342 = vadd.f32 0.0, %v1341
        %v1343 = vpop.f32.mrb[0].mxu0
        %v1344 = vadd.f32 0.0, %v1343
        %1345 = vmatprep.mubr.f32.mxu0 0.0
        %1346 = vmatmul.mubr.f32.gmra.mrb[0].mxu0 %v1167
        %v1347 = vpop.f32.mrb[0].mxu0
        %v1348 = vadd.f32 0.0, %v1347
        %v1349 = vpop.f32.mrb[0].mxu0
        %v1350 = vadd.f32 0.0, %v1349
        %1351 = vmatprep.mubr.f32.mxu0 0.0
        %1352 = vmatmul.mubr.f32.gmra.mrb[0].mxu0 %v1170
        %v1353 = vpop.f32.mrb[0].mxu0
        %v1354 = vadd.f32 0.0, %v1353
        %v1355 = vpop.f32.mrb[0].mxu0
        %v1356 = vadd.f32 0.0, %v1355
        %1357 = vmatprep.mubr.f32.mxu0 0.0
        %1358 = vmatmul.mubr.f32.gmra.mrb[0].mxu0 %v1173
        %v1359 = vpop.f32.mrb[0].mxu0
        %v1360 = vadd.f32 0.0, %v1359
        %v1361 = vpop.f32.mrb[0].mxu0
        %v1362 = vadd.f32 0.0, %v1361
        %1363 = vmatprep.mubr.f32.mxu0 0.0
        %1364 = vmatmul.mubr.f32.gmra.mrb[0].mxu0 %v1176
        %v1365 = vpop.f32.mrb[0].mxu0
        %v1366 = vadd.f32 0.0, %v1365
        %v1367 = vpop.f32.mrb[0].mxu0
        %v1368 = vadd.f32 0.0, %v1367
        %1369 = vmatprep.mubr.f32.mxu0 0.0
        %1370 = vmatmul.mubr.f32.gmra.mrb[0].mxu0 %v1179
        %v1371 = vpop.f32.mrb[0].mxu0
        %v1372 = vadd.f32 0.0, %v1371
        %v1373 = vpop.f32.mrb[0].mxu0
        %v1374 = vadd.f32 0.0, %v1373
        %1375 = vmatprep.mubr.f32.mxu0 0.0
        %1376 = vmatmul.mubr.f32.gmra.mrb[0].mxu0 %v1182
        %v1377 = vpop.f32.mrb[0].mxu0
        %v1378 = vadd.f32 0.0, %v1377
        %v1379 = vpop.f32.mrb[0].mxu0
        %v1380 = vadd.f32 0.0, %v1379
        %1381 = vmatprep.mubr.f32.mxu0 0.0
        %1382 = vmatmul.mubr.f32.gmra.mrb[0].mxu0 %v1185
        %v1383 = vpop.f32.mrb[0].mxu0
        %v1384 = vadd.f32 0.0, %v1383
        %v1385 = vpop.f32.mrb[0].mxu0
        %v1386 = vadd.f32 0.0, %v1385
        %1387 = vmatprep.mubr.f32.mxu0 0.0
        %1388 = vmatmul.mubr.f32.gmra.mrb[0].mxu0 %v1188
        %v1389 = vpop.f32.mrb[0].mxu0
        %v1390 = vadd.f32 0.0, %v1389
        %v1391 = vpop.f32.mrb[0].mxu0
        %v1392 = vadd.f32 0.0, %v1391
        %1393 = vmatprep.mubr.f32.mxu0 0.0
        %1394 = vmatmul.mubr.f32.gmra.mrb[0].mxu0 %v1191
        %v1395 = vpop.f32.mrb[0].mxu0
        %v1396 = vadd.f32 0.0, %v1395
        %v1397 = vpop.f32.mrb[0].mxu0
        %v1398 = vadd.f32 0.0, %v1397
        %1399 = vmatprep.mubr.f32.mxu0 0.0
        %1400 = vmatmul.mubr.f32.gmra.mrb[0].mxu0 %v1194
        %v1401 = vpop.f32.mrb[0].mxu0
        %v1402 = vadd.f32 0.0, %v1401
        %v1403 = vpop.f32.mrb[0].mxu0
        %v1404 = vadd.f32 0.0, %v1403
        %1405 = vmatprep.mubr.f32.mxu0 0.0
        %1406 = vmatmul.mubr.f32.gmra.mrb[0].mxu0 %v1197
        %v1407 = vpop.f32.mrb[0].mxu0
        %v1408 = vadd.f32 0.0, %v1407
        %v1409 = vpop.f32.mrb[0].mxu0
        %v1410 = vadd.f32 0.0, %v1409
        %1411 = vmatprep.mubr.f32.mxu0 0.0
        %1412 = vmatmul.mubr.f32.gmra.mrb[0].mxu0 %v1200
        %v1413 = vpop.f32.mrb[0].mxu0
        %v1414 = vadd.f32 0.0, %v1413
        %v1415 = vpop.f32.mrb[0].mxu0
        %v1416 = vadd.f32 0.0, %v1415
        %1417 = vdwg.mxu0
        %v1419 = vlaneseq
        %v1420 = vshrl.u32 %v1419, 7
        %v1421 = vsub.s32 0, %v1420
        %v1422 = vrot.slane %v814, %v1421
        %v1423 = vlaneseq
        %v1424 = vshrl.u32 %v1423, 7
        %v1425 = vsub.s32 1, %v1424
        %v1426 = vrot.slane %v814, %v1425
        %v1429 = vadd.f32 %v1422, %v1276
        %v1430 = vadd.f32 %v1426, %v1278
        %v1431 = vadd.f32 %v1422, %v1282
        %v1432 = vadd.f32 %v1426, %v1284
        %v1433 = vadd.f32 %v1422, %v1288
        %v1434 = vadd.f32 %v1426, %v1290
        %v1435 = vadd.f32 %v1422, %v1294
        %v1436 = vadd.f32 %v1426, %v1296
        %v1437 = vadd.f32 %v1422, %v1300
        %v1438 = vadd.f32 %v1426, %v1302
        %v1439 = vadd.f32 %v1422, %v1306
        %v1440 = vadd.f32 %v1426, %v1308
        %v1441 = vadd.f32 %v1422, %v1312
        %v1442 = vadd.f32 %v1426, %v1314
        %v1443 = vadd.f32 %v1422, %v1318
        %v1444 = vadd.f32 %v1426, %v1320
        %v1445 = vadd.f32 %v1422, %v1324
        %v1446 = vadd.f32 %v1426, %v1326
        %v1447 = vadd.f32 %v1422, %v1330
        %v1448 = vadd.f32 %v1426, %v1332
        %v1449 = vadd.f32 %v1422, %v1336
        %v1450 = vadd.f32 %v1426, %v1338
        %v1451 = vadd.f32 %v1422, %v1342
        %v1452 = vadd.f32 %v1426, %v1344
        %v1453 = vadd.f32 %v1422, %v1348
        %v1454 = vadd.f32 %v1426, %v1350
        %v1455 = vadd.f32 %v1422, %v1354
        %v1456 = vadd.f32 %v1426, %v1356
        %v1457 = vadd.f32 %v1422, %v1360
        %v1458 = vadd.f32 %v1426, %v1362
        %v1459 = vadd.f32 %v1422, %v1366
        %v1460 = vadd.f32 %v1426, %v1368
        %v1461 = vadd.f32 %v1422, %v1372
        %v1462 = vadd.f32 %v1426, %v1374
        %v1463 = vadd.f32 %v1422, %v1378
        %v1464 = vadd.f32 %v1426, %v1380
        %v1465 = vadd.f32 %v1422, %v1384
        %v1466 = vadd.f32 %v1426, %v1386
        %v1467 = vadd.f32 %v1422, %v1390
        %v1468 = vadd.f32 %v1426, %v1392
        %v1469 = vadd.f32 %v1422, %v1396
        %v1470 = vadd.f32 %v1426, %v1398
        %v1471 = vadd.f32 %v1422, %v1402
        %v1472 = vadd.f32 %v1426, %v1404
        %v1473 = vadd.f32 %v1422, %v1408
        %v1474 = vadd.f32 %v1426, %v1410
        %v1475 = vadd.f32 %v1422, %v1414
        %v1476 = vadd.f32 %v1426, %v1416
        %s1477 = scalar_lea.vmem %s1, 384
        %v1478 = vld [vmem:[%s1477] sm:$0xff]
        %v1479 = vld [vmem:[%s1477 + $0x8] sm:$0xff]
        %v1480 = vld [vmem:[%s1477 + $0x10] sm:$0xff]
        %v1481 = vld [vmem:[%s1477 + $0x18] sm:$0xff]
        %v1482 = vld [vmem:[%s1477 + $0x20] sm:$0xff]
        %v1483 = vld [vmem:[%s1477 + $0x28] sm:$0xff]
        %v1484 = vld [vmem:[%s1477 + $0x30] sm:$0xff]
        %v1485 = vld [vmem:[%s1477 + $0x38] sm:$0xff]
        %v1486 = vld [vmem:[%s1477 + $0x40] sm:$0xff]
        %v1487 = vld [vmem:[%s1477 + $0x48] sm:$0xff]
        %v1488 = vld [vmem:[%s1477 + $0x50] sm:$0xff]
        %v1489 = vld [vmem:[%s1477 + $0x58] sm:$0xff]
        %v1490 = vld [vmem:[%s1477 + $0x60] sm:$0xff]
        %v1491 = vld [vmem:[%s1477 + $0x68] sm:$0xff]
        %v1492 = vld [vmem:[%s1477 + $0x70] sm:$0xff]
        %v1493 = vld [vmem:[%s1477 + $0x78] sm:$0xff]
        %v1494 = vld [vmem:[%s1477 + $0x80] sm:$0xff]
        %v1495 = vld [vmem:[%s1477 + $0x88] sm:$0xff]
        %v1496 = vld [vmem:[%s1477 + $0x90] sm:$0xff]
        %v1497 = vld [vmem:[%s1477 + $0x98] sm:$0xff]
        %v1498 = vld [vmem:[%s1477 + $0xa0] sm:$0xff]
        %v1499 = vld [vmem:[%s1477 + $0xa8] sm:$0xff]
        %v1500 = vld [vmem:[%s1477 + $0xb0] sm:$0xff]
        %v1501 = vld [vmem:[%s1477 + $0xb8] sm:$0xff]
        %v1502 = vld [vmem:[%s1477 + $0xc0] sm:$0xff]
        %v1503 = vld [vmem:[%s1477 + $0xc8] sm:$0xff]
        %v1504 = vld [vmem:[%s1477 + $0xd0] sm:$0xff]
        %v1505 = vld [vmem:[%s1477 + $0xd8] sm:$0xff]
        %v1506 = vld [vmem:[%s1477 + $0xe0] sm:$0xff]
        %v1507 = vld [vmem:[%s1477 + $0xe8] sm:$0xff]
        %v1508 = vld [vmem:[%s1477 + $0xf0] sm:$0xff]
        %v1509 = vld [vmem:[%s1477 + $0xf8] sm:$0xff]
        %v1510 = vld [vmem:[%s1477 + $0x100] sm:$0xff]
        %v1511 = vld [vmem:[%s1477 + $0x108] sm:$0xff]
        %v1512 = vld [vmem:[%s1477 + $0x110] sm:$0xff]
        %v1513 = vld [vmem:[%s1477 + $0x118] sm:$0xff]
        %v1514 = vld [vmem:[%s1477 + $0x120] sm:$0xff]
        %v1515 = vld [vmem:[%s1477 + $0x128] sm:$0xff]
        %v1516 = vld [vmem:[%s1477 + $0x130] sm:$0xff]
        %v1517 = vld [vmem:[%s1477 + $0x138] sm:$0xff]
        %v1518 = vld [vmem:[%s1477 + $0x140] sm:$0xff]
        %v1519 = vld [vmem:[%s1477 + $0x148] sm:$0xff]
        %v1520 = vld [vmem:[%s1477 + $0x150] sm:$0xff]
        %v1521 = vld [vmem:[%s1477 + $0x158] sm:$0xff]
        %v1522 = vld [vmem:[%s1477 + $0x160] sm:$0xff]
        %v1523 = vld [vmem:[%s1477 + $0x168] sm:$0xff]
        %v1524 = vld [vmem:[%s1477 + $0x170] sm:$0xff]
        %v1525 = vld [vmem:[%s1477 + $0x178] sm:$0xff]
        %v1527 = vsel %vm863, %v1479, 0
        %v1530 = vsel %vm863, %v1481, 0
        %v1533 = vsel %vm863, %v1483, 0
        %v1536 = vsel %vm863, %v1485, 0
        %v1539 = vsel %vm863, %v1487, 0
        %v1542 = vsel %vm863, %v1489, 0
        %v1545 = vsel %vm863, %v1491, 0
        %v1548 = vsel %vm863, %v1493, 0
        %v1551 = vsel %vm863, %v1495, 0
        %v1554 = vsel %vm863, %v1497, 0
        %v1557 = vsel %vm863, %v1499, 0
        %v1560 = vsel %vm863, %v1501, 0
        %v1563 = vsel %vm863, %v1503, 0
        %v1566 = vsel %vm863, %v1505, 0
        %v1569 = vsel %vm863, %v1507, 0
        %v1572 = vsel %vm863, %v1509, 0
        %v1575 = vsel %vm863, %v1511, 0
        %v1578 = vsel %vm863, %v1513, 0
        %v1581 = vsel %vm863, %v1515, 0
        %v1584 = vsel %vm863, %v1517, 0
        %v1587 = vsel %vm863, %v1519, 0
        %v1590 = vsel %vm863, %v1521, 0
        %v1593 = vsel %vm863, %v1523, 0
        %v1596 = vsel %vm863, %v1525, 0
        %1598 = vmatprep.subr.mxu0 0.0
        %1599 = vmatpush1.msra.mxu0 %v786
        %1600 = vmatprep.subr.mxu0 0.0
        %1601 = vmatpush1.msra.mxu0 %v787
        %1602 = vmatprep.subr.mxu0 0.0
        %1603 = vmatpush1.msra.mxu0 %v788
        %1604 = vmatprep.subr.mxu0 0.0
        %1605 = vmatpush1.msra.mxu0 %v789
        %1606 = vmatprep.subr.mxu0 0.0
        %1607 = vmatpush1.msra.mxu0 %v790
        %1608 = vmatprep.subr.mxu0 0.0
        %1609 = vmatpush1.msra.mxu0 %v791
        %1610 = vmatprep.subr.mxu0 0.0
        %1611 = vmatpush1.msra.mxu0 %v792
        %1612 = vmatprep.subr.mxu0 0.0
        %1613 = vmatpush1.msra.mxu0 %v793
        %1614 = vmatprep.subr.mxu0 0.0
        %1615 = vmatpush1.msra.mxu0 %v794
        %1616 = vmatprep.subr.mxu0 0.0
        %1617 = vmatpush1.msra.mxu0 %v795
        %1618 = vmatprep.subr.mxu0 0.0
        %1619 = vmatpush1.msra.mxu0 %v796
        %1620 = vmatprep.subr.mxu0 0.0
        %1621 = vmatpush1.msra.mxu0 %v797
        %1622 = vmatprep.subr.mxu0 0.0
        %1623 = vmatpush1.msra.mxu0 %v798
        %1624 = vmatprep.subr.mxu0 0.0
        %1625 = vmatpush1.msra.mxu0 %v799
        %1626 = vmatprep.subr.mxu0 0.0
        %1627 = vmatpush1.msra.mxu0 %v800
        %1628 = vmatprep.subr.mxu0 0.0
        %1629 = vmatpush1.msra.mxu0 %v801
        %1630 = vmatprep.subr.mxu0 0.0
        %1631 = vmatpush1.msra.mxu0 %v802
        %1632 = vmatprep.subr.mxu0 0.0
        %1633 = vmatpush1.msra.mxu0 %v803
        %1634 = vmatprep.subr.mxu0 0.0
        %1635 = vmatpush1.msra.mxu0 %v804
        %1636 = vmatprep.subr.mxu0 0.0
        %1637 = vmatpush1.msra.mxu0 %v805
        %1638 = vmatprep.subr.mxu0 0.0
        %1639 = vmatpush1.msra.mxu0 %v806
        %1640 = vmatprep.subr.mxu0 0.0
        %1641 = vmatpush1.msra.mxu0 %v807
        %1642 = vmatprep.subr.mxu0 0.0
        %1643 = vmatpush1.msra.mxu0 %v808
        %1644 = vmatprep.subr.mxu0 0.0
        %1645 = vmatpush1.msra.mxu0 %v809
        %1646 = vmatprep.subr.mxu0 0.0
        %1647 = vmatpush1.msra.mxu0 %v810
        %1648 = vmatprep.subr.mxu0 0.0
        %1649 = vmatpush1.msra.mxu0 %v811
        %1650 = vmatprep.subr.mxu0 0.0
        %1651 = vmatpush1.msra.mxu0 %v812
        %1652 = vmatprep.subr.mxu0 0.0
        %1653 = vmatpush1.msra.mxu0 %v813
        %1654 = vmatprep.subr.mxu0 0.0
        %1655 = vmatpush1.msra.mxu0 0.0
        %1656 = vmatprep.subr.mxu0 0.0
        %1657 = vmatpush1.msra.mxu0 0.0
        %1658 = vmatprep.subr.mxu0 0.0
        %1659 = vmatpush1.msra.mxu0 0.0
        %1660 = vmatprep.subr.mxu0 0.0
        %1661 = vmatpush1.msra.mxu0 0.0
        %1662 = vmatprep.mubr.f32.mxu0 %v1527
        %1663 = vmatmul.mubr.f32.gmra.mrb[0].mxu0 %v1478
        %v1664 = vpop.f32.mrb[0].mxu0
        %v1665 = vadd.f32 0.0, %v1664
        %v1666 = vpop.f32.mrb[0].mxu0
        %1667 = vmatprep.mubr.f32.mxu0 %v1530
        %1668 = vmatmul.mubr.f32.gmra.mrb[0].mxu0 %v1480
        %v1669 = vpop.f32.mrb[0].mxu0
        %v1670 = vadd.f32 0.0, %v1669
        %v1671 = vpop.f32.mrb[0].mxu0
        %1672 = vmatprep.mubr.f32.mxu0 %v1533
        %1673 = vmatmul.mubr.f32.gmra.mrb[0].mxu0 %v1482
        %v1674 = vpop.f32.mrb[0].mxu0
        %v1675 = vadd.f32 0.0, %v1674
        %v1676 = vpop.f32.mrb[0].mxu0
        %1677 = vmatprep.mubr.f32.mxu0 %v1536
        %1678 = vmatmul.mubr.f32.gmra.mrb[0].mxu0 %v1484
        %v1679 = vpop.f32.mrb[0].mxu0
        %v1680 = vadd.f32 0.0, %v1679
        %v1681 = vpop.f32.mrb[0].mxu0
        %1682 = vmatprep.mubr.f32.mxu0 %v1539
        %1683 = vmatmul.mubr.f32.gmra.mrb[0].mxu0 %v1486
        %v1684 = vpop.f32.mrb[0].mxu0
        %v1685 = vadd.f32 0.0, %v1684
        %v1686 = vpop.f32.mrb[0].mxu0
        %1687 = vmatprep.mubr.f32.mxu0 %v1542
        %1688 = vmatmul.mubr.f32.gmra.mrb[0].mxu0 %v1488
        %v1689 = vpop.f32.mrb[0].mxu0
        %v1690 = vadd.f32 0.0, %v1689
        %v1691 = vpop.f32.mrb[0].mxu0
        %1692 = vmatprep.mubr.f32.mxu0 %v1545
        %1693 = vmatmul.mubr.f32.gmra.mrb[0].mxu0 %v1490
        %v1694 = vpop.f32.mrb[0].mxu0
        %v1695 = vadd.f32 0.0, %v1694
        %v1696 = vpop.f32.mrb[0].mxu0
        %1697 = vmatprep.mubr.f32.mxu0 %v1548
        %1698 = vmatmul.mubr.f32.gmra.mrb[0].mxu0 %v1492
        %v1699 = vpop.f32.mrb[0].mxu0
        %v1700 = vadd.f32 0.0, %v1699
        %v1701 = vpop.f32.mrb[0].mxu0
        %1702 = vmatprep.mubr.f32.mxu0 %v1551
        %1703 = vmatmul.mubr.f32.gmra.mrb[0].mxu0 %v1494
        %v1704 = vpop.f32.mrb[0].mxu0
        %v1705 = vadd.f32 0.0, %v1704
        %v1706 = vpop.f32.mrb[0].mxu0
        %1707 = vmatprep.mubr.f32.mxu0 %v1554
        %1708 = vmatmul.mubr.f32.gmra.mrb[0].mxu0 %v1496
        %v1709 = vpop.f32.mrb[0].mxu0
        %v1710 = vadd.f32 0.0, %v1709
        %v1711 = vpop.f32.mrb[0].mxu0
        %1712 = vmatprep.mubr.f32.mxu0 %v1557
        %1713 = vmatmul.mubr.f32.gmra.mrb[0].mxu0 %v1498
        %v1714 = vpop.f32.mrb[0].mxu0
        %v1715 = vadd.f32 0.0, %v1714
        %v1716 = vpop.f32.mrb[0].mxu0
        %1717 = vmatprep.mubr.f32.mxu0 %v1560
        %1718 = vmatmul.mubr.f32.gmra.mrb[0].mxu0 %v1500
        %v1719 = vpop.f32.mrb[0].mxu0
        %v1720 = vadd.f32 0.0, %v1719
        %v1721 = vpop.f32.mrb[0].mxu0
        %1722 = vmatprep.mubr.f32.mxu0 %v1563
        %1723 = vmatmul.mubr.f32.gmra.mrb[0].mxu0 %v1502
        %v1724 = vpop.f32.mrb[0].mxu0
        %v1725 = vadd.f32 0.0, %v1724
        %v1726 = vpop.f32.mrb[0].mxu0
        %1727 = vmatprep.mubr.f32.mxu0 %v1566
        %1728 = vmatmul.mubr.f32.gmra.mrb[0].mxu0 %v1504
        %v1729 = vpop.f32.mrb[0].mxu0
        %v1730 = vadd.f32 0.0, %v1729
        %v1731 = vpop.f32.mrb[0].mxu0
        %1732 = vmatprep.mubr.f32.mxu0 %v1569
        %1733 = vmatmul.mubr.f32.gmra.mrb[0].mxu0 %v1506
        %v1734 = vpop.f32.mrb[0].mxu0
        %v1735 = vadd.f32 0.0, %v1734
        %v1736 = vpop.f32.mrb[0].mxu0
        %1737 = vmatprep.mubr.f32.mxu0 %v1572
        %1738 = vmatmul.mubr.f32.gmra.mrb[0].mxu0 %v1508
        %v1739 = vpop.f32.mrb[0].mxu0
        %v1740 = vadd.f32 0.0, %v1739
        %v1741 = vpop.f32.mrb[0].mxu0
        %1742 = vmatprep.mubr.f32.mxu0 %v1575
        %1743 = vmatmul.mubr.f32.gmra.mrb[0].mxu0 %v1510
        %v1744 = vpop.f32.mrb[0].mxu0
        %v1745 = vadd.f32 0.0, %v1744
        %v1746 = vpop.f32.mrb[0].mxu0
        %1747 = vmatprep.mubr.f32.mxu0 %v1578
        %1748 = vmatmul.mubr.f32.gmra.mrb[0].mxu0 %v1512
        %v1749 = vpop.f32.mrb[0].mxu0
        %v1750 = vadd.f32 0.0, %v1749
        %v1751 = vpop.f32.mrb[0].mxu0
        %1752 = vmatprep.mubr.f32.mxu0 %v1581
        %1753 = vmatmul.mubr.f32.gmra.mrb[0].mxu0 %v1514
        %v1754 = vpop.f32.mrb[0].mxu0
        %v1755 = vadd.f32 0.0, %v1754
        %v1756 = vpop.f32.mrb[0].mxu0
        %1757 = vmatprep.mubr.f32.mxu0 %v1584
        %1758 = vmatmul.mubr.f32.gmra.mrb[0].mxu0 %v1516
        %v1759 = vpop.f32.mrb[0].mxu0
        %v1760 = vadd.f32 0.0, %v1759
        %v1761 = vpop.f32.mrb[0].mxu0
        %1762 = vmatprep.mubr.f32.mxu0 %v1587
        %1763 = vmatmul.mubr.f32.gmra.mrb[0].mxu0 %v1518
        %v1764 = vpop.f32.mrb[0].mxu0
        %v1765 = vadd.f32 0.0, %v1764
        %v1766 = vpop.f32.mrb[0].mxu0
        %1767 = vmatprep.mubr.f32.mxu0 %v1590
        %1768 = vmatmul.mubr.f32.gmra.mrb[0].mxu0 %v1520
        %v1769 = vpop.f32.mrb[0].mxu0
        %v1770 = vadd.f32 0.0, %v1769
        %v1771 = vpop.f32.mrb[0].mxu0
        %1772 = vmatprep.mubr.f32.mxu0 %v1593
        %1773 = vmatmul.mubr.f32.gmra.mrb[0].mxu0 %v1522
        %v1774 = vpop.f32.mrb[0].mxu0
        %v1775 = vadd.f32 0.0, %v1774
        %v1776 = vpop.f32.mrb[0].mxu0
        %1777 = vmatprep.mubr.f32.mxu0 %v1596
        %1778 = vmatmul.mubr.f32.gmra.mrb[0].mxu0 %v1524
        %v1779 = vpop.f32.mrb[0].mxu0
        %v1780 = vadd.f32 0.0, %v1779
        %v1781 = vpop.f32.mrb[0].mxu0
        %1782 = vdwg.mxu0
        %s1783 = scalar_lea.vmem %s2, 64
        %v1784 = vld [vmem:[%s1783] sm:$0xff]
        %v1785 = vld [vmem:[%s1783 + $0x8] sm:$0xff]
        %v1786 = vld [vmem:[%s1783 + $0x10] sm:$0xff]
        %v1787 = vld [vmem:[%s1783 + $0x18] sm:$0xff]
        %v1788 = vld [vmem:[%s1783 + $0x20] sm:$0xff]
        %v1789 = vld [vmem:[%s1783 + $0x28] sm:$0xff]
        %v1790 = vld [vmem:[%s1783 + $0x30] sm:$0xf]
        %v1791 = vld [vmem:[%s1783 + $0x38] sm:$0xf]
        %v1793 = vsel %vm1129, %v1665, 0
        %v1796 = vsel %vm1129, %v1670, 0
        %v1799 = vsel %vm1129, %v1675, 0
        %v1802 = vsel %vm1129, %v1680, 0
        %v1805 = vsel %vm1129, %v1685, 0
        %v1808 = vsel %vm1129, %v1690, 0
        %v1811 = vsel %vm1129, %v1695, 0
        %v1814 = vsel %vm1129, %v1700, 0
        %v1817 = vsel %vm1129, %v1705, 0
        %v1820 = vsel %vm1129, %v1710, 0
        %v1823 = vsel %vm1129, %v1715, 0
        %v1826 = vsel %vm1129, %v1720, 0
        %v1829 = vsel %vm1129, %v1725, 0
        %v1832 = vsel %vm1129, %v1730, 0
        %v1835 = vsel %vm1129, %v1735, 0
        %v1838 = vsel %vm1129, %v1740, 0
        %v1841 = vsel %vm1129, %v1745, 0
        %v1844 = vsel %vm1129, %v1750, 0
        %v1847 = vsel %vm1129, %v1755, 0
        %v1850 = vsel %vm1129, %v1760, 0
        %v1853 = vsel %vm1129, %v1765, 0
        %v1856 = vsel %vm1129, %v1770, 0
        %v1859 = vsel %vm1129, %v1775, 0
        %v1862 = vsel %vm1129, %v1780, 0
        %v1865 = vsel %vm1202, %v1790, 0
        %v1868 = vsel %vm1202, %v1791, 0
        %1870 = vmatprep.subr.mxu0 %v1785
        %1871 = vmatpush1.msra.mxu0 %v1784
        %1872 = vmatprep.subr.mxu0 %v1787
        %1873 = vmatpush1.msra.mxu0 %v1786
        %1874 = vmatprep.subr.mxu0 %v1789
        %1875 = vmatpush1.msra.mxu0 %v1788
        %1876 = vmatprep.subr.mxu0 %v1868
        %1877 = vmatpush1.msra.mxu0 %v1865
        %1878 = vmatprep.subr.mxu0 0.0
        %1879 = vmatpush1.msra.mxu0 0.0
        %1880 = vmatprep.subr.mxu0 0.0
        %1881 = vmatpush1.msra.mxu0 0.0
        %1882 = vmatprep.subr.mxu0 0.0
        %1883 = vmatpush1.msra.mxu0 0.0
        %1884 = vmatprep.subr.mxu0 0.0
        %1885 = vmatpush1.msra.mxu0 0.0
        %1886 = vmatprep.subr.mxu0 0.0
        %1887 = vmatpush1.msra.mxu0 0.0
        %1888 = vmatprep.subr.mxu0 0.0
        %1889 = vmatpush1.msra.mxu0 0.0
        %1890 = vmatprep.subr.mxu0 0.0
        %1891 = vmatpush1.msra.mxu0 0.0
        %1892 = vmatprep.subr.mxu0 0.0
        %1893 = vmatpush1.msra.mxu0 0.0
        %1894 = vmatprep.subr.mxu0 0.0
        %1895 = vmatpush1.msra.mxu0 0.0
        %1896 = vmatprep.subr.mxu0 0.0
        %1897 = vmatpush1.msra.mxu0 0.0
        %1898 = vmatprep.subr.mxu0 0.0
        %1899 = vmatpush1.msra.mxu0 0.0
        %1900 = vmatprep.subr.mxu0 0.0
        %1901 = vmatpush1.msra.mxu0 0.0
        %1902 = vmatprep.subr.mxu0 0.0
        %1903 = vmatpush1.msra.mxu0 0.0
        %1904 = vmatprep.subr.mxu0 0.0
        %1905 = vmatpush1.msra.mxu0 0.0
        %1906 = vmatprep.subr.mxu0 0.0
        %1907 = vmatpush1.msra.mxu0 0.0
        %1908 = vmatprep.subr.mxu0 0.0
        %1909 = vmatpush1.msra.mxu0 0.0
        %1910 = vmatprep.subr.mxu0 0.0
        %1911 = vmatpush1.msra.mxu0 0.0
        %1912 = vmatprep.subr.mxu0 0.0
        %1913 = vmatpush1.msra.mxu0 0.0
        %1914 = vmatprep.subr.mxu0 0.0
        %1915 = vmatpush1.msra.mxu0 0.0
        %1916 = vmatprep.subr.mxu0 0.0
        %1917 = vmatpush1.msra.mxu0 0.0
        %1918 = vmatprep.subr.mxu0 0.0
        %1919 = vmatpush1.msra.mxu0 0.0
        %1920 = vmatprep.subr.mxu0 0.0
        %1921 = vmatpush1.msra.mxu0 0.0
        %1922 = vmatprep.subr.mxu0 0.0
        %1923 = vmatpush1.msra.mxu0 0.0
        %1924 = vmatprep.subr.mxu0 0.0
        %1925 = vmatpush1.msra.mxu0 0.0
        %1926 = vmatprep.subr.mxu0 0.0
        %1927 = vmatpush1.msra.mxu0 0.0
        %1928 = vmatprep.subr.mxu0 0.0
        %1929 = vmatpush1.msra.mxu0 0.0
        %1930 = vmatprep.subr.mxu0 0.0
        %1931 = vmatpush1.msra.mxu0 0.0
        %1932 = vmatprep.subr.mxu0 0.0
        %1933 = vmatpush1.msra.mxu0 0.0
        %1934 = vmatprep.mubr.f32.mxu0 0.0
        %1935 = vmatmul.mubr.f32.gmra.mrb[0].mxu0 %v1793
        %v1936 = vpop.f32.mrb[0].mxu0
        %v1937 = vadd.f32 0.0, %v1936
        %v1938 = vpop.f32.mrb[0].mxu0
        %v1939 = vadd.f32 0.0, %v1938
        %1940 = vmatprep.mubr.f32.mxu0 0.0
        %1941 = vmatmul.mubr.f32.gmra.mrb[0].mxu0 %v1796
        %v1942 = vpop.f32.mrb[0].mxu0
        %v1943 = vadd.f32 0.0, %v1942
        %v1944 = vpop.f32.mrb[0].mxu0
        %v1945 = vadd.f32 0.0, %v1944
        %1946 = vmatprep.mubr.f32.mxu0 0.0
        %1947 = vmatmul.mubr.f32.gmra.mrb[0].mxu0 %v1799
        %v1948 = vpop.f32.mrb[0].mxu0
        %v1949 = vadd.f32 0.0, %v1948
        %v1950 = vpop.f32.mrb[0].mxu0
        %v1951 = vadd.f32 0.0, %v1950
        %1952 = vmatprep.mubr.f32.mxu0 0.0
        %1953 = vmatmul.mubr.f32.gmra.mrb[0].mxu0 %v1802
        %v1954 = vpop.f32.mrb[0].mxu0
        %v1955 = vadd.f32 0.0, %v1954
        %v1956 = vpop.f32.mrb[0].mxu0
        %v1957 = vadd.f32 0.0, %v1956
        %1958 = vmatprep.mubr.f32.mxu0 0.0
        %1959 = vmatmul.mubr.f32.gmra.mrb[0].mxu0 %v1805
        %v1960 = vpop.f32.mrb[0].mxu0
        %v1961 = vadd.f32 0.0, %v1960
        %v1962 = vpop.f32.mrb[0].mxu0
        %v1963 = vadd.f32 0.0, %v1962
        %1964 = vmatprep.mubr.f32.mxu0 0.0
        %1965 = vmatmul.mubr.f32.gmra.mrb[0].mxu0 %v1808
        %v1966 = vpop.f32.mrb[0].mxu0
        %v1967 = vadd.f32 0.0, %v1966
        %v1968 = vpop.f32.mrb[0].mxu0
        %v1969 = vadd.f32 0.0, %v1968
        %1970 = vmatprep.mubr.f32.mxu0 0.0
        %1971 = vmatmul.mubr.f32.gmra.mrb[0].mxu0 %v1811
        %v1972 = vpop.f32.mrb[0].mxu0
        %v1973 = vadd.f32 0.0, %v1972
        %v1974 = vpop.f32.mrb[0].mxu0
        %v1975 = vadd.f32 0.0, %v1974
        %1976 = vmatprep.mubr.f32.mxu0 0.0
        %1977 = vmatmul.mubr.f32.gmra.mrb[0].mxu0 %v1814
        %v1978 = vpop.f32.mrb[0].mxu0
        %v1979 = vadd.f32 0.0, %v1978
        %v1980 = vpop.f32.mrb[0].mxu0
        %v1981 = vadd.f32 0.0, %v1980
        %1982 = vmatprep.mubr.f32.mxu0 0.0
        %1983 = vmatmul.mubr.f32.gmra.mrb[0].mxu0 %v1817
        %v1984 = vpop.f32.mrb[0].mxu0
        %v1985 = vadd.f32 0.0, %v1984
        %v1986 = vpop.f32.mrb[0].mxu0
        %v1987 = vadd.f32 0.0, %v1986
        %1988 = vmatprep.mubr.f32.mxu0 0.0
        %1989 = vmatmul.mubr.f32.gmra.mrb[0].mxu0 %v1820
        %v1990 = vpop.f32.mrb[0].mxu0
        %v1991 = vadd.f32 0.0, %v1990
        %v1992 = vpop.f32.mrb[0].mxu0
        %v1993 = vadd.f32 0.0, %v1992
        %1994 = vmatprep.mubr.f32.mxu0 0.0
        %1995 = vmatmul.mubr.f32.gmra.mrb[0].mxu0 %v1823
        %v1996 = vpop.f32.mrb[0].mxu0
        %v1997 = vadd.f32 0.0, %v1996
        %v1998 = vpop.f32.mrb[0].mxu0
        %v1999 = vadd.f32 0.0, %v1998
        %2000 = vmatprep.mubr.f32.mxu0 0.0
        %2001 = vmatmul.mubr.f32.gmra.mrb[0].mxu0 %v1826
        %v2002 = vpop.f32.mrb[0].mxu0
        %v2003 = vadd.f32 0.0, %v2002
        %v2004 = vpop.f32.mrb[0].mxu0
        %v2005 = vadd.f32 0.0, %v2004
        %2006 = vmatprep.mubr.f32.mxu0 0.0
        %2007 = vmatmul.mubr.f32.gmra.mrb[0].mxu0 %v1829
        %v2008 = vpop.f32.mrb[0].mxu0
        %v2009 = vadd.f32 0.0, %v2008
        %v2010 = vpop.f32.mrb[0].mxu0
        %v2011 = vadd.f32 0.0, %v2010
        %2012 = vmatprep.mubr.f32.mxu0 0.0
        %2013 = vmatmul.mubr.f32.gmra.mrb[0].mxu0 %v1832
        %v2014 = vpop.f32.mrb[0].mxu0
        %v2015 = vadd.f32 0.0, %v2014
        %v2016 = vpop.f32.mrb[0].mxu0
        %v2017 = vadd.f32 0.0, %v2016
        %2018 = vmatprep.mubr.f32.mxu0 0.0
        %2019 = vmatmul.mubr.f32.gmra.mrb[0].mxu0 %v1835
        %v2020 = vpop.f32.mrb[0].mxu0
        %v2021 = vadd.f32 0.0, %v2020
        %v2022 = vpop.f32.mrb[0].mxu0
        %v2023 = vadd.f32 0.0, %v2022
        %2024 = vmatprep.mubr.f32.mxu0 0.0
        %2025 = vmatmul.mubr.f32.gmra.mrb[0].mxu0 %v1838
        %v2026 = vpop.f32.mrb[0].mxu0
        %v2027 = vadd.f32 0.0, %v2026
        %v2028 = vpop.f32.mrb[0].mxu0
        %v2029 = vadd.f32 0.0, %v2028
        %2030 = vmatprep.mubr.f32.mxu0 0.0
        %2031 = vmatmul.mubr.f32.gmra.mrb[0].mxu0 %v1841
        %v2032 = vpop.f32.mrb[0].mxu0
        %v2033 = vadd.f32 0.0, %v2032
        %v2034 = vpop.f32.mrb[0].mxu0
        %v2035 = vadd.f32 0.0, %v2034
        %2036 = vmatprep.mubr.f32.mxu0 0.0
        %2037 = vmatmul.mubr.f32.gmra.mrb[0].mxu0 %v1844
        %v2038 = vpop.f32.mrb[0].mxu0
        %v2039 = vadd.f32 0.0, %v2038
        %v2040 = vpop.f32.mrb[0].mxu0
        %v2041 = vadd.f32 0.0, %v2040
        %2042 = vmatprep.mubr.f32.mxu0 0.0
        %2043 = vmatmul.mubr.f32.gmra.mrb[0].mxu0 %v1847
        %v2044 = vpop.f32.mrb[0].mxu0
        %v2045 = vadd.f32 0.0, %v2044
        %v2046 = vpop.f32.mrb[0].mxu0
        %v2047 = vadd.f32 0.0, %v2046
        %2048 = vmatprep.mubr.f32.mxu0 0.0
        %2049 = vmatmul.mubr.f32.gmra.mrb[0].mxu0 %v1850
        %v2050 = vpop.f32.mrb[0].mxu0
        %v2051 = vadd.f32 0.0, %v2050
        %v2052 = vpop.f32.mrb[0].mxu0
        %v2053 = vadd.f32 0.0, %v2052
        %2054 = vmatprep.mubr.f32.mxu0 0.0
        %2055 = vmatmul.mubr.f32.gmra.mrb[0].mxu0 %v1853
        %v2056 = vpop.f32.mrb[0].mxu0
        %v2057 = vadd.f32 0.0, %v2056
        %v2058 = vpop.f32.mrb[0].mxu0
        %v2059 = vadd.f32 0.0, %v2058
        %2060 = vmatprep.mubr.f32.mxu0 0.0
        %2061 = vmatmul.mubr.f32.gmra.mrb[0].mxu0 %v1856
        %v2062 = vpop.f32.mrb[0].mxu0
        %v2063 = vadd.f32 0.0, %v2062
        %v2064 = vpop.f32.mrb[0].mxu0
        %v2065 = vadd.f32 0.0, %v2064
        %2066 = vmatprep.mubr.f32.mxu0 0.0
        %2067 = vmatmul.mubr.f32.gmra.mrb[0].mxu0 %v1859
        %v2068 = vpop.f32.mrb[0].mxu0
        %v2069 = vadd.f32 0.0, %v2068
        %v2070 = vpop.f32.mrb[0].mxu0
        %v2071 = vadd.f32 0.0, %v2070
        %2072 = vmatprep.mubr.f32.mxu0 0.0
        %2073 = vmatmul.mubr.f32.gmra.mrb[0].mxu0 %v1862
        %v2074 = vpop.f32.mrb[0].mxu0
        %v2075 = vadd.f32 0.0, %v2074
        %v2076 = vpop.f32.mrb[0].mxu0
        %v2077 = vadd.f32 0.0, %v2076
        %2078 = vdwg.mxu0
        %v2079 = vadd.f32 %v1429, %v1937
        %v2080 = vadd.f32 %v1430, %v1939
        %v2081 = vadd.f32 %v1431, %v1943
        %v2082 = vadd.f32 %v1432, %v1945
        %v2083 = vadd.f32 %v1433, %v1949
        %v2084 = vadd.f32 %v1434, %v1951
        %v2085 = vadd.f32 %v1435, %v1955
        %v2086 = vadd.f32 %v1436, %v1957
        %v2087 = vadd.f32 %v1437, %v1961
        %v2088 = vadd.f32 %v1438, %v1963
        %v2089 = vadd.f32 %v1439, %v1967
        %v2090 = vadd.f32 %v1440, %v1969
        %v2091 = vadd.f32 %v1441, %v1973
        %v2092 = vadd.f32 %v1442, %v1975
        %v2093 = vadd.f32 %v1443, %v1979
        %v2094 = vadd.f32 %v1444, %v1981
        %v2095 = vadd.f32 %v1445, %v1985
        %v2096 = vadd.f32 %v1446, %v1987
        %v2097 = vadd.f32 %v1447, %v1991
        %v2098 = vadd.f32 %v1448, %v1993
        %v2099 = vadd.f32 %v1449, %v1997
        %v2100 = vadd.f32 %v1450, %v1999
        %v2101 = vadd.f32 %v1451, %v2003
        %v2102 = vadd.f32 %v1452, %v2005
        %v2103 = vadd.f32 %v1453, %v2009
        %v2104 = vadd.f32 %v1454, %v2011
        %v2105 = vadd.f32 %v1455, %v2015
        %v2106 = vadd.f32 %v1456, %v2017
        %v2107 = vadd.f32 %v1457, %v2021
        %v2108 = vadd.f32 %v1458, %v2023
        %v2109 = vadd.f32 %v1459, %v2027
        %v2110 = vadd.f32 %v1460, %v2029
        %v2111 = vadd.f32 %v1461, %v2033
        %v2112 = vadd.f32 %v1462, %v2035
        %v2113 = vadd.f32 %v1463, %v2039
        %v2114 = vadd.f32 %v1464, %v2041
        %v2115 = vadd.f32 %v1465, %v2045
        %v2116 = vadd.f32 %v1466, %v2047
        %v2117 = vadd.f32 %v1467, %v2051
        %v2118 = vadd.f32 %v1468, %v2053
        %v2119 = vadd.f32 %v1469, %v2057
        %v2120 = vadd.f32 %v1470, %v2059
        %v2121 = vadd.f32 %v1471, %v2063
        %v2122 = vadd.f32 %v1472, %v2065
        %v2123 = vadd.f32 %v1473, %v2069
        %v2124 = vadd.f32 %v1474, %v2071
        %v2125 = vadd.f32 %v1475, %v2075
        %v2126 = vadd.f32 %v1476, %v2077
        %s2127 = scalar_lea.vmem %s1, 768
        %v2128 = vld [vmem:[%s2127] sm:$0xff]
        %v2129 = vld [vmem:[%s2127 + $0x8] sm:$0xff]
        %v2130 = vld [vmem:[%s2127 + $0x10] sm:$0xff]
        %v2131 = vld [vmem:[%s2127 + $0x18] sm:$0xff]
        %v2132 = vld [vmem:[%s2127 + $0x20] sm:$0xff]
        %v2133 = vld [vmem:[%s2127 + $0x28] sm:$0xff]
        %v2134 = vld [vmem:[%s2127 + $0x30] sm:$0xff]
        %v2135 = vld [vmem:[%s2127 + $0x38] sm:$0xff]
        %v2136 = vld [vmem:[%s2127 + $0x40] sm:$0xff]
        %v2137 = vld [vmem:[%s2127 + $0x48] sm:$0xff]
        %v2138 = vld [vmem:[%s2127 + $0x50] sm:$0xff]
        %v2139 = vld [vmem:[%s2127 + $0x58] sm:$0xff]
        %v2140 = vld [vmem:[%s2127 + $0x60] sm:$0xff]
        %v2141 = vld [vmem:[%s2127 + $0x68] sm:$0xff]
        %v2142 = vld [vmem:[%s2127 + $0x70] sm:$0xff]
        %v2143 = vld [vmem:[%s2127 + $0x78] sm:$0xff]
        %v2144 = vld [vmem:[%s2127 + $0x80] sm:$0xff]
        %v2145 = vld [vmem:[%s2127 + $0x88] sm:$0xff]
        %v2146 = vld [vmem:[%s2127 + $0x90] sm:$0xff]
        %v2147 = vld [vmem:[%s2127 + $0x98] sm:$0xff]
        %v2148 = vld [vmem:[%s2127 + $0xa0] sm:$0xff]
        %v2149 = vld [vmem:[%s2127 + $0xa8] sm:$0xff]
        %v2150 = vld [vmem:[%s2127 + $0xb0] sm:$0xff]
        %v2151 = vld [vmem:[%s2127 + $0xb8] sm:$0xff]
        %v2152 = vld [vmem:[%s2127 + $0xc0] sm:$0xff]
        %v2153 = vld [vmem:[%s2127 + $0xc8] sm:$0xff]
        %v2154 = vld [vmem:[%s2127 + $0xd0] sm:$0xff]
        %v2155 = vld [vmem:[%s2127 + $0xd8] sm:$0xff]
        %v2156 = vld [vmem:[%s2127 + $0xe0] sm:$0xff]
        %v2157 = vld [vmem:[%s2127 + $0xe8] sm:$0xff]
        %v2158 = vld [vmem:[%s2127 + $0xf0] sm:$0xff]
        %v2159 = vld [vmem:[%s2127 + $0xf8] sm:$0xff]
        %v2160 = vld [vmem:[%s2127 + $0x100] sm:$0xff]
        %v2161 = vld [vmem:[%s2127 + $0x108] sm:$0xff]
        %v2162 = vld [vmem:[%s2127 + $0x110] sm:$0xff]
        %v2163 = vld [vmem:[%s2127 + $0x118] sm:$0xff]
        %v2164 = vld [vmem:[%s2127 + $0x120] sm:$0xff]
        %v2165 = vld [vmem:[%s2127 + $0x128] sm:$0xff]
        %v2166 = vld [vmem:[%s2127 + $0x130] sm:$0xff]
        %v2167 = vld [vmem:[%s2127 + $0x138] sm:$0xff]
        %v2168 = vld [vmem:[%s2127 + $0x140] sm:$0xff]
        %v2169 = vld [vmem:[%s2127 + $0x148] sm:$0xff]
        %v2170 = vld [vmem:[%s2127 + $0x150] sm:$0xff]
        %v2171 = vld [vmem:[%s2127 + $0x158] sm:$0xff]
        %v2172 = vld [vmem:[%s2127 + $0x160] sm:$0xff]
        %v2173 = vld [vmem:[%s2127 + $0x168] sm:$0xff]
        %v2174 = vld [vmem:[%s2127 + $0x170] sm:$0xff]
        %v2175 = vld [vmem:[%s2127 + $0x178] sm:$0xff]
        %v2177 = vsel %vm863, %v2129, 0
        %v2180 = vsel %vm863, %v2131, 0
        %v2183 = vsel %vm863, %v2133, 0
        %v2186 = vsel %vm863, %v2135, 0
        %v2189 = vsel %vm863, %v2137, 0
        %v2192 = vsel %vm863, %v2139, 0
        %v2195 = vsel %vm863, %v2141, 0
        %v2198 = vsel %vm863, %v2143, 0
        %v2201 = vsel %vm863, %v2145, 0
        %v2204 = vsel %vm863, %v2147, 0
        %v2207 = vsel %vm863, %v2149, 0
        %v2210 = vsel %vm863, %v2151, 0
        %v2213 = vsel %vm863, %v2153, 0
        %v2216 = vsel %vm863, %v2155, 0
        %v2219 = vsel %vm863, %v2157, 0
        %v2222 = vsel %vm863, %v2159, 0
        %v2225 = vsel %vm863, %v2161, 0
        %v2228 = vsel %vm863, %v2163, 0
        %v2231 = vsel %vm863, %v2165, 0
        %v2234 = vsel %vm863, %v2167, 0
        %v2237 = vsel %vm863, %v2169, 0
        %v2240 = vsel %vm863, %v2171, 0
        %v2243 = vsel %vm863, %v2173, 0
        %v2246 = vsel %vm863, %v2175, 0
        %2248 = vmatprep.subr.mxu0 0.0
        %2249 = vmatpush1.msra.mxu0 %v786
        %2250 = vmatprep.subr.mxu0 0.0
        %2251 = vmatpush1.msra.mxu0 %v787
        %2252 = vmatprep.subr.mxu0 0.0
        %2253 = vmatpush1.msra.mxu0 %v788
        %2254 = vmatprep.subr.mxu0 0.0
        %2255 = vmatpush1.msra.mxu0 %v789
        %2256 = vmatprep.subr.mxu0 0.0
        %2257 = vmatpush1.msra.mxu0 %v790
        %2258 = vmatprep.subr.mxu0 0.0
        %2259 = vmatpush1.msra.mxu0 %v791
        %2260 = vmatprep.subr.mxu0 0.0
        %2261 = vmatpush1.msra.mxu0 %v792
        %2262 = vmatprep.subr.mxu0 0.0
        %2263 = vmatpush1.msra.mxu0 %v793
        %2264 = vmatprep.subr.mxu0 0.0
        %2265 = vmatpush1.msra.mxu0 %v794
        %2266 = vmatprep.subr.mxu0 0.0
        %2267 = vmatpush1.msra.mxu0 %v795
        %2268 = vmatprep.subr.mxu0 0.0
        %2269 = vmatpush1.msra.mxu0 %v796
        %2270 = vmatprep.subr.mxu0 0.0
        %2271 = vmatpush1.msra.mxu0 %v797
        %2272 = vmatprep.subr.mxu0 0.0
        %2273 = vmatpush1.msra.mxu0 %v798
        %2274 = vmatprep.subr.mxu0 0.0
        %2275 = vmatpush1.msra.mxu0 %v799
        %2276 = vmatprep.subr.mxu0 0.0
        %2277 = vmatpush1.msra.mxu0 %v800
        %2278 = vmatprep.subr.mxu0 0.0
        %2279 = vmatpush1.msra.mxu0 %v801
        %2280 = vmatprep.subr.mxu0 0.0
        %2281 = vmatpush1.msra.mxu0 %v802
        %2282 = vmatprep.subr.mxu0 0.0
        %2283 = vmatpush1.msra.mxu0 %v803
        %2284 = vmatprep.subr.mxu0 0.0
        %2285 = vmatpush1.msra.mxu0 %v804
        %2286 = vmatprep.subr.mxu0 0.0
        %2287 = vmatpush1.msra.mxu0 %v805
        %2288 = vmatprep.subr.mxu0 0.0
        %2289 = vmatpush1.msra.mxu0 %v806
        %2290 = vmatprep.subr.mxu0 0.0
        %2291 = vmatpush1.msra.mxu0 %v807
        %2292 = vmatprep.subr.mxu0 0.0
        %2293 = vmatpush1.msra.mxu0 %v808
        %2294 = vmatprep.subr.mxu0 0.0
        %2295 = vmatpush1.msra.mxu0 %v809
        %2296 = vmatprep.subr.mxu0 0.0
        %2297 = vmatpush1.msra.mxu0 %v810
        %2298 = vmatprep.subr.mxu0 0.0
        %2299 = vmatpush1.msra.mxu0 %v811
        %2300 = vmatprep.subr.mxu0 0.0
        %2301 = vmatpush1.msra.mxu0 %v812
        %2302 = vmatprep.subr.mxu0 0.0
        %2303 = vmatpush1.msra.mxu0 %v813
        %2304 = vmatprep.subr.mxu0 0.0
        %2305 = vmatpush1.msra.mxu0 0.0
        %2306 = vmatprep.subr.mxu0 0.0
        %2307 = vmatpush1.msra.mxu0 0.0
        %2308 = vmatprep.subr.mxu0 0.0
        %2309 = vmatpush1.msra.mxu0 0.0
        %2310 = vmatprep.subr.mxu0 0.0
        %2311 = vmatpush1.msra.mxu0 0.0
        %2312 = vmatprep.mubr.f32.mxu0 %v2177
        %2313 = vmatmul.mubr.f32.gmra.mrb[0].mxu0 %v2128
        %v2314 = vpop.f32.mrb[0].mxu0
        %v2315 = vadd.f32 0.0, %v2314
        %v2316 = vpop.f32.mrb[0].mxu0
        %2317 = vmatprep.mubr.f32.mxu0 %v2180
        %2318 = vmatmul.mubr.f32.gmra.mrb[0].mxu0 %v2130
        %v2319 = vpop.f32.mrb[0].mxu0
        %v2320 = vadd.f32 0.0, %v2319
        %v2321 = vpop.f32.mrb[0].mxu0
        %2322 = vmatprep.mubr.f32.mxu0 %v2183
        %2323 = vmatmul.mubr.f32.gmra.mrb[0].mxu0 %v2132
        %v2324 = vpop.f32.mrb[0].mxu0
        %v2325 = vadd.f32 0.0, %v2324
        %v2326 = vpop.f32.mrb[0].mxu0
        %2327 = vmatprep.mubr.f32.mxu0 %v2186
        %2328 = vmatmul.mubr.f32.gmra.mrb[0].mxu0 %v2134
        %v2329 = vpop.f32.mrb[0].mxu0
        %v2330 = vadd.f32 0.0, %v2329
        %v2331 = vpop.f32.mrb[0].mxu0
        %2332 = vmatprep.mubr.f32.mxu0 %v2189
        %2333 = vmatmul.mubr.f32.gmra.mrb[0].mxu0 %v2136
        %v2334 = vpop.f32.mrb[0].mxu0
        %v2335 = vadd.f32 0.0, %v2334
        %v2336 = vpop.f32.mrb[0].mxu0
        %2337 = vmatprep.mubr.f32.mxu0 %v2192
        %2338 = vmatmul.mubr.f32.gmra.mrb[0].mxu0 %v2138
        %v2339 = vpop.f32.mrb[0].mxu0
        %v2340 = vadd.f32 0.0, %v2339
        %v2341 = vpop.f32.mrb[0].mxu0
        %2342 = vmatprep.mubr.f32.mxu0 %v2195
        %2343 = vmatmul.mubr.f32.gmra.mrb[0].mxu0 %v2140
        %v2344 = vpop.f32.mrb[0].mxu0
        %v2345 = vadd.f32 0.0, %v2344
        %v2346 = vpop.f32.mrb[0].mxu0
        %2347 = vmatprep.mubr.f32.mxu0 %v2198
        %2348 = vmatmul.mubr.f32.gmra.mrb[0].mxu0 %v2142
        %v2349 = vpop.f32.mrb[0].mxu0
        %v2350 = vadd.f32 0.0, %v2349
        %v2351 = vpop.f32.mrb[0].mxu0
        %2352 = vmatprep.mubr.f32.mxu0 %v2201
        %2353 = vmatmul.mubr.f32.gmra.mrb[0].mxu0 %v2144
        %v2354 = vpop.f32.mrb[0].mxu0
        %v2355 = vadd.f32 0.0, %v2354
        %v2356 = vpop.f32.mrb[0].mxu0
        %2357 = vmatprep.mubr.f32.mxu0 %v2204
        %2358 = vmatmul.mubr.f32.gmra.mrb[0].mxu0 %v2146
        %v2359 = vpop.f32.mrb[0].mxu0
        %v2360 = vadd.f32 0.0, %v2359
        %v2361 = vpop.f32.mrb[0].mxu0
        %2362 = vmatprep.mubr.f32.mxu0 %v2207
        %2363 = vmatmul.mubr.f32.gmra.mrb[0].mxu0 %v2148
        %v2364 = vpop.f32.mrb[0].mxu0
        %v2365 = vadd.f32 0.0, %v2364
        %v2366 = vpop.f32.mrb[0].mxu0
        %2367 = vmatprep.mubr.f32.mxu0 %v2210
        %2368 = vmatmul.mubr.f32.gmra.mrb[0].mxu0 %v2150
        %v2369 = vpop.f32.mrb[0].mxu0
        %v2370 = vadd.f32 0.0, %v2369
        %v2371 = vpop.f32.mrb[0].mxu0
        %2372 = vmatprep.mubr.f32.mxu0 %v2213
        %2373 = vmatmul.mubr.f32.gmra.mrb[0].mxu0 %v2152
        %v2374 = vpop.f32.mrb[0].mxu0
        %v2375 = vadd.f32 0.0, %v2374
        %v2376 = vpop.f32.mrb[0].mxu0
        %2377 = vmatprep.mubr.f32.mxu0 %v2216
        %2378 = vmatmul.mubr.f32.gmra.mrb[0].mxu0 %v2154
        %v2379 = vpop.f32.mrb[0].mxu0
        %v2380 = vadd.f32 0.0, %v2379
        %v2381 = vpop.f32.mrb[0].mxu0
        %2382 = vmatprep.mubr.f32.mxu0 %v2219
        %2383 = vmatmul.mubr.f32.gmra.mrb[0].mxu0 %v2156
        %v2384 = vpop.f32.mrb[0].mxu0
        %v2385 = vadd.f32 0.0, %v2384
        %v2386 = vpop.f32.mrb[0].mxu0
        %2387 = vmatprep.mubr.f32.mxu0 %v2222
        %2388 = vmatmul.mubr.f32.gmra.mrb[0].mxu0 %v2158
        %v2389 = vpop.f32.mrb[0].mxu0
        %v2390 = vadd.f32 0.0, %v2389
        %v2391 = vpop.f32.mrb[0].mxu0
        %2392 = vmatprep.mubr.f32.mxu0 %v2225
        %2393 = vmatmul.mubr.f32.gmra.mrb[0].mxu0 %v2160
        %v2394 = vpop.f32.mrb[0].mxu0
        %v2395 = vadd.f32 0.0, %v2394
        %v2396 = vpop.f32.mrb[0].mxu0
        %2397 = vmatprep.mubr.f32.mxu0 %v2228
        %2398 = vmatmul.mubr.f32.gmra.mrb[0].mxu0 %v2162
        %v2399 = vpop.f32.mrb[0].mxu0
        %v2400 = vadd.f32 0.0, %v2399
        %v2401 = vpop.f32.mrb[0].mxu0
        %2402 = vmatprep.mubr.f32.mxu0 %v2231
        %2403 = vmatmul.mubr.f32.gmra.mrb[0].mxu0 %v2164
        %v2404 = vpop.f32.mrb[0].mxu0
        %v2405 = vadd.f32 0.0, %v2404
        %v2406 = vpop.f32.mrb[0].mxu0
        %2407 = vmatprep.mubr.f32.mxu0 %v2234
        %2408 = vmatmul.mubr.f32.gmra.mrb[0].mxu0 %v2166
        %v2409 = vpop.f32.mrb[0].mxu0
        %v2410 = vadd.f32 0.0, %v2409
        %v2411 = vpop.f32.mrb[0].mxu0
        %2412 = vmatprep.mubr.f32.mxu0 %v2237
        %2413 = vmatmul.mubr.f32.gmra.mrb[0].mxu0 %v2168
        %v2414 = vpop.f32.mrb[0].mxu0
        %v2415 = vadd.f32 0.0, %v2414
        %v2416 = vpop.f32.mrb[0].mxu0
        %2417 = vmatprep.mubr.f32.mxu0 %v2240
        %2418 = vmatmul.mubr.f32.gmra.mrb[0].mxu0 %v2170
        %v2419 = vpop.f32.mrb[0].mxu0
        %v2420 = vadd.f32 0.0, %v2419
        %v2421 = vpop.f32.mrb[0].mxu0
        %2422 = vmatprep.mubr.f32.mxu0 %v2243
        %2423 = vmatmul.mubr.f32.gmra.mrb[0].mxu0 %v2172
        %v2424 = vpop.f32.mrb[0].mxu0
        %v2425 = vadd.f32 0.0, %v2424
        %v2426 = vpop.f32.mrb[0].mxu0
        %2427 = vmatprep.mubr.f32.mxu0 %v2246
        %2428 = vmatmul.mubr.f32.gmra.mrb[0].mxu0 %v2174
        %v2429 = vpop.f32.mrb[0].mxu0
        %v2430 = vadd.f32 0.0, %v2429
        %v2431 = vpop.f32.mrb[0].mxu0
        %2432 = vdwg.mxu0
        %s2433 = scalar_lea.vmem %s2, 128
        %v2434 = vld [vmem:[%s2433] sm:$0xff]
        %v2435 = vld [vmem:[%s2433 + $0x8] sm:$0xff]
        %v2436 = vld [vmem:[%s2433 + $0x10] sm:$0xff]
        %v2437 = vld [vmem:[%s2433 + $0x18] sm:$0xff]
        %v2438 = vld [vmem:[%s2433 + $0x20] sm:$0xff]
        %v2439 = vld [vmem:[%s2433 + $0x28] sm:$0xff]
        %v2440 = vld [vmem:[%s2433 + $0x30] sm:$0xf]
        %v2441 = vld [vmem:[%s2433 + $0x38] sm:$0xf]
        %v2443 = vsel %vm1129, %v2315, 0
        %v2446 = vsel %vm1129, %v2320, 0
        %v2449 = vsel %vm1129, %v2325, 0
        %v2452 = vsel %vm1129, %v2330, 0
        %v2455 = vsel %vm1129, %v2335, 0
        %v2458 = vsel %vm1129, %v2340, 0
        %v2461 = vsel %vm1129, %v2345, 0
        %v2464 = vsel %vm1129, %v2350, 0
        %v2467 = vsel %vm1129, %v2355, 0
        %v2470 = vsel %vm1129, %v2360, 0
        %v2473 = vsel %vm1129, %v2365, 0
        %v2476 = vsel %vm1129, %v2370, 0
        %v2479 = vsel %vm1129, %v2375, 0
        %v2482 = vsel %vm1129, %v2380, 0
        %v2485 = vsel %vm1129, %v2385, 0
        %v2488 = vsel %vm1129, %v2390, 0
        %v2491 = vsel %vm1129, %v2395, 0
        %v2494 = vsel %vm1129, %v2400, 0
        %v2497 = vsel %vm1129, %v2405, 0
        %v2500 = vsel %vm1129, %v2410, 0
        %v2503 = vsel %vm1129, %v2415, 0
        %v2506 = vsel %vm1129, %v2420, 0
        %v2509 = vsel %vm1129, %v2425, 0
        %v2512 = vsel %vm1129, %v2430, 0
        %v2515 = vsel %vm1202, %v2440, 0
        %v2518 = vsel %vm1202, %v2441, 0
        %2520 = vmatprep.subr.mxu0 %v2435
        %2521 = vmatpush1.msra.mxu0 %v2434
        %2522 = vmatprep.subr.mxu0 %v2437
        %2523 = vmatpush1.msra.mxu0 %v2436
        %2524 = vmatprep.subr.mxu0 %v2439
        %2525 = vmatpush1.msra.mxu0 %v2438
        %2526 = vmatprep.subr.mxu0 %v2518
        %2527 = vmatpush1.msra.mxu0 %v2515
        %2528 = vmatprep.subr.mxu0 0.0
        %2529 = vmatpush1.msra.mxu0 0.0
        %2530 = vmatprep.subr.mxu0 0.0
        %2531 = vmatpush1.msra.mxu0 0.0
        %2532 = vmatprep.subr.mxu0 0.0
        %2533 = vmatpush1.msra.mxu0 0.0
        %2534 = vmatprep.subr.mxu0 0.0
        %2535 = vmatpush1.msra.mxu0 0.0
        %2536 = vmatprep.subr.mxu0 0.0
        %2537 = vmatpush1.msra.mxu0 0.0
        %2538 = vmatprep.subr.mxu0 0.0
        %2539 = vmatpush1.msra.mxu0 0.0
        %2540 = vmatprep.subr.mxu0 0.0
        %2541 = vmatpush1.msra.mxu0 0.0
        %2542 = vmatprep.subr.mxu0 0.0
        %2543 = vmatpush1.msra.mxu0 0.0
        %2544 = vmatprep.subr.mxu0 0.0
        %2545 = vmatpush1.msra.mxu0 0.0
        %2546 = vmatprep.subr.mxu0 0.0
        %2547 = vmatpush1.msra.mxu0 0.0
        %2548 = vmatprep.subr.mxu0 0.0
        %2549 = vmatpush1.msra.mxu0 0.0
        %2550 = vmatprep.subr.mxu0 0.0
        %2551 = vmatpush1.msra.mxu0 0.0
        %2552 = vmatprep.subr.mxu0 0.0
        %2553 = vmatpush1.msra.mxu0 0.0
        %2554 = vmatprep.subr.mxu0 0.0
        %2555 = vmatpush1.msra.mxu0 0.0
        %2556 = vmatprep.subr.mxu0 0.0
        %2557 = vmatpush1.msra.mxu0 0.0
        %2558 = vmatprep.subr.mxu0 0.0
        %2559 = vmatpush1.msra.mxu0 0.0
        %2560 = vmatprep.subr.mxu0 0.0
        %2561 = vmatpush1.msra.mxu0 0.0
        %2562 = vmatprep.subr.mxu0 0.0
        %2563 = vmatpush1.msra.mxu0 0.0
        %2564 = vmatprep.subr.mxu0 0.0
        %2565 = vmatpush1.msra.mxu0 0.0
        %2566 = vmatprep.subr.mxu0 0.0
        %2567 = vmatpush1.msra.mxu0 0.0
        %2568 = vmatprep.subr.mxu0 0.0
        %2569 = vmatpush1.msra.mxu0 0.0
        %2570 = vmatprep.subr.mxu0 0.0
        %2571 = vmatpush1.msra.mxu0 0.0
        %2572 = vmatprep.subr.mxu0 0.0
        %2573 = vmatpush1.msra.mxu0 0.0
        %2574 = vmatprep.subr.mxu0 0.0
        %2575 = vmatpush1.msra.mxu0 0.0
        %2576 = vmatprep.subr.mxu0 0.0
        %2577 = vmatpush1.msra.mxu0 0.0
        %2578 = vmatprep.subr.mxu0 0.0
        %2579 = vmatpush1.msra.mxu0 0.0
        %2580 = vmatprep.subr.mxu0 0.0
        %2581 = vmatpush1.msra.mxu0 0.0
        %2582 = vmatprep.subr.mxu0 0.0
        %2583 = vmatpush1.msra.mxu0 0.0
        %2584 = vmatprep.mubr.f32.mxu0 0.0
        %2585 = vmatmul.mubr.f32.gmra.mrb[0].mxu0 %v2443
        %v2586 = vpop.f32.mrb[0].mxu0
        %v2587 = vadd.f32 0.0, %v2586
        %v2588 = vpop.f32.mrb[0].mxu0
        %v2589 = vadd.f32 0.0, %v2588
        %2590 = vmatprep.mubr.f32.mxu0 0.0
        %2591 = vmatmul.mubr.f32.gmra.mrb[0].mxu0 %v2446
        %v2592 = vpop.f32.mrb[0].mxu0
        %v2593 = vadd.f32 0.0, %v2592
        %v2594 = vpop.f32.mrb[0].mxu0
        %v2595 = vadd.f32 0.0, %v2594
        %2596 = vmatprep.mubr.f32.mxu0 0.0
        %2597 = vmatmul.mubr.f32.gmra.mrb[0].mxu0 %v2449
        %v2598 = vpop.f32.mrb[0].mxu0
        %v2599 = vadd.f32 0.0, %v2598
        %v2600 = vpop.f32.mrb[0].mxu0
        %v2601 = vadd.f32 0.0, %v2600
        %2602 = vmatprep.mubr.f32.mxu0 0.0
        %2603 = vmatmul.mubr.f32.gmra.mrb[0].mxu0 %v2452
        %v2604 = vpop.f32.mrb[0].mxu0
        %v2605 = vadd.f32 0.0, %v2604
        %v2606 = vpop.f32.mrb[0].mxu0
        %v2607 = vadd.f32 0.0, %v2606
        %2608 = vmatprep.mubr.f32.mxu0 0.0
        %2609 = vmatmul.mubr.f32.gmra.mrb[0].mxu0 %v2455
        %v2610 = vpop.f32.mrb[0].mxu0
        %v2611 = vadd.f32 0.0, %v2610
        %v2612 = vpop.f32.mrb[0].mxu0
        %v2613 = vadd.f32 0.0, %v2612
        %2614 = vmatprep.mubr.f32.mxu0 0.0
        %2615 = vmatmul.mubr.f32.gmra.mrb[0].mxu0 %v2458
        %v2616 = vpop.f32.mrb[0].mxu0
        %v2617 = vadd.f32 0.0, %v2616
        %v2618 = vpop.f32.mrb[0].mxu0
        %v2619 = vadd.f32 0.0, %v2618
        %2620 = vmatprep.mubr.f32.mxu0 0.0
        %2621 = vmatmul.mubr.f32.gmra.mrb[0].mxu0 %v2461
        %v2622 = vpop.f32.mrb[0].mxu0
        %v2623 = vadd.f32 0.0, %v2622
        %v2624 = vpop.f32.mrb[0].mxu0
        %v2625 = vadd.f32 0.0, %v2624
        %2626 = vmatprep.mubr.f32.mxu0 0.0
        %2627 = vmatmul.mubr.f32.gmra.mrb[0].mxu0 %v2464
        %v2628 = vpop.f32.mrb[0].mxu0
        %v2629 = vadd.f32 0.0, %v2628
        %v2630 = vpop.f32.mrb[0].mxu0
        %v2631 = vadd.f32 0.0, %v2630
        %2632 = vmatprep.mubr.f32.mxu0 0.0
        %2633 = vmatmul.mubr.f32.gmra.mrb[0].mxu0 %v2467
        %v2634 = vpop.f32.mrb[0].mxu0
        %v2635 = vadd.f32 0.0, %v2634
        %v2636 = vpop.f32.mrb[0].mxu0
        %v2637 = vadd.f32 0.0, %v2636
        %2638 = vmatprep.mubr.f32.mxu0 0.0
        %2639 = vmatmul.mubr.f32.gmra.mrb[0].mxu0 %v2470
        %v2640 = vpop.f32.mrb[0].mxu0
        %v2641 = vadd.f32 0.0, %v2640
        %v2642 = vpop.f32.mrb[0].mxu0
        %v2643 = vadd.f32 0.0, %v2642
        %2644 = vmatprep.mubr.f32.mxu0 0.0
        %2645 = vmatmul.mubr.f32.gmra.mrb[0].mxu0 %v2473
        %v2646 = vpop.f32.mrb[0].mxu0
        %v2647 = vadd.f32 0.0, %v2646
        %v2648 = vpop.f32.mrb[0].mxu0
        %v2649 = vadd.f32 0.0, %v2648
        %2650 = vmatprep.mubr.f32.mxu0 0.0
        %2651 = vmatmul.mubr.f32.gmra.mrb[0].mxu0 %v2476
        %v2652 = vpop.f32.mrb[0].mxu0
        %v2653 = vadd.f32 0.0, %v2652
        %v2654 = vpop.f32.mrb[0].mxu0
        %v2655 = vadd.f32 0.0, %v2654
        %2656 = vmatprep.mubr.f32.mxu0 0.0
        %2657 = vmatmul.mubr.f32.gmra.mrb[0].mxu0 %v2479
        %v2658 = vpop.f32.mrb[0].mxu0
        %v2659 = vadd.f32 0.0, %v2658
        %v2660 = vpop.f32.mrb[0].mxu0
        %v2661 = vadd.f32 0.0, %v2660
        %2662 = vmatprep.mubr.f32.mxu0 0.0
        %2663 = vmatmul.mubr.f32.gmra.mrb[0].mxu0 %v2482
        %v2664 = vpop.f32.mrb[0].mxu0
        %v2665 = vadd.f32 0.0, %v2664
        %v2666 = vpop.f32.mrb[0].mxu0
        %v2667 = vadd.f32 0.0, %v2666
        %2668 = vmatprep.mubr.f32.mxu0 0.0
        %2669 = vmatmul.mubr.f32.gmra.mrb[0].mxu0 %v2485
        %v2670 = vpop.f32.mrb[0].mxu0
        %v2671 = vadd.f32 0.0, %v2670
        %v2672 = vpop.f32.mrb[0].mxu0
        %v2673 = vadd.f32 0.0, %v2672
        %2674 = vmatprep.mubr.f32.mxu0 0.0
        %2675 = vmatmul.mubr.f32.gmra.mrb[0].mxu0 %v2488
        %v2676 = vpop.f32.mrb[0].mxu0
        %v2677 = vadd.f32 0.0, %v2676
        %v2678 = vpop.f32.mrb[0].mxu0
        %v2679 = vadd.f32 0.0, %v2678
        %2680 = vmatprep.mubr.f32.mxu0 0.0
        %2681 = vmatmul.mubr.f32.gmra.mrb[0].mxu0 %v2491
        %v2682 = vpop.f32.mrb[0].mxu0
        %v2683 = vadd.f32 0.0, %v2682
        %v2684 = vpop.f32.mrb[0].mxu0
        %v2685 = vadd.f32 0.0, %v2684
        %2686 = vmatprep.mubr.f32.mxu0 0.0
        %2687 = vmatmul.mubr.f32.gmra.mrb[0].mxu0 %v2494
        %v2688 = vpop.f32.mrb[0].mxu0
        %v2689 = vadd.f32 0.0, %v2688
        %v2690 = vpop.f32.mrb[0].mxu0
        %v2691 = vadd.f32 0.0, %v2690
        %2692 = vmatprep.mubr.f32.mxu0 0.0
        %2693 = vmatmul.mubr.f32.gmra.mrb[0].mxu0 %v2497
        %v2694 = vpop.f32.mrb[0].mxu0
        %v2695 = vadd.f32 0.0, %v2694
        %v2696 = vpop.f32.mrb[0].mxu0
        %v2697 = vadd.f32 0.0, %v2696
        %2698 = vmatprep.mubr.f32.mxu0 0.0
        %2699 = vmatmul.mubr.f32.gmra.mrb[0].mxu0 %v2500
        %v2700 = vpop.f32.mrb[0].mxu0
        %v2701 = vadd.f32 0.0, %v2700
        %v2702 = vpop.f32.mrb[0].mxu0
        %v2703 = vadd.f32 0.0, %v2702
        %2704 = vmatprep.mubr.f32.mxu0 0.0
        %2705 = vmatmul.mubr.f32.gmra.mrb[0].mxu0 %v2503
        %v2706 = vpop.f32.mrb[0].mxu0
        %v2707 = vadd.f32 0.0, %v2706
        %v2708 = vpop.f32.mrb[0].mxu0
        %v2709 = vadd.f32 0.0, %v2708
        %2710 = vmatprep.mubr.f32.mxu0 0.0
        %2711 = vmatmul.mubr.f32.gmra.mrb[0].mxu0 %v2506
        %v2712 = vpop.f32.mrb[0].mxu0
        %v2713 = vadd.f32 0.0, %v2712
        %v2714 = vpop.f32.mrb[0].mxu0
        %v2715 = vadd.f32 0.0, %v2714
        %2716 = vmatprep.mubr.f32.mxu0 0.0
        %2717 = vmatmul.mubr.f32.gmra.mrb[0].mxu0 %v2509
        %v2718 = vpop.f32.mrb[0].mxu0
        %v2719 = vadd.f32 0.0, %v2718
        %v2720 = vpop.f32.mrb[0].mxu0
        %v2721 = vadd.f32 0.0, %v2720
        %2722 = vmatprep.mubr.f32.mxu0 0.0
        %2723 = vmatmul.mubr.f32.gmra.mrb[0].mxu0 %v2512
        %v2724 = vpop.f32.mrb[0].mxu0
        %v2725 = vadd.f32 0.0, %v2724
        %v2726 = vpop.f32.mrb[0].mxu0
        %v2727 = vadd.f32 0.0, %v2726
        %2728 = vdwg.mxu0
        %v2729 = vadd.f32 %v2079, %v2587
        %v2730 = vadd.f32 %v2080, %v2589
        %v2731 = vadd.f32 %v2081, %v2593
        %v2732 = vadd.f32 %v2082, %v2595
        %v2733 = vadd.f32 %v2083, %v2599
        %v2734 = vadd.f32 %v2084, %v2601
        %v2735 = vadd.f32 %v2085, %v2605
        %v2736 = vadd.f32 %v2086, %v2607
        %v2737 = vadd.f32 %v2087, %v2611
        %v2738 = vadd.f32 %v2088, %v2613
        %v2739 = vadd.f32 %v2089, %v2617
        %v2740 = vadd.f32 %v2090, %v2619
        %v2741 = vadd.f32 %v2091, %v2623
        %v2742 = vadd.f32 %v2092, %v2625
        %v2743 = vadd.f32 %v2093, %v2629
        %v2744 = vadd.f32 %v2094, %v2631
        %v2745 = vadd.f32 %v2095, %v2635
        %v2746 = vadd.f32 %v2096, %v2637
        %v2747 = vadd.f32 %v2097, %v2641
        %v2748 = vadd.f32 %v2098, %v2643
        %v2749 = vadd.f32 %v2099, %v2647
        %v2750 = vadd.f32 %v2100, %v2649
        %v2751 = vadd.f32 %v2101, %v2653
        %v2752 = vadd.f32 %v2102, %v2655
        %v2753 = vadd.f32 %v2103, %v2659
        %v2754 = vadd.f32 %v2104, %v2661
        %v2755 = vadd.f32 %v2105, %v2665
        %v2756 = vadd.f32 %v2106, %v2667
        %v2757 = vadd.f32 %v2107, %v2671
        %v2758 = vadd.f32 %v2108, %v2673
        %v2759 = vadd.f32 %v2109, %v2677
        %v2760 = vadd.f32 %v2110, %v2679
        %v2761 = vadd.f32 %v2111, %v2683
        %v2762 = vadd.f32 %v2112, %v2685
        %v2763 = vadd.f32 %v2113, %v2689
        %v2764 = vadd.f32 %v2114, %v2691
        %v2765 = vadd.f32 %v2115, %v2695
        %v2766 = vadd.f32 %v2116, %v2697
        %v2767 = vadd.f32 %v2117, %v2701
        %v2768 = vadd.f32 %v2118, %v2703
        %v2769 = vadd.f32 %v2119, %v2707
        %v2770 = vadd.f32 %v2120, %v2709
        %v2771 = vadd.f32 %v2121, %v2713
        %v2772 = vadd.f32 %v2122, %v2715
        %v2773 = vadd.f32 %v2123, %v2719
        %v2774 = vadd.f32 %v2124, %v2721
        %v2775 = vadd.f32 %v2125, %v2725
        %v2776 = vadd.f32 %v2126, %v2727
        %s2777 = scalar_lea.vmem %s1, 1152
        %v2778 = vld [vmem:[%s2777] sm:$0xff]
        %v2779 = vld [vmem:[%s2777 + $0x8] sm:$0xff]
        %v2780 = vld [vmem:[%s2777 + $0x10] sm:$0xff]
        %v2781 = vld [vmem:[%s2777 + $0x18] sm:$0xff]
        %v2782 = vld [vmem:[%s2777 + $0x20] sm:$0xff]
        %v2783 = vld [vmem:[%s2777 + $0x28] sm:$0xff]
        %v2784 = vld [vmem:[%s2777 + $0x30] sm:$0xff]
        %v2785 = vld [vmem:[%s2777 + $0x38] sm:$0xff]
        %v2786 = vld [vmem:[%s2777 + $0x40] sm:$0xff]
        %v2787 = vld [vmem:[%s2777 + $0x48] sm:$0xff]
        %v2788 = vld [vmem:[%s2777 + $0x50] sm:$0xff]
        %v2789 = vld [vmem:[%s2777 + $0x58] sm:$0xff]
        %v2790 = vld [vmem:[%s2777 + $0x60] sm:$0xff]
        %v2791 = vld [vmem:[%s2777 + $0x68] sm:$0xff]
        %v2792 = vld [vmem:[%s2777 + $0x70] sm:$0xff]
        %v2793 = vld [vmem:[%s2777 + $0x78] sm:$0xff]
        %v2794 = vld [vmem:[%s2777 + $0x80] sm:$0xff]
        %v2795 = vld [vmem:[%s2777 + $0x88] sm:$0xff]
        %v2796 = vld [vmem:[%s2777 + $0x90] sm:$0xff]
        %v2797 = vld [vmem:[%s2777 + $0x98] sm:$0xff]
        %v2798 = vld [vmem:[%s2777 + $0xa0] sm:$0xff]
        %v2799 = vld [vmem:[%s2777 + $0xa8] sm:$0xff]
        %v2800 = vld [vmem:[%s2777 + $0xb0] sm:$0xff]
        %v2801 = vld [vmem:[%s2777 + $0xb8] sm:$0xff]
        %v2802 = vld [vmem:[%s2777 + $0xc0] sm:$0xff]
        %v2803 = vld [vmem:[%s2777 + $0xc8] sm:$0xff]
        %v2804 = vld [vmem:[%s2777 + $0xd0] sm:$0xff]
        %v2805 = vld [vmem:[%s2777 + $0xd8] sm:$0xff]
        %v2806 = vld [vmem:[%s2777 + $0xe0] sm:$0xff]
        %v2807 = vld [vmem:[%s2777 + $0xe8] sm:$0xff]
        %v2808 = vld [vmem:[%s2777 + $0xf0] sm:$0xff]
        %v2809 = vld [vmem:[%s2777 + $0xf8] sm:$0xff]
        %v2810 = vld [vmem:[%s2777 + $0x100] sm:$0xff]
        %v2811 = vld [vmem:[%s2777 + $0x108] sm:$0xff]
        %v2812 = vld [vmem:[%s2777 + $0x110] sm:$0xff]
        %v2813 = vld [vmem:[%s2777 + $0x118] sm:$0xff]
        %v2814 = vld [vmem:[%s2777 + $0x120] sm:$0xff]
        %v2815 = vld [vmem:[%s2777 + $0x128] sm:$0xff]
        %v2816 = vld [vmem:[%s2777 + $0x130] sm:$0xff]
        %v2817 = vld [vmem:[%s2777 + $0x138] sm:$0xff]
        %v2818 = vld [vmem:[%s2777 + $0x140] sm:$0xff]
        %v2819 = vld [vmem:[%s2777 + $0x148] sm:$0xff]
        %v2820 = vld [vmem:[%s2777 + $0x150] sm:$0xff]
        %v2821 = vld [vmem:[%s2777 + $0x158] sm:$0xff]
        %v2822 = vld [vmem:[%s2777 + $0x160] sm:$0xff]
        %v2823 = vld [vmem:[%s2777 + $0x168] sm:$0xff]
        %v2824 = vld [vmem:[%s2777 + $0x170] sm:$0xff]
        %v2825 = vld [vmem:[%s2777 + $0x178] sm:$0xff]
        %v2827 = vsel %vm863, %v2779, 0
        %v2830 = vsel %vm863, %v2781, 0
        %v2833 = vsel %vm863, %v2783, 0
        %v2836 = vsel %vm863, %v2785, 0
        %v2839 = vsel %vm863, %v2787, 0
        %v2842 = vsel %vm863, %v2789, 0
        %v2845 = vsel %vm863, %v2791, 0
        %v2848 = vsel %vm863, %v2793, 0
        %v2851 = vsel %vm863, %v2795, 0
        %v2854 = vsel %vm863, %v2797, 0
        %v2857 = vsel %vm863, %v2799, 0
        %v2860 = vsel %vm863, %v2801, 0
        %v2863 = vsel %vm863, %v2803, 0
        %v2866 = vsel %vm863, %v2805, 0
        %v2869 = vsel %vm863, %v2807, 0
        %v2872 = vsel %vm863, %v2809, 0
        %v2875 = vsel %vm863, %v2811, 0
        %v2878 = vsel %vm863, %v2813, 0
        %v2881 = vsel %vm863, %v2815, 0
        %v2884 = vsel %vm863, %v2817, 0
        %v2887 = vsel %vm863, %v2819, 0
        %v2890 = vsel %vm863, %v2821, 0
        %v2893 = vsel %vm863, %v2823, 0
        %v2896 = vsel %vm863, %v2825, 0
        %2898 = vmatprep.subr.mxu0 0.0
        %2899 = vmatpush1.msra.mxu0 %v786
        %2900 = vmatprep.subr.mxu0 0.0
        %2901 = vmatpush1.msra.mxu0 %v787
        %2902 = vmatprep.subr.mxu0 0.0
        %2903 = vmatpush1.msra.mxu0 %v788
        %2904 = vmatprep.subr.mxu0 0.0
        %2905 = vmatpush1.msra.mxu0 %v789
        %2906 = vmatprep.subr.mxu0 0.0
        %2907 = vmatpush1.msra.mxu0 %v790
        %2908 = vmatprep.subr.mxu0 0.0
        %2909 = vmatpush1.msra.mxu0 %v791
        %2910 = vmatprep.subr.mxu0 0.0
        %2911 = vmatpush1.msra.mxu0 %v792
        %2912 = vmatprep.subr.mxu0 0.0
        %2913 = vmatpush1.msra.mxu0 %v793
        %2914 = vmatprep.subr.mxu0 0.0
        %2915 = vmatpush1.msra.mxu0 %v794
        %2916 = vmatprep.subr.mxu0 0.0
        %2917 = vmatpush1.msra.mxu0 %v795
        %2918 = vmatprep.subr.mxu0 0.0
        %2919 = vmatpush1.msra.mxu0 %v796
        %2920 = vmatprep.subr.mxu0 0.0
        %2921 = vmatpush1.msra.mxu0 %v797
        %2922 = vmatprep.subr.mxu0 0.0
        %2923 = vmatpush1.msra.mxu0 %v798
        %2924 = vmatprep.subr.mxu0 0.0
        %2925 = vmatpush1.msra.mxu0 %v799
        %2926 = vmatprep.subr.mxu0 0.0
        %2927 = vmatpush1.msra.mxu0 %v800
        %2928 = vmatprep.subr.mxu0 0.0
        %2929 = vmatpush1.msra.mxu0 %v801
        %2930 = vmatprep.subr.mxu0 0.0
        %2931 = vmatpush1.msra.mxu0 %v802
        %2932 = vmatprep.subr.mxu0 0.0
        %2933 = vmatpush1.msra.mxu0 %v803
        %2934 = vmatprep.subr.mxu0 0.0
        %2935 = vmatpush1.msra.mxu0 %v804
        %2936 = vmatprep.subr.mxu0 0.0
        %2937 = vmatpush1.msra.mxu0 %v805
        %2938 = vmatprep.subr.mxu0 0.0
        %2939 = vmatpush1.msra.mxu0 %v806
        %2940 = vmatprep.subr.mxu0 0.0
        %2941 = vmatpush1.msra.mxu0 %v807
        %2942 = vmatprep.subr.mxu0 0.0
        %2943 = vmatpush1.msra.mxu0 %v808
        %2944 = vmatprep.subr.mxu0 0.0
        %2945 = vmatpush1.msra.mxu0 %v809
        %2946 = vmatprep.subr.mxu0 0.0
        %2947 = vmatpush1.msra.mxu0 %v810
        %2948 = vmatprep.subr.mxu0 0.0
        %2949 = vmatpush1.msra.mxu0 %v811
        %2950 = vmatprep.subr.mxu0 0.0
        %2951 = vmatpush1.msra.mxu0 %v812
        %2952 = vmatprep.subr.mxu0 0.0
        %2953 = vmatpush1.msra.mxu0 %v813
        %2954 = vmatprep.subr.mxu0 0.0
        %2955 = vmatpush1.msra.mxu0 0.0
        %2956 = vmatprep.subr.mxu0 0.0
        %2957 = vmatpush1.msra.mxu0 0.0
        %2958 = vmatprep.subr.mxu0 0.0
        %2959 = vmatpush1.msra.mxu0 0.0
        %2960 = vmatprep.subr.mxu0 0.0
        %2961 = vmatpush1.msra.mxu0 0.0
        %2962 = vmatprep.mubr.f32.mxu0 %v2827
        %2963 = vmatmul.mubr.f32.gmra.mrb[0].mxu0 %v2778
        %v2964 = vpop.f32.mrb[0].mxu0
        %v2965 = vadd.f32 0.0, %v2964
        %v2966 = vpop.f32.mrb[0].mxu0
        %2967 = vmatprep.mubr.f32.mxu0 %v2830
        %2968 = vmatmul.mubr.f32.gmra.mrb[0].mxu0 %v2780
        %v2969 = vpop.f32.mrb[0].mxu0
        %v2970 = vadd.f32 0.0, %v2969
        %v2971 = vpop.f32.mrb[0].mxu0
        %2972 = vmatprep.mubr.f32.mxu0 %v2833
        %2973 = vmatmul.mubr.f32.gmra.mrb[0].mxu0 %v2782
        %v2974 = vpop.f32.mrb[0].mxu0
        %v2975 = vadd.f32 0.0, %v2974
        %v2976 = vpop.f32.mrb[0].mxu0
        %2977 = vmatprep.mubr.f32.mxu0 %v2836
        %2978 = vmatmul.mubr.f32.gmra.mrb[0].mxu0 %v2784
        %v2979 = vpop.f32.mrb[0].mxu0
        %v2980 = vadd.f32 0.0, %v2979
        %v2981 = vpop.f32.mrb[0].mxu0
        %2982 = vmatprep.mubr.f32.mxu0 %v2839
        %2983 = vmatmul.mubr.f32.gmra.mrb[0].mxu0 %v2786
        %v2984 = vpop.f32.mrb[0].mxu0
        %v2985 = vadd.f32 0.0, %v2984
        %v2986 = vpop.f32.mrb[0].mxu0
        %2987 = vmatprep.mubr.f32.mxu0 %v2842
        %2988 = vmatmul.mubr.f32.gmra.mrb[0].mxu0 %v2788
        %v2989 = vpop.f32.mrb[0].mxu0
        %v2990 = vadd.f32 0.0, %v2989
        %v2991 = vpop.f32.mrb[0].mxu0
        %2992 = vmatprep.mubr.f32.mxu0 %v2845
        %2993 = vmatmul.mubr.f32.gmra.mrb[0].mxu0 %v2790
        %v2994 = vpop.f32.mrb[0].mxu0
        %v2995 = vadd.f32 0.0, %v2994
        %v2996 = vpop.f32.mrb[0].mxu0
        %2997 = vmatprep.mubr.f32.mxu0 %v2848
        %2998 = vmatmul.mubr.f32.gmra.mrb[0].mxu0 %v2792
        %v2999 = vpop.f32.mrb[0].mxu0
        %v3000 = vadd.f32 0.0, %v2999
        %v3001 = vpop.f32.mrb[0].mxu0
        %3002 = vmatprep.mubr.f32.mxu0 %v2851
        %3003 = vmatmul.mubr.f32.gmra.mrb[0].mxu0 %v2794
        %v3004 = vpop.f32.mrb[0].mxu0
        %v3005 = vadd.f32 0.0, %v3004
        %v3006 = vpop.f32.mrb[0].mxu0
        %3007 = vmatprep.mubr.f32.mxu0 %v2854
        %3008 = vmatmul.mubr.f32.gmra.mrb[0].mxu0 %v2796
        %v3009 = vpop.f32.mrb[0].mxu0
        %v3010 = vadd.f32 0.0, %v3009
        %v3011 = vpop.f32.mrb[0].mxu0
        %3012 = vmatprep.mubr.f32.mxu0 %v2857
        %3013 = vmatmul.mubr.f32.gmra.mrb[0].mxu0 %v2798
        %v3014 = vpop.f32.mrb[0].mxu0
        %v3015 = vadd.f32 0.0, %v3014
        %v3016 = vpop.f32.mrb[0].mxu0
        %3017 = vmatprep.mubr.f32.mxu0 %v2860
        %3018 = vmatmul.mubr.f32.gmra.mrb[0].mxu0 %v2800
        %v3019 = vpop.f32.mrb[0].mxu0
        %v3020 = vadd.f32 0.0, %v3019
        %v3021 = vpop.f32.mrb[0].mxu0
        %3022 = vmatprep.mubr.f32.mxu0 %v2863
        %3023 = vmatmul.mubr.f32.gmra.mrb[0].mxu0 %v2802
        %v3024 = vpop.f32.mrb[0].mxu0
        %v3025 = vadd.f32 0.0, %v3024
        %v3026 = vpop.f32.mrb[0].mxu0
        %3027 = vmatprep.mubr.f32.mxu0 %v2866
        %3028 = vmatmul.mubr.f32.gmra.mrb[0].mxu0 %v2804
        %v3029 = vpop.f32.mrb[0].mxu0
        %v3030 = vadd.f32 0.0, %v3029
        %v3031 = vpop.f32.mrb[0].mxu0
        %3032 = vmatprep.mubr.f32.mxu0 %v2869
        %3033 = vmatmul.mubr.f32.gmra.mrb[0].mxu0 %v2806
        %v3034 = vpop.f32.mrb[0].mxu0
        %v3035 = vadd.f32 0.0, %v3034
        %v3036 = vpop.f32.mrb[0].mxu0
        %3037 = vmatprep.mubr.f32.mxu0 %v2872
        %3038 = vmatmul.mubr.f32.gmra.mrb[0].mxu0 %v2808
        %v3039 = vpop.f32.mrb[0].mxu0
        %v3040 = vadd.f32 0.0, %v3039
        %v3041 = vpop.f32.mrb[0].mxu0
        %3042 = vmatprep.mubr.f32.mxu0 %v2875
        %3043 = vmatmul.mubr.f32.gmra.mrb[0].mxu0 %v2810
        %v3044 = vpop.f32.mrb[0].mxu0
        %v3045 = vadd.f32 0.0, %v3044
        %v3046 = vpop.f32.mrb[0].mxu0
        %3047 = vmatprep.mubr.f32.mxu0 %v2878
        %3048 = vmatmul.mubr.f32.gmra.mrb[0].mxu0 %v2812
        %v3049 = vpop.f32.mrb[0].mxu0
        %v3050 = vadd.f32 0.0, %v3049
        %v3051 = vpop.f32.mrb[0].mxu0
        %3052 = vmatprep.mubr.f32.mxu0 %v2881
        %3053 = vmatmul.mubr.f32.gmra.mrb[0].mxu0 %v2814
        %v3054 = vpop.f32.mrb[0].mxu0
        %v3055 = vadd.f32 0.0, %v3054
        %v3056 = vpop.f32.mrb[0].mxu0
        %3057 = vmatprep.mubr.f32.mxu0 %v2884
        %3058 = vmatmul.mubr.f32.gmra.mrb[0].mxu0 %v2816
        %v3059 = vpop.f32.mrb[0].mxu0
        %v3060 = vadd.f32 0.0, %v3059
        %v3061 = vpop.f32.mrb[0].mxu0
        %3062 = vmatprep.mubr.f32.mxu0 %v2887
        %3063 = vmatmul.mubr.f32.gmra.mrb[0].mxu0 %v2818
        %v3064 = vpop.f32.mrb[0].mxu0
        %v3065 = vadd.f32 0.0, %v3064
        %v3066 = vpop.f32.mrb[0].mxu0
        %3067 = vmatprep.mubr.f32.mxu0 %v2890
        %3068 = vmatmul.mubr.f32.gmra.mrb[0].mxu0 %v2820
        %v3069 = vpop.f32.mrb[0].mxu0
        %v3070 = vadd.f32 0.0, %v3069
        %v3071 = vpop.f32.mrb[0].mxu0
        %3072 = vmatprep.mubr.f32.mxu0 %v2893
        %3073 = vmatmul.mubr.f32.gmra.mrb[0].mxu0 %v2822
        %v3074 = vpop.f32.mrb[0].mxu0
        %v3075 = vadd.f32 0.0, %v3074
        %v3076 = vpop.f32.mrb[0].mxu0
        %3077 = vmatprep.mubr.f32.mxu0 %v2896
        %3078 = vmatmul.mubr.f32.gmra.mrb[0].mxu0 %v2824
        %v3079 = vpop.f32.mrb[0].mxu0
        %v3080 = vadd.f32 0.0, %v3079
        %v3081 = vpop.f32.mrb[0].mxu0
        %3082 = vdwg.mxu0
        %s3083 = scalar_lea.vmem %s2, 192
        %v3084 = vld [vmem:[%s3083] sm:$0xff]
        %v3085 = vld [vmem:[%s3083 + $0x8] sm:$0xff]
        %v3086 = vld [vmem:[%s3083 + $0x10] sm:$0xff]
        %v3087 = vld [vmem:[%s3083 + $0x18] sm:$0xff]
        %v3088 = vld [vmem:[%s3083 + $0x20] sm:$0xff]
        %v3089 = vld [vmem:[%s3083 + $0x28] sm:$0xff]
        %v3090 = vld [vmem:[%s3083 + $0x30] sm:$0xf]
        %v3091 = vld [vmem:[%s3083 + $0x38] sm:$0xf]
        %v3093 = vsel %vm1129, %v2965, 0
        %v3096 = vsel %vm1129, %v2970, 0
        %v3099 = vsel %vm1129, %v2975, 0
        %v3102 = vsel %vm1129, %v2980, 0
        %v3105 = vsel %vm1129, %v2985, 0
        %v3108 = vsel %vm1129, %v2990, 0
        %v3111 = vsel %vm1129, %v2995, 0
        %v3114 = vsel %vm1129, %v3000, 0
        %v3117 = vsel %vm1129, %v3005, 0
        %v3120 = vsel %vm1129, %v3010, 0
        %v3123 = vsel %vm1129, %v3015, 0
        %v3126 = vsel %vm1129, %v3020, 0
        %v3129 = vsel %vm1129, %v3025, 0
        %v3132 = vsel %vm1129, %v3030, 0
        %v3135 = vsel %vm1129, %v3035, 0
        %v3138 = vsel %vm1129, %v3040, 0
        %v3141 = vsel %vm1129, %v3045, 0
        %v3144 = vsel %vm1129, %v3050, 0
        %v3147 = vsel %vm1129, %v3055, 0
        %v3150 = vsel %vm1129, %v3060, 0
        %v3153 = vsel %vm1129, %v3065, 0
        %v3156 = vsel %vm1129, %v3070, 0
        %v3159 = vsel %vm1129, %v3075, 0
        %v3162 = vsel %vm1129, %v3080, 0
        %v3165 = vsel %vm1202, %v3090, 0
        %v3168 = vsel %vm1202, %v3091, 0
        %3170 = vmatprep.subr.mxu0 %v3085
        %3171 = vmatpush1.msra.mxu0 %v3084
        %3172 = vmatprep.subr.mxu0 %v3087
        %3173 = vmatpush1.msra.mxu0 %v3086
        %3174 = vmatprep.subr.mxu0 %v3089
        %3175 = vmatpush1.msra.mxu0 %v3088
        %3176 = vmatprep.subr.mxu0 %v3168
        %3177 = vmatpush1.msra.mxu0 %v3165
        %3178 = vmatprep.subr.mxu0 0.0
        %3179 = vmatpush1.msra.mxu0 0.0
        %3180 = vmatprep.subr.mxu0 0.0
        %3181 = vmatpush1.msra.mxu0 0.0
        %3182 = vmatprep.subr.mxu0 0.0
        %3183 = vmatpush1.msra.mxu0 0.0
        %3184 = vmatprep.subr.mxu0 0.0
        %3185 = vmatpush1.msra.mxu0 0.0
        %3186 = vmatprep.subr.mxu0 0.0
        %3187 = vmatpush1.msra.mxu0 0.0
        %3188 = vmatprep.subr.mxu0 0.0
        %3189 = vmatpush1.msra.mxu0 0.0
        %3190 = vmatprep.subr.mxu0 0.0
        %3191 = vmatpush1.msra.mxu0 0.0
        %3192 = vmatprep.subr.mxu0 0.0
        %3193 = vmatpush1.msra.mxu0 0.0
        %3194 = vmatprep.subr.mxu0 0.0
        %3195 = vmatpush1.msra.mxu0 0.0
        %3196 = vmatprep.subr.mxu0 0.0
        %3197 = vmatpush1.msra.mxu0 0.0
        %3198 = vmatprep.subr.mxu0 0.0
        %3199 = vmatpush1.msra.mxu0 0.0
        %3200 = vmatprep.subr.mxu0 0.0
        %3201 = vmatpush1.msra.mxu0 0.0
        %3202 = vmatprep.subr.mxu0 0.0
        %3203 = vmatpush1.msra.mxu0 0.0
        %3204 = vmatprep.subr.mxu0 0.0
        %3205 = vmatpush1.msra.mxu0 0.0
        %3206 = vmatprep.subr.mxu0 0.0
        %3207 = vmatpush1.msra.mxu0 0.0
        %3208 = vmatprep.subr.mxu0 0.0
        %3209 = vmatpush1.msra.mxu0 0.0
        %3210 = vmatprep.subr.mxu0 0.0
        %3211 = vmatpush1.msra.mxu0 0.0
        %3212 = vmatprep.subr.mxu0 0.0
        %3213 = vmatpush1.msra.mxu0 0.0
        %3214 = vmatprep.subr.mxu0 0.0
        %3215 = vmatpush1.msra.mxu0 0.0
        %3216 = vmatprep.subr.mxu0 0.0
        %3217 = vmatpush1.msra.mxu0 0.0
        %3218 = vmatprep.subr.mxu0 0.0
        %3219 = vmatpush1.msra.mxu0 0.0
        %3220 = vmatprep.subr.mxu0 0.0
        %3221 = vmatpush1.msra.mxu0 0.0
        %3222 = vmatprep.subr.mxu0 0.0
        %3223 = vmatpush1.msra.mxu0 0.0
        %3224 = vmatprep.subr.mxu0 0.0
        %3225 = vmatpush1.msra.mxu0 0.0
        %3226 = vmatprep.subr.mxu0 0.0
        %3227 = vmatpush1.msra.mxu0 0.0
        %3228 = vmatprep.subr.mxu0 0.0
        %3229 = vmatpush1.msra.mxu0 0.0
        %3230 = vmatprep.subr.mxu0 0.0
        %3231 = vmatpush1.msra.mxu0 0.0
        %3232 = vmatprep.subr.mxu0 0.0
        %3233 = vmatpush1.msra.mxu0 0.0
        %3234 = vmatprep.mubr.f32.mxu0 0.0
        %3235 = vmatmul.mubr.f32.gmra.mrb[0].mxu0 %v3093
        %v3236 = vpop.f32.mrb[0].mxu0
        %v3237 = vadd.f32 0.0, %v3236
        %v3238 = vpop.f32.mrb[0].mxu0
        %v3239 = vadd.f32 0.0, %v3238
        %3240 = vmatprep.mubr.f32.mxu0 0.0
        %3241 = vmatmul.mubr.f32.gmra.mrb[0].mxu0 %v3096
        %v3242 = vpop.f32.mrb[0].mxu0
        %v3243 = vadd.f32 0.0, %v3242
        %v3244 = vpop.f32.mrb[0].mxu0
        %v3245 = vadd.f32 0.0, %v3244
        %3246 = vmatprep.mubr.f32.mxu0 0.0
        %3247 = vmatmul.mubr.f32.gmra.mrb[0].mxu0 %v3099
        %v3248 = vpop.f32.mrb[0].mxu0
        %v3249 = vadd.f32 0.0, %v3248
        %v3250 = vpop.f32.mrb[0].mxu0
        %v3251 = vadd.f32 0.0, %v3250
        %3252 = vmatprep.mubr.f32.mxu0 0.0
        %3253 = vmatmul.mubr.f32.gmra.mrb[0].mxu0 %v3102
        %v3254 = vpop.f32.mrb[0].mxu0
        %v3255 = vadd.f32 0.0, %v3254
        %v3256 = vpop.f32.mrb[0].mxu0
        %v3257 = vadd.f32 0.0, %v3256
        %3258 = vmatprep.mubr.f32.mxu0 0.0
        %3259 = vmatmul.mubr.f32.gmra.mrb[0].mxu0 %v3105
        %v3260 = vpop.f32.mrb[0].mxu0
        %v3261 = vadd.f32 0.0, %v3260
        %v3262 = vpop.f32.mrb[0].mxu0
        %v3263 = vadd.f32 0.0, %v3262
        %3264 = vmatprep.mubr.f32.mxu0 0.0
        %3265 = vmatmul.mubr.f32.gmra.mrb[0].mxu0 %v3108
        %v3266 = vpop.f32.mrb[0].mxu0
        %v3267 = vadd.f32 0.0, %v3266
        %v3268 = vpop.f32.mrb[0].mxu0
        %v3269 = vadd.f32 0.0, %v3268
        %3270 = vmatprep.mubr.f32.mxu0 0.0
        %3271 = vmatmul.mubr.f32.gmra.mrb[0].mxu0 %v3111
        %v3272 = vpop.f32.mrb[0].mxu0
        %v3273 = vadd.f32 0.0, %v3272
        %v3274 = vpop.f32.mrb[0].mxu0
        %v3275 = vadd.f32 0.0, %v3274
        %3276 = vmatprep.mubr.f32.mxu0 0.0
        %3277 = vmatmul.mubr.f32.gmra.mrb[0].mxu0 %v3114
        %v3278 = vpop.f32.mrb[0].mxu0
        %v3279 = vadd.f32 0.0, %v3278
        %v3280 = vpop.f32.mrb[0].mxu0
        %v3281 = vadd.f32 0.0, %v3280
        %3282 = vmatprep.mubr.f32.mxu0 0.0
        %3283 = vmatmul.mubr.f32.gmra.mrb[0].mxu0 %v3117
        %v3284 = vpop.f32.mrb[0].mxu0
        %v3285 = vadd.f32 0.0, %v3284
        %v3286 = vpop.f32.mrb[0].mxu0
        %v3287 = vadd.f32 0.0, %v3286
        %3288 = vmatprep.mubr.f32.mxu0 0.0
        %3289 = vmatmul.mubr.f32.gmra.mrb[0].mxu0 %v3120
        %v3290 = vpop.f32.mrb[0].mxu0
        %v3291 = vadd.f32 0.0, %v3290
        %v3292 = vpop.f32.mrb[0].mxu0
        %v3293 = vadd.f32 0.0, %v3292
        %3294 = vmatprep.mubr.f32.mxu0 0.0
        %3295 = vmatmul.mubr.f32.gmra.mrb[0].mxu0 %v3123
        %v3296 = vpop.f32.mrb[0].mxu0
        %v3297 = vadd.f32 0.0, %v3296
        %v3298 = vpop.f32.mrb[0].mxu0
        %v3299 = vadd.f32 0.0, %v3298
        %3300 = vmatprep.mubr.f32.mxu0 0.0
        %3301 = vmatmul.mubr.f32.gmra.mrb[0].mxu0 %v3126
        %v3302 = vpop.f32.mrb[0].mxu0
        %v3303 = vadd.f32 0.0, %v3302
        %v3304 = vpop.f32.mrb[0].mxu0
        %v3305 = vadd.f32 0.0, %v3304
        %3306 = vmatprep.mubr.f32.mxu0 0.0
        %3307 = vmatmul.mubr.f32.gmra.mrb[0].mxu0 %v3129
        %v3308 = vpop.f32.mrb[0].mxu0
        %v3309 = vadd.f32 0.0, %v3308
        %v3310 = vpop.f32.mrb[0].mxu0
        %v3311 = vadd.f32 0.0, %v3310
        %3312 = vmatprep.mubr.f32.mxu0 0.0
        %3313 = vmatmul.mubr.f32.gmra.mrb[0].mxu0 %v3132
        %v3314 = vpop.f32.mrb[0].mxu0
        %v3315 = vadd.f32 0.0, %v3314
        %v3316 = vpop.f32.mrb[0].mxu0
        %v3317 = vadd.f32 0.0, %v3316
        %3318 = vmatprep.mubr.f32.mxu0 0.0
        %3319 = vmatmul.mubr.f32.gmra.mrb[0].mxu0 %v3135
        %v3320 = vpop.f32.mrb[0].mxu0
        %v3321 = vadd.f32 0.0, %v3320
        %v3322 = vpop.f32.mrb[0].mxu0
        %v3323 = vadd.f32 0.0, %v3322
        %3324 = vmatprep.mubr.f32.mxu0 0.0
        %3325 = vmatmul.mubr.f32.gmra.mrb[0].mxu0 %v3138
        %v3326 = vpop.f32.mrb[0].mxu0
        %v3327 = vadd.f32 0.0, %v3326
        %v3328 = vpop.f32.mrb[0].mxu0
        %v3329 = vadd.f32 0.0, %v3328
        %3330 = vmatprep.mubr.f32.mxu0 0.0
        %3331 = vmatmul.mubr.f32.gmra.mrb[0].mxu0 %v3141
        %v3332 = vpop.f32.mrb[0].mxu0
        %v3333 = vadd.f32 0.0, %v3332
        %v3334 = vpop.f32.mrb[0].mxu0
        %v3335 = vadd.f32 0.0, %v3334
        %3336 = vmatprep.mubr.f32.mxu0 0.0
        %3337 = vmatmul.mubr.f32.gmra.mrb[0].mxu0 %v3144
        %v3338 = vpop.f32.mrb[0].mxu0
        %v3339 = vadd.f32 0.0, %v3338
        %v3340 = vpop.f32.mrb[0].mxu0
        %v3341 = vadd.f32 0.0, %v3340
        %3342 = vmatprep.mubr.f32.mxu0 0.0
        %3343 = vmatmul.mubr.f32.gmra.mrb[0].mxu0 %v3147
        %v3344 = vpop.f32.mrb[0].mxu0
        %v3345 = vadd.f32 0.0, %v3344
        %v3346 = vpop.f32.mrb[0].mxu0
        %v3347 = vadd.f32 0.0, %v3346
        %3348 = vmatprep.mubr.f32.mxu0 0.0
        %3349 = vmatmul.mubr.f32.gmra.mrb[0].mxu0 %v3150
        %v3350 = vpop.f32.mrb[0].mxu0
        %v3351 = vadd.f32 0.0, %v3350
        %v3352 = vpop.f32.mrb[0].mxu0
        %v3353 = vadd.f32 0.0, %v3352
        %3354 = vmatprep.mubr.f32.mxu0 0.0
        %3355 = vmatmul.mubr.f32.gmra.mrb[0].mxu0 %v3153
        %v3356 = vpop.f32.mrb[0].mxu0
        %v3357 = vadd.f32 0.0, %v3356
        %v3358 = vpop.f32.mrb[0].mxu0
        %v3359 = vadd.f32 0.0, %v3358
        %3360 = vmatprep.mubr.f32.mxu0 0.0
        %3361 = vmatmul.mubr.f32.gmra.mrb[0].mxu0 %v3156
        %v3362 = vpop.f32.mrb[0].mxu0
        %v3363 = vadd.f32 0.0, %v3362
        %v3364 = vpop.f32.mrb[0].mxu0
        %v3365 = vadd.f32 0.0, %v3364
        %3366 = vmatprep.mubr.f32.mxu0 0.0
        %3367 = vmatmul.mubr.f32.gmra.mrb[0].mxu0 %v3159
        %v3368 = vpop.f32.mrb[0].mxu0
        %v3369 = vadd.f32 0.0, %v3368
        %v3370 = vpop.f32.mrb[0].mxu0
        %v3371 = vadd.f32 0.0, %v3370
        %3372 = vmatprep.mubr.f32.mxu0 0.0
        %3373 = vmatmul.mubr.f32.gmra.mrb[0].mxu0 %v3162
        %v3374 = vpop.f32.mrb[0].mxu0
        %v3375 = vadd.f32 0.0, %v3374
        %v3376 = vpop.f32.mrb[0].mxu0
        %v3377 = vadd.f32 0.0, %v3376
        %3378 = vdwg.mxu0
        %v3379 = vadd.f32 %v2729, %v3237
        %v3380 = vadd.f32 %v2730, %v3239
        %v3381 = vadd.f32 %v2731, %v3243
        %v3382 = vadd.f32 %v2732, %v3245
        %v3383 = vadd.f32 %v2733, %v3249
        %v3384 = vadd.f32 %v2734, %v3251
        %v3385 = vadd.f32 %v2735, %v3255
        %v3386 = vadd.f32 %v2736, %v3257
        %v3387 = vadd.f32 %v2737, %v3261
        %v3388 = vadd.f32 %v2738, %v3263
        %v3389 = vadd.f32 %v2739, %v3267
        %v3390 = vadd.f32 %v2740, %v3269
        %v3391 = vadd.f32 %v2741, %v3273
        %v3392 = vadd.f32 %v2742, %v3275
        %v3393 = vadd.f32 %v2743, %v3279
        %v3394 = vadd.f32 %v2744, %v3281
        %v3395 = vadd.f32 %v2745, %v3285
        %v3396 = vadd.f32 %v2746, %v3287
        %v3397 = vadd.f32 %v2747, %v3291
        %v3398 = vadd.f32 %v2748, %v3293
        %v3399 = vadd.f32 %v2749, %v3297
        %v3400 = vadd.f32 %v2750, %v3299
        %v3401 = vadd.f32 %v2751, %v3303
        %v3402 = vadd.f32 %v2752, %v3305
        %v3403 = vadd.f32 %v2753, %v3309
        %v3404 = vadd.f32 %v2754, %v3311
        %v3405 = vadd.f32 %v2755, %v3315
        %v3406 = vadd.f32 %v2756, %v3317
        %v3407 = vadd.f32 %v2757, %v3321
        %v3408 = vadd.f32 %v2758, %v3323
        %v3409 = vadd.f32 %v2759, %v3327
        %v3410 = vadd.f32 %v2760, %v3329
        %v3411 = vadd.f32 %v2761, %v3333
        %v3412 = vadd.f32 %v2762, %v3335
        %v3413 = vadd.f32 %v2763, %v3339
        %v3414 = vadd.f32 %v2764, %v3341
        %v3415 = vadd.f32 %v2765, %v3345
        %v3416 = vadd.f32 %v2766, %v3347
        %v3417 = vadd.f32 %v2767, %v3351
        %v3418 = vadd.f32 %v2768, %v3353
        %v3419 = vadd.f32 %v2769, %v3357
        %v3420 = vadd.f32 %v2770, %v3359
        %v3421 = vadd.f32 %v2771, %v3363
        %v3422 = vadd.f32 %v2772, %v3365
        %v3423 = vadd.f32 %v2773, %v3369
        %v3424 = vadd.f32 %v2774, %v3371
        %v3425 = vadd.f32 %v2775, %v3375
        %v3426 = vadd.f32 %v2776, %v3377
        %s3427 = scalar_lea.vmem %s1, 1536
        %v3428 = vld [vmem:[%s3427] sm:$0xff]
        %v3429 = vld [vmem:[%s3427 + $0x8] sm:$0xff]
        %v3430 = vld [vmem:[%s3427 + $0x10] sm:$0xff]
        %v3431 = vld [vmem:[%s3427 + $0x18] sm:$0xff]
        %v3432 = vld [vmem:[%s3427 + $0x20] sm:$0xff]
        %v3433 = vld [vmem:[%s3427 + $0x28] sm:$0xff]
        %v3434 = vld [vmem:[%s3427 + $0x30] sm:$0xff]
        %v3435 = vld [vmem:[%s3427 + $0x38] sm:$0xff]
        %v3436 = vld [vmem:[%s3427 + $0x40] sm:$0xff]
        %v3437 = vld [vmem:[%s3427 + $0x48] sm:$0xff]
        %v3438 = vld [vmem:[%s3427 + $0x50] sm:$0xff]
        %v3439 = vld [vmem:[%s3427 + $0x58] sm:$0xff]
        %v3440 = vld [vmem:[%s3427 + $0x60] sm:$0xff]
        %v3441 = vld [vmem:[%s3427 + $0x68] sm:$0xff]
        %v3442 = vld [vmem:[%s3427 + $0x70] sm:$0xff]
        %v3443 = vld [vmem:[%s3427 + $0x78] sm:$0xff]
        %v3444 = vld [vmem:[%s3427 + $0x80] sm:$0xff]
        %v3445 = vld [vmem:[%s3427 + $0x88] sm:$0xff]
        %v3446 = vld [vmem:[%s3427 + $0x90] sm:$0xff]
        %v3447 = vld [vmem:[%s3427 + $0x98] sm:$0xff]
        %v3448 = vld [vmem:[%s3427 + $0xa0] sm:$0xff]
        %v3449 = vld [vmem:[%s3427 + $0xa8] sm:$0xff]
        %v3450 = vld [vmem:[%s3427 + $0xb0] sm:$0xff]
        %v3451 = vld [vmem:[%s3427 + $0xb8] sm:$0xff]
        %v3452 = vld [vmem:[%s3427 + $0xc0] sm:$0xff]
        %v3453 = vld [vmem:[%s3427 + $0xc8] sm:$0xff]
        %v3454 = vld [vmem:[%s3427 + $0xd0] sm:$0xff]
        %v3455 = vld [vmem:[%s3427 + $0xd8] sm:$0xff]
        %v3456 = vld [vmem:[%s3427 + $0xe0] sm:$0xff]
        %v3457 = vld [vmem:[%s3427 + $0xe8] sm:$0xff]
        %v3458 = vld [vmem:[%s3427 + $0xf0] sm:$0xff]
        %v3459 = vld [vmem:[%s3427 + $0xf8] sm:$0xff]
        %v3460 = vld [vmem:[%s3427 + $0x100] sm:$0xff]
        %v3461 = vld [vmem:[%s3427 + $0x108] sm:$0xff]
        %v3462 = vld [vmem:[%s3427 + $0x110] sm:$0xff]
        %v3463 = vld [vmem:[%s3427 + $0x118] sm:$0xff]
        %v3464 = vld [vmem:[%s3427 + $0x120] sm:$0xff]
        %v3465 = vld [vmem:[%s3427 + $0x128] sm:$0xff]
        %v3466 = vld [vmem:[%s3427 + $0x130] sm:$0xff]
        %v3467 = vld [vmem:[%s3427 + $0x138] sm:$0xff]
        %v3468 = vld [vmem:[%s3427 + $0x140] sm:$0xff]
        %v3469 = vld [vmem:[%s3427 + $0x148] sm:$0xff]
        %v3470 = vld [vmem:[%s3427 + $0x150] sm:$0xff]
        %v3471 = vld [vmem:[%s3427 + $0x158] sm:$0xff]
        %v3472 = vld [vmem:[%s3427 + $0x160] sm:$0xff]
        %v3473 = vld [vmem:[%s3427 + $0x168] sm:$0xff]
        %v3474 = vld [vmem:[%s3427 + $0x170] sm:$0xff]
        %v3475 = vld [vmem:[%s3427 + $0x178] sm:$0xff]
        %v3477 = vsel %vm863, %v3429, 0
        %v3480 = vsel %vm863, %v3431, 0
        %v3483 = vsel %vm863, %v3433, 0
        %v3486 = vsel %vm863, %v3435, 0
        %v3489 = vsel %vm863, %v3437, 0
        %v3492 = vsel %vm863, %v3439, 0
        %v3495 = vsel %vm863, %v3441, 0
        %v3498 = vsel %vm863, %v3443, 0
        %v3501 = vsel %vm863, %v3445, 0
        %v3504 = vsel %vm863, %v3447, 0
        %v3507 = vsel %vm863, %v3449, 0
        %v3510 = vsel %vm863, %v3451, 0
        %v3513 = vsel %vm863, %v3453, 0
        %v3516 = vsel %vm863, %v3455, 0
        %v3519 = vsel %vm863, %v3457, 0
        %v3522 = vsel %vm863, %v3459, 0
        %v3525 = vsel %vm863, %v3461, 0
        %v3528 = vsel %vm863, %v3463, 0
        %v3531 = vsel %vm863, %v3465, 0
        %v3534 = vsel %vm863, %v3467, 0
        %v3537 = vsel %vm863, %v3469, 0
        %v3540 = vsel %vm863, %v3471, 0
        %v3543 = vsel %vm863, %v3473, 0
        %v3546 = vsel %vm863, %v3475, 0
        %3548 = vmatprep.subr.mxu0 0.0
        %3549 = vmatpush1.msra.mxu0 %v786
        %3550 = vmatprep.subr.mxu0 0.0
        %3551 = vmatpush1.msra.mxu0 %v787
        %3552 = vmatprep.subr.mxu0 0.0
        %3553 = vmatpush1.msra.mxu0 %v788
        %3554 = vmatprep.subr.mxu0 0.0
        %3555 = vmatpush1.msra.mxu0 %v789
        %3556 = vmatprep.subr.mxu0 0.0
        %3557 = vmatpush1.msra.mxu0 %v790
        %3558 = vmatprep.subr.mxu0 0.0
        %3559 = vmatpush1.msra.mxu0 %v791
        %3560 = vmatprep.subr.mxu0 0.0
        %3561 = vmatpush1.msra.mxu0 %v792
        %3562 = vmatprep.subr.mxu0 0.0
        %3563 = vmatpush1.msra.mxu0 %v793
        %3564 = vmatprep.subr.mxu0 0.0
        %3565 = vmatpush1.msra.mxu0 %v794
        %3566 = vmatprep.subr.mxu0 0.0
        %3567 = vmatpush1.msra.mxu0 %v795
        %3568 = vmatprep.subr.mxu0 0.0
        %3569 = vmatpush1.msra.mxu0 %v796
        %3570 = vmatprep.subr.mxu0 0.0
        %3571 = vmatpush1.msra.mxu0 %v797
        %3572 = vmatprep.subr.mxu0 0.0
        %3573 = vmatpush1.msra.mxu0 %v798
        %3574 = vmatprep.subr.mxu0 0.0
        %3575 = vmatpush1.msra.mxu0 %v799
        %3576 = vmatprep.subr.mxu0 0.0
        %3577 = vmatpush1.msra.mxu0 %v800
        %3578 = vmatprep.subr.mxu0 0.0
        %3579 = vmatpush1.msra.mxu0 %v801
        %3580 = vmatprep.subr.mxu0 0.0
        %3581 = vmatpush1.msra.mxu0 %v802
        %3582 = vmatprep.subr.mxu0 0.0
        %3583 = vmatpush1.msra.mxu0 %v803
        %3584 = vmatprep.subr.mxu0 0.0
        %3585 = vmatpush1.msra.mxu0 %v804
        %3586 = vmatprep.subr.mxu0 0.0
        %3587 = vmatpush1.msra.mxu0 %v805
        %3588 = vmatprep.subr.mxu0 0.0
        %3589 = vmatpush1.msra.mxu0 %v806
        %3590 = vmatprep.subr.mxu0 0.0
        %3591 = vmatpush1.msra.mxu0 %v807
        %3592 = vmatprep.subr.mxu0 0.0
        %3593 = vmatpush1.msra.mxu0 %v808
        %3594 = vmatprep.subr.mxu0 0.0
        %3595 = vmatpush1.msra.mxu0 %v809
        %3596 = vmatprep.subr.mxu0 0.0
        %3597 = vmatpush1.msra.mxu0 %v810
        %3598 = vmatprep.subr.mxu0 0.0
        %3599 = vmatpush1.msra.mxu0 %v811
        %3600 = vmatprep.subr.mxu0 0.0
        %3601 = vmatpush1.msra.mxu0 %v812
        %3602 = vmatprep.subr.mxu0 0.0
        %3603 = vmatpush1.msra.mxu0 %v813
        %3604 = vmatprep.subr.mxu0 0.0
        %3605 = vmatpush1.msra.mxu0 0.0
        %3606 = vmatprep.subr.mxu0 0.0
        %3607 = vmatpush1.msra.mxu0 0.0
        %3608 = vmatprep.subr.mxu0 0.0
        %3609 = vmatpush1.msra.mxu0 0.0
        %3610 = vmatprep.subr.mxu0 0.0
        %3611 = vmatpush1.msra.mxu0 0.0
        %3612 = vmatprep.mubr.f32.mxu0 %v3477
        %3613 = vmatmul.mubr.f32.gmra.mrb[0].mxu0 %v3428
        %v3614 = vpop.f32.mrb[0].mxu0
        %v3615 = vadd.f32 0.0, %v3614
        %v3616 = vpop.f32.mrb[0].mxu0
        %3617 = vmatprep.mubr.f32.mxu0 %v3480
        %3618 = vmatmul.mubr.f32.gmra.mrb[0].mxu0 %v3430
        %v3619 = vpop.f32.mrb[0].mxu0
        %v3620 = vadd.f32 0.0, %v3619
        %v3621 = vpop.f32.mrb[0].mxu0
        %3622 = vmatprep.mubr.f32.mxu0 %v3483
        %3623 = vmatmul.mubr.f32.gmra.mrb[0].mxu0 %v3432
        %v3624 = vpop.f32.mrb[0].mxu0
        %v3625 = vadd.f32 0.0, %v3624
        %v3626 = vpop.f32.mrb[0].mxu0
        %3627 = vmatprep.mubr.f32.mxu0 %v3486
        %3628 = vmatmul.mubr.f32.gmra.mrb[0].mxu0 %v3434
        %v3629 = vpop.f32.mrb[0].mxu0
        %v3630 = vadd.f32 0.0, %v3629
        %v3631 = vpop.f32.mrb[0].mxu0
        %3632 = vmatprep.mubr.f32.mxu0 %v3489
        %3633 = vmatmul.mubr.f32.gmra.mrb[0].mxu0 %v3436
        %v3634 = vpop.f32.mrb[0].mxu0
        %v3635 = vadd.f32 0.0, %v3634
        %v3636 = vpop.f32.mrb[0].mxu0
        %3637 = vmatprep.mubr.f32.mxu0 %v3492
        %3638 = vmatmul.mubr.f32.gmra.mrb[0].mxu0 %v3438
        %v3639 = vpop.f32.mrb[0].mxu0
        %v3640 = vadd.f32 0.0, %v3639
        %v3641 = vpop.f32.mrb[0].mxu0
        %3642 = vmatprep.mubr.f32.mxu0 %v3495
        %3643 = vmatmul.mubr.f32.gmra.mrb[0].mxu0 %v3440
        %v3644 = vpop.f32.mrb[0].mxu0
        %v3645 = vadd.f32 0.0, %v3644
        %v3646 = vpop.f32.mrb[0].mxu0
        %3647 = vmatprep.mubr.f32.mxu0 %v3498
        %3648 = vmatmul.mubr.f32.gmra.mrb[0].mxu0 %v3442
        %v3649 = vpop.f32.mrb[0].mxu0
        %v3650 = vadd.f32 0.0, %v3649
        %v3651 = vpop.f32.mrb[0].mxu0
        %3652 = vmatprep.mubr.f32.mxu0 %v3501
        %3653 = vmatmul.mubr.f32.gmra.mrb[0].mxu0 %v3444
        %v3654 = vpop.f32.mrb[0].mxu0
        %v3655 = vadd.f32 0.0, %v3654
        %v3656 = vpop.f32.mrb[0].mxu0
        %3657 = vmatprep.mubr.f32.mxu0 %v3504
        %3658 = vmatmul.mubr.f32.gmra.mrb[0].mxu0 %v3446
        %v3659 = vpop.f32.mrb[0].mxu0
        %v3660 = vadd.f32 0.0, %v3659
        %v3661 = vpop.f32.mrb[0].mxu0
        %3662 = vmatprep.mubr.f32.mxu0 %v3507
        %3663 = vmatmul.mubr.f32.gmra.mrb[0].mxu0 %v3448
        %v3664 = vpop.f32.mrb[0].mxu0
        %v3665 = vadd.f32 0.0, %v3664
        %v3666 = vpop.f32.mrb[0].mxu0
        %3667 = vmatprep.mubr.f32.mxu0 %v3510
        %3668 = vmatmul.mubr.f32.gmra.mrb[0].mxu0 %v3450
        %v3669 = vpop.f32.mrb[0].mxu0
        %v3670 = vadd.f32 0.0, %v3669
        %v3671 = vpop.f32.mrb[0].mxu0
        %3672 = vmatprep.mubr.f32.mxu0 %v3513
        %3673 = vmatmul.mubr.f32.gmra.mrb[0].mxu0 %v3452
        %v3674 = vpop.f32.mrb[0].mxu0
        %v3675 = vadd.f32 0.0, %v3674
        %v3676 = vpop.f32.mrb[0].mxu0
        %3677 = vmatprep.mubr.f32.mxu0 %v3516
        %3678 = vmatmul.mubr.f32.gmra.mrb[0].mxu0 %v3454
        %v3679 = vpop.f32.mrb[0].mxu0
        %v3680 = vadd.f32 0.0, %v3679
        %v3681 = vpop.f32.mrb[0].mxu0
        %3682 = vmatprep.mubr.f32.mxu0 %v3519
        %3683 = vmatmul.mubr.f32.gmra.mrb[0].mxu0 %v3456
        %v3684 = vpop.f32.mrb[0].mxu0
        %v3685 = vadd.f32 0.0, %v3684
        %v3686 = vpop.f32.mrb[0].mxu0
        %3687 = vmatprep.mubr.f32.mxu0 %v3522
        %3688 = vmatmul.mubr.f32.gmra.mrb[0].mxu0 %v3458
        %v3689 = vpop.f32.mrb[0].mxu0
        %v3690 = vadd.f32 0.0, %v3689
        %v3691 = vpop.f32.mrb[0].mxu0
        %3692 = vmatprep.mubr.f32.mxu0 %v3525
        %3693 = vmatmul.mubr.f32.gmra.mrb[0].mxu0 %v3460
        %v3694 = vpop.f32.mrb[0].mxu0
        %v3695 = vadd.f32 0.0, %v3694
        %v3696 = vpop.f32.mrb[0].mxu0
        %3697 = vmatprep.mubr.f32.mxu0 %v3528
        %3698 = vmatmul.mubr.f32.gmra.mrb[0].mxu0 %v3462
        %v3699 = vpop.f32.mrb[0].mxu0
        %v3700 = vadd.f32 0.0, %v3699
        %v3701 = vpop.f32.mrb[0].mxu0
        %3702 = vmatprep.mubr.f32.mxu0 %v3531
        %3703 = vmatmul.mubr.f32.gmra.mrb[0].mxu0 %v3464
        %v3704 = vpop.f32.mrb[0].mxu0
        %v3705 = vadd.f32 0.0, %v3704
        %v3706 = vpop.f32.mrb[0].mxu0
        %3707 = vmatprep.mubr.f32.mxu0 %v3534
        %3708 = vmatmul.mubr.f32.gmra.mrb[0].mxu0 %v3466
        %v3709 = vpop.f32.mrb[0].mxu0
        %v3710 = vadd.f32 0.0, %v3709
        %v3711 = vpop.f32.mrb[0].mxu0
        %3712 = vmatprep.mubr.f32.mxu0 %v3537
        %3713 = vmatmul.mubr.f32.gmra.mrb[0].mxu0 %v3468
        %v3714 = vpop.f32.mrb[0].mxu0
        %v3715 = vadd.f32 0.0, %v3714
        %v3716 = vpop.f32.mrb[0].mxu0
        %3717 = vmatprep.mubr.f32.mxu0 %v3540
        %3718 = vmatmul.mubr.f32.gmra.mrb[0].mxu0 %v3470
        %v3719 = vpop.f32.mrb[0].mxu0
        %v3720 = vadd.f32 0.0, %v3719
        %v3721 = vpop.f32.mrb[0].mxu0
        %3722 = vmatprep.mubr.f32.mxu0 %v3543
        %3723 = vmatmul.mubr.f32.gmra.mrb[0].mxu0 %v3472
        %v3724 = vpop.f32.mrb[0].mxu0
        %v3725 = vadd.f32 0.0, %v3724
        %v3726 = vpop.f32.mrb[0].mxu0
        %3727 = vmatprep.mubr.f32.mxu0 %v3546
        %3728 = vmatmul.mubr.f32.gmra.mrb[0].mxu0 %v3474
        %v3729 = vpop.f32.mrb[0].mxu0
        %v3730 = vadd.f32 0.0, %v3729
        %v3731 = vpop.f32.mrb[0].mxu0
        %3732 = vdwg.mxu0
        %s3733 = scalar_lea.vmem %s2, 256
        %v3734 = vld [vmem:[%s3733] sm:$0xff]
        %v3735 = vld [vmem:[%s3733 + $0x8] sm:$0xff]
        %v3736 = vld [vmem:[%s3733 + $0x10] sm:$0xff]
        %v3737 = vld [vmem:[%s3733 + $0x18] sm:$0xff]
        %v3738 = vld [vmem:[%s3733 + $0x20] sm:$0xff]
        %v3739 = vld [vmem:[%s3733 + $0x28] sm:$0xff]
        %v3740 = vld [vmem:[%s3733 + $0x30] sm:$0xf]
        %v3741 = vld [vmem:[%s3733 + $0x38] sm:$0xf]
        %v3743 = vsel %vm1129, %v3615, 0
        %v3746 = vsel %vm1129, %v3620, 0
        %v3749 = vsel %vm1129, %v3625, 0
        %v3752 = vsel %vm1129, %v3630, 0
        %v3755 = vsel %vm1129, %v3635, 0
        %v3758 = vsel %vm1129, %v3640, 0
        %v3761 = vsel %vm1129, %v3645, 0
        %v3764 = vsel %vm1129, %v3650, 0
        %v3767 = vsel %vm1129, %v3655, 0
        %v3770 = vsel %vm1129, %v3660, 0
        %v3773 = vsel %vm1129, %v3665, 0
        %v3776 = vsel %vm1129, %v3670, 0
        %v3779 = vsel %vm1129, %v3675, 0
        %v3782 = vsel %vm1129, %v3680, 0
        %v3785 = vsel %vm1129, %v3685, 0
        %v3788 = vsel %vm1129, %v3690, 0
        %v3791 = vsel %vm1129, %v3695, 0
        %v3794 = vsel %vm1129, %v3700, 0
        %v3797 = vsel %vm1129, %v3705, 0
        %v3800 = vsel %vm1129, %v3710, 0
        %v3803 = vsel %vm1129, %v3715, 0
        %v3806 = vsel %vm1129, %v3720, 0
        %v3809 = vsel %vm1129, %v3725, 0
        %v3812 = vsel %vm1129, %v3730, 0
        %v3815 = vsel %vm1202, %v3740, 0
        %v3818 = vsel %vm1202, %v3741, 0
        %3820 = vmatprep.subr.mxu0 %v3735
        %3821 = vmatpush1.msra.mxu0 %v3734
        %3822 = vmatprep.subr.mxu0 %v3737
        %3823 = vmatpush1.msra.mxu0 %v3736
        %3824 = vmatprep.subr.mxu0 %v3739
        %3825 = vmatpush1.msra.mxu0 %v3738
        %3826 = vmatprep.subr.mxu0 %v3818
        %3827 = vmatpush1.msra.mxu0 %v3815
        %3828 = vmatprep.subr.mxu0 0.0
        %3829 = vmatpush1.msra.mxu0 0.0
        %3830 = vmatprep.subr.mxu0 0.0
        %3831 = vmatpush1.msra.mxu0 0.0
        %3832 = vmatprep.subr.mxu0 0.0
        %3833 = vmatpush1.msra.mxu0 0.0
        %3834 = vmatprep.subr.mxu0 0.0
        %3835 = vmatpush1.msra.mxu0 0.0
        %3836 = vmatprep.subr.mxu0 0.0
        %3837 = vmatpush1.msra.mxu0 0.0
        %3838 = vmatprep.subr.mxu0 0.0
        %3839 = vmatpush1.msra.mxu0 0.0
        %3840 = vmatprep.subr.mxu0 0.0
        %3841 = vmatpush1.msra.mxu0 0.0
        %3842 = vmatprep.subr.mxu0 0.0
        %3843 = vmatpush1.msra.mxu0 0.0
        %3844 = vmatprep.subr.mxu0 0.0
        %3845 = vmatpush1.msra.mxu0 0.0
        %3846 = vmatprep.subr.mxu0 0.0
        %3847 = vmatpush1.msra.mxu0 0.0
        %3848 = vmatprep.subr.mxu0 0.0
        %3849 = vmatpush1.msra.mxu0 0.0
        %3850 = vmatprep.subr.mxu0 0.0
        %3851 = vmatpush1.msra.mxu0 0.0
        %3852 = vmatprep.subr.mxu0 0.0
        %3853 = vmatpush1.msra.mxu0 0.0
        %3854 = vmatprep.subr.mxu0 0.0
        %3855 = vmatpush1.msra.mxu0 0.0
        %3856 = vmatprep.subr.mxu0 0.0
        %3857 = vmatpush1.msra.mxu0 0.0
        %3858 = vmatprep.subr.mxu0 0.0
        %3859 = vmatpush1.msra.mxu0 0.0
        %3860 = vmatprep.subr.mxu0 0.0
        %3861 = vmatpush1.msra.mxu0 0.0
        %3862 = vmatprep.subr.mxu0 0.0
        %3863 = vmatpush1.msra.mxu0 0.0
        %3864 = vmatprep.subr.mxu0 0.0
        %3865 = vmatpush1.msra.mxu0 0.0
        %3866 = vmatprep.subr.mxu0 0.0
        %3867 = vmatpush1.msra.mxu0 0.0
        %3868 = vmatprep.subr.mxu0 0.0
        %3869 = vmatpush1.msra.mxu0 0.0
        %3870 = vmatprep.subr.mxu0 0.0
        %3871 = vmatpush1.msra.mxu0 0.0
        %3872 = vmatprep.subr.mxu0 0.0
        %3873 = vmatpush1.msra.mxu0 0.0
        %3874 = vmatprep.subr.mxu0 0.0
        %3875 = vmatpush1.msra.mxu0 0.0
        %3876 = vmatprep.subr.mxu0 0.0
        %3877 = vmatpush1.msra.mxu0 0.0
        %3878 = vmatprep.subr.mxu0 0.0
        %3879 = vmatpush1.msra.mxu0 0.0
        %3880 = vmatprep.subr.mxu0 0.0
        %3881 = vmatpush1.msra.mxu0 0.0
        %3882 = vmatprep.subr.mxu0 0.0
        %3883 = vmatpush1.msra.mxu0 0.0
        %3884 = vmatprep.mubr.f32.mxu0 0.0
        %3885 = vmatmul.mubr.f32.gmra.mrb[0].mxu0 %v3743
        %v3886 = vpop.f32.mrb[0].mxu0
        %v3887 = vadd.f32 0.0, %v3886
        %v3888 = vpop.f32.mrb[0].mxu0
        %v3889 = vadd.f32 0.0, %v3888
        %3890 = vmatprep.mubr.f32.mxu0 0.0
        %3891 = vmatmul.mubr.f32.gmra.mrb[0].mxu0 %v3746
        %v3892 = vpop.f32.mrb[0].mxu0
        %v3893 = vadd.f32 0.0, %v3892
        %v3894 = vpop.f32.mrb[0].mxu0
        %v3895 = vadd.f32 0.0, %v3894
        %3896 = vmatprep.mubr.f32.mxu0 0.0
        %3897 = vmatmul.mubr.f32.gmra.mrb[0].mxu0 %v3749
        %v3898 = vpop.f32.mrb[0].mxu0
        %v3899 = vadd.f32 0.0, %v3898
        %v3900 = vpop.f32.mrb[0].mxu0
        %v3901 = vadd.f32 0.0, %v3900
        %3902 = vmatprep.mubr.f32.mxu0 0.0
        %3903 = vmatmul.mubr.f32.gmra.mrb[0].mxu0 %v3752
        %v3904 = vpop.f32.mrb[0].mxu0
        %v3905 = vadd.f32 0.0, %v3904
        %v3906 = vpop.f32.mrb[0].mxu0
        %v3907 = vadd.f32 0.0, %v3906
        %3908 = vmatprep.mubr.f32.mxu0 0.0
        %3909 = vmatmul.mubr.f32.gmra.mrb[0].mxu0 %v3755
        %v3910 = vpop.f32.mrb[0].mxu0
        %v3911 = vadd.f32 0.0, %v3910
        %v3912 = vpop.f32.mrb[0].mxu0
        %v3913 = vadd.f32 0.0, %v3912
        %3914 = vmatprep.mubr.f32.mxu0 0.0
        %3915 = vmatmul.mubr.f32.gmra.mrb[0].mxu0 %v3758
        %v3916 = vpop.f32.mrb[0].mxu0
        %v3917 = vadd.f32 0.0, %v3916
        %v3918 = vpop.f32.mrb[0].mxu0
        %v3919 = vadd.f32 0.0, %v3918
        %3920 = vmatprep.mubr.f32.mxu0 0.0
        %3921 = vmatmul.mubr.f32.gmra.mrb[0].mxu0 %v3761
        %v3922 = vpop.f32.mrb[0].mxu0
        %v3923 = vadd.f32 0.0, %v3922
        %v3924 = vpop.f32.mrb[0].mxu0
        %v3925 = vadd.f32 0.0, %v3924
        %3926 = vmatprep.mubr.f32.mxu0 0.0
        %3927 = vmatmul.mubr.f32.gmra.mrb[0].mxu0 %v3764
        %v3928 = vpop.f32.mrb[0].mxu0
        %v3929 = vadd.f32 0.0, %v3928
        %v3930 = vpop.f32.mrb[0].mxu0
        %v3931 = vadd.f32 0.0, %v3930
        %3932 = vmatprep.mubr.f32.mxu0 0.0
        %3933 = vmatmul.mubr.f32.gmra.mrb[0].mxu0 %v3767
        %v3934 = vpop.f32.mrb[0].mxu0
        %v3935 = vadd.f32 0.0, %v3934
        %v3936 = vpop.f32.mrb[0].mxu0
        %v3937 = vadd.f32 0.0, %v3936
        %3938 = vmatprep.mubr.f32.mxu0 0.0
        %3939 = vmatmul.mubr.f32.gmra.mrb[0].mxu0 %v3770
        %v3940 = vpop.f32.mrb[0].mxu0
        %v3941 = vadd.f32 0.0, %v3940
        %v3942 = vpop.f32.mrb[0].mxu0
        %v3943 = vadd.f32 0.0, %v3942
        %3944 = vmatprep.mubr.f32.mxu0 0.0
        %3945 = vmatmul.mubr.f32.gmra.mrb[0].mxu0 %v3773
        %v3946 = vpop.f32.mrb[0].mxu0
        %v3947 = vadd.f32 0.0, %v3946
        %v3948 = vpop.f32.mrb[0].mxu0
        %v3949 = vadd.f32 0.0, %v3948
        %3950 = vmatprep.mubr.f32.mxu0 0.0
        %3951 = vmatmul.mubr.f32.gmra.mrb[0].mxu0 %v3776
        %v3952 = vpop.f32.mrb[0].mxu0
        %v3953 = vadd.f32 0.0, %v3952
        %v3954 = vpop.f32.mrb[0].mxu0
        %v3955 = vadd.f32 0.0, %v3954
        %3956 = vmatprep.mubr.f32.mxu0 0.0
        %3957 = vmatmul.mubr.f32.gmra.mrb[0].mxu0 %v3779
        %v3958 = vpop.f32.mrb[0].mxu0
        %v3959 = vadd.f32 0.0, %v3958
        %v3960 = vpop.f32.mrb[0].mxu0
        %v3961 = vadd.f32 0.0, %v3960
        %3962 = vmatprep.mubr.f32.mxu0 0.0
        %3963 = vmatmul.mubr.f32.gmra.mrb[0].mxu0 %v3782
        %v3964 = vpop.f32.mrb[0].mxu0
        %v3965 = vadd.f32 0.0, %v3964
        %v3966 = vpop.f32.mrb[0].mxu0
        %v3967 = vadd.f32 0.0, %v3966
        %3968 = vmatprep.mubr.f32.mxu0 0.0
        %3969 = vmatmul.mubr.f32.gmra.mrb[0].mxu0 %v3785
        %v3970 = vpop.f32.mrb[0].mxu0
        %v3971 = vadd.f32 0.0, %v3970
        %v3972 = vpop.f32.mrb[0].mxu0
        %v3973 = vadd.f32 0.0, %v3972
        %3974 = vmatprep.mubr.f32.mxu0 0.0
        %3975 = vmatmul.mubr.f32.gmra.mrb[0].mxu0 %v3788
        %v3976 = vpop.f32.mrb[0].mxu0
        %v3977 = vadd.f32 0.0, %v3976
        %v3978 = vpop.f32.mrb[0].mxu0
        %v3979 = vadd.f32 0.0, %v3978
        %3980 = vmatprep.mubr.f32.mxu0 0.0
        %3981 = vmatmul.mubr.f32.gmra.mrb[0].mxu0 %v3791
        %v3982 = vpop.f32.mrb[0].mxu0
        %v3983 = vadd.f32 0.0, %v3982
        %v3984 = vpop.f32.mrb[0].mxu0
        %v3985 = vadd.f32 0.0, %v3984
        %3986 = vmatprep.mubr.f32.mxu0 0.0
        %3987 = vmatmul.mubr.f32.gmra.mrb[0].mxu0 %v3794
        %v3988 = vpop.f32.mrb[0].mxu0
        %v3989 = vadd.f32 0.0, %v3988
        %v3990 = vpop.f32.mrb[0].mxu0
        %v3991 = vadd.f32 0.0, %v3990
        %3992 = vmatprep.mubr.f32.mxu0 0.0
        %3993 = vmatmul.mubr.f32.gmra.mrb[0].mxu0 %v3797
        %v3994 = vpop.f32.mrb[0].mxu0
        %v3995 = vadd.f32 0.0, %v3994
        %v3996 = vpop.f32.mrb[0].mxu0
        %v3997 = vadd.f32 0.0, %v3996
        %3998 = vmatprep.mubr.f32.mxu0 0.0
        %3999 = vmatmul.mubr.f32.gmra.mrb[0].mxu0 %v3800
        %v4000 = vpop.f32.mrb[0].mxu0
        %v4001 = vadd.f32 0.0, %v4000
        %v4002 = vpop.f32.mrb[0].mxu0
        %v4003 = vadd.f32 0.0, %v4002
        %4004 = vmatprep.mubr.f32.mxu0 0.0
        %4005 = vmatmul.mubr.f32.gmra.mrb[0].mxu0 %v3803
        %v4006 = vpop.f32.mrb[0].mxu0
        %v4007 = vadd.f32 0.0, %v4006
        %v4008 = vpop.f32.mrb[0].mxu0
        %v4009 = vadd.f32 0.0, %v4008
        %4010 = vmatprep.mubr.f32.mxu0 0.0
        %4011 = vmatmul.mubr.f32.gmra.mrb[0].mxu0 %v3806
        %v4012 = vpop.f32.mrb[0].mxu0
        %v4013 = vadd.f32 0.0, %v4012
        %v4014 = vpop.f32.mrb[0].mxu0
        %v4015 = vadd.f32 0.0, %v4014
        %4016 = vmatprep.mubr.f32.mxu0 0.0
        %4017 = vmatmul.mubr.f32.gmra.mrb[0].mxu0 %v3809
        %v4018 = vpop.f32.mrb[0].mxu0
        %v4019 = vadd.f32 0.0, %v4018
        %v4020 = vpop.f32.mrb[0].mxu0
        %v4021 = vadd.f32 0.0, %v4020
        %4022 = vmatprep.mubr.f32.mxu0 0.0
        %4023 = vmatmul.mubr.f32.gmra.mrb[0].mxu0 %v3812
        %v4024 = vpop.f32.mrb[0].mxu0
        %v4025 = vadd.f32 0.0, %v4024
        %v4026 = vpop.f32.mrb[0].mxu0
        %v4027 = vadd.f32 0.0, %v4026
        %4028 = vdwg.mxu0
        %v4029 = vadd.f32 %v3379, %v3887
        %v4030 = vadd.f32 %v3380, %v3889
        %v4031 = vadd.f32 %v3381, %v3893
        %v4032 = vadd.f32 %v3382, %v3895
        %v4033 = vadd.f32 %v3383, %v3899
        %v4034 = vadd.f32 %v3384, %v3901
        %v4035 = vadd.f32 %v3385, %v3905
        %v4036 = vadd.f32 %v3386, %v3907
        %v4037 = vadd.f32 %v3387, %v3911
        %v4038 = vadd.f32 %v3388, %v3913
        %v4039 = vadd.f32 %v3389, %v3917
        %v4040 = vadd.f32 %v3390, %v3919
        %v4041 = vadd.f32 %v3391, %v3923
        %v4042 = vadd.f32 %v3392, %v3925
        %v4043 = vadd.f32 %v3393, %v3929
        %v4044 = vadd.f32 %v3394, %v3931
        %v4045 = vadd.f32 %v3395, %v3935
        %v4046 = vadd.f32 %v3396, %v3937
        %v4047 = vadd.f32 %v3397, %v3941
        %v4048 = vadd.f32 %v3398, %v3943
        %v4049 = vadd.f32 %v3399, %v3947
        %v4050 = vadd.f32 %v3400, %v3949
        %v4051 = vadd.f32 %v3401, %v3953
        %v4052 = vadd.f32 %v3402, %v3955
        %v4053 = vadd.f32 %v3403, %v3959
        %v4054 = vadd.f32 %v3404, %v3961
        %v4055 = vadd.f32 %v3405, %v3965
        %v4056 = vadd.f32 %v3406, %v3967
        %v4057 = vadd.f32 %v3407, %v3971
        %v4058 = vadd.f32 %v3408, %v3973
        %v4059 = vadd.f32 %v3409, %v3977
        %v4060 = vadd.f32 %v3410, %v3979
        %v4061 = vadd.f32 %v3411, %v3983
        %v4062 = vadd.f32 %v3412, %v3985
        %v4063 = vadd.f32 %v3413, %v3989
        %v4064 = vadd.f32 %v3414, %v3991
        %v4065 = vadd.f32 %v3415, %v3995
        %v4066 = vadd.f32 %v3416, %v3997
        %v4067 = vadd.f32 %v3417, %v4001
        %v4068 = vadd.f32 %v3418, %v4003
        %v4069 = vadd.f32 %v3419, %v4007
        %v4070 = vadd.f32 %v3420, %v4009
        %v4071 = vadd.f32 %v3421, %v4013
        %v4072 = vadd.f32 %v3422, %v4015
        %v4073 = vadd.f32 %v3423, %v4019
        %v4074 = vadd.f32 %v3424, %v4021
        %v4075 = vadd.f32 %v3425, %v4025
        %v4076 = vadd.f32 %v3426, %v4027
        %v4077 = vld [vmem:[#allocation5] sm:$0xff]
        %v4078 = vld [vmem:[#allocation5 + $0x8] sm:$0xff]
        %v4079 = vld [vmem:[#allocation5 + $0x10] sm:$0xff]
        %v4080 = vld [vmem:[#allocation5 + $0x18] sm:$0xff]
        %v4081 = vld [vmem:[#allocation5 + $0x20] sm:$0xff]
        %v4082 = vld [vmem:[#allocation5 + $0x28] sm:$0xff]
        %v4083 = vld [vmem:[#allocation5 + $0x30] sm:$0xff]
        %v4084 = vld [vmem:[#allocation5 + $0x38] sm:$0xff]
        %v4085 = vld [vmem:[#allocation5 + $0x40] sm:$0xff]
        %v4086 = vld [vmem:[#allocation5 + $0x48] sm:$0xff]
        %v4087 = vld [vmem:[#allocation5 + $0x50] sm:$0xff]
        %v4088 = vld [vmem:[#allocation5 + $0x58] sm:$0xff]
        %v4089 = vld [vmem:[#allocation5 + $0x60] sm:$0xff]
        %v4090 = vld [vmem:[#allocation5 + $0x68] sm:$0xff]
        %v4091 = vld [vmem:[#allocation5 + $0x70] sm:$0xff]
        %v4092 = vld [vmem:[#allocation5 + $0x78] sm:$0xff]
        %v4093 = vld [vmem:[#allocation5 + $0x80] sm:$0xff]
        %v4094 = vld [vmem:[#allocation5 + $0x88] sm:$0xff]
        %v4095 = vld [vmem:[#allocation5 + $0x90] sm:$0xff]
        %v4096 = vld [vmem:[#allocation5 + $0x98] sm:$0xff]
        %v4097 = vld [vmem:[#allocation5 + $0xa0] sm:$0xff]
        %v4098 = vld [vmem:[#allocation5 + $0xa8] sm:$0xff]
        %v4099 = vld [vmem:[#allocation5 + $0xb0] sm:$0xff]
        %v4100 = vld [vmem:[#allocation5 + $0xb8] sm:$0xff]
        %v4101 = vld [vmem:[#allocation5 + $0xc0] sm:$0xff]
        %v4102 = vld [vmem:[#allocation5 + $0xc8] sm:$0xff]
        %v4103 = vld [vmem:[#allocation5 + $0xd0] sm:$0xff]
        %v4104 = vld [vmem:[#allocation5 + $0xd8] sm:$0xff]
        %v4105 = vld [vmem:[#allocation5 + $0xe0] sm:$0xff]
        %v4106 = vld [vmem:[#allocation5 + $0xe8] sm:$0xff]
        %vm4107 = vcmask 916480
        %v4109 = vsel %vm4107, %v4030, 0
        %v4112 = vsel %vm4107, %v4032, 0
        %v4115 = vsel %vm4107, %v4034, 0
        %v4118 = vsel %vm4107, %v4036, 0
        %v4121 = vsel %vm4107, %v4038, 0
        %v4124 = vsel %vm4107, %v4040, 0
        %v4127 = vsel %vm4107, %v4042, 0
        %v4130 = vsel %vm4107, %v4044, 0
        %v4133 = vsel %vm4107, %v4046, 0
        %v4136 = vsel %vm4107, %v4048, 0
        %v4139 = vsel %vm4107, %v4050, 0
        %v4142 = vsel %vm4107, %v4052, 0
        %v4145 = vsel %vm4107, %v4054, 0
        %v4148 = vsel %vm4107, %v4056, 0
        %v4151 = vsel %vm4107, %v4058, 0
        %v4154 = vsel %vm4107, %v4060, 0
        %v4157 = vsel %vm4107, %v4062, 0
        %v4160 = vsel %vm4107, %v4064, 0
        %v4163 = vsel %vm4107, %v4066, 0
        %v4166 = vsel %vm4107, %v4068, 0
        %v4169 = vsel %vm4107, %v4070, 0
        %v4172 = vsel %vm4107, %v4072, 0
        %v4175 = vsel %vm4107, %v4074, 0
        %v4178 = vsel %vm4107, %v4076, 0
        %4180 = vmatprep.subr.mxu0 0.0
        %4181 = vmatpush1.msra.mxu0 %v4077
        %4182 = vmatprep.subr.mxu0 0.0
        %4183 = vmatpush1.msra.mxu0 %v4078
        %4184 = vmatprep.subr.mxu0 0.0
        %4185 = vmatpush1.msra.mxu0 %v4079
        %4186 = vmatprep.subr.mxu0 0.0
        %4187 = vmatpush1.msra.mxu0 %v4080
        %4188 = vmatprep.subr.mxu0 0.0
        %4189 = vmatpush1.msra.mxu0 %v4081
        %4190 = vmatprep.subr.mxu0 0.0
        %4191 = vmatpush1.msra.mxu0 %v4082
        %4192 = vmatprep.subr.mxu0 0.0
        %4193 = vmatpush1.msra.mxu0 %v4083
        %4194 = vmatprep.subr.mxu0 0.0
        %4195 = vmatpush1.msra.mxu0 %v4084
        %4196 = vmatprep.subr.mxu0 0.0
        %4197 = vmatpush1.msra.mxu0 %v4085
        %4198 = vmatprep.subr.mxu0 0.0
        %4199 = vmatpush1.msra.mxu0 %v4086
        %4200 = vmatprep.subr.mxu0 0.0
        %4201 = vmatpush1.msra.mxu0 %v4087
        %4202 = vmatprep.subr.mxu0 0.0
        %4203 = vmatpush1.msra.mxu0 %v4088
        %4204 = vmatprep.subr.mxu0 0.0
        %4205 = vmatpush1.msra.mxu0 %v4089
        %4206 = vmatprep.subr.mxu0 0.0
        %4207 = vmatpush1.msra.mxu0 %v4090
        %4208 = vmatprep.subr.mxu0 0.0
        %4209 = vmatpush1.msra.mxu0 %v4091
        %4210 = vmatprep.subr.mxu0 0.0
        %4211 = vmatpush1.msra.mxu0 %v4092
        %4212 = vmatprep.subr.mxu0 0.0
        %4213 = vmatpush1.msra.mxu0 %v4093
        %4214 = vmatprep.subr.mxu0 0.0
        %4215 = vmatpush1.msra.mxu0 %v4094
        %4216 = vmatprep.subr.mxu0 0.0
        %4217 = vmatpush1.msra.mxu0 %v4095
        %4218 = vmatprep.subr.mxu0 0.0
        %4219 = vmatpush1.msra.mxu0 %v4096
        %4220 = vmatprep.subr.mxu0 0.0
        %4221 = vmatpush1.msra.mxu0 %v4097
        %4222 = vmatprep.subr.mxu0 0.0
        %4223 = vmatpush1.msra.mxu0 %v4098
        %4224 = vmatprep.subr.mxu0 0.0
        %4225 = vmatpush1.msra.mxu0 %v4099
        %4226 = vmatprep.subr.mxu0 0.0
        %4227 = vmatpush1.msra.mxu0 %v4100
        %4228 = vmatprep.subr.mxu0 0.0
        %4229 = vmatpush1.msra.mxu0 %v4101
        %4230 = vmatprep.subr.mxu0 0.0
        %4231 = vmatpush1.msra.mxu0 %v4102
        %4232 = vmatprep.subr.mxu0 0.0
        %4233 = vmatpush1.msra.mxu0 %v4103
        %4234 = vmatprep.subr.mxu0 0.0
        %4235 = vmatpush1.msra.mxu0 %v4104
        %4236 = vmatprep.subr.mxu0 0.0
        %4237 = vmatpush1.msra.mxu0 %v4105
        %4238 = vmatprep.subr.mxu0 0.0
        %4239 = vmatpush1.msra.mxu0 %v4106
        %4240 = vmatprep.subr.mxu0 0.0
        %4241 = vmatpush1.msra.mxu0 0.0
        %4242 = vmatprep.subr.mxu0 0.0
        %4243 = vmatpush1.msra.mxu0 0.0
        %4244 = vmatprep.mubr.f32.mxu0 %v4109
        %4245 = vmatmul.mubr.f32.gmra.mrb[0].mxu0 %v4029
        %v4246 = vpop.f32.mrb[0].mxu0
        %v4247 = vadd.f32 0.0, %v4246
        %v4248 = vpop.f32.mrb[0].mxu0
        %4249 = vmatprep.mubr.f32.mxu0 %v4112
        %4250 = vmatmul.mubr.f32.gmra.mrb[0].mxu0 %v4031
        %v4251 = vpop.f32.mrb[0].mxu0
        %v4252 = vadd.f32 0.0, %v4251
        %v4253 = vpop.f32.mrb[0].mxu0
        %4254 = vmatprep.mubr.f32.mxu0 %v4115
        %4255 = vmatmul.mubr.f32.gmra.mrb[0].mxu0 %v4033
        %v4256 = vpop.f32.mrb[0].mxu0
        %v4257 = vadd.f32 0.0, %v4256
        %v4258 = vpop.f32.mrb[0].mxu0
        %4259 = vmatprep.mubr.f32.mxu0 %v4118
        %4260 = vmatmul.mubr.f32.gmra.mrb[0].mxu0 %v4035
        %v4261 = vpop.f32.mrb[0].mxu0
        %v4262 = vadd.f32 0.0, %v4261
        %v4263 = vpop.f32.mrb[0].mxu0
        %4264 = vmatprep.mubr.f32.mxu0 %v4121
        %4265 = vmatmul.mubr.f32.gmra.mrb[0].mxu0 %v4037
        %v4266 = vpop.f32.mrb[0].mxu0
        %v4267 = vadd.f32 0.0, %v4266
        %v4268 = vpop.f32.mrb[0].mxu0
        %4269 = vmatprep.mubr.f32.mxu0 %v4124
        %4270 = vmatmul.mubr.f32.gmra.mrb[0].mxu0 %v4039
        %v4271 = vpop.f32.mrb[0].mxu0
        %v4272 = vadd.f32 0.0, %v4271
        %v4273 = vpop.f32.mrb[0].mxu0
        %4274 = vmatprep.mubr.f32.mxu0 %v4127
        %4275 = vmatmul.mubr.f32.gmra.mrb[0].mxu0 %v4041
        %v4276 = vpop.f32.mrb[0].mxu0
        %v4277 = vadd.f32 0.0, %v4276
        %v4278 = vpop.f32.mrb[0].mxu0
        %4279 = vmatprep.mubr.f32.mxu0 %v4130
        %4280 = vmatmul.mubr.f32.gmra.mrb[0].mxu0 %v4043
        %v4281 = vpop.f32.mrb[0].mxu0
        %v4282 = vadd.f32 0.0, %v4281
        %v4283 = vpop.f32.mrb[0].mxu0
        %4284 = vmatprep.mubr.f32.mxu0 %v4133
        %4285 = vmatmul.mubr.f32.gmra.mrb[0].mxu0 %v4045
        %v4286 = vpop.f32.mrb[0].mxu0
        %v4287 = vadd.f32 0.0, %v4286
        %v4288 = vpop.f32.mrb[0].mxu0
        %4289 = vmatprep.mubr.f32.mxu0 %v4136
        %4290 = vmatmul.mubr.f32.gmra.mrb[0].mxu0 %v4047
        %v4291 = vpop.f32.mrb[0].mxu0
        %v4292 = vadd.f32 0.0, %v4291
        %v4293 = vpop.f32.mrb[0].mxu0
        %4294 = vmatprep.mubr.f32.mxu0 %v4139
        %4295 = vmatmul.mubr.f32.gmra.mrb[0].mxu0 %v4049
        %v4296 = vpop.f32.mrb[0].mxu0
        %v4297 = vadd.f32 0.0, %v4296
        %v4298 = vpop.f32.mrb[0].mxu0
        %4299 = vmatprep.mubr.f32.mxu0 %v4142
        %4300 = vmatmul.mubr.f32.gmra.mrb[0].mxu0 %v4051
        %v4301 = vpop.f32.mrb[0].mxu0
        %v4302 = vadd.f32 0.0, %v4301
        %v4303 = vpop.f32.mrb[0].mxu0
        %4304 = vmatprep.mubr.f32.mxu0 %v4145
        %4305 = vmatmul.mubr.f32.gmra.mrb[0].mxu0 %v4053
        %v4306 = vpop.f32.mrb[0].mxu0
        %v4307 = vadd.f32 0.0, %v4306
        %v4308 = vpop.f32.mrb[0].mxu0
        %4309 = vmatprep.mubr.f32.mxu0 %v4148
        %4310 = vmatmul.mubr.f32.gmra.mrb[0].mxu0 %v4055
        %v4311 = vpop.f32.mrb[0].mxu0
        %v4312 = vadd.f32 0.0, %v4311
        %v4313 = vpop.f32.mrb[0].mxu0
        %4314 = vmatprep.mubr.f32.mxu0 %v4151
        %4315 = vmatmul.mubr.f32.gmra.mrb[0].mxu0 %v4057
        %v4316 = vpop.f32.mrb[0].mxu0
        %v4317 = vadd.f32 0.0, %v4316
        %v4318 = vpop.f32.mrb[0].mxu0
        %4319 = vmatprep.mubr.f32.mxu0 %v4154
        %4320 = vmatmul.mubr.f32.gmra.mrb[0].mxu0 %v4059
        %v4321 = vpop.f32.mrb[0].mxu0
        %v4322 = vadd.f32 0.0, %v4321
        %v4323 = vpop.f32.mrb[0].mxu0
        %4324 = vmatprep.mubr.f32.mxu0 %v4157
        %4325 = vmatmul.mubr.f32.gmra.mrb[0].mxu0 %v4061
        %v4326 = vpop.f32.mrb[0].mxu0
        %v4327 = vadd.f32 0.0, %v4326
        %v4328 = vpop.f32.mrb[0].mxu0
        %4329 = vmatprep.mubr.f32.mxu0 %v4160
        %4330 = vmatmul.mubr.f32.gmra.mrb[0].mxu0 %v4063
        %v4331 = vpop.f32.mrb[0].mxu0
        %v4332 = vadd.f32 0.0, %v4331
        %v4333 = vpop.f32.mrb[0].mxu0
        %4334 = vmatprep.mubr.f32.mxu0 %v4163
        %4335 = vmatmul.mubr.f32.gmra.mrb[0].mxu0 %v4065
        %v4336 = vpop.f32.mrb[0].mxu0
        %v4337 = vadd.f32 0.0, %v4336
        %v4338 = vpop.f32.mrb[0].mxu0
        %4339 = vmatprep.mubr.f32.mxu0 %v4166
        %4340 = vmatmul.mubr.f32.gmra.mrb[0].mxu0 %v4067
        %v4341 = vpop.f32.mrb[0].mxu0
        %v4342 = vadd.f32 0.0, %v4341
        %v4343 = vpop.f32.mrb[0].mxu0
        %4344 = vmatprep.mubr.f32.mxu0 %v4169
        %4345 = vmatmul.mubr.f32.gmra.mrb[0].mxu0 %v4069
        %v4346 = vpop.f32.mrb[0].mxu0
        %v4347 = vadd.f32 0.0, %v4346
        %v4348 = vpop.f32.mrb[0].mxu0
        %4349 = vmatprep.mubr.f32.mxu0 %v4172
        %4350 = vmatmul.mubr.f32.gmra.mrb[0].mxu0 %v4071
        %v4351 = vpop.f32.mrb[0].mxu0
        %v4352 = vadd.f32 0.0, %v4351
        %v4353 = vpop.f32.mrb[0].mxu0
        %4354 = vmatprep.mubr.f32.mxu0 %v4175
        %4355 = vmatmul.mubr.f32.gmra.mrb[0].mxu0 %v4073
        %v4356 = vpop.f32.mrb[0].mxu0
        %v4357 = vadd.f32 0.0, %v4356
        %v4358 = vpop.f32.mrb[0].mxu0
        %4359 = vmatprep.mubr.f32.mxu0 %v4178
        %4360 = vmatmul.mubr.f32.gmra.mrb[0].mxu0 %v4075
        %v4361 = vpop.f32.mrb[0].mxu0
        %v4362 = vadd.f32 0.0, %v4361
        %v4363 = vpop.f32.mrb[0].mxu0
        %4364 = vdwg.mxu0
        %v4365 = vld [vmem:[#allocation7] sm:$0xff]
        %v4366 = vld [vmem:[#allocation7 + $0x8] sm:$0xff]
        %v4367 = vld [vmem:[#allocation7 + $0x10] sm:$0xff]
        %v4368 = vld [vmem:[#allocation7 + $0x18] sm:$0xff]
        %v4369 = vld [vmem:[#allocation7 + $0x20] sm:$0xff]
        %v4370 = vld [vmem:[#allocation7 + $0x28] sm:$0xff]
        %v4371 = vld [vmem:[#allocation7 + $0x30] sm:$0xff]
        %v4372 = vld [vmem:[#allocation7 + $0x38] sm:$0xff]
        %v4373 = vld [vmem:[#allocation7 + $0x40] sm:$0xff]
        %v4374 = vld [vmem:[#allocation7 + $0x48] sm:$0xff]
        %v4375 = vld [vmem:[#allocation7 + $0x50] sm:$0xff]
        %v4376 = vld [vmem:[#allocation7 + $0x58] sm:$0xff]
        %v4377 = vld [vmem:[#allocation7 + $0x60] sm:$0xff]
        %v4378 = vld [vmem:[#allocation7 + $0x68] sm:$0xff]
        %v4379 = vld [vmem:[#allocation7 + $0x70] sm:$0xff]
        %v4380 = vld [vmem:[#allocation7 + $0x78] sm:$0xff]
        %v4381 = vld [vmem:[#allocation7 + $0x80] sm:$0xff]
        %v4382 = vld [vmem:[#allocation7 + $0x88] sm:$0xff]
        %v4383 = vld [vmem:[#allocation7 + $0x90] sm:$0xff]
        %v4384 = vld [vmem:[#allocation7 + $0x98] sm:$0xff]
        %v4385 = vld [vmem:[#allocation7 + $0xa0] sm:$0xff]
        %v4386 = vld [vmem:[#allocation7 + $0xa8] sm:$0xff]
        %v4387 = vld [vmem:[#allocation7 + $0xb0] sm:$0xff]
        %v4388 = vld [vmem:[#allocation7 + $0xb8] sm:$0xff]
        %v4389 = vld [vmem:[#allocation7 + $0xc0] sm:$0xff]
        %v4390 = vld [vmem:[#allocation7 + $0xc8] sm:$0xff]
        %v4391 = vld [vmem:[#allocation7 + $0xd0] sm:$0xff]
        %v4392 = vld [vmem:[#allocation7 + $0xd8] sm:$0xff]
        %v4393 = vld [vmem:[#allocation7 + $0xe0] sm:$0xff]
        %v4394 = vld [vmem:[#allocation7 + $0xe8] sm:$0xff]
        %4395 = vmatprep.subr.mxu0 0.0
        %4396 = vmatpush1.msra.mxu0 %v4365
        %4397 = vmatprep.subr.mxu0 0.0
        %4398 = vmatpush1.msra.mxu0 %v4366
        %4399 = vmatprep.subr.mxu0 0.0
        %4400 = vmatpush1.msra.mxu0 %v4367
        %4401 = vmatprep.subr.mxu0 0.0
        %4402 = vmatpush1.msra.mxu0 %v4368
        %4403 = vmatprep.subr.mxu0 0.0
        %4404 = vmatpush1.msra.mxu0 %v4369
        %4405 = vmatprep.subr.mxu0 0.0
        %4406 = vmatpush1.msra.mxu0 %v4370
        %4407 = vmatprep.subr.mxu0 0.0
        %4408 = vmatpush1.msra.mxu0 %v4371
        %4409 = vmatprep.subr.mxu0 0.0
        %4410 = vmatpush1.msra.mxu0 %v4372
        %4411 = vmatprep.subr.mxu0 0.0
        %4412 = vmatpush1.msra.mxu0 %v4373
        %4413 = vmatprep.subr.mxu0 0.0
        %4414 = vmatpush1.msra.mxu0 %v4374
        %4415 = vmatprep.subr.mxu0 0.0
        %4416 = vmatpush1.msra.mxu0 %v4375
        %4417 = vmatprep.subr.mxu0 0.0
        %4418 = vmatpush1.msra.mxu0 %v4376
        %4419 = vmatprep.subr.mxu0 0.0
        %4420 = vmatpush1.msra.mxu0 %v4377
        %4421 = vmatprep.subr.mxu0 0.0
        %4422 = vmatpush1.msra.mxu0 %v4378
        %4423 = vmatprep.subr.mxu0 0.0
        %4424 = vmatpush1.msra.mxu0 %v4379
        %4425 = vmatprep.subr.mxu0 0.0
        %4426 = vmatpush1.msra.mxu0 %v4380
        %4427 = vmatprep.subr.mxu0 0.0
        %4428 = vmatpush1.msra.mxu0 %v4381
        %4429 = vmatprep.subr.mxu0 0.0
        %4430 = vmatpush1.msra.mxu0 %v4382
        %4431 = vmatprep.subr.mxu0 0.0
        %4432 = vmatpush1.msra.mxu0 %v4383
        %4433 = vmatprep.subr.mxu0 0.0
        %4434 = vmatpush1.msra.mxu0 %v4384
        %4435 = vmatprep.subr.mxu0 0.0
        %4436 = vmatpush1.msra.mxu0 %v4385
        %4437 = vmatprep.subr.mxu0 0.0
        %4438 = vmatpush1.msra.mxu0 %v4386
        %4439 = vmatprep.subr.mxu0 0.0
        %4440 = vmatpush1.msra.mxu0 %v4387
        %4441 = vmatprep.subr.mxu0 0.0
        %4442 = vmatpush1.msra.mxu0 %v4388
        %4443 = vmatprep.subr.mxu0 0.0
        %4444 = vmatpush1.msra.mxu0 %v4389
        %4445 = vmatprep.subr.mxu0 0.0
        %4446 = vmatpush1.msra.mxu0 %v4390
        %4447 = vmatprep.subr.mxu0 0.0
        %4448 = vmatpush1.msra.mxu0 %v4391
        %4449 = vmatprep.subr.mxu0 0.0
        %4450 = vmatpush1.msra.mxu0 %v4392
        %4451 = vmatprep.subr.mxu0 0.0
        %4452 = vmatpush1.msra.mxu0 %v4393
        %4453 = vmatprep.subr.mxu0 0.0
        %4454 = vmatpush1.msra.mxu0 %v4394
        %4455 = vmatprep.subr.mxu0 0.0
        %4456 = vmatpush1.msra.mxu0 0.0
        %4457 = vmatprep.subr.mxu0 0.0
        %4458 = vmatpush1.msra.mxu0 0.0
        %4459 = vmatprep.mubr.f32.mxu0 %v4109
        %4460 = vmatmul.mubr.f32.gmra.mrb[0].mxu0 %v4029
        %v4461 = vpop.f32.mrb[0].mxu0
        %v4462 = vadd.f32 0.0, %v4461
        %v4463 = vpop.f32.mrb[0].mxu0
        %4464 = vmatprep.mubr.f32.mxu0 %v4112
        %4465 = vmatmul.mubr.f32.gmra.mrb[0].mxu0 %v4031
        %v4466 = vpop.f32.mrb[0].mxu0
        %v4467 = vadd.f32 0.0, %v4466
        %v4468 = vpop.f32.mrb[0].mxu0
        %4469 = vmatprep.mubr.f32.mxu0 %v4115
        %4470 = vmatmul.mubr.f32.gmra.mrb[0].mxu0 %v4033
        %v4471 = vpop.f32.mrb[0].mxu0
        %v4472 = vadd.f32 0.0, %v4471
        %v4473 = vpop.f32.mrb[0].mxu0
        %4474 = vmatprep.mubr.f32.mxu0 %v4118
        %4475 = vmatmul.mubr.f32.gmra.mrb[0].mxu0 %v4035
        %v4476 = vpop.f32.mrb[0].mxu0
        %v4477 = vadd.f32 0.0, %v4476
        %v4478 = vpop.f32.mrb[0].mxu0
        %4479 = vmatprep.mubr.f32.mxu0 %v4121
        %4480 = vmatmul.mubr.f32.gmra.mrb[0].mxu0 %v4037
        %v4481 = vpop.f32.mrb[0].mxu0
        %v4482 = vadd.f32 0.0, %v4481
        %v4483 = vpop.f32.mrb[0].mxu0
        %4484 = vmatprep.mubr.f32.mxu0 %v4124
        %4485 = vmatmul.mubr.f32.gmra.mrb[0].mxu0 %v4039
        %v4486 = vpop.f32.mrb[0].mxu0
        %v4487 = vadd.f32 0.0, %v4486
        %v4488 = vpop.f32.mrb[0].mxu0
        %4489 = vmatprep.mubr.f32.mxu0 %v4127
        %4490 = vmatmul.mubr.f32.gmra.mrb[0].mxu0 %v4041
        %v4491 = vpop.f32.mrb[0].mxu0
        %v4492 = vadd.f32 0.0, %v4491
        %v4493 = vpop.f32.mrb[0].mxu0
        %4494 = vmatprep.mubr.f32.mxu0 %v4130
        %4495 = vmatmul.mubr.f32.gmra.mrb[0].mxu0 %v4043
        %v4496 = vpop.f32.mrb[0].mxu0
        %v4497 = vadd.f32 0.0, %v4496
        %v4498 = vpop.f32.mrb[0].mxu0
        %4499 = vmatprep.mubr.f32.mxu0 %v4133
        %4500 = vmatmul.mubr.f32.gmra.mrb[0].mxu0 %v4045
        %v4501 = vpop.f32.mrb[0].mxu0
        %v4502 = vadd.f32 0.0, %v4501
        %v4503 = vpop.f32.mrb[0].mxu0
        %4504 = vmatprep.mubr.f32.mxu0 %v4136
        %4505 = vmatmul.mubr.f32.gmra.mrb[0].mxu0 %v4047
        %v4506 = vpop.f32.mrb[0].mxu0
        %v4507 = vadd.f32 0.0, %v4506
        %v4508 = vpop.f32.mrb[0].mxu0
        %4509 = vmatprep.mubr.f32.mxu0 %v4139
        %4510 = vmatmul.mubr.f32.gmra.mrb[0].mxu0 %v4049
        %v4511 = vpop.f32.mrb[0].mxu0
        %v4512 = vadd.f32 0.0, %v4511
        %v4513 = vpop.f32.mrb[0].mxu0
        %4514 = vmatprep.mubr.f32.mxu0 %v4142
        %4515 = vmatmul.mubr.f32.gmra.mrb[0].mxu0 %v4051
        %v4516 = vpop.f32.mrb[0].mxu0
        %v4517 = vadd.f32 0.0, %v4516
        %v4518 = vpop.f32.mrb[0].mxu0
        %4519 = vmatprep.mubr.f32.mxu0 %v4145
        %4520 = vmatmul.mubr.f32.gmra.mrb[0].mxu0 %v4053
        %v4521 = vpop.f32.mrb[0].mxu0
        %v4522 = vadd.f32 0.0, %v4521
        %v4523 = vpop.f32.mrb[0].mxu0
        %4524 = vmatprep.mubr.f32.mxu0 %v4148
        %4525 = vmatmul.mubr.f32.gmra.mrb[0].mxu0 %v4055
        %v4526 = vpop.f32.mrb[0].mxu0
        %v4527 = vadd.f32 0.0, %v4526
        %v4528 = vpop.f32.mrb[0].mxu0
        %4529 = vmatprep.mubr.f32.mxu0 %v4151
        %4530 = vmatmul.mubr.f32.gmra.mrb[0].mxu0 %v4057
        %v4531 = vpop.f32.mrb[0].mxu0
        %v4532 = vadd.f32 0.0, %v4531
        %v4533 = vpop.f32.mrb[0].mxu0
        %4534 = vmatprep.mubr.f32.mxu0 %v4154
        %4535 = vmatmul.mubr.f32.gmra.mrb[0].mxu0 %v4059
        %v4536 = vpop.f32.mrb[0].mxu0
        %v4537 = vadd.f32 0.0, %v4536
        %v4538 = vpop.f32.mrb[0].mxu0
        %4539 = vmatprep.mubr.f32.mxu0 %v4157
        %4540 = vmatmul.mubr.f32.gmra.mrb[0].mxu0 %v4061
        %v4541 = vpop.f32.mrb[0].mxu0
        %v4542 = vadd.f32 0.0, %v4541
        %v4543 = vpop.f32.mrb[0].mxu0
        %4544 = vmatprep.mubr.f32.mxu0 %v4160
        %4545 = vmatmul.mubr.f32.gmra.mrb[0].mxu0 %v4063
        %v4546 = vpop.f32.mrb[0].mxu0
        %v4547 = vadd.f32 0.0, %v4546
        %v4548 = vpop.f32.mrb[0].mxu0
        %4549 = vmatprep.mubr.f32.mxu0 %v4163
        %4550 = vmatmul.mubr.f32.gmra.mrb[0].mxu0 %v4065
        %v4551 = vpop.f32.mrb[0].mxu0
        %v4552 = vadd.f32 0.0, %v4551
        %v4553 = vpop.f32.mrb[0].mxu0
        %4554 = vmatprep.mubr.f32.mxu0 %v4166
        %4555 = vmatmul.mubr.f32.gmra.mrb[0].mxu0 %v4067
        %v4556 = vpop.f32.mrb[0].mxu0
        %v4557 = vadd.f32 0.0, %v4556
        %v4558 = vpop.f32.mrb[0].mxu0
        %4559 = vmatprep.mubr.f32.mxu0 %v4169
        %4560 = vmatmul.mubr.f32.gmra.mrb[0].mxu0 %v4069
        %v4561 = vpop.f32.mrb[0].mxu0
        %v4562 = vadd.f32 0.0, %v4561
        %v4563 = vpop.f32.mrb[0].mxu0
        %4564 = vmatprep.mubr.f32.mxu0 %v4172
        %4565 = vmatmul.mubr.f32.gmra.mrb[0].mxu0 %v4071
        %v4566 = vpop.f32.mrb[0].mxu0
        %v4567 = vadd.f32 0.0, %v4566
        %v4568 = vpop.f32.mrb[0].mxu0
        %4569 = vmatprep.mubr.f32.mxu0 %v4175
        %4570 = vmatmul.mubr.f32.gmra.mrb[0].mxu0 %v4073
        %v4571 = vpop.f32.mrb[0].mxu0
        %v4572 = vadd.f32 0.0, %v4571
        %v4573 = vpop.f32.mrb[0].mxu0
        %4574 = vmatprep.mubr.f32.mxu0 %v4178
        %4575 = vmatmul.mubr.f32.gmra.mrb[0].mxu0 %v4075
        %v4576 = vpop.f32.mrb[0].mxu0
        %v4577 = vadd.f32 0.0, %v4576
        %v4578 = vpop.f32.mrb[0].mxu0
        %4579 = vdwg.mxu0
        %v4580 = vmax.f32 %v4247, %v4462
        %v4581 = vmax.f32 %v4252, %v4467
        %v4582 = vmax.f32 %v4257, %v4472
        %v4583 = vmax.f32 %v4262, %v4477
        %v4584 = vmax.f32 %v4267, %v4482
        %v4585 = vmax.f32 %v4272, %v4487
        %v4586 = vmax.f32 %v4277, %v4492
        %v4587 = vmax.f32 %v4282, %v4497
        %v4588 = vmax.f32 %v4287, %v4502
        %v4589 = vmax.f32 %v4292, %v4507
        %v4590 = vmax.f32 %v4297, %v4512
        %v4591 = vmax.f32 %v4302, %v4517
        %v4592 = vmax.f32 %v4307, %v4522
        %v4593 = vmax.f32 %v4312, %v4527
        %v4594 = vmax.f32 %v4317, %v4532
        %v4595 = vmax.f32 %v4322, %v4537
        %v4596 = vmax.f32 %v4327, %v4542
        %v4597 = vmax.f32 %v4332, %v4547
        %v4598 = vmax.f32 %v4337, %v4552
        %v4599 = vmax.f32 %v4342, %v4557
        %v4600 = vmax.f32 %v4347, %v4562
        %v4601 = vmax.f32 %v4352, %v4567
        %v4602 = vmax.f32 %v4357, %v4572
        %v4603 = vmax.f32 %v4362, %v4577
        %v4604 = vld [vmem:[#allocation8] sm:$0xff]
        %v4605 = vld [vmem:[#allocation8 + $0x8] sm:$0xff]
        %v4606 = vld [vmem:[#allocation8 + $0x10] sm:$0xff]
        %v4607 = vld [vmem:[#allocation8 + $0x18] sm:$0xff]
        %v4608 = vld [vmem:[#allocation8 + $0x20] sm:$0xff]
        %v4609 = vld [vmem:[#allocation8 + $0x28] sm:$0xff]
        %v4610 = vld [vmem:[#allocation8 + $0x30] sm:$0xff]
        %v4611 = vld [vmem:[#allocation8 + $0x38] sm:$0xff]
        %v4612 = vld [vmem:[#allocation8 + $0x40] sm:$0xff]
        %v4613 = vld [vmem:[#allocation8 + $0x48] sm:$0xff]
        %v4614 = vld [vmem:[#allocation8 + $0x50] sm:$0xff]
        %v4615 = vld [vmem:[#allocation8 + $0x58] sm:$0xff]
        %v4616 = vld [vmem:[#allocation8 + $0x60] sm:$0xff]
        %v4617 = vld [vmem:[#allocation8 + $0x68] sm:$0xff]
        %v4618 = vld [vmem:[#allocation8 + $0x70] sm:$0xff]
        %v4619 = vld [vmem:[#allocation8 + $0x78] sm:$0xff]
        %v4620 = vld [vmem:[#allocation8 + $0x80] sm:$0xff]
        %v4621 = vld [vmem:[#allocation8 + $0x88] sm:$0xff]
        %v4622 = vld [vmem:[#allocation8 + $0x90] sm:$0xff]
        %v4623 = vld [vmem:[#allocation8 + $0x98] sm:$0xff]
        %v4624 = vld [vmem:[#allocation8 + $0xa0] sm:$0xff]
        %v4625 = vld [vmem:[#allocation8 + $0xa8] sm:$0xff]
        %v4626 = vld [vmem:[#allocation8 + $0xb0] sm:$0xff]
        %v4627 = vld [vmem:[#allocation8 + $0xb8] sm:$0xff]
        %vm4628 = vcmask 523264
        %v4630 = vsel %vm4628, %v4605, 0
        %v4633 = vsel %vm4628, %v4607, 0
        %v4636 = vsel %vm4628, %v4609, 0
        %v4639 = vsel %vm4628, %v4611, 0
        %v4642 = vsel %vm4628, %v4613, 0
        %v4645 = vsel %vm4628, %v4615, 0
        %v4648 = vsel %vm4628, %v4617, 0
        %v4651 = vsel %vm4628, %v4619, 0
        %v4654 = vsel %vm4628, %v4621, 0
        %v4657 = vsel %vm4628, %v4623, 0
        %v4660 = vsel %vm4628, %v4625, 0
        %v4663 = vsel %vm4628, %v4627, 0
        %4665 = vmatprep.subr.mxu0 0.0
        %4666 = vmatpush1.msra.mxu0 %v4580
        %4667 = vmatprep.subr.mxu0 0.0
        %4668 = vmatpush1.msra.mxu0 %v4581
        %4669 = vmatprep.subr.mxu0 0.0
        %4670 = vmatpush1.msra.mxu0 %v4582
        %4671 = vmatprep.subr.mxu0 0.0
        %4672 = vmatpush1.msra.mxu0 %v4583
        %4673 = vmatprep.subr.mxu0 0.0
        %4674 = vmatpush1.msra.mxu0 %v4584
        %4675 = vmatprep.subr.mxu0 0.0
        %4676 = vmatpush1.msra.mxu0 %v4585
        %4677 = vmatprep.subr.mxu0 0.0
        %4678 = vmatpush1.msra.mxu0 %v4586
        %4679 = vmatprep.subr.mxu0 0.0
        %4680 = vmatpush1.msra.mxu0 %v4587
        %4681 = vmatprep.subr.mxu0 0.0
        %4682 = vmatpush1.msra.mxu0 %v4588
        %4683 = vmatprep.subr.mxu0 0.0
        %4684 = vmatpush1.msra.mxu0 %v4589
        %4685 = vmatprep.subr.mxu0 0.0
        %4686 = vmatpush1.msra.mxu0 %v4590
        %4687 = vmatprep.subr.mxu0 0.0
        %4688 = vmatpush1.msra.mxu0 %v4591
        %4689 = vmatprep.subr.mxu0 0.0
        %4690 = vmatpush1.msra.mxu0 %v4592
        %4691 = vmatprep.subr.mxu0 0.0
        %4692 = vmatpush1.msra.mxu0 %v4593
        %4693 = vmatprep.subr.mxu0 0.0
        %4694 = vmatpush1.msra.mxu0 %v4594
        %4695 = vmatprep.subr.mxu0 0.0
        %4696 = vmatpush1.msra.mxu0 %v4595
        %4697 = vmatprep.subr.mxu0 0.0
        %4698 = vmatpush1.msra.mxu0 %v4596
        %4699 = vmatprep.subr.mxu0 0.0
        %4700 = vmatpush1.msra.mxu0 %v4597
        %4701 = vmatprep.subr.mxu0 0.0
        %4702 = vmatpush1.msra.mxu0 %v4598
        %4703 = vmatprep.subr.mxu0 0.0
        %4704 = vmatpush1.msra.mxu0 %v4599
        %4705 = vmatprep.subr.mxu0 0.0
        %4706 = vmatpush1.msra.mxu0 %v4600
        %4707 = vmatprep.subr.mxu0 0.0
        %4708 = vmatpush1.msra.mxu0 %v4601
        %4709 = vmatprep.subr.mxu0 0.0
        %4710 = vmatpush1.msra.mxu0 %v4602
        %4711 = vmatprep.subr.mxu0 0.0
        %4712 = vmatpush1.msra.mxu0 %v4603
        %4713 = vmatprep.subr.mxu0 0.0
        %4714 = vmatpush1.msra.mxu0 0.0
        %4715 = vmatprep.subr.mxu0 0.0
        %4716 = vmatpush1.msra.mxu0 0.0
        %4717 = vmatprep.subr.mxu0 0.0
        %4718 = vmatpush1.msra.mxu0 0.0
        %4719 = vmatprep.subr.mxu0 0.0
        %4720 = vmatpush1.msra.mxu0 0.0
        %4721 = vmatprep.subr.mxu0 0.0
        %4722 = vmatpush1.msra.mxu0 0.0
        %4723 = vmatprep.subr.mxu0 0.0
        %4724 = vmatpush1.msra.mxu0 0.0
        %4725 = vmatprep.subr.mxu0 0.0
        %4726 = vmatpush1.msra.mxu0 0.0
        %4727 = vmatprep.subr.mxu0 0.0
        %4728 = vmatpush1.msra.mxu0 0.0
        %4729 = vmatprep.mubr.f32.mxu0 %v4630
        %4730 = vmatmul.mubr.f32.gmra.mrb[0].mxu0 %v4604
        %v4731 = vpop.f32.mrb[0].mxu0
        %v4732 = vadd.f32 0.0, %v4731
        %v4733 = vpop.f32.mrb[0].mxu0
        %4734 = vmatprep.mubr.f32.mxu0 %v4633
        %4735 = vmatmul.mubr.f32.gmra.mrb[0].mxu0 %v4606
        %v4736 = vpop.f32.mrb[0].mxu0
        %v4737 = vadd.f32 0.0, %v4736
        %v4738 = vpop.f32.mrb[0].mxu0
        %4739 = vmatprep.mubr.f32.mxu0 %v4636
        %4740 = vmatmul.mubr.f32.gmra.mrb[0].mxu0 %v4608
        %v4741 = vpop.f32.mrb[0].mxu0
        %v4742 = vadd.f32 0.0, %v4741
        %v4743 = vpop.f32.mrb[0].mxu0
        %4744 = vmatprep.mubr.f32.mxu0 %v4639
        %4745 = vmatmul.mubr.f32.gmra.mrb[0].mxu0 %v4610
        %v4746 = vpop.f32.mrb[0].mxu0
        %v4747 = vadd.f32 0.0, %v4746
        %v4748 = vpop.f32.mrb[0].mxu0
        %4749 = vmatprep.mubr.f32.mxu0 %v4642
        %4750 = vmatmul.mubr.f32.gmra.mrb[0].mxu0 %v4612
        %v4751 = vpop.f32.mrb[0].mxu0
        %v4752 = vadd.f32 0.0, %v4751
        %v4753 = vpop.f32.mrb[0].mxu0
        %4754 = vmatprep.mubr.f32.mxu0 %v4645
        %4755 = vmatmul.mubr.f32.gmra.mrb[0].mxu0 %v4614
        %v4756 = vpop.f32.mrb[0].mxu0
        %v4757 = vadd.f32 0.0, %v4756
        %v4758 = vpop.f32.mrb[0].mxu0
        %4759 = vmatprep.mubr.f32.mxu0 %v4648
        %4760 = vmatmul.mubr.f32.gmra.mrb[0].mxu0 %v4616
        %v4761 = vpop.f32.mrb[0].mxu0
        %v4762 = vadd.f32 0.0, %v4761
        %v4763 = vpop.f32.mrb[0].mxu0
        %4764 = vmatprep.mubr.f32.mxu0 %v4651
        %4765 = vmatmul.mubr.f32.gmra.mrb[0].mxu0 %v4618
        %v4766 = vpop.f32.mrb[0].mxu0
        %v4767 = vadd.f32 0.0, %v4766
        %v4768 = vpop.f32.mrb[0].mxu0
        %4769 = vmatprep.mubr.f32.mxu0 %v4654
        %4770 = vmatmul.mubr.f32.gmra.mrb[0].mxu0 %v4620
        %v4771 = vpop.f32.mrb[0].mxu0
        %v4772 = vadd.f32 0.0, %v4771
        %v4773 = vpop.f32.mrb[0].mxu0
        %4774 = vmatprep.mubr.f32.mxu0 %v4657
        %4775 = vmatmul.mubr.f32.gmra.mrb[0].mxu0 %v4622
        %v4776 = vpop.f32.mrb[0].mxu0
        %v4777 = vadd.f32 0.0, %v4776
        %v4778 = vpop.f32.mrb[0].mxu0
        %4779 = vmatprep.mubr.f32.mxu0 %v4660
        %4780 = vmatmul.mubr.f32.gmra.mrb[0].mxu0 %v4624
        %v4781 = vpop.f32.mrb[0].mxu0
        %v4782 = vadd.f32 0.0, %v4781
        %v4783 = vpop.f32.mrb[0].mxu0
        %4784 = vmatprep.mubr.f32.mxu0 %v4663
        %4785 = vmatmul.mubr.f32.gmra.mrb[0].mxu0 %v4626
        %v4786 = vpop.f32.mrb[0].mxu0
        %v4787 = vadd.f32 0.0, %v4786
        %v4788 = vpop.f32.mrb[0].mxu0
        %4789 = vdwg.mxu0
        %v4790 = vld [vmem:[#allocation10] sm:$0xff]
        %v4791 = vld [vmem:[#allocation10 + $0x8] sm:$0xff]
        %v4792 = vld [vmem:[#allocation10 + $0x10] sm:$0xff]
        %v4793 = vld [vmem:[#allocation10 + $0x18] sm:$0xff]
        %v4794 = vld [vmem:[#allocation10 + $0x20] sm:$0xff]
        %v4795 = vld [vmem:[#allocation10 + $0x28] sm:$0xff]
        %v4796 = vld [vmem:[#allocation10 + $0x30] sm:$0xff]
        %v4797 = vld [vmem:[#allocation10 + $0x38] sm:$0xff]
        %v4798 = vld [vmem:[#allocation10 + $0x40] sm:$0xff]
        %v4799 = vld [vmem:[#allocation10 + $0x48] sm:$0xff]
        %v4800 = vld [vmem:[#allocation10 + $0x50] sm:$0xff]
        %v4801 = vld [vmem:[#allocation10 + $0x58] sm:$0xff]
        %v4802 = vld [vmem:[#allocation10 + $0x60] sm:$0xff]
        %v4803 = vld [vmem:[#allocation10 + $0x68] sm:$0xff]
        %v4804 = vld [vmem:[#allocation10 + $0x70] sm:$0xff]
        %v4805 = vld [vmem:[#allocation10 + $0x78] sm:$0xff]
        %v4806 = vld [vmem:[#allocation10 + $0x80] sm:$0xff]
        %v4807 = vld [vmem:[#allocation10 + $0x88] sm:$0xff]
        %v4808 = vld [vmem:[#allocation10 + $0x90] sm:$0xff]
        %v4809 = vld [vmem:[#allocation10 + $0x98] sm:$0xff]
        %v4810 = vld [vmem:[#allocation10 + $0xa0] sm:$0xff]
        %v4811 = vld [vmem:[#allocation10 + $0xa8] sm:$0xff]
        %v4812 = vld [vmem:[#allocation10 + $0xb0] sm:$0xff]
        %v4813 = vld [vmem:[#allocation10 + $0xb8] sm:$0xff]
        %v4815 = vsel %vm4628, %v4791, 0
        %v4818 = vsel %vm4628, %v4793, 0
        %v4821 = vsel %vm4628, %v4795, 0
        %v4824 = vsel %vm4628, %v4797, 0
        %v4827 = vsel %vm4628, %v4799, 0
        %v4830 = vsel %vm4628, %v4801, 0
        %v4833 = vsel %vm4628, %v4803, 0
        %v4836 = vsel %vm4628, %v4805, 0
        %v4839 = vsel %vm4628, %v4807, 0
        %v4842 = vsel %vm4628, %v4809, 0
        %v4845 = vsel %vm4628, %v4811, 0
        %v4848 = vsel %vm4628, %v4813, 0
        %4850 = vmatprep.subr.mxu0 0.0
        %4851 = vmatpush1.msra.mxu0 %v4580
        %4852 = vmatprep.subr.mxu0 0.0
        %4853 = vmatpush1.msra.mxu0 %v4581
        %4854 = vmatprep.subr.mxu0 0.0
        %4855 = vmatpush1.msra.mxu0 %v4582
        %4856 = vmatprep.subr.mxu0 0.0
        %4857 = vmatpush1.msra.mxu0 %v4583
        %4858 = vmatprep.subr.mxu0 0.0
        %4859 = vmatpush1.msra.mxu0 %v4584
        %4860 = vmatprep.subr.mxu0 0.0
        %4861 = vmatpush1.msra.mxu0 %v4585
        %4862 = vmatprep.subr.mxu0 0.0
        %4863 = vmatpush1.msra.mxu0 %v4586
        %4864 = vmatprep.subr.mxu0 0.0
        %4865 = vmatpush1.msra.mxu0 %v4587
        %4866 = vmatprep.subr.mxu0 0.0
        %4867 = vmatpush1.msra.mxu0 %v4588
        %4868 = vmatprep.subr.mxu0 0.0
        %4869 = vmatpush1.msra.mxu0 %v4589
        %4870 = vmatprep.subr.mxu0 0.0
        %4871 = vmatpush1.msra.mxu0 %v4590
        %4872 = vmatprep.subr.mxu0 0.0
        %4873 = vmatpush1.msra.mxu0 %v4591
        %4874 = vmatprep.subr.mxu0 0.0
        %4875 = vmatpush1.msra.mxu0 %v4592
        %4876 = vmatprep.subr.mxu0 0.0
        %4877 = vmatpush1.msra.mxu0 %v4593
        %4878 = vmatprep.subr.mxu0 0.0
        %4879 = vmatpush1.msra.mxu0 %v4594
        %4880 = vmatprep.subr.mxu0 0.0
        %4881 = vmatpush1.msra.mxu0 %v4595
        %4882 = vmatprep.subr.mxu0 0.0
        %4883 = vmatpush1.msra.mxu0 %v4596
        %4884 = vmatprep.subr.mxu0 0.0
        %4885 = vmatpush1.msra.mxu0 %v4597
        %4886 = vmatprep.subr.mxu0 0.0
        %4887 = vmatpush1.msra.mxu0 %v4598
        %4888 = vmatprep.subr.mxu0 0.0
        %4889 = vmatpush1.msra.mxu0 %v4599
        %4890 = vmatprep.subr.mxu0 0.0
        %4891 = vmatpush1.msra.mxu0 %v4600
        %4892 = vmatprep.subr.mxu0 0.0
        %4893 = vmatpush1.msra.mxu0 %v4601
        %4894 = vmatprep.subr.mxu0 0.0
        %4895 = vmatpush1.msra.mxu0 %v4602
        %4896 = vmatprep.subr.mxu0 0.0
        %4897 = vmatpush1.msra.mxu0 %v4603
        %4898 = vmatprep.subr.mxu0 0.0
        %4899 = vmatpush1.msra.mxu0 0.0
        %4900 = vmatprep.subr.mxu0 0.0
        %4901 = vmatpush1.msra.mxu0 0.0
        %4902 = vmatprep.subr.mxu0 0.0
        %4903 = vmatpush1.msra.mxu0 0.0
        %4904 = vmatprep.subr.mxu0 0.0
        %4905 = vmatpush1.msra.mxu0 0.0
        %4906 = vmatprep.subr.mxu0 0.0
        %4907 = vmatpush1.msra.mxu0 0.0
        %4908 = vmatprep.subr.mxu0 0.0
        %4909 = vmatpush1.msra.mxu0 0.0
        %4910 = vmatprep.subr.mxu0 0.0
        %4911 = vmatpush1.msra.mxu0 0.0
        %4912 = vmatprep.subr.mxu0 0.0
        %4913 = vmatpush1.msra.mxu0 0.0
        %4914 = vmatprep.mubr.f32.mxu0 %v4815
        %4915 = vmatmul.mubr.f32.gmra.mrb[0].mxu0 %v4790
        %v4916 = vpop.f32.mrb[0].mxu0
        %v4917 = vadd.f32 0.0, %v4916
        %v4918 = vpop.f32.mrb[0].mxu0
        %4919 = vmatprep.mubr.f32.mxu0 %v4818
        %4920 = vmatmul.mubr.f32.gmra.mrb[0].mxu0 %v4792
        %v4921 = vpop.f32.mrb[0].mxu0
        %v4922 = vadd.f32 0.0, %v4921
        %v4923 = vpop.f32.mrb[0].mxu0
        %4924 = vmatprep.mubr.f32.mxu0 %v4821
        %4925 = vmatmul.mubr.f32.gmra.mrb[0].mxu0 %v4794
        %v4926 = vpop.f32.mrb[0].mxu0
        %v4927 = vadd.f32 0.0, %v4926
        %v4928 = vpop.f32.mrb[0].mxu0
        %4929 = vmatprep.mubr.f32.mxu0 %v4824
        %4930 = vmatmul.mubr.f32.gmra.mrb[0].mxu0 %v4796
        %v4931 = vpop.f32.mrb[0].mxu0
        %v4932 = vadd.f32 0.0, %v4931
        %v4933 = vpop.f32.mrb[0].mxu0
        %4934 = vmatprep.mubr.f32.mxu0 %v4827
        %4935 = vmatmul.mubr.f32.gmra.mrb[0].mxu0 %v4798
        %v4936 = vpop.f32.mrb[0].mxu0
        %v4937 = vadd.f32 0.0, %v4936
        %v4938 = vpop.f32.mrb[0].mxu0
        %4939 = vmatprep.mubr.f32.mxu0 %v4830
        %4940 = vmatmul.mubr.f32.gmra.mrb[0].mxu0 %v4800
        %v4941 = vpop.f32.mrb[0].mxu0
        %v4942 = vadd.f32 0.0, %v4941
        %v4943 = vpop.f32.mrb[0].mxu0
        %4944 = vmatprep.mubr.f32.mxu0 %v4833
        %4945 = vmatmul.mubr.f32.gmra.mrb[0].mxu0 %v4802
        %v4946 = vpop.f32.mrb[0].mxu0
        %v4947 = vadd.f32 0.0, %v4946
        %v4948 = vpop.f32.mrb[0].mxu0
        %4949 = vmatprep.mubr.f32.mxu0 %v4836
        %4950 = vmatmul.mubr.f32.gmra.mrb[0].mxu0 %v4804
        %v4951 = vpop.f32.mrb[0].mxu0
        %v4952 = vadd.f32 0.0, %v4951
        %v4953 = vpop.f32.mrb[0].mxu0
        %4954 = vmatprep.mubr.f32.mxu0 %v4839
        %4955 = vmatmul.mubr.f32.gmra.mrb[0].mxu0 %v4806
        %v4956 = vpop.f32.mrb[0].mxu0
        %v4957 = vadd.f32 0.0, %v4956
        %v4958 = vpop.f32.mrb[0].mxu0
        %4959 = vmatprep.mubr.f32.mxu0 %v4842
        %4960 = vmatmul.mubr.f32.gmra.mrb[0].mxu0 %v4808
        %v4961 = vpop.f32.mrb[0].mxu0
        %v4962 = vadd.f32 0.0, %v4961
        %v4963 = vpop.f32.mrb[0].mxu0
        %4964 = vmatprep.mubr.f32.mxu0 %v4845
        %4965 = vmatmul.mubr.f32.gmra.mrb[0].mxu0 %v4810
        %v4966 = vpop.f32.mrb[0].mxu0
        %v4967 = vadd.f32 0.0, %v4966
        %v4968 = vpop.f32.mrb[0].mxu0
        %4969 = vmatprep.mubr.f32.mxu0 %v4848
        %4970 = vmatmul.mubr.f32.gmra.mrb[0].mxu0 %v4812
        %v4971 = vpop.f32.mrb[0].mxu0
        %v4972 = vadd.f32 0.0, %v4971
        %v4973 = vpop.f32.mrb[0].mxu0
        %4974 = vdwg.mxu0
        %v4975 = vmax.f32 %v4732, %v4917
        %v4976 = vmax.f32 %v4737, %v4922
        %v4977 = vmax.f32 %v4742, %v4927
        %v4978 = vmax.f32 %v4747, %v4932
        %v4979 = vmax.f32 %v4752, %v4937
        %v4980 = vmax.f32 %v4757, %v4942
        %v4981 = vmax.f32 %v4762, %v4947
        %v4982 = vmax.f32 %v4767, %v4952
        %v4983 = vmax.f32 %v4772, %v4957
        %v4984 = vmax.f32 %v4777, %v4962
        %v4985 = vmax.f32 %v4782, %v4967
        %v4986 = vmax.f32 %v4787, %v4972
        %v4987 = vmax.f32 %v4975, 0.0
        %v4988 = vmax.f32 %v4976, 0.0
        %v4989 = vmax.f32 %v4977, 0.0
        %v4990 = vmax.f32 %v4978, 0.0
        %v4991 = vmax.f32 %v4979, 0.0
        %v4992 = vmax.f32 %v4980, 0.0
        %v4993 = vmax.f32 %v4981, 0.0
        %v4994 = vmax.f32 %v4982, 0.0
        %v4995 = vmax.f32 %v4983, 0.0
        %v4996 = vmax.f32 %v4984, 0.0
        %v4997 = vmax.f32 %v4985, 0.0
        %v4998 = vmax.f32 %v4986, 0.0
        %v4999 = vld [vmem:[#allocation13] sm:$0x3]
        %v5000 = vld [vmem:[#allocation11] sm:$0xff]
        %v5001 = vld [vmem:[#allocation11 + $0x8] sm:$0xff]
        %v5002 = vld [vmem:[#allocation11 + $0x10] sm:$0xff]
        %v5003 = vld [vmem:[#allocation11 + $0x18] sm:$0xff]
        %v5004 = vld [vmem:[#allocation11 + $0x20] sm:$0xff]
        %v5005 = vld [vmem:[#allocation11 + $0x28] sm:$0xff]
        %v5006 = vld [vmem:[#allocation11 + $0x30] sm:$0xff]
        %v5007 = vld [vmem:[#allocation11 + $0x38] sm:$0xff]
        %v5009 = vsel %vm863, %v5000, 0
        %v5012 = vsel %vm863, %v5001, 0
        %v5015 = vsel %vm863, %v5002, 0
        %v5018 = vsel %vm863, %v5003, 0
        %v5021 = vsel %vm863, %v5004, 0
        %v5024 = vsel %vm863, %v5005, 0
        %v5027 = vsel %vm863, %v5006, 0
        %v5030 = vsel %vm863, %v5007, 0
        %5032 = vmatprep.subr.mxu0 0.0
        %5033 = vmatpush1.msra.mxu0 %v4987
        %5034 = vmatprep.subr.mxu0 0.0
        %5035 = vmatpush1.msra.mxu0 %v4988
        %5036 = vmatprep.subr.mxu0 0.0
        %5037 = vmatpush1.msra.mxu0 %v4989
        %5038 = vmatprep.subr.mxu0 0.0
        %5039 = vmatpush1.msra.mxu0 %v4990
        %5040 = vmatprep.subr.mxu0 0.0
        %5041 = vmatpush1.msra.mxu0 %v4991
        %5042 = vmatprep.subr.mxu0 0.0
        %5043 = vmatpush1.msra.mxu0 %v4992
        %5044 = vmatprep.subr.mxu0 0.0
        %5045 = vmatpush1.msra.mxu0 %v4993
        %5046 = vmatprep.subr.mxu0 0.0
        %5047 = vmatpush1.msra.mxu0 %v4994
        %5048 = vmatprep.subr.mxu0 0.0
        %5049 = vmatpush1.msra.mxu0 %v4995
        %5050 = vmatprep.subr.mxu0 0.0
        %5051 = vmatpush1.msra.mxu0 %v4996
        %5052 = vmatprep.subr.mxu0 0.0
        %5053 = vmatpush1.msra.mxu0 %v4997
        %5054 = vmatprep.subr.mxu0 0.0
        %5055 = vmatpush1.msra.mxu0 %v4998
        %5056 = vmatprep.subr.mxu0 0.0
        %5057 = vmatpush1.msra.mxu0 0.0
        %5058 = vmatprep.subr.mxu0 0.0
        %5059 = vmatpush1.msra.mxu0 0.0
        %5060 = vmatprep.subr.mxu0 0.0
        %5061 = vmatpush1.msra.mxu0 0.0
        %5062 = vmatprep.subr.mxu0 0.0
        %5063 = vmatpush1.msra.mxu0 0.0
        %5064 = vmatprep.subr.mxu0 0.0
        %5065 = vmatpush1.msra.mxu0 0.0
        %5066 = vmatprep.subr.mxu0 0.0
        %5067 = vmatpush1.msra.mxu0 0.0
        %5068 = vmatprep.subr.mxu0 0.0
        %5069 = vmatpush1.msra.mxu0 0.0
        %5070 = vmatprep.subr.mxu0 0.0
        %5071 = vmatpush1.msra.mxu0 0.0
        %5072 = vmatprep.subr.mxu0 0.0
        %5073 = vmatpush1.msra.mxu0 0.0
        %5074 = vmatprep.subr.mxu0 0.0
        %5075 = vmatpush1.msra.mxu0 0.0
        %5076 = vmatprep.subr.mxu0 0.0
        %5077 = vmatpush1.msra.mxu0 0.0
        %5078 = vmatprep.subr.mxu0 0.0
        %5079 = vmatpush1.msra.mxu0 0.0
        %5080 = vmatprep.subr.mxu0 0.0
        %5081 = vmatpush1.msra.mxu0 0.0
        %5082 = vmatprep.subr.mxu0 0.0
        %5083 = vmatpush1.msra.mxu0 0.0
        %5084 = vmatprep.subr.mxu0 0.0
        %5085 = vmatpush1.msra.mxu0 0.0
        %5086 = vmatprep.subr.mxu0 0.0
        %5087 = vmatpush1.msra.mxu0 0.0
        %5088 = vmatprep.subr.mxu0 0.0
        %5089 = vmatpush1.msra.mxu0 0.0
        %5090 = vmatprep.subr.mxu0 0.0
        %5091 = vmatpush1.msra.mxu0 0.0
        %5092 = vmatprep.subr.mxu0 0.0
        %5093 = vmatpush1.msra.mxu0 0.0
        %5094 = vmatprep.subr.mxu0 0.0
        %5095 = vmatpush1.msra.mxu0 0.0
        %5096 = vmatprep.mubr.f32.mxu0 0.0
        %5097 = vmatmul.mubr.f32.gmra.mrb[0].mxu0 %v5009
        %v5098 = vpop.f32.mrb[0].mxu0
        %v5099 = vadd.f32 0.0, %v5098
        %v5100 = vpop.f32.mrb[0].mxu0
        %5101 = vmatprep.mubr.f32.mxu0 0.0
        %5102 = vmatmul.mubr.f32.gmra.mrb[0].mxu0 %v5012
        %v5103 = vpop.f32.mrb[0].mxu0
        %v5104 = vadd.f32 0.0, %v5103
        %v5105 = vpop.f32.mrb[0].mxu0
        %5106 = vmatprep.mubr.f32.mxu0 0.0
        %5107 = vmatmul.mubr.f32.gmra.mrb[0].mxu0 %v5015
        %v5108 = vpop.f32.mrb[0].mxu0
        %v5109 = vadd.f32 0.0, %v5108
        %v5110 = vpop.f32.mrb[0].mxu0
        %5111 = vmatprep.mubr.f32.mxu0 0.0
        %5112 = vmatmul.mubr.f32.gmra.mrb[0].mxu0 %v5018
        %v5113 = vpop.f32.mrb[0].mxu0
        %v5114 = vadd.f32 0.0, %v5113
        %v5115 = vpop.f32.mrb[0].mxu0
        %5116 = vmatprep.mubr.f32.mxu0 0.0
        %5117 = vmatmul.mubr.f32.gmra.mrb[0].mxu0 %v5021
        %v5118 = vpop.f32.mrb[0].mxu0
        %v5119 = vadd.f32 0.0, %v5118
        %v5120 = vpop.f32.mrb[0].mxu0
        %5121 = vmatprep.mubr.f32.mxu0 0.0
        %5122 = vmatmul.mubr.f32.gmra.mrb[0].mxu0 %v5024
        %v5123 = vpop.f32.mrb[0].mxu0
        %v5124 = vadd.f32 0.0, %v5123
        %v5125 = vpop.f32.mrb[0].mxu0
        %5126 = vmatprep.mubr.f32.mxu0 0.0
        %5127 = vmatmul.mubr.f32.gmra.mrb[0].mxu0 %v5027
        %v5128 = vpop.f32.mrb[0].mxu0
        %v5129 = vadd.f32 0.0, %v5128
        %v5130 = vpop.f32.mrb[0].mxu0
        %5131 = vmatprep.mubr.f32.mxu0 0.0
        %5132 = vmatmul.mubr.f32.gmra.mrb[0].mxu0 %v5030
        %v5133 = vpop.f32.mrb[0].mxu0
        %v5134 = vadd.f32 0.0, %v5133
        %v5135 = vpop.f32.mrb[0].mxu0
        %5136 = vdwg.mxu0
        %v5137 = vld [vmem:[%s9] sm:$0xff]
        %v5138 = vld [vmem:[%s9 + $0x8] sm:$0xff]
        %v5139 = vld [vmem:[%s9 + $0x10] sm:$0xff]
        %v5140 = vld [vmem:[%s9 + $0x18] sm:$0xff]
        %v5141 = vld [vmem:[%s9 + $0x20] sm:$0xff]
        %v5142 = vld [vmem:[%s9 + $0x28] sm:$0xff]
        %v5143 = vld [vmem:[%s9 + $0x30] sm:$0xff]
        %v5144 = vld [vmem:[%s9 + $0x38] sm:$0xff]
        %v5145 = vld [vmem:[%s9 + $0x40] sm:$0xff]
        %v5146 = vld [vmem:[%s9 + $0x48] sm:$0xff]
        %v5147 = vld [vmem:[%s9 + $0x50] sm:$0xff]
        %v5148 = vld [vmem:[%s9 + $0x58] sm:$0xff]
        %v5149 = vld [vmem:[%s9 + $0x60] sm:$0xff]
        %v5150 = vld [vmem:[%s9 + $0x68] sm:$0xff]
        %v5151 = vld [vmem:[%s9 + $0x70] sm:$0xff]
        %v5152 = vld [vmem:[%s9 + $0x78] sm:$0xff]
        %v5153 = vld [vmem:[%s9 + $0x80] sm:$0xff]
        %v5154 = vld [vmem:[%s9 + $0x88] sm:$0xff]
        %v5155 = vld [vmem:[%s9 + $0x90] sm:$0xff]
        %v5156 = vld [vmem:[%s9 + $0x98] sm:$0xff]
        %v5157 = vld [vmem:[%s9 + $0xa0] sm:$0xff]
        %v5158 = vld [vmem:[%s9 + $0xa8] sm:$0xff]
        %v5159 = vld [vmem:[%s9 + $0xb0] sm:$0xff]
        %v5160 = vld [vmem:[%s9 + $0xb8] sm:$0xff]
        %v5161 = vld [vmem:[%s9 + $0xc0] sm:$0xff]
        %v5162 = vld [vmem:[%s9 + $0xc8] sm:$0xff]
        %v5163 = vld [vmem:[%s9 + $0xd0] sm:$0xff]
        %v5164 = vld [vmem:[%s9 + $0xd8] sm:$0xff]
        %v5165 = vld [vmem:[%s9 + $0xe0] sm:$0xff]
        %v5166 = vld [vmem:[%s9 + $0xe8] sm:$0xff]
        %vm5167 = vcmask 982016
        %v5169 = vsel %vm5167, %v5099, 0
        %v5172 = vsel %vm5167, %v5104, 0
        %v5175 = vsel %vm5167, %v5109, 0
        %v5178 = vsel %vm5167, %v5114, 0
        %v5181 = vsel %vm5167, %v5119, 0
        %v5184 = vsel %vm5167, %v5124, 0
        %v5187 = vsel %vm5167, %v5129, 0
        %v5190 = vsel %vm5167, %v5134, 0
        %5192 = vmatprep.subr.mxu0 %v5138
        %5193 = vmatpush1.msra.mxu0 %v5137
        %5194 = vmatprep.subr.mxu0 %v5140
        %5195 = vmatpush1.msra.mxu0 %v5139
        %5196 = vmatprep.subr.mxu0 %v5142
        %5197 = vmatpush1.msra.mxu0 %v5141
        %5198 = vmatprep.subr.mxu0 %v5144
        %5199 = vmatpush1.msra.mxu0 %v5143
        %5200 = vmatprep.subr.mxu0 %v5146
        %5201 = vmatpush1.msra.mxu0 %v5145
        %5202 = vmatprep.subr.mxu0 %v5148
        %5203 = vmatpush1.msra.mxu0 %v5147
        %5204 = vmatprep.subr.mxu0 %v5150
        %5205 = vmatpush1.msra.mxu0 %v5149
        %5206 = vmatprep.subr.mxu0 %v5152
        %5207 = vmatpush1.msra.mxu0 %v5151
        %5208 = vmatprep.subr.mxu0 %v5154
        %5209 = vmatpush1.msra.mxu0 %v5153
        %5210 = vmatprep.subr.mxu0 %v5156
        %5211 = vmatpush1.msra.mxu0 %v5155
        %5212 = vmatprep.subr.mxu0 %v5158
        %5213 = vmatpush1.msra.mxu0 %v5157
        %5214 = vmatprep.subr.mxu0 %v5160
        %5215 = vmatpush1.msra.mxu0 %v5159
        %5216 = vmatprep.subr.mxu0 %v5162
        %5217 = vmatpush1.msra.mxu0 %v5161
        %5218 = vmatprep.subr.mxu0 %v5164
        %5219 = vmatpush1.msra.mxu0 %v5163
        %5220 = vmatprep.subr.mxu0 %v5166
        %5221 = vmatpush1.msra.mxu0 %v5165
        %5222 = vmatprep.subr.mxu0 0.0
        %5223 = vmatpush1.msra.mxu0 0.0
        %5224 = vmatprep.subr.mxu0 0.0
        %5225 = vmatpush1.msra.mxu0 0.0
        %5226 = vmatprep.subr.mxu0 0.0
        %5227 = vmatpush1.msra.mxu0 0.0
        %5228 = vmatprep.subr.mxu0 0.0
        %5229 = vmatpush1.msra.mxu0 0.0
        %5230 = vmatprep.subr.mxu0 0.0
        %5231 = vmatpush1.msra.mxu0 0.0
        %5232 = vmatprep.subr.mxu0 0.0
        %5233 = vmatpush1.msra.mxu0 0.0
        %5234 = vmatprep.subr.mxu0 0.0
        %5235 = vmatpush1.msra.mxu0 0.0
        %5236 = vmatprep.subr.mxu0 0.0
        %5237 = vmatpush1.msra.mxu0 0.0
        %5238 = vmatprep.subr.mxu0 0.0
        %5239 = vmatpush1.msra.mxu0 0.0
        %5240 = vmatprep.subr.mxu0 0.0
        %5241 = vmatpush1.msra.mxu0 0.0
        %5242 = vmatprep.subr.mxu0 0.0
        %5243 = vmatpush1.msra.mxu0 0.0
        %5244 = vmatprep.subr.mxu0 0.0
        %5245 = vmatpush1.msra.mxu0 0.0
        %5246 = vmatprep.subr.mxu0 0.0
        %5247 = vmatpush1.msra.mxu0 0.0
        %5248 = vmatprep.subr.mxu0 0.0
        %5249 = vmatpush1.msra.mxu0 0.0
        %5250 = vmatprep.subr.mxu0 0.0
        %5251 = vmatpush1.msra.mxu0 0.0
        %5252 = vmatprep.subr.mxu0 0.0
        %5253 = vmatpush1.msra.mxu0 0.0
        %5254 = vmatprep.subr.mxu0 0.0
        %5255 = vmatpush1.msra.mxu0 0.0
        %5256 = vmatprep.mubr.f32.mxu0 0.0
        %5257 = vmatmul.mubr.f32.gmra.mrb[0].mxu0 %v5169
        %v5258 = vpop.f32.mrb[0].mxu0
        %v5259 = vadd.f32 0.0, %v5258
        %v5260 = vpop.f32.mrb[0].mxu0
        %v5261 = vadd.f32 0.0, %v5260
        %5262 = vmatprep.mubr.f32.mxu0 0.0
        %5263 = vmatmul.mubr.f32.gmra.mrb[0].mxu0 %v5172
        %v5264 = vpop.f32.mrb[0].mxu0
        %v5265 = vadd.f32 0.0, %v5264
        %v5266 = vpop.f32.mrb[0].mxu0
        %v5267 = vadd.f32 0.0, %v5266
        %5268 = vmatprep.mubr.f32.mxu0 0.0
        %5269 = vmatmul.mubr.f32.gmra.mrb[0].mxu0 %v5175
        %v5270 = vpop.f32.mrb[0].mxu0
        %v5271 = vadd.f32 0.0, %v5270
        %v5272 = vpop.f32.mrb[0].mxu0
        %v5273 = vadd.f32 0.0, %v5272
        %5274 = vmatprep.mubr.f32.mxu0 0.0
        %5275 = vmatmul.mubr.f32.gmra.mrb[0].mxu0 %v5178
        %v5276 = vpop.f32.mrb[0].mxu0
        %v5277 = vadd.f32 0.0, %v5276
        %v5278 = vpop.f32.mrb[0].mxu0
        %v5279 = vadd.f32 0.0, %v5278
        %5280 = vmatprep.mubr.f32.mxu0 0.0
        %5281 = vmatmul.mubr.f32.gmra.mrb[0].mxu0 %v5181
        %v5282 = vpop.f32.mrb[0].mxu0
        %v5283 = vadd.f32 0.0, %v5282
        %v5284 = vpop.f32.mrb[0].mxu0
        %v5285 = vadd.f32 0.0, %v5284
        %5286 = vmatprep.mubr.f32.mxu0 0.0
        %5287 = vmatmul.mubr.f32.gmra.mrb[0].mxu0 %v5184
        %v5288 = vpop.f32.mrb[0].mxu0
        %v5289 = vadd.f32 0.0, %v5288
        %v5290 = vpop.f32.mrb[0].mxu0
        %v5291 = vadd.f32 0.0, %v5290
        %5292 = vmatprep.mubr.f32.mxu0 0.0
        %5293 = vmatmul.mubr.f32.gmra.mrb[0].mxu0 %v5187
        %v5294 = vpop.f32.mrb[0].mxu0
        %v5295 = vadd.f32 0.0, %v5294
        %v5296 = vpop.f32.mrb[0].mxu0
        %v5297 = vadd.f32 0.0, %v5296
        %5298 = vmatprep.mubr.f32.mxu0 0.0
        %5299 = vmatmul.mubr.f32.gmra.mrb[0].mxu0 %v5190
        %v5300 = vpop.f32.mrb[0].mxu0
        %v5301 = vadd.f32 0.0, %v5300
        %v5302 = vpop.f32.mrb[0].mxu0
        %v5303 = vadd.f32 0.0, %v5302
        %5304 = vdwg.mxu0
        %v5306 = vlaneseq
        %v5307 = vshrl.u32 %v5306, 7
        %v5308 = vsub.s32 0, %v5307
        %v5309 = vrot.slane %v4999, %v5308
        %v5310 = vlaneseq
        %v5311 = vshrl.u32 %v5310, 7
        %v5312 = vsub.s32 1, %v5311
        %v5313 = vrot.slane %v4999, %v5312
        %v5316 = vadd.f32 %v5309, %v5259
        %v5317 = vadd.f32 %v5313, %v5261
        %v5318 = vadd.f32 %v5309, %v5265
        %v5319 = vadd.f32 %v5313, %v5267
        %v5320 = vadd.f32 %v5309, %v5271
        %v5321 = vadd.f32 %v5313, %v5273
        %v5322 = vadd.f32 %v5309, %v5277
        %v5323 = vadd.f32 %v5313, %v5279
        %v5324 = vadd.f32 %v5309, %v5283
        %v5325 = vadd.f32 %v5313, %v5285
        %v5326 = vadd.f32 %v5309, %v5289
        %v5327 = vadd.f32 %v5313, %v5291
        %v5328 = vadd.f32 %v5309, %v5295
        %v5329 = vadd.f32 %v5313, %v5297
        %v5330 = vadd.f32 %v5309, %v5301
        %v5331 = vadd.f32 %v5313, %v5303
        %s5332 = scalar_lea.vmem [#allocation11], 64
        %v5333 = vld [vmem:[%s5332] sm:$0xff]
        %v5334 = vld [vmem:[%s5332 + $0x8] sm:$0xff]
        %v5335 = vld [vmem:[%s5332 + $0x10] sm:$0xff]
        %v5336 = vld [vmem:[%s5332 + $0x18] sm:$0xff]
        %v5337 = vld [vmem:[%s5332 + $0x20] sm:$0xff]
        %v5338 = vld [vmem:[%s5332 + $0x28] sm:$0xff]
        %v5339 = vld [vmem:[%s5332 + $0x30] sm:$0xff]
        %v5340 = vld [vmem:[%s5332 + $0x38] sm:$0xff]
        %v5342 = vsel %vm863, %v5333, 0
        %v5345 = vsel %vm863, %v5334, 0
        %v5348 = vsel %vm863, %v5335, 0
        %v5351 = vsel %vm863, %v5336, 0
        %v5354 = vsel %vm863, %v5337, 0
        %v5357 = vsel %vm863, %v5338, 0
        %v5360 = vsel %vm863, %v5339, 0
        %v5363 = vsel %vm863, %v5340, 0
        %5365 = vmatprep.subr.mxu0 0.0
        %5366 = vmatpush1.msra.mxu0 %v4987
        %5367 = vmatprep.subr.mxu0 0.0
        %5368 = vmatpush1.msra.mxu0 %v4988
        %5369 = vmatprep.subr.mxu0 0.0
        %5370 = vmatpush1.msra.mxu0 %v4989
        %5371 = vmatprep.subr.mxu0 0.0
        %5372 = vmatpush1.msra.mxu0 %v4990
        %5373 = vmatprep.subr.mxu0 0.0
        %5374 = vmatpush1.msra.mxu0 %v4991
        %5375 = vmatprep.subr.mxu0 0.0
        %5376 = vmatpush1.msra.mxu0 %v4992
        %5377 = vmatprep.subr.mxu0 0.0
        %5378 = vmatpush1.msra.mxu0 %v4993
        %5379 = vmatprep.subr.mxu0 0.0
        %5380 = vmatpush1.msra.mxu0 %v4994
        %5381 = vmatprep.subr.mxu0 0.0
        %5382 = vmatpush1.msra.mxu0 %v4995
        %5383 = vmatprep.subr.mxu0 0.0
        %5384 = vmatpush1.msra.mxu0 %v4996
        %5385 = vmatprep.subr.mxu0 0.0
        %5386 = vmatpush1.msra.mxu0 %v4997
        %5387 = vmatprep.subr.mxu0 0.0
        %5388 = vmatpush1.msra.mxu0 %v4998
        %5389 = vmatprep.subr.mxu0 0.0
        %5390 = vmatpush1.msra.mxu0 0.0
        %5391 = vmatprep.subr.mxu0 0.0
        %5392 = vmatpush1.msra.mxu0 0.0
        %5393 = vmatprep.subr.mxu0 0.0
        %5394 = vmatpush1.msra.mxu0 0.0
        %5395 = vmatprep.subr.mxu0 0.0
        %5396 = vmatpush1.msra.mxu0 0.0
        %5397 = vmatprep.subr.mxu0 0.0
        %5398 = vmatpush1.msra.mxu0 0.0
        %5399 = vmatprep.subr.mxu0 0.0
        %5400 = vmatpush1.msra.mxu0 0.0
        %5401 = vmatprep.subr.mxu0 0.0
        %5402 = vmatpush1.msra.mxu0 0.0
        %5403 = vmatprep.subr.mxu0 0.0
        %5404 = vmatpush1.msra.mxu0 0.0
        %5405 = vmatprep.subr.mxu0 0.0
        %5406 = vmatpush1.msra.mxu0 0.0
        %5407 = vmatprep.subr.mxu0 0.0
        %5408 = vmatpush1.msra.mxu0 0.0
        %5409 = vmatprep.subr.mxu0 0.0
        %5410 = vmatpush1.msra.mxu0 0.0
        %5411 = vmatprep.subr.mxu0 0.0
        %5412 = vmatpush1.msra.mxu0 0.0
        %5413 = vmatprep.subr.mxu0 0.0
        %5414 = vmatpush1.msra.mxu0 0.0
        %5415 = vmatprep.subr.mxu0 0.0
        %5416 = vmatpush1.msra.mxu0 0.0
        %5417 = vmatprep.subr.mxu0 0.0
        %5418 = vmatpush1.msra.mxu0 0.0
        %5419 = vmatprep.subr.mxu0 0.0
        %5420 = vmatpush1.msra.mxu0 0.0
        %5421 = vmatprep.subr.mxu0 0.0
        %5422 = vmatpush1.msra.mxu0 0.0
        %5423 = vmatprep.subr.mxu0 0.0
        %5424 = vmatpush1.msra.mxu0 0.0
        %5425 = vmatprep.subr.mxu0 0.0
        %5426 = vmatpush1.msra.mxu0 0.0
        %5427 = vmatprep.subr.mxu0 0.0
        %5428 = vmatpush1.msra.mxu0 0.0
        %5429 = vmatprep.mubr.f32.mxu0 0.0
        %5430 = vmatmul.mubr.f32.gmra.mrb[0].mxu0 %v5342
        %v5431 = vpop.f32.mrb[0].mxu0
        %v5432 = vadd.f32 0.0, %v5431
        %v5433 = vpop.f32.mrb[0].mxu0
        %5434 = vmatprep.mubr.f32.mxu0 0.0
        %5435 = vmatmul.mubr.f32.gmra.mrb[0].mxu0 %v5345
        %v5436 = vpop.f32.mrb[0].mxu0
        %v5437 = vadd.f32 0.0, %v5436
        %v5438 = vpop.f32.mrb[0].mxu0
        %5439 = vmatprep.mubr.f32.mxu0 0.0
        %5440 = vmatmul.mubr.f32.gmra.mrb[0].mxu0 %v5348
        %v5441 = vpop.f32.mrb[0].mxu0
        %v5442 = vadd.f32 0.0, %v5441
        %v5443 = vpop.f32.mrb[0].mxu0
        %5444 = vmatprep.mubr.f32.mxu0 0.0
        %5445 = vmatmul.mubr.f32.gmra.mrb[0].mxu0 %v5351
        %v5446 = vpop.f32.mrb[0].mxu0
        %v5447 = vadd.f32 0.0, %v5446
        %v5448 = vpop.f32.mrb[0].mxu0
        %5449 = vmatprep.mubr.f32.mxu0 0.0
        %5450 = vmatmul.mubr.f32.gmra.mrb[0].mxu0 %v5354
        %v5451 = vpop.f32.mrb[0].mxu0
        %v5452 = vadd.f32 0.0, %v5451
        %v5453 = vpop.f32.mrb[0].mxu0
        %5454 = vmatprep.mubr.f32.mxu0 0.0
        %5455 = vmatmul.mubr.f32.gmra.mrb[0].mxu0 %v5357
        %v5456 = vpop.f32.mrb[0].mxu0
        %v5457 = vadd.f32 0.0, %v5456
        %v5458 = vpop.f32.mrb[0].mxu0
        %5459 = vmatprep.mubr.f32.mxu0 0.0
        %5460 = vmatmul.mubr.f32.gmra.mrb[0].mxu0 %v5360
        %v5461 = vpop.f32.mrb[0].mxu0
        %v5462 = vadd.f32 0.0, %v5461
        %v5463 = vpop.f32.mrb[0].mxu0
        %5464 = vmatprep.mubr.f32.mxu0 0.0
        %5465 = vmatmul.mubr.f32.gmra.mrb[0].mxu0 %v5363
        %v5466 = vpop.f32.mrb[0].mxu0
        %v5467 = vadd.f32 0.0, %v5466
        %v5468 = vpop.f32.mrb[0].mxu0
        %5469 = vdwg.mxu0
        %s5470 = scalar_lea.vmem %s9, 240
        %v5471 = vld [vmem:[%s5470] sm:$0xff]
        %v5472 = vld [vmem:[%s5470 + $0x8] sm:$0xff]
        %v5473 = vld [vmem:[%s5470 + $0x10] sm:$0xff]
        %v5474 = vld [vmem:[%s5470 + $0x18] sm:$0xff]
        %v5475 = vld [vmem:[%s5470 + $0x20] sm:$0xff]
        %v5476 = vld [vmem:[%s5470 + $0x28] sm:$0xff]
        %v5477 = vld [vmem:[%s5470 + $0x30] sm:$0xff]
        %v5478 = vld [vmem:[%s5470 + $0x38] sm:$0xff]
        %v5479 = vld [vmem:[%s5470 + $0x40] sm:$0xff]
        %v5480 = vld [vmem:[%s5470 + $0x48] sm:$0xff]
        %v5481 = vld [vmem:[%s5470 + $0x50] sm:$0xff]
        %v5482 = vld [vmem:[%s5470 + $0x58] sm:$0xff]
        %v5483 = vld [vmem:[%s5470 + $0x60] sm:$0xff]
        %v5484 = vld [vmem:[%s5470 + $0x68] sm:$0xff]
        %v5485 = vld [vmem:[%s5470 + $0x70] sm:$0xff]
        %v5486 = vld [vmem:[%s5470 + $0x78] sm:$0xff]
        %v5487 = vld [vmem:[%s5470 + $0x80] sm:$0xff]
        %v5488 = vld [vmem:[%s5470 + $0x88] sm:$0xff]
        %v5489 = vld [vmem:[%s5470 + $0x90] sm:$0xff]
        %v5490 = vld [vmem:[%s5470 + $0x98] sm:$0xff]
        %v5491 = vld [vmem:[%s5470 + $0xa0] sm:$0xff]
        %v5492 = vld [vmem:[%s5470 + $0xa8] sm:$0xff]
        %v5493 = vld [vmem:[%s5470 + $0xb0] sm:$0xff]
        %v5494 = vld [vmem:[%s5470 + $0xb8] sm:$0xff]
        %v5495 = vld [vmem:[%s5470 + $0xc0] sm:$0xff]
        %v5496 = vld [vmem:[%s5470 + $0xc8] sm:$0xff]
        %v5497 = vld [vmem:[%s5470 + $0xd0] sm:$0xff]
        %v5498 = vld [vmem:[%s5470 + $0xd8] sm:$0xff]
        %v5499 = vld [vmem:[%s5470 + $0xe0] sm:$0xff]
        %v5500 = vld [vmem:[%s5470 + $0xe8] sm:$0xff]
        %v5502 = vsel %vm5167, %v5432, 0
        %v5505 = vsel %vm5167, %v5437, 0
        %v5508 = vsel %vm5167, %v5442, 0
        %v5511 = vsel %vm5167, %v5447, 0
        %v5514 = vsel %vm5167, %v5452, 0
        %v5517 = vsel %vm5167, %v5457, 0
        %v5520 = vsel %vm5167, %v5462, 0
        %v5523 = vsel %vm5167, %v5467, 0
        %5525 = vmatprep.subr.mxu0 %v5472
        %5526 = vmatpush1.msra.mxu0 %v5471
        %5527 = vmatprep.subr.mxu0 %v5474
        %5528 = vmatpush1.msra.mxu0 %v5473
        %5529 = vmatprep.subr.mxu0 %v5476
        %5530 = vmatpush1.msra.mxu0 %v5475
        %5531 = vmatprep.subr.mxu0 %v5478
        %5532 = vmatpush1.msra.mxu0 %v5477
        %5533 = vmatprep.subr.mxu0 %v5480
        %5534 = vmatpush1.msra.mxu0 %v5479
        %5535 = vmatprep.subr.mxu0 %v5482
        %5536 = vmatpush1.msra.mxu0 %v5481
        %5537 = vmatprep.subr.mxu0 %v5484
        %5538 = vmatpush1.msra.mxu0 %v5483
        %5539 = vmatprep.subr.mxu0 %v5486
        %5540 = vmatpush1.msra.mxu0 %v5485
        %5541 = vmatprep.subr.mxu0 %v5488
        %5542 = vmatpush1.msra.mxu0 %v5487
        %5543 = vmatprep.subr.mxu0 %v5490
        %5544 = vmatpush1.msra.mxu0 %v5489
        %5545 = vmatprep.subr.mxu0 %v5492
        %5546 = vmatpush1.msra.mxu0 %v5491
        %5547 = vmatprep.subr.mxu0 %v5494
        %5548 = vmatpush1.msra.mxu0 %v5493
        %5549 = vmatprep.subr.mxu0 %v5496
        %5550 = vmatpush1.msra.mxu0 %v5495
        %5551 = vmatprep.subr.mxu0 %v5498
        %5552 = vmatpush1.msra.mxu0 %v5497
        %5553 = vmatprep.subr.mxu0 %v5500
        %5554 = vmatpush1.msra.mxu0 %v5499
        %5555 = vmatprep.subr.mxu0 0.0
        %5556 = vmatpush1.msra.mxu0 0.0
        %5557 = vmatprep.subr.mxu0 0.0
        %5558 = vmatpush1.msra.mxu0 0.0
        %5559 = vmatprep.subr.mxu0 0.0
        %5560 = vmatpush1.msra.mxu0 0.0
        %5561 = vmatprep.subr.mxu0 0.0
        %5562 = vmatpush1.msra.mxu0 0.0
        %5563 = vmatprep.subr.mxu0 0.0
        %5564 = vmatpush1.msra.mxu0 0.0
        %5565 = vmatprep.subr.mxu0 0.0
        %5566 = vmatpush1.msra.mxu0 0.0
        %5567 = vmatprep.subr.mxu0 0.0
        %5568 = vmatpush1.msra.mxu0 0.0
        %5569 = vmatprep.subr.mxu0 0.0
        %5570 = vmatpush1.msra.mxu0 0.0
        %5571 = vmatprep.subr.mxu0 0.0
        %5572 = vmatpush1.msra.mxu0 0.0
        %5573 = vmatprep.subr.mxu0 0.0
        %5574 = vmatpush1.msra.mxu0 0.0
        %5575 = vmatprep.subr.mxu0 0.0
        %5576 = vmatpush1.msra.mxu0 0.0
        %5577 = vmatprep.subr.mxu0 0.0
        %5578 = vmatpush1.msra.mxu0 0.0
        %5579 = vmatprep.subr.mxu0 0.0
        %5580 = vmatpush1.msra.mxu0 0.0
        %5581 = vmatprep.subr.mxu0 0.0
        %5582 = vmatpush1.msra.mxu0 0.0
        %5583 = vmatprep.subr.mxu0 0.0
        %5584 = vmatpush1.msra.mxu0 0.0
        %5585 = vmatprep.subr.mxu0 0.0
        %5586 = vmatpush1.msra.mxu0 0.0
        %5587 = vmatprep.subr.mxu0 0.0
        %5588 = vmatpush1.msra.mxu0 0.0
        %5589 = vmatprep.mubr.f32.mxu0 0.0
        %5590 = vmatmul.mubr.f32.gmra.mrb[0].mxu0 %v5502
        %v5591 = vpop.f32.mrb[0].mxu0
        %v5592 = vadd.f32 0.0, %v5591
        %v5593 = vpop.f32.mrb[0].mxu0
        %v5594 = vadd.f32 0.0, %v5593
        %5595 = vmatprep.mubr.f32.mxu0 0.0
        %5596 = vmatmul.mubr.f32.gmra.mrb[0].mxu0 %v5505
        %v5597 = vpop.f32.mrb[0].mxu0
        %v5598 = vadd.f32 0.0, %v5597
        %v5599 = vpop.f32.mrb[0].mxu0
        %v5600 = vadd.f32 0.0, %v5599
        %5601 = vmatprep.mubr.f32.mxu0 0.0
        %5602 = vmatmul.mubr.f32.gmra.mrb[0].mxu0 %v5508
        %v5603 = vpop.f32.mrb[0].mxu0
        %v5604 = vadd.f32 0.0, %v5603
        %v5605 = vpop.f32.mrb[0].mxu0
        %v5606 = vadd.f32 0.0, %v5605
        %5607 = vmatprep.mubr.f32.mxu0 0.0
        %5608 = vmatmul.mubr.f32.gmra.mrb[0].mxu0 %v5511
        %v5609 = vpop.f32.mrb[0].mxu0
        %v5610 = vadd.f32 0.0, %v5609
        %v5611 = vpop.f32.mrb[0].mxu0
        %v5612 = vadd.f32 0.0, %v5611
        %5613 = vmatprep.mubr.f32.mxu0 0.0
        %5614 = vmatmul.mubr.f32.gmra.mrb[0].mxu0 %v5514
        %v5615 = vpop.f32.mrb[0].mxu0
        %v5616 = vadd.f32 0.0, %v5615
        %v5617 = vpop.f32.mrb[0].mxu0
        %v5618 = vadd.f32 0.0, %v5617
        %5619 = vmatprep.mubr.f32.mxu0 0.0
        %5620 = vmatmul.mubr.f32.gmra.mrb[0].mxu0 %v5517
        %v5621 = vpop.f32.mrb[0].mxu0
        %v5622 = vadd.f32 0.0, %v5621
        %v5623 = vpop.f32.mrb[0].mxu0
        %v5624 = vadd.f32 0.0, %v5623
        %5625 = vmatprep.mubr.f32.mxu0 0.0
        %5626 = vmatmul.mubr.f32.gmra.mrb[0].mxu0 %v5520
        %v5627 = vpop.f32.mrb[0].mxu0
        %v5628 = vadd.f32 0.0, %v5627
        %v5629 = vpop.f32.mrb[0].mxu0
        %v5630 = vadd.f32 0.0, %v5629
        %5631 = vmatprep.mubr.f32.mxu0 0.0
        %5632 = vmatmul.mubr.f32.gmra.mrb[0].mxu0 %v5523
        %v5633 = vpop.f32.mrb[0].mxu0
        %v5634 = vadd.f32 0.0, %v5633
        %v5635 = vpop.f32.mrb[0].mxu0
        %v5636 = vadd.f32 0.0, %v5635
        %5637 = vdwg.mxu0
        %v5638 = vadd.f32 %v5316, %v5592
        %v5639 = vadd.f32 %v5317, %v5594
        %v5640 = vadd.f32 %v5318, %v5598
        %v5641 = vadd.f32 %v5319, %v5600
        %v5642 = vadd.f32 %v5320, %v5604
        %v5643 = vadd.f32 %v5321, %v5606
        %v5644 = vadd.f32 %v5322, %v5610
        %v5645 = vadd.f32 %v5323, %v5612
        %v5646 = vadd.f32 %v5324, %v5616
        %v5647 = vadd.f32 %v5325, %v5618
        %v5648 = vadd.f32 %v5326, %v5622
        %v5649 = vadd.f32 %v5327, %v5624
        %v5650 = vadd.f32 %v5328, %v5628
        %v5651 = vadd.f32 %v5329, %v5630
        %v5652 = vadd.f32 %v5330, %v5634
        %v5653 = vadd.f32 %v5331, %v5636
        %s5654 = scalar_lea.vmem [#allocation11], 128
        %v5655 = vld [vmem:[%s5654] sm:$0xff]
        %v5656 = vld [vmem:[%s5654 + $0x8] sm:$0xff]
        %v5657 = vld [vmem:[%s5654 + $0x10] sm:$0xff]
        %v5658 = vld [vmem:[%s5654 + $0x18] sm:$0xff]
        %v5659 = vld [vmem:[%s5654 + $0x20] sm:$0xff]
        %v5660 = vld [vmem:[%s5654 + $0x28] sm:$0xff]
        %v5661 = vld [vmem:[%s5654 + $0x30] sm:$0xff]
        %v5662 = vld [vmem:[%s5654 + $0x38] sm:$0xff]
        %v5664 = vsel %vm863, %v5655, 0
        %v5667 = vsel %vm863, %v5656, 0
        %v5670 = vsel %vm863, %v5657, 0
        %v5673 = vsel %vm863, %v5658, 0
        %v5676 = vsel %vm863, %v5659, 0
        %v5679 = vsel %vm863, %v5660, 0
        %v5682 = vsel %vm863, %v5661, 0
        %v5685 = vsel %vm863, %v5662, 0
        %5687 = vmatprep.subr.mxu0 0.0
        %5688 = vmatpush1.msra.mxu0 %v4987
        %5689 = vmatprep.subr.mxu0 0.0
        %5690 = vmatpush1.msra.mxu0 %v4988
        %5691 = vmatprep.subr.mxu0 0.0
        %5692 = vmatpush1.msra.mxu0 %v4989
        %5693 = vmatprep.subr.mxu0 0.0
        %5694 = vmatpush1.msra.mxu0 %v4990
        %5695 = vmatprep.subr.mxu0 0.0
        %5696 = vmatpush1.msra.mxu0 %v4991
        %5697 = vmatprep.subr.mxu0 0.0
        %5698 = vmatpush1.msra.mxu0 %v4992
        %5699 = vmatprep.subr.mxu0 0.0
        %5700 = vmatpush1.msra.mxu0 %v4993
        %5701 = vmatprep.subr.mxu0 0.0
        %5702 = vmatpush1.msra.mxu0 %v4994
        %5703 = vmatprep.subr.mxu0 0.0
        %5704 = vmatpush1.msra.mxu0 %v4995
        %5705 = vmatprep.subr.mxu0 0.0
        %5706 = vmatpush1.msra.mxu0 %v4996
        %5707 = vmatprep.subr.mxu0 0.0
        %5708 = vmatpush1.msra.mxu0 %v4997
        %5709 = vmatprep.subr.mxu0 0.0
        %5710 = vmatpush1.msra.mxu0 %v4998
        %5711 = vmatprep.subr.mxu0 0.0
        %5712 = vmatpush1.msra.mxu0 0.0
        %5713 = vmatprep.subr.mxu0 0.0
        %5714 = vmatpush1.msra.mxu0 0.0
        %5715 = vmatprep.subr.mxu0 0.0
        %5716 = vmatpush1.msra.mxu0 0.0
        %5717 = vmatprep.subr.mxu0 0.0
        %5718 = vmatpush1.msra.mxu0 0.0
        %5719 = vmatprep.subr.mxu0 0.0
        %5720 = vmatpush1.msra.mxu0 0.0
        %5721 = vmatprep.subr.mxu0 0.0
        %5722 = vmatpush1.msra.mxu0 0.0
        %5723 = vmatprep.subr.mxu0 0.0
        %5724 = vmatpush1.msra.mxu0 0.0
        %5725 = vmatprep.subr.mxu0 0.0
        %5726 = vmatpush1.msra.mxu0 0.0
        %5727 = vmatprep.subr.mxu0 0.0
        %5728 = vmatpush1.msra.mxu0 0.0
        %5729 = vmatprep.subr.mxu0 0.0
        %5730 = vmatpush1.msra.mxu0 0.0
        %5731 = vmatprep.subr.mxu0 0.0
        %5732 = vmatpush1.msra.mxu0 0.0
        %5733 = vmatprep.subr.mxu0 0.0
        %5734 = vmatpush1.msra.mxu0 0.0
        %5735 = vmatprep.subr.mxu0 0.0
        %5736 = vmatpush1.msra.mxu0 0.0
        %5737 = vmatprep.subr.mxu0 0.0
        %5738 = vmatpush1.msra.mxu0 0.0
        %5739 = vmatprep.subr.mxu0 0.0
        %5740 = vmatpush1.msra.mxu0 0.0
        %5741 = vmatprep.subr.mxu0 0.0
        %5742 = vmatpush1.msra.mxu0 0.0
        %5743 = vmatprep.subr.mxu0 0.0
        %5744 = vmatpush1.msra.mxu0 0.0
        %5745 = vmatprep.subr.mxu0 0.0
        %5746 = vmatpush1.msra.mxu0 0.0
        %5747 = vmatprep.subr.mxu0 0.0
        %5748 = vmatpush1.msra.mxu0 0.0
        %5749 = vmatprep.subr.mxu0 0.0
        %5750 = vmatpush1.msra.mxu0 0.0
        %5751 = vmatprep.mubr.f32.mxu0 0.0
        %5752 = vmatmul.mubr.f32.gmra.mrb[0].mxu0 %v5664
        %v5753 = vpop.f32.mrb[0].mxu0
        %v5754 = vadd.f32 0.0, %v5753
        %v5755 = vpop.f32.mrb[0].mxu0
        %5756 = vmatprep.mubr.f32.mxu0 0.0
        %5757 = vmatmul.mubr.f32.gmra.mrb[0].mxu0 %v5667
        %v5758 = vpop.f32.mrb[0].mxu0
        %v5759 = vadd.f32 0.0, %v5758
        %v5760 = vpop.f32.mrb[0].mxu0
        %5761 = vmatprep.mubr.f32.mxu0 0.0
        %5762 = vmatmul.mubr.f32.gmra.mrb[0].mxu0 %v5670
        %v5763 = vpop.f32.mrb[0].mxu0
        %v5764 = vadd.f32 0.0, %v5763
        %v5765 = vpop.f32.mrb[0].mxu0
        %5766 = vmatprep.mubr.f32.mxu0 0.0
        %5767 = vmatmul.mubr.f32.gmra.mrb[0].mxu0 %v5673
        %v5768 = vpop.f32.mrb[0].mxu0
        %v5769 = vadd.f32 0.0, %v5768
        %v5770 = vpop.f32.mrb[0].mxu0
        %5771 = vmatprep.mubr.f32.mxu0 0.0
        %5772 = vmatmul.mubr.f32.gmra.mrb[0].mxu0 %v5676
        %v5773 = vpop.f32.mrb[0].mxu0
        %v5774 = vadd.f32 0.0, %v5773
        %v5775 = vpop.f32.mrb[0].mxu0
        %5776 = vmatprep.mubr.f32.mxu0 0.0
        %5777 = vmatmul.mubr.f32.gmra.mrb[0].mxu0 %v5679
        %v5778 = vpop.f32.mrb[0].mxu0
        %v5779 = vadd.f32 0.0, %v5778
        %v5780 = vpop.f32.mrb[0].mxu0
        %5781 = vmatprep.mubr.f32.mxu0 0.0
        %5782 = vmatmul.mubr.f32.gmra.mrb[0].mxu0 %v5682
        %v5783 = vpop.f32.mrb[0].mxu0
        %v5784 = vadd.f32 0.0, %v5783
        %v5785 = vpop.f32.mrb[0].mxu0
        %5786 = vmatprep.mubr.f32.mxu0 0.0
        %5787 = vmatmul.mubr.f32.gmra.mrb[0].mxu0 %v5685
        %v5788 = vpop.f32.mrb[0].mxu0
        %v5789 = vadd.f32 0.0, %v5788
        %v5790 = vpop.f32.mrb[0].mxu0
        %5791 = vdwg.mxu0
        %s5792 = scalar_lea.vmem %s9, 480
        %v5793 = vld [vmem:[%s5792] sm:$0xff]
        %v5794 = vld [vmem:[%s5792 + $0x8] sm:$0xff]
        %v5795 = vld [vmem:[%s5792 + $0x10] sm:$0xff]
        %v5796 = vld [vmem:[%s5792 + $0x18] sm:$0xff]
        %v5797 = vld [vmem:[%s5792 + $0x20] sm:$0xff]
        %v5798 = vld [vmem:[%s5792 + $0x28] sm:$0xff]
        %v5799 = vld [vmem:[%s5792 + $0x30] sm:$0xff]
        %v5800 = vld [vmem:[%s5792 + $0x38] sm:$0xff]
        %v5801 = vld [vmem:[%s5792 + $0x40] sm:$0xff]
        %v5802 = vld [vmem:[%s5792 + $0x48] sm:$0xff]
        %v5803 = vld [vmem:[%s5792 + $0x50] sm:$0xff]
        %v5804 = vld [vmem:[%s5792 + $0x58] sm:$0xff]
        %v5805 = vld [vmem:[%s5792 + $0x60] sm:$0xff]
        %v5806 = vld [vmem:[%s5792 + $0x68] sm:$0xff]
        %v5807 = vld [vmem:[%s5792 + $0x70] sm:$0xff]
        %v5808 = vld [vmem:[%s5792 + $0x78] sm:$0xff]
        %v5809 = vld [vmem:[%s5792 + $0x80] sm:$0xff]
        %v5810 = vld [vmem:[%s5792 + $0x88] sm:$0xff]
        %v5811 = vld [vmem:[%s5792 + $0x90] sm:$0xff]
        %v5812 = vld [vmem:[%s5792 + $0x98] sm:$0xff]
        %v5813 = vld [vmem:[%s5792 + $0xa0] sm:$0xff]
        %v5814 = vld [vmem:[%s5792 + $0xa8] sm:$0xff]
        %v5815 = vld [vmem:[%s5792 + $0xb0] sm:$0xff]
        %v5816 = vld [vmem:[%s5792 + $0xb8] sm:$0xff]
        %v5817 = vld [vmem:[%s5792 + $0xc0] sm:$0xff]
        %v5818 = vld [vmem:[%s5792 + $0xc8] sm:$0xff]
        %v5819 = vld [vmem:[%s5792 + $0xd0] sm:$0xff]
        %v5820 = vld [vmem:[%s5792 + $0xd8] sm:$0xff]
        %v5821 = vld [vmem:[%s5792 + $0xe0] sm:$0xff]
        %v5822 = vld [vmem:[%s5792 + $0xe8] sm:$0xff]
        %v5824 = vsel %vm5167, %v5754, 0
        %v5827 = vsel %vm5167, %v5759, 0
        %v5830 = vsel %vm5167, %v5764, 0
        %v5833 = vsel %vm5167, %v5769, 0
        %v5836 = vsel %vm5167, %v5774, 0
        %v5839 = vsel %vm5167, %v5779, 0
        %v5842 = vsel %vm5167, %v5784, 0
        %v5845 = vsel %vm5167, %v5789, 0
        %5847 = vmatprep.subr.mxu0 %v5794
        %5848 = vmatpush1.msra.mxu0 %v5793
        %5849 = vmatprep.subr.mxu0 %v5796
        %5850 = vmatpush1.msra.mxu0 %v5795
        %5851 = vmatprep.subr.mxu0 %v5798
        %5852 = vmatpush1.msra.mxu0 %v5797
        %5853 = vmatprep.subr.mxu0 %v5800
        %5854 = vmatpush1.msra.mxu0 %v5799
        %5855 = vmatprep.subr.mxu0 %v5802
        %5856 = vmatpush1.msra.mxu0 %v5801
        %5857 = vmatprep.subr.mxu0 %v5804
        %5858 = vmatpush1.msra.mxu0 %v5803
        %5859 = vmatprep.subr.mxu0 %v5806
        %5860 = vmatpush1.msra.mxu0 %v5805
        %5861 = vmatprep.subr.mxu0 %v5808
        %5862 = vmatpush1.msra.mxu0 %v5807
        %5863 = vmatprep.subr.mxu0 %v5810
        %5864 = vmatpush1.msra.mxu0 %v5809
        %5865 = vmatprep.subr.mxu0 %v5812
        %5866 = vmatpush1.msra.mxu0 %v5811
        %5867 = vmatprep.subr.mxu0 %v5814
        %5868 = vmatpush1.msra.mxu0 %v5813
        %5869 = vmatprep.subr.mxu0 %v5816
        %5870 = vmatpush1.msra.mxu0 %v5815
        %5871 = vmatprep.subr.mxu0 %v5818
        %5872 = vmatpush1.msra.mxu0 %v5817
        %5873 = vmatprep.subr.mxu0 %v5820
        %5874 = vmatpush1.msra.mxu0 %v5819
        %5875 = vmatprep.subr.mxu0 %v5822
        %5876 = vmatpush1.msra.mxu0 %v5821
        %5877 = vmatprep.subr.mxu0 0.0
        %5878 = vmatpush1.msra.mxu0 0.0
        %5879 = vmatprep.subr.mxu0 0.0
        %5880 = vmatpush1.msra.mxu0 0.0
        %5881 = vmatprep.subr.mxu0 0.0
        %5882 = vmatpush1.msra.mxu0 0.0
        %5883 = vmatprep.subr.mxu0 0.0
        %5884 = vmatpush1.msra.mxu0 0.0
        %5885 = vmatprep.subr.mxu0 0.0
        %5886 = vmatpush1.msra.mxu0 0.0
        %5887 = vmatprep.subr.mxu0 0.0
        %5888 = vmatpush1.msra.mxu0 0.0
        %5889 = vmatprep.subr.mxu0 0.0
        %5890 = vmatpush1.msra.mxu0 0.0
        %5891 = vmatprep.subr.mxu0 0.0
        %5892 = vmatpush1.msra.mxu0 0.0
        %5893 = vmatprep.subr.mxu0 0.0
        %5894 = vmatpush1.msra.mxu0 0.0
        %5895 = vmatprep.subr.mxu0 0.0
        %5896 = vmatpush1.msra.mxu0 0.0
        %5897 = vmatprep.subr.mxu0 0.0
        %5898 = vmatpush1.msra.mxu0 0.0
        %5899 = vmatprep.subr.mxu0 0.0
        %5900 = vmatpush1.msra.mxu0 0.0
        %5901 = vmatprep.subr.mxu0 0.0
        %5902 = vmatpush1.msra.mxu0 0.0
        %5903 = vmatprep.subr.mxu0 0.0
        %5904 = vmatpush1.msra.mxu0 0.0
        %5905 = vmatprep.subr.mxu0 0.0
        %5906 = vmatpush1.msra.mxu0 0.0
        %5907 = vmatprep.subr.mxu0 0.0
        %5908 = vmatpush1.msra.mxu0 0.0
        %5909 = vmatprep.subr.mxu0 0.0
        %5910 = vmatpush1.msra.mxu0 0.0
        %5911 = vmatprep.mubr.f32.mxu0 0.0
        %5912 = vmatmul.mubr.f32.gmra.mrb[0].mxu0 %v5824
        %v5913 = vpop.f32.mrb[0].mxu0
        %v5914 = vadd.f32 0.0, %v5913
        %v5915 = vpop.f32.mrb[0].mxu0
        %v5916 = vadd.f32 0.0, %v5915
        %5917 = vmatprep.mubr.f32.mxu0 0.0
        %5918 = vmatmul.mubr.f32.gmra.mrb[0].mxu0 %v5827
        %v5919 = vpop.f32.mrb[0].mxu0
        %v5920 = vadd.f32 0.0, %v5919
        %v5921 = vpop.f32.mrb[0].mxu0
        %v5922 = vadd.f32 0.0, %v5921
        %5923 = vmatprep.mubr.f32.mxu0 0.0
        %5924 = vmatmul.mubr.f32.gmra.mrb[0].mxu0 %v5830
        %v5925 = vpop.f32.mrb[0].mxu0
        %v5926 = vadd.f32 0.0, %v5925
        %v5927 = vpop.f32.mrb[0].mxu0
        %v5928 = vadd.f32 0.0, %v5927
        %5929 = vmatprep.mubr.f32.mxu0 0.0
        %5930 = vmatmul.mubr.f32.gmra.mrb[0].mxu0 %v5833
        %v5931 = vpop.f32.mrb[0].mxu0
        %v5932 = vadd.f32 0.0, %v5931
        %v5933 = vpop.f32.mrb[0].mxu0
        %v5934 = vadd.f32 0.0, %v5933
        %5935 = vmatprep.mubr.f32.mxu0 0.0
        %5936 = vmatmul.mubr.f32.gmra.mrb[0].mxu0 %v5836
        %v5937 = vpop.f32.mrb[0].mxu0
        %v5938 = vadd.f32 0.0, %v5937
        %v5939 = vpop.f32.mrb[0].mxu0
        %v5940 = vadd.f32 0.0, %v5939
        %5941 = vmatprep.mubr.f32.mxu0 0.0
        %5942 = vmatmul.mubr.f32.gmra.mrb[0].mxu0 %v5839
        %v5943 = vpop.f32.mrb[0].mxu0
        %v5944 = vadd.f32 0.0, %v5943
        %v5945 = vpop.f32.mrb[0].mxu0
        %v5946 = vadd.f32 0.0, %v5945
        %5947 = vmatprep.mubr.f32.mxu0 0.0
        %5948 = vmatmul.mubr.f32.gmra.mrb[0].mxu0 %v5842
        %v5949 = vpop.f32.mrb[0].mxu0
        %v5950 = vadd.f32 0.0, %v5949
        %v5951 = vpop.f32.mrb[0].mxu0
        %v5952 = vadd.f32 0.0, %v5951
        %5953 = vmatprep.mubr.f32.mxu0 0.0
        %5954 = vmatmul.mubr.f32.gmra.mrb[0].mxu0 %v5845
        %v5955 = vpop.f32.mrb[0].mxu0
        %v5956 = vadd.f32 0.0, %v5955
        %v5957 = vpop.f32.mrb[0].mxu0
        %v5958 = vadd.f32 0.0, %v5957
        %5959 = vdwg.mxu0
        %v5960 = vadd.f32 %v5638, %v5914
        %v5961 = vadd.f32 %v5639, %v5916
        %v5962 = vadd.f32 %v5640, %v5920
        %v5963 = vadd.f32 %v5641, %v5922
        %v5964 = vadd.f32 %v5642, %v5926
        %v5965 = vadd.f32 %v5643, %v5928
        %v5966 = vadd.f32 %v5644, %v5932
        %v5967 = vadd.f32 %v5645, %v5934
        %v5968 = vadd.f32 %v5646, %v5938
        %v5969 = vadd.f32 %v5647, %v5940
        %v5970 = vadd.f32 %v5648, %v5944
        %v5971 = vadd.f32 %v5649, %v5946
        %v5972 = vadd.f32 %v5650, %v5950
        %v5973 = vadd.f32 %v5651, %v5952
        %v5974 = vadd.f32 %v5652, %v5956
        %v5975 = vadd.f32 %v5653, %v5958
        %s5976 = scalar_lea.vmem [#allocation11], 192
        %v5977 = vld [vmem:[%s5976] sm:$0xff]
        %v5978 = vld [vmem:[%s5976 + $0x8] sm:$0xff]
        %v5979 = vld [vmem:[%s5976 + $0x10] sm:$0xff]
        %v5980 = vld [vmem:[%s5976 + $0x18] sm:$0xff]
        %v5981 = vld [vmem:[%s5976 + $0x20] sm:$0xff]
        %v5982 = vld [vmem:[%s5976 + $0x28] sm:$0xff]
        %v5983 = vld [vmem:[%s5976 + $0x30] sm:$0xff]
        %v5984 = vld [vmem:[%s5976 + $0x38] sm:$0xff]
        %v5986 = vsel %vm863, %v5977, 0
        %v5989 = vsel %vm863, %v5978, 0
        %v5992 = vsel %vm863, %v5979, 0
        %v5995 = vsel %vm863, %v5980, 0
        %v5998 = vsel %vm863, %v5981, 0
        %v6001 = vsel %vm863, %v5982, 0
        %v6004 = vsel %vm863, %v5983, 0
        %v6007 = vsel %vm863, %v5984, 0
        %6009 = vmatprep.subr.mxu0 0.0
        %6010 = vmatpush1.msra.mxu0 %v4987
        %6011 = vmatprep.subr.mxu0 0.0
        %6012 = vmatpush1.msra.mxu0 %v4988
        %6013 = vmatprep.subr.mxu0 0.0
        %6014 = vmatpush1.msra.mxu0 %v4989
        %6015 = vmatprep.subr.mxu0 0.0
        %6016 = vmatpush1.msra.mxu0 %v4990
        %6017 = vmatprep.subr.mxu0 0.0
        %6018 = vmatpush1.msra.mxu0 %v4991
        %6019 = vmatprep.subr.mxu0 0.0
        %6020 = vmatpush1.msra.mxu0 %v4992
        %6021 = vmatprep.subr.mxu0 0.0
        %6022 = vmatpush1.msra.mxu0 %v4993
        %6023 = vmatprep.subr.mxu0 0.0
        %6024 = vmatpush1.msra.mxu0 %v4994
        %6025 = vmatprep.subr.mxu0 0.0
        %6026 = vmatpush1.msra.mxu0 %v4995
        %6027 = vmatprep.subr.mxu0 0.0
        %6028 = vmatpush1.msra.mxu0 %v4996
        %6029 = vmatprep.subr.mxu0 0.0
        %6030 = vmatpush1.msra.mxu0 %v4997
        %6031 = vmatprep.subr.mxu0 0.0
        %6032 = vmatpush1.msra.mxu0 %v4998
        %6033 = vmatprep.subr.mxu0 0.0
        %6034 = vmatpush1.msra.mxu0 0.0
        %6035 = vmatprep.subr.mxu0 0.0
        %6036 = vmatpush1.msra.mxu0 0.0
        %6037 = vmatprep.subr.mxu0 0.0
        %6038 = vmatpush1.msra.mxu0 0.0
        %6039 = vmatprep.subr.mxu0 0.0
        %6040 = vmatpush1.msra.mxu0 0.0
        %6041 = vmatprep.subr.mxu0 0.0
        %6042 = vmatpush1.msra.mxu0 0.0
        %6043 = vmatprep.subr.mxu0 0.0
        %6044 = vmatpush1.msra.mxu0 0.0
        %6045 = vmatprep.subr.mxu0 0.0
        %6046 = vmatpush1.msra.mxu0 0.0
        %6047 = vmatprep.subr.mxu0 0.0
        %6048 = vmatpush1.msra.mxu0 0.0
        %6049 = vmatprep.subr.mxu0 0.0
        %6050 = vmatpush1.msra.mxu0 0.0
        %6051 = vmatprep.subr.mxu0 0.0
        %6052 = vmatpush1.msra.mxu0 0.0
        %6053 = vmatprep.subr.mxu0 0.0
        %6054 = vmatpush1.msra.mxu0 0.0
        %6055 = vmatprep.subr.mxu0 0.0
        %6056 = vmatpush1.msra.mxu0 0.0
        %6057 = vmatprep.subr.mxu0 0.0
        %6058 = vmatpush1.msra.mxu0 0.0
        %6059 = vmatprep.subr.mxu0 0.0
        %6060 = vmatpush1.msra.mxu0 0.0
        %6061 = vmatprep.subr.mxu0 0.0
        %6062 = vmatpush1.msra.mxu0 0.0
        %6063 = vmatprep.subr.mxu0 0.0
        %6064 = vmatpush1.msra.mxu0 0.0
        %6065 = vmatprep.subr.mxu0 0.0
        %6066 = vmatpush1.msra.mxu0 0.0
        %6067 = vmatprep.subr.mxu0 0.0
        %6068 = vmatpush1.msra.mxu0 0.0
        %6069 = vmatprep.subr.mxu0 0.0
        %6070 = vmatpush1.msra.mxu0 0.0
        %6071 = vmatprep.subr.mxu0 0.0
        %6072 = vmatpush1.msra.mxu0 0.0
        %6073 = vmatprep.mubr.f32.mxu0 0.0
        %6074 = vmatmul.mubr.f32.gmra.mrb[0].mxu0 %v5986
        %v6075 = vpop.f32.mrb[0].mxu0
        %v6076 = vadd.f32 0.0, %v6075
        %v6077 = vpop.f32.mrb[0].mxu0
        %6078 = vmatprep.mubr.f32.mxu0 0.0
        %6079 = vmatmul.mubr.f32.gmra.mrb[0].mxu0 %v5989
        %v6080 = vpop.f32.mrb[0].mxu0
        %v6081 = vadd.f32 0.0, %v6080
        %v6082 = vpop.f32.mrb[0].mxu0
        %6083 = vmatprep.mubr.f32.mxu0 0.0
        %6084 = vmatmul.mubr.f32.gmra.mrb[0].mxu0 %v5992
        %v6085 = vpop.f32.mrb[0].mxu0
        %v6086 = vadd.f32 0.0, %v6085
        %v6087 = vpop.f32.mrb[0].mxu0
        %6088 = vmatprep.mubr.f32.mxu0 0.0
        %6089 = vmatmul.mubr.f32.gmra.mrb[0].mxu0 %v5995
        %v6090 = vpop.f32.mrb[0].mxu0
        %v6091 = vadd.f32 0.0, %v6090
        %v6092 = vpop.f32.mrb[0].mxu0
        %6093 = vmatprep.mubr.f32.mxu0 0.0
        %6094 = vmatmul.mubr.f32.gmra.mrb[0].mxu0 %v5998
        %v6095 = vpop.f32.mrb[0].mxu0
        %v6096 = vadd.f32 0.0, %v6095
        %v6097 = vpop.f32.mrb[0].mxu0
        %6098 = vmatprep.mubr.f32.mxu0 0.0
        %6099 = vmatmul.mubr.f32.gmra.mrb[0].mxu0 %v6001
        %v6100 = vpop.f32.mrb[0].mxu0
        %v6101 = vadd.f32 0.0, %v6100
        %v6102 = vpop.f32.mrb[0].mxu0
        %6103 = vmatprep.mubr.f32.mxu0 0.0
        %6104 = vmatmul.mubr.f32.gmra.mrb[0].mxu0 %v6004
        %v6105 = vpop.f32.mrb[0].mxu0
        %v6106 = vadd.f32 0.0, %v6105
        %v6107 = vpop.f32.mrb[0].mxu0
        %6108 = vmatprep.mubr.f32.mxu0 0.0
        %6109 = vmatmul.mubr.f32.gmra.mrb[0].mxu0 %v6007
        %v6110 = vpop.f32.mrb[0].mxu0
        %v6111 = vadd.f32 0.0, %v6110
        %v6112 = vpop.f32.mrb[0].mxu0
        %6113 = vdwg.mxu0
        %s6114 = scalar_lea.vmem %s9, 720
        %v6115 = vld [vmem:[%s6114] sm:$0xff]
        %v6116 = vld [vmem:[%s6114 + $0x8] sm:$0xff]
        %v6117 = vld [vmem:[%s6114 + $0x10] sm:$0xff]
        %v6118 = vld [vmem:[%s6114 + $0x18] sm:$0xff]
        %v6119 = vld [vmem:[%s6114 + $0x20] sm:$0xff]
        %v6120 = vld [vmem:[%s6114 + $0x28] sm:$0xff]
        %v6121 = vld [vmem:[%s6114 + $0x30] sm:$0xff]
        %v6122 = vld [vmem:[%s6114 + $0x38] sm:$0xff]
        %v6123 = vld [vmem:[%s6114 + $0x40] sm:$0xff]
        %v6124 = vld [vmem:[%s6114 + $0x48] sm:$0xff]
        %v6125 = vld [vmem:[%s6114 + $0x50] sm:$0xff]
        %v6126 = vld [vmem:[%s6114 + $0x58] sm:$0xff]
        %v6127 = vld [vmem:[%s6114 + $0x60] sm:$0xff]
        %v6128 = vld [vmem:[%s6114 + $0x68] sm:$0xff]
        %v6129 = vld [vmem:[%s6114 + $0x70] sm:$0xff]
        %v6130 = vld [vmem:[%s6114 + $0x78] sm:$0xff]
        %v6131 = vld [vmem:[%s6114 + $0x80] sm:$0xff]
        %v6132 = vld [vmem:[%s6114 + $0x88] sm:$0xff]
        %v6133 = vld [vmem:[%s6114 + $0x90] sm:$0xff]
        %v6134 = vld [vmem:[%s6114 + $0x98] sm:$0xff]
        %v6135 = vld [vmem:[%s6114 + $0xa0] sm:$0xff]
        %v6136 = vld [vmem:[%s6114 + $0xa8] sm:$0xff]
        %v6137 = vld [vmem:[%s6114 + $0xb0] sm:$0xff]
        %v6138 = vld [vmem:[%s6114 + $0xb8] sm:$0xff]
        %v6139 = vld [vmem:[%s6114 + $0xc0] sm:$0xff]
        %v6140 = vld [vmem:[%s6114 + $0xc8] sm:$0xff]
        %v6141 = vld [vmem:[%s6114 + $0xd0] sm:$0xff]
        %v6142 = vld [vmem:[%s6114 + $0xd8] sm:$0xff]
        %v6143 = vld [vmem:[%s6114 + $0xe0] sm:$0xff]
        %v6144 = vld [vmem:[%s6114 + $0xe8] sm:$0xff]
        %v6146 = vsel %vm5167, %v6076, 0
        %v6149 = vsel %vm5167, %v6081, 0
        %v6152 = vsel %vm5167, %v6086, 0
        %v6155 = vsel %vm5167, %v6091, 0
        %v6158 = vsel %vm5167, %v6096, 0
        %v6161 = vsel %vm5167, %v6101, 0
        %v6164 = vsel %vm5167, %v6106, 0
        %v6167 = vsel %vm5167, %v6111, 0
        %6169 = vmatprep.subr.mxu0 %v6116
        %6170 = vmatpush1.msra.mxu0 %v6115
        %6171 = vmatprep.subr.mxu0 %v6118
        %6172 = vmatpush1.msra.mxu0 %v6117
        %6173 = vmatprep.subr.mxu0 %v6120
        %6174 = vmatpush1.msra.mxu0 %v6119
        %6175 = vmatprep.subr.mxu0 %v6122
        %6176 = vmatpush1.msra.mxu0 %v6121
        %6177 = vmatprep.subr.mxu0 %v6124
        %6178 = vmatpush1.msra.mxu0 %v6123
        %6179 = vmatprep.subr.mxu0 %v6126
        %6180 = vmatpush1.msra.mxu0 %v6125
        %6181 = vmatprep.subr.mxu0 %v6128
        %6182 = vmatpush1.msra.mxu0 %v6127
        %6183 = vmatprep.subr.mxu0 %v6130
        %6184 = vmatpush1.msra.mxu0 %v6129
        %6185 = vmatprep.subr.mxu0 %v6132
        %6186 = vmatpush1.msra.mxu0 %v6131
        %6187 = vmatprep.subr.mxu0 %v6134
        %6188 = vmatpush1.msra.mxu0 %v6133
        %6189 = vmatprep.subr.mxu0 %v6136
        %6190 = vmatpush1.msra.mxu0 %v6135
        %6191 = vmatprep.subr.mxu0 %v6138
        %6192 = vmatpush1.msra.mxu0 %v6137
        %6193 = vmatprep.subr.mxu0 %v6140
        %6194 = vmatpush1.msra.mxu0 %v6139
        %6195 = vmatprep.subr.mxu0 %v6142
        %6196 = vmatpush1.msra.mxu0 %v6141
        %6197 = vmatprep.subr.mxu0 %v6144
        %6198 = vmatpush1.msra.mxu0 %v6143
        %6199 = vmatprep.subr.mxu0 0.0
        %6200 = vmatpush1.msra.mxu0 0.0
        %6201 = vmatprep.subr.mxu0 0.0
        %6202 = vmatpush1.msra.mxu0 0.0
        %6203 = vmatprep.subr.mxu0 0.0
        %6204 = vmatpush1.msra.mxu0 0.0
        %6205 = vmatprep.subr.mxu0 0.0
        %6206 = vmatpush1.msra.mxu0 0.0
        %6207 = vmatprep.subr.mxu0 0.0
        %6208 = vmatpush1.msra.mxu0 0.0
        %6209 = vmatprep.subr.mxu0 0.0
        %6210 = vmatpush1.msra.mxu0 0.0
        %6211 = vmatprep.subr.mxu0 0.0
        %6212 = vmatpush1.msra.mxu0 0.0
        %6213 = vmatprep.subr.mxu0 0.0
        %6214 = vmatpush1.msra.mxu0 0.0
        %6215 = vmatprep.subr.mxu0 0.0
        %6216 = vmatpush1.msra.mxu0 0.0
        %6217 = vmatprep.subr.mxu0 0.0
        %6218 = vmatpush1.msra.mxu0 0.0
        %6219 = vmatprep.subr.mxu0 0.0
        %6220 = vmatpush1.msra.mxu0 0.0
        %6221 = vmatprep.subr.mxu0 0.0
        %6222 = vmatpush1.msra.mxu0 0.0
        %6223 = vmatprep.subr.mxu0 0.0
        %6224 = vmatpush1.msra.mxu0 0.0
        %6225 = vmatprep.subr.mxu0 0.0
        %6226 = vmatpush1.msra.mxu0 0.0
        %6227 = vmatprep.subr.mxu0 0.0
        %6228 = vmatpush1.msra.mxu0 0.0
        %6229 = vmatprep.subr.mxu0 0.0
        %6230 = vmatpush1.msra.mxu0 0.0
        %6231 = vmatprep.subr.mxu0 0.0
        %6232 = vmatpush1.msra.mxu0 0.0
        %6233 = vmatprep.mubr.f32.mxu0 0.0
        %6234 = vmatmul.mubr.f32.gmra.mrb[0].mxu0 %v6146
        %v6235 = vpop.f32.mrb[0].mxu0
        %v6236 = vadd.f32 0.0, %v6235
        %v6237 = vpop.f32.mrb[0].mxu0
        %v6238 = vadd.f32 0.0, %v6237
        %6239 = vmatprep.mubr.f32.mxu0 0.0
        %6240 = vmatmul.mubr.f32.gmra.mrb[0].mxu0 %v6149
        %v6241 = vpop.f32.mrb[0].mxu0
        %v6242 = vadd.f32 0.0, %v6241
        %v6243 = vpop.f32.mrb[0].mxu0
        %v6244 = vadd.f32 0.0, %v6243
        %6245 = vmatprep.mubr.f32.mxu0 0.0
        %6246 = vmatmul.mubr.f32.gmra.mrb[0].mxu0 %v6152
        %v6247 = vpop.f32.mrb[0].mxu0
        %v6248 = vadd.f32 0.0, %v6247
        %v6249 = vpop.f32.mrb[0].mxu0
        %v6250 = vadd.f32 0.0, %v6249
        %6251 = vmatprep.mubr.f32.mxu0 0.0
        %6252 = vmatmul.mubr.f32.gmra.mrb[0].mxu0 %v6155
        %v6253 = vpop.f32.mrb[0].mxu0
        %v6254 = vadd.f32 0.0, %v6253
        %v6255 = vpop.f32.mrb[0].mxu0
        %v6256 = vadd.f32 0.0, %v6255
        %6257 = vmatprep.mubr.f32.mxu0 0.0
        %6258 = vmatmul.mubr.f32.gmra.mrb[0].mxu0 %v6158
        %v6259 = vpop.f32.mrb[0].mxu0
        %v6260 = vadd.f32 0.0, %v6259
        %v6261 = vpop.f32.mrb[0].mxu0
        %v6262 = vadd.f32 0.0, %v6261
        %6263 = vmatprep.mubr.f32.mxu0 0.0
        %6264 = vmatmul.mubr.f32.gmra.mrb[0].mxu0 %v6161
        %v6265 = vpop.f32.mrb[0].mxu0
        %v6266 = vadd.f32 0.0, %v6265
        %v6267 = vpop.f32.mrb[0].mxu0
        %v6268 = vadd.f32 0.0, %v6267
        %6269 = vmatprep.mubr.f32.mxu0 0.0
        %6270 = vmatmul.mubr.f32.gmra.mrb[0].mxu0 %v6164
        %v6271 = vpop.f32.mrb[0].mxu0
        %v6272 = vadd.f32 0.0, %v6271
        %v6273 = vpop.f32.mrb[0].mxu0
        %v6274 = vadd.f32 0.0, %v6273
        %6275 = vmatprep.mubr.f32.mxu0 0.0
        %6276 = vmatmul.mubr.f32.gmra.mrb[0].mxu0 %v6167
        %v6277 = vpop.f32.mrb[0].mxu0
        %v6278 = vadd.f32 0.0, %v6277
        %v6279 = vpop.f32.mrb[0].mxu0
        %v6280 = vadd.f32 0.0, %v6279
        %6281 = vdwg.mxu0
        %v6282 = vadd.f32 %v5960, %v6236
        %v6283 = vadd.f32 %v5961, %v6238
        %v6284 = vadd.f32 %v5962, %v6242
        %v6285 = vadd.f32 %v5963, %v6244
        %v6286 = vadd.f32 %v5964, %v6248
        %v6287 = vadd.f32 %v5965, %v6250
        %v6288 = vadd.f32 %v5966, %v6254
        %v6289 = vadd.f32 %v5967, %v6256
        %v6290 = vadd.f32 %v5968, %v6260
        %v6291 = vadd.f32 %v5969, %v6262
        %v6292 = vadd.f32 %v5970, %v6266
        %v6293 = vadd.f32 %v5971, %v6268
        %v6294 = vadd.f32 %v5972, %v6272
        %v6295 = vadd.f32 %v5973, %v6274
        %v6296 = vadd.f32 %v5974, %v6278
        %v6297 = vadd.f32 %v5975, %v6280
        %s6298 = scalar_lea.vmem [#allocation11], 256
        %v6299 = vld [vmem:[%s6298] sm:$0xff]
        %v6300 = vld [vmem:[%s6298 + $0x8] sm:$0xff]
        %v6301 = vld [vmem:[%s6298 + $0x10] sm:$0xff]
        %v6302 = vld [vmem:[%s6298 + $0x18] sm:$0xff]
        %v6303 = vld [vmem:[%s6298 + $0x20] sm:$0xff]
        %v6304 = vld [vmem:[%s6298 + $0x28] sm:$0xff]
        %v6305 = vld [vmem:[%s6298 + $0x30] sm:$0xff]
        %v6306 = vld [vmem:[%s6298 + $0x38] sm:$0xff]
        %v6308 = vsel %vm863, %v6299, 0
        %v6311 = vsel %vm863, %v6300, 0
        %v6314 = vsel %vm863, %v6301, 0
        %v6317 = vsel %vm863, %v6302, 0
        %v6320 = vsel %vm863, %v6303, 0
        %v6323 = vsel %vm863, %v6304, 0
        %v6326 = vsel %vm863, %v6305, 0
        %v6329 = vsel %vm863, %v6306, 0
        %6331 = vmatprep.subr.mxu0 0.0
        %6332 = vmatpush1.msra.mxu0 %v4987
        %6333 = vmatprep.subr.mxu0 0.0
        %6334 = vmatpush1.msra.mxu0 %v4988
        %6335 = vmatprep.subr.mxu0 0.0
        %6336 = vmatpush1.msra.mxu0 %v4989
        %6337 = vmatprep.subr.mxu0 0.0
        %6338 = vmatpush1.msra.mxu0 %v4990
        %6339 = vmatprep.subr.mxu0 0.0
        %6340 = vmatpush1.msra.mxu0 %v4991
        %6341 = vmatprep.subr.mxu0 0.0
        %6342 = vmatpush1.msra.mxu0 %v4992
        %6343 = vmatprep.subr.mxu0 0.0
        %6344 = vmatpush1.msra.mxu0 %v4993
        %6345 = vmatprep.subr.mxu0 0.0
        %6346 = vmatpush1.msra.mxu0 %v4994
        %6347 = vmatprep.subr.mxu0 0.0
        %6348 = vmatpush1.msra.mxu0 %v4995
        %6349 = vmatprep.subr.mxu0 0.0
        %6350 = vmatpush1.msra.mxu0 %v4996
        %6351 = vmatprep.subr.mxu0 0.0
        %6352 = vmatpush1.msra.mxu0 %v4997
        %6353 = vmatprep.subr.mxu0 0.0
        %6354 = vmatpush1.msra.mxu0 %v4998
        %6355 = vmatprep.subr.mxu0 0.0
        %6356 = vmatpush1.msra.mxu0 0.0
        %6357 = vmatprep.subr.mxu0 0.0
        %6358 = vmatpush1.msra.mxu0 0.0
        %6359 = vmatprep.subr.mxu0 0.0
        %6360 = vmatpush1.msra.mxu0 0.0
        %6361 = vmatprep.subr.mxu0 0.0
        %6362 = vmatpush1.msra.mxu0 0.0
        %6363 = vmatprep.subr.mxu0 0.0
        %6364 = vmatpush1.msra.mxu0 0.0
        %6365 = vmatprep.subr.mxu0 0.0
        %6366 = vmatpush1.msra.mxu0 0.0
        %6367 = vmatprep.subr.mxu0 0.0
        %6368 = vmatpush1.msra.mxu0 0.0
        %6369 = vmatprep.subr.mxu0 0.0
        %6370 = vmatpush1.msra.mxu0 0.0
        %6371 = vmatprep.subr.mxu0 0.0
        %6372 = vmatpush1.msra.mxu0 0.0
        %6373 = vmatprep.subr.mxu0 0.0
        %6374 = vmatpush1.msra.mxu0 0.0
        %6375 = vmatprep.subr.mxu0 0.0
        %6376 = vmatpush1.msra.mxu0 0.0
        %6377 = vmatprep.subr.mxu0 0.0
        %6378 = vmatpush1.msra.mxu0 0.0
        %6379 = vmatprep.subr.mxu0 0.0
        %6380 = vmatpush1.msra.mxu0 0.0
        %6381 = vmatprep.subr.mxu0 0.0
        %6382 = vmatpush1.msra.mxu0 0.0
        %6383 = vmatprep.subr.mxu0 0.0
        %6384 = vmatpush1.msra.mxu0 0.0
        %6385 = vmatprep.subr.mxu0 0.0
        %6386 = vmatpush1.msra.mxu0 0.0
        %6387 = vmatprep.subr.mxu0 0.0
        %6388 = vmatpush1.msra.mxu0 0.0
        %6389 = vmatprep.subr.mxu0 0.0
        %6390 = vmatpush1.msra.mxu0 0.0
        %6391 = vmatprep.subr.mxu0 0.0
        %6392 = vmatpush1.msra.mxu0 0.0
        %6393 = vmatprep.subr.mxu0 0.0
        %6394 = vmatpush1.msra.mxu0 0.0
        %6395 = vmatprep.mubr.f32.mxu0 0.0
        %6396 = vmatmul.mubr.f32.gmra.mrb[0].mxu0 %v6308
        %v6397 = vpop.f32.mrb[0].mxu0
        %v6398 = vadd.f32 0.0, %v6397
        %v6399 = vpop.f32.mrb[0].mxu0
        %6400 = vmatprep.mubr.f32.mxu0 0.0
        %6401 = vmatmul.mubr.f32.gmra.mrb[0].mxu0 %v6311
        %v6402 = vpop.f32.mrb[0].mxu0
        %v6403 = vadd.f32 0.0, %v6402
        %v6404 = vpop.f32.mrb[0].mxu0
        %6405 = vmatprep.mubr.f32.mxu0 0.0
        %6406 = vmatmul.mubr.f32.gmra.mrb[0].mxu0 %v6314
        %v6407 = vpop.f32.mrb[0].mxu0
        %v6408 = vadd.f32 0.0, %v6407
        %v6409 = vpop.f32.mrb[0].mxu0
        %6410 = vmatprep.mubr.f32.mxu0 0.0
        %6411 = vmatmul.mubr.f32.gmra.mrb[0].mxu0 %v6317
        %v6412 = vpop.f32.mrb[0].mxu0
        %v6413 = vadd.f32 0.0, %v6412
        %v6414 = vpop.f32.mrb[0].mxu0
        %6415 = vmatprep.mubr.f32.mxu0 0.0
        %6416 = vmatmul.mubr.f32.gmra.mrb[0].mxu0 %v6320
        %v6417 = vpop.f32.mrb[0].mxu0
        %v6418 = vadd.f32 0.0, %v6417
        %v6419 = vpop.f32.mrb[0].mxu0
        %6420 = vmatprep.mubr.f32.mxu0 0.0
        %6421 = vmatmul.mubr.f32.gmra.mrb[0].mxu0 %v6323
        %v6422 = vpop.f32.mrb[0].mxu0
        %v6423 = vadd.f32 0.0, %v6422
        %v6424 = vpop.f32.mrb[0].mxu0
        %6425 = vmatprep.mubr.f32.mxu0 0.0
        %6426 = vmatmul.mubr.f32.gmra.mrb[0].mxu0 %v6326
        %v6427 = vpop.f32.mrb[0].mxu0
        %v6428 = vadd.f32 0.0, %v6427
        %v6429 = vpop.f32.mrb[0].mxu0
        %6430 = vmatprep.mubr.f32.mxu0 0.0
        %6431 = vmatmul.mubr.f32.gmra.mrb[0].mxu0 %v6329
        %v6432 = vpop.f32.mrb[0].mxu0
        %v6433 = vadd.f32 0.0, %v6432
        %v6434 = vpop.f32.mrb[0].mxu0
        %6435 = vdwg.mxu0
        %s6436 = scalar_lea.vmem %s9, 960
        %v6437 = vld [vmem:[%s6436] sm:$0xff]
        %v6438 = vld [vmem:[%s6436 + $0x8] sm:$0xff]
        %v6439 = vld [vmem:[%s6436 + $0x10] sm:$0xff]
        %v6440 = vld [vmem:[%s6436 + $0x18] sm:$0xff]
        %v6441 = vld [vmem:[%s6436 + $0x20] sm:$0xff]
        %v6442 = vld [vmem:[%s6436 + $0x28] sm:$0xff]
        %v6443 = vld [vmem:[%s6436 + $0x30] sm:$0xff]
        %v6444 = vld [vmem:[%s6436 + $0x38] sm:$0xff]
        %v6445 = vld [vmem:[%s6436 + $0x40] sm:$0xff]
        %v6446 = vld [vmem:[%s6436 + $0x48] sm:$0xff]
        %v6447 = vld [vmem:[%s6436 + $0x50] sm:$0xff]
        %v6448 = vld [vmem:[%s6436 + $0x58] sm:$0xff]
        %v6449 = vld [vmem:[%s6436 + $0x60] sm:$0xff]
        %v6450 = vld [vmem:[%s6436 + $0x68] sm:$0xff]
        %v6451 = vld [vmem:[%s6436 + $0x70] sm:$0xff]
        %v6452 = vld [vmem:[%s6436 + $0x78] sm:$0xff]
        %v6453 = vld [vmem:[%s6436 + $0x80] sm:$0xff]
        %v6454 = vld [vmem:[%s6436 + $0x88] sm:$0xff]
        %v6455 = vld [vmem:[%s6436 + $0x90] sm:$0xff]
        %v6456 = vld [vmem:[%s6436 + $0x98] sm:$0xff]
        %v6457 = vld [vmem:[%s6436 + $0xa0] sm:$0xff]
        %v6458 = vld [vmem:[%s6436 + $0xa8] sm:$0xff]
        %v6459 = vld [vmem:[%s6436 + $0xb0] sm:$0xff]
        %v6460 = vld [vmem:[%s6436 + $0xb8] sm:$0xff]
        %v6461 = vld [vmem:[%s6436 + $0xc0] sm:$0xff]
        %v6462 = vld [vmem:[%s6436 + $0xc8] sm:$0xff]
        %v6463 = vld [vmem:[%s6436 + $0xd0] sm:$0xff]
        %v6464 = vld [vmem:[%s6436 + $0xd8] sm:$0xff]
        %v6465 = vld [vmem:[%s6436 + $0xe0] sm:$0xff]
        %v6466 = vld [vmem:[%s6436 + $0xe8] sm:$0xff]
        %v6468 = vsel %vm5167, %v6398, 0
        %v6471 = vsel %vm5167, %v6403, 0
        %v6474 = vsel %vm5167, %v6408, 0
        %v6477 = vsel %vm5167, %v6413, 0
        %v6480 = vsel %vm5167, %v6418, 0
        %v6483 = vsel %vm5167, %v6423, 0
        %v6486 = vsel %vm5167, %v6428, 0
        %v6489 = vsel %vm5167, %v6433, 0
        %6491 = vmatprep.subr.mxu0 %v6438
        %6492 = vmatpush1.msra.mxu0 %v6437
        %6493 = vmatprep.subr.mxu0 %v6440
        %6494 = vmatpush1.msra.mxu0 %v6439
        %6495 = vmatprep.subr.mxu0 %v6442
        %6496 = vmatpush1.msra.mxu0 %v6441
        %6497 = vmatprep.subr.mxu0 %v6444
        %6498 = vmatpush1.msra.mxu0 %v6443
        %6499 = vmatprep.subr.mxu0 %v6446
        %6500 = vmatpush1.msra.mxu0 %v6445
        %6501 = vmatprep.subr.mxu0 %v6448
        %6502 = vmatpush1.msra.mxu0 %v6447
        %6503 = vmatprep.subr.mxu0 %v6450
        %6504 = vmatpush1.msra.mxu0 %v6449
        %6505 = vmatprep.subr.mxu0 %v6452
        %6506 = vmatpush1.msra.mxu0 %v6451
        %6507 = vmatprep.subr.mxu0 %v6454
        %6508 = vmatpush1.msra.mxu0 %v6453
        %6509 = vmatprep.subr.mxu0 %v6456
        %6510 = vmatpush1.msra.mxu0 %v6455
        %6511 = vmatprep.subr.mxu0 %v6458
        %6512 = vmatpush1.msra.mxu0 %v6457
        %6513 = vmatprep.subr.mxu0 %v6460
        %6514 = vmatpush1.msra.mxu0 %v6459
        %6515 = vmatprep.subr.mxu0 %v6462
        %6516 = vmatpush1.msra.mxu0 %v6461
        %6517 = vmatprep.subr.mxu0 %v6464
        %6518 = vmatpush1.msra.mxu0 %v6463
        %6519 = vmatprep.subr.mxu0 %v6466
        %6520 = vmatpush1.msra.mxu0 %v6465
        %6521 = vmatprep.subr.mxu0 0.0
        %6522 = vmatpush1.msra.mxu0 0.0
        %6523 = vmatprep.subr.mxu0 0.0
        %6524 = vmatpush1.msra.mxu0 0.0
        %6525 = vmatprep.subr.mxu0 0.0
        %6526 = vmatpush1.msra.mxu0 0.0
        %6527 = vmatprep.subr.mxu0 0.0
        %6528 = vmatpush1.msra.mxu0 0.0
        %6529 = vmatprep.subr.mxu0 0.0
        %6530 = vmatpush1.msra.mxu0 0.0
        %6531 = vmatprep.subr.mxu0 0.0
        %6532 = vmatpush1.msra.mxu0 0.0
        %6533 = vmatprep.subr.mxu0 0.0
        %6534 = vmatpush1.msra.mxu0 0.0
        %6535 = vmatprep.subr.mxu0 0.0
        %6536 = vmatpush1.msra.mxu0 0.0
        %6537 = vmatprep.subr.mxu0 0.0
        %6538 = vmatpush1.msra.mxu0 0.0
        %6539 = vmatprep.subr.mxu0 0.0
        %6540 = vmatpush1.msra.mxu0 0.0
        %6541 = vmatprep.subr.mxu0 0.0
        %6542 = vmatpush1.msra.mxu0 0.0
        %6543 = vmatprep.subr.mxu0 0.0
        %6544 = vmatpush1.msra.mxu0 0.0
        %6545 = vmatprep.subr.mxu0 0.0
        %6546 = vmatpush1.msra.mxu0 0.0
        %6547 = vmatprep.subr.mxu0 0.0
        %6548 = vmatpush1.msra.mxu0 0.0
        %6549 = vmatprep.subr.mxu0 0.0
        %6550 = vmatpush1.msra.mxu0 0.0
        %6551 = vmatprep.subr.mxu0 0.0
        %6552 = vmatpush1.msra.mxu0 0.0
        %6553 = vmatprep.subr.mxu0 0.0
        %6554 = vmatpush1.msra.mxu0 0.0
        %6555 = vmatprep.mubr.f32.mxu0 0.0
        %6556 = vmatmul.mubr.f32.gmra.mrb[0].mxu0 %v6468
        %v6557 = vpop.f32.mrb[0].mxu0
        %v6558 = vadd.f32 0.0, %v6557
        %v6559 = vpop.f32.mrb[0].mxu0
        %v6560 = vadd.f32 0.0, %v6559
        %6561 = vmatprep.mubr.f32.mxu0 0.0
        %6562 = vmatmul.mubr.f32.gmra.mrb[0].mxu0 %v6471
        %v6563 = vpop.f32.mrb[0].mxu0
        %v6564 = vadd.f32 0.0, %v6563
        %v6565 = vpop.f32.mrb[0].mxu0
        %v6566 = vadd.f32 0.0, %v6565
        %6567 = vmatprep.mubr.f32.mxu0 0.0
        %6568 = vmatmul.mubr.f32.gmra.mrb[0].mxu0 %v6474
        %v6569 = vpop.f32.mrb[0].mxu0
        %v6570 = vadd.f32 0.0, %v6569
        %v6571 = vpop.f32.mrb[0].mxu0
        %v6572 = vadd.f32 0.0, %v6571
        %6573 = vmatprep.mubr.f32.mxu0 0.0
        %6574 = vmatmul.mubr.f32.gmra.mrb[0].mxu0 %v6477
        %v6575 = vpop.f32.mrb[0].mxu0
        %v6576 = vadd.f32 0.0, %v6575
        %v6577 = vpop.f32.mrb[0].mxu0
        %v6578 = vadd.f32 0.0, %v6577
        %6579 = vmatprep.mubr.f32.mxu0 0.0
        %6580 = vmatmul.mubr.f32.gmra.mrb[0].mxu0 %v6480
        %v6581 = vpop.f32.mrb[0].mxu0
        %v6582 = vadd.f32 0.0, %v6581
        %v6583 = vpop.f32.mrb[0].mxu0
        %v6584 = vadd.f32 0.0, %v6583
        %6585 = vmatprep.mubr.f32.mxu0 0.0
        %6586 = vmatmul.mubr.f32.gmra.mrb[0].mxu0 %v6483
        %v6587 = vpop.f32.mrb[0].mxu0
        %v6588 = vadd.f32 0.0, %v6587
        %v6589 = vpop.f32.mrb[0].mxu0
        %v6590 = vadd.f32 0.0, %v6589
        %6591 = vmatprep.mubr.f32.mxu0 0.0
        %6592 = vmatmul.mubr.f32.gmra.mrb[0].mxu0 %v6486
        %v6593 = vpop.f32.mrb[0].mxu0
        %v6594 = vadd.f32 0.0, %v6593
        %v6595 = vpop.f32.mrb[0].mxu0
        %v6596 = vadd.f32 0.0, %v6595
        %6597 = vmatprep.mubr.f32.mxu0 0.0
        %6598 = vmatmul.mubr.f32.gmra.mrb[0].mxu0 %v6489
        %v6599 = vpop.f32.mrb[0].mxu0
        %v6600 = vadd.f32 0.0, %v6599
        %v6601 = vpop.f32.mrb[0].mxu0
        %v6602 = vadd.f32 0.0, %v6601
        %6603 = vdwg.mxu0
        %v6604 = vadd.f32 %v6282, %v6558
        %v6605 = vadd.f32 %v6283, %v6560
        %v6606 = vadd.f32 %v6284, %v6564
        %v6607 = vadd.f32 %v6285, %v6566
        %v6608 = vadd.f32 %v6286, %v6570
        %v6609 = vadd.f32 %v6287, %v6572
        %v6610 = vadd.f32 %v6288, %v6576
        %v6611 = vadd.f32 %v6289, %v6578
        %v6612 = vadd.f32 %v6290, %v6582
        %v6613 = vadd.f32 %v6291, %v6584
        %v6614 = vadd.f32 %v6292, %v6588
        %v6615 = vadd.f32 %v6293, %v6590
        %v6616 = vadd.f32 %v6294, %v6594
        %v6617 = vadd.f32 %v6295, %v6596
        %v6618 = vadd.f32 %v6296, %v6600
        %v6619 = vadd.f32 %v6297, %v6602
        %v6620 = vld [vmem:[%s11] sm:$0xff]
        %v6621 = vld [vmem:[%s11 + $0x8] sm:$0xff]
        %v6622 = vld [vmem:[%s11 + $0x10] sm:$0xff]
        %v6623 = vld [vmem:[%s11 + $0x18] sm:$0xff]
        %v6624 = vld [vmem:[%s11 + $0x20] sm:$0xff]
        %v6625 = vld [vmem:[%s11 + $0x28] sm:$0xff]
        %v6626 = vld [vmem:[%s11 + $0x30] sm:$0xff]
        %v6627 = vld [vmem:[%s11 + $0x38] sm:$0xff]
        %v6628 = vld [vmem:[%s11 + $0x40] sm:$0xff]
        %v6629 = vld [vmem:[%s11 + $0x48] sm:$0xff]
        %v6630 = vld [vmem:[%s11 + $0x50] sm:$0xff]
        %v6631 = vld [vmem:[%s11 + $0x58] sm:$0xff]
        %v6632 = vld [vmem:[%s11 + $0x60] sm:$0xff]
        %v6633 = vld [vmem:[%s11 + $0x68] sm:$0xff]
        %v6634 = vld [vmem:[%s11 + $0x70] sm:$0xff]
        %v6635 = vld [vmem:[%s11 + $0x78] sm:$0xff]
        %v6636 = vld [vmem:[%s11 + $0x80] sm:$0xff]
        %v6637 = vld [vmem:[%s11 + $0x88] sm:$0xff]
        %v6638 = vld [vmem:[%s11 + $0x90] sm:$0xff]
        %v6639 = vld [vmem:[%s11 + $0x98] sm:$0xff]
        %vm6640 = vcmask 261120
        %v6642 = vsel %vm6640, %v6605, 0
        %v6645 = vsel %vm6640, %v6607, 0
        %v6648 = vsel %vm6640, %v6609, 0
        %v6651 = vsel %vm6640, %v6611, 0
        %v6654 = vsel %vm6640, %v6613, 0
        %v6657 = vsel %vm6640, %v6615, 0
        %v6660 = vsel %vm6640, %v6617, 0
        %v6663 = vsel %vm6640, %v6619, 0
        %6665 = vmatprep.subr.mxu0 0.0
        %6666 = vmatpush1.msra.mxu0 %v6620
        %6667 = vmatprep.subr.mxu0 0.0
        %6668 = vmatpush1.msra.mxu0 %v6621
        %6669 = vmatprep.subr.mxu0 0.0
        %6670 = vmatpush1.msra.mxu0 %v6622
        %6671 = vmatprep.subr.mxu0 0.0
        %6672 = vmatpush1.msra.mxu0 %v6623
        %6673 = vmatprep.subr.mxu0 0.0
        %6674 = vmatpush1.msra.mxu0 %v6624
        %6675 = vmatprep.subr.mxu0 0.0
        %6676 = vmatpush1.msra.mxu0 %v6625
        %6677 = vmatprep.subr.mxu0 0.0
        %6678 = vmatpush1.msra.mxu0 %v6626
        %6679 = vmatprep.subr.mxu0 0.0
        %6680 = vmatpush1.msra.mxu0 %v6627
        %6681 = vmatprep.subr.mxu0 0.0
        %6682 = vmatpush1.msra.mxu0 %v6628
        %6683 = vmatprep.subr.mxu0 0.0
        %6684 = vmatpush1.msra.mxu0 %v6629
        %6685 = vmatprep.subr.mxu0 0.0
        %6686 = vmatpush1.msra.mxu0 %v6630
        %6687 = vmatprep.subr.mxu0 0.0
        %6688 = vmatpush1.msra.mxu0 %v6631
        %6689 = vmatprep.subr.mxu0 0.0
        %6690 = vmatpush1.msra.mxu0 %v6632
        %6691 = vmatprep.subr.mxu0 0.0
        %6692 = vmatpush1.msra.mxu0 %v6633
        %6693 = vmatprep.subr.mxu0 0.0
        %6694 = vmatpush1.msra.mxu0 %v6634
        %6695 = vmatprep.subr.mxu0 0.0
        %6696 = vmatpush1.msra.mxu0 %v6635
        %6697 = vmatprep.subr.mxu0 0.0
        %6698 = vmatpush1.msra.mxu0 %v6636
        %6699 = vmatprep.subr.mxu0 0.0
        %6700 = vmatpush1.msra.mxu0 %v6637
        %6701 = vmatprep.subr.mxu0 0.0
        %6702 = vmatpush1.msra.mxu0 %v6638
        %6703 = vmatprep.subr.mxu0 0.0
        %6704 = vmatpush1.msra.mxu0 %v6639
        %6705 = vmatprep.subr.mxu0 0.0
        %6706 = vmatpush1.msra.mxu0 0.0
        %6707 = vmatprep.subr.mxu0 0.0
        %6708 = vmatpush1.msra.mxu0 0.0
        %6709 = vmatprep.subr.mxu0 0.0
        %6710 = vmatpush1.msra.mxu0 0.0
        %6711 = vmatprep.subr.mxu0 0.0
        %6712 = vmatpush1.msra.mxu0 0.0
        %6713 = vmatprep.subr.mxu0 0.0
        %6714 = vmatpush1.msra.mxu0 0.0
        %6715 = vmatprep.subr.mxu0 0.0
        %6716 = vmatpush1.msra.mxu0 0.0
        %6717 = vmatprep.subr.mxu0 0.0
        %6718 = vmatpush1.msra.mxu0 0.0
        %6719 = vmatprep.subr.mxu0 0.0
        %6720 = vmatpush1.msra.mxu0 0.0
        %6721 = vmatprep.subr.mxu0 0.0
        %6722 = vmatpush1.msra.mxu0 0.0
        %6723 = vmatprep.subr.mxu0 0.0
        %6724 = vmatpush1.msra.mxu0 0.0
        %6725 = vmatprep.subr.mxu0 0.0
        %6726 = vmatpush1.msra.mxu0 0.0
        %6727 = vmatprep.subr.mxu0 0.0
        %6728 = vmatpush1.msra.mxu0 0.0
        %6729 = vmatprep.mubr.f32.mxu0 %v6642
        %6730 = vmatmul.mubr.f32.gmra.mrb[0].mxu0 %v6604
        %v6731 = vpop.f32.mrb[0].mxu0
        %v6732 = vadd.f32 0.0, %v6731
        %v6733 = vpop.f32.mrb[0].mxu0
        %6734 = vmatprep.mubr.f32.mxu0 %v6645
        %6735 = vmatmul.mubr.f32.gmra.mrb[0].mxu0 %v6606
        %v6736 = vpop.f32.mrb[0].mxu0
        %v6737 = vadd.f32 0.0, %v6736
        %v6738 = vpop.f32.mrb[0].mxu0
        %6739 = vmatprep.mubr.f32.mxu0 %v6648
        %6740 = vmatmul.mubr.f32.gmra.mrb[0].mxu0 %v6608
        %v6741 = vpop.f32.mrb[0].mxu0
        %v6742 = vadd.f32 0.0, %v6741
        %v6743 = vpop.f32.mrb[0].mxu0
        %6744 = vmatprep.mubr.f32.mxu0 %v6651
        %6745 = vmatmul.mubr.f32.gmra.mrb[0].mxu0 %v6610
        %v6746 = vpop.f32.mrb[0].mxu0
        %v6747 = vadd.f32 0.0, %v6746
        %v6748 = vpop.f32.mrb[0].mxu0
        %6749 = vmatprep.mubr.f32.mxu0 %v6654
        %6750 = vmatmul.mubr.f32.gmra.mrb[0].mxu0 %v6612
        %v6751 = vpop.f32.mrb[0].mxu0
        %v6752 = vadd.f32 0.0, %v6751
        %v6753 = vpop.f32.mrb[0].mxu0
        %6754 = vmatprep.mubr.f32.mxu0 %v6657
        %6755 = vmatmul.mubr.f32.gmra.mrb[0].mxu0 %v6614
        %v6756 = vpop.f32.mrb[0].mxu0
        %v6757 = vadd.f32 0.0, %v6756
        %v6758 = vpop.f32.mrb[0].mxu0
        %6759 = vmatprep.mubr.f32.mxu0 %v6660
        %6760 = vmatmul.mubr.f32.gmra.mrb[0].mxu0 %v6616
        %v6761 = vpop.f32.mrb[0].mxu0
        %v6762 = vadd.f32 0.0, %v6761
        %v6763 = vpop.f32.mrb[0].mxu0
        %6764 = vmatprep.mubr.f32.mxu0 %v6663
        %6765 = vmatmul.mubr.f32.gmra.mrb[0].mxu0 %v6618
        %v6766 = vpop.f32.mrb[0].mxu0
        %v6767 = vadd.f32 0.0, %v6766
        %v6768 = vpop.f32.mrb[0].mxu0
        %6769 = vdwg.mxu0
        %v6770 = vld [vmem:[#allocation14] sm:$0xff]
        %v6771 = vld [vmem:[#allocation14 + $0x8] sm:$0xff]
        %v6772 = vld [vmem:[#allocation14 + $0x10] sm:$0xff]
        %v6773 = vld [vmem:[#allocation14 + $0x18] sm:$0xff]
        %v6774 = vld [vmem:[#allocation14 + $0x20] sm:$0xff]
        %v6775 = vld [vmem:[#allocation14 + $0x28] sm:$0xff]
        %v6776 = vld [vmem:[#allocation14 + $0x30] sm:$0xff]
        %v6777 = vld [vmem:[#allocation14 + $0x38] sm:$0xff]
        %v6778 = vld [vmem:[#allocation14 + $0x40] sm:$0xff]
        %v6779 = vld [vmem:[#allocation14 + $0x48] sm:$0xff]
        %v6780 = vld [vmem:[#allocation14 + $0x50] sm:$0xff]
        %v6781 = vld [vmem:[#allocation14 + $0x58] sm:$0xff]
        %v6782 = vld [vmem:[#allocation14 + $0x60] sm:$0xff]
        %v6783 = vld [vmem:[#allocation14 + $0x68] sm:$0xff]
        %v6784 = vld [vmem:[#allocation14 + $0x70] sm:$0xff]
        %v6785 = vld [vmem:[#allocation14 + $0x78] sm:$0xff]
        %v6786 = vld [vmem:[#allocation14 + $0x80] sm:$0xff]
        %v6787 = vld [vmem:[#allocation14 + $0x88] sm:$0xff]
        %v6788 = vld [vmem:[#allocation14 + $0x90] sm:$0xff]
        %v6789 = vld [vmem:[#allocation14 + $0x98] sm:$0xff]
        %6790 = vmatprep.subr.mxu0 0.0
        %6791 = vmatpush1.msra.mxu0 %v6770
        %6792 = vmatprep.subr.mxu0 0.0
        %6793 = vmatpush1.msra.mxu0 %v6771
        %6794 = vmatprep.subr.mxu0 0.0
        %6795 = vmatpush1.msra.mxu0 %v6772
        %6796 = vmatprep.subr.mxu0 0.0
        %6797 = vmatpush1.msra.mxu0 %v6773
        %6798 = vmatprep.subr.mxu0 0.0
        %6799 = vmatpush1.msra.mxu0 %v6774
        %6800 = vmatprep.subr.mxu0 0.0
        %6801 = vmatpush1.msra.mxu0 %v6775
        %6802 = vmatprep.subr.mxu0 0.0
        %6803 = vmatpush1.msra.mxu0 %v6776
        %6804 = vmatprep.subr.mxu0 0.0
        %6805 = vmatpush1.msra.mxu0 %v6777
        %6806 = vmatprep.subr.mxu0 0.0
        %6807 = vmatpush1.msra.mxu0 %v6778
        %6808 = vmatprep.subr.mxu0 0.0
        %6809 = vmatpush1.msra.mxu0 %v6779
        %6810 = vmatprep.subr.mxu0 0.0
        %6811 = vmatpush1.msra.mxu0 %v6780
        %6812 = vmatprep.subr.mxu0 0.0
        %6813 = vmatpush1.msra.mxu0 %v6781
        %6814 = vmatprep.subr.mxu0 0.0
        %6815 = vmatpush1.msra.mxu0 %v6782
        %6816 = vmatprep.subr.mxu0 0.0
        %6817 = vmatpush1.msra.mxu0 %v6783
        %6818 = vmatprep.subr.mxu0 0.0
        %6819 = vmatpush1.msra.mxu0 %v6784
        %6820 = vmatprep.subr.mxu0 0.0
        %6821 = vmatpush1.msra.mxu0 %v6785
        %6822 = vmatprep.subr.mxu0 0.0
        %6823 = vmatpush1.msra.mxu0 %v6786
        %6824 = vmatprep.subr.mxu0 0.0
        %6825 = vmatpush1.msra.mxu0 %v6787
        %6826 = vmatprep.subr.mxu0 0.0
        %6827 = vmatpush1.msra.mxu0 %v6788
        %6828 = vmatprep.subr.mxu0 0.0
        %6829 = vmatpush1.msra.mxu0 %v6789
        %6830 = vmatprep.subr.mxu0 0.0
        %6831 = vmatpush1.msra.mxu0 0.0
        %6832 = vmatprep.subr.mxu0 0.0
        %6833 = vmatpush1.msra.mxu0 0.0
        %6834 = vmatprep.subr.mxu0 0.0
        %6835 = vmatpush1.msra.mxu0 0.0
        %6836 = vmatprep.subr.mxu0 0.0
        %6837 = vmatpush1.msra.mxu0 0.0
        %6838 = vmatprep.subr.mxu0 0.0
        %6839 = vmatpush1.msra.mxu0 0.0
        %6840 = vmatprep.subr.mxu0 0.0
        %6841 = vmatpush1.msra.mxu0 0.0
        %6842 = vmatprep.subr.mxu0 0.0
        %6843 = vmatpush1.msra.mxu0 0.0
        %6844 = vmatprep.subr.mxu0 0.0
        %6845 = vmatpush1.msra.mxu0 0.0
        %6846 = vmatprep.subr.mxu0 0.0
        %6847 = vmatpush1.msra.mxu0 0.0
        %6848 = vmatprep.subr.mxu0 0.0
        %6849 = vmatpush1.msra.mxu0 0.0
        %6850 = vmatprep.subr.mxu0 0.0
        %6851 = vmatpush1.msra.mxu0 0.0
        %6852 = vmatprep.subr.mxu0 0.0
        %6853 = vmatpush1.msra.mxu0 0.0
        %6854 = vmatprep.mubr.f32.mxu0 %v6642
        %6855 = vmatmul.mubr.f32.gmra.mrb[0].mxu0 %v6604
        %v6856 = vpop.f32.mrb[0].mxu0
        %v6857 = vadd.f32 0.0, %v6856
        %v6858 = vpop.f32.mrb[0].mxu0
        %6859 = vmatprep.mubr.f32.mxu0 %v6645
        %6860 = vmatmul.mubr.f32.gmra.mrb[0].mxu0 %v6606
        %v6861 = vpop.f32.mrb[0].mxu0
        %v6862 = vadd.f32 0.0, %v6861
        %v6863 = vpop.f32.mrb[0].mxu0
        %6864 = vmatprep.mubr.f32.mxu0 %v6648
        %6865 = vmatmul.mubr.f32.gmra.mrb[0].mxu0 %v6608
        %v6866 = vpop.f32.mrb[0].mxu0
        %v6867 = vadd.f32 0.0, %v6866
        %v6868 = vpop.f32.mrb[0].mxu0
        %6869 = vmatprep.mubr.f32.mxu0 %v6651
        %6870 = vmatmul.mubr.f32.gmra.mrb[0].mxu0 %v6610
        %v6871 = vpop.f32.mrb[0].mxu0
        %v6872 = vadd.f32 0.0, %v6871
        %v6873 = vpop.f32.mrb[0].mxu0
        %6874 = vmatprep.mubr.f32.mxu0 %v6654
        %6875 = vmatmul.mubr.f32.gmra.mrb[0].mxu0 %v6612
        %v6876 = vpop.f32.mrb[0].mxu0
        %v6877 = vadd.f32 0.0, %v6876
        %v6878 = vpop.f32.mrb[0].mxu0
        %6879 = vmatprep.mubr.f32.mxu0 %v6657
        %6880 = vmatmul.mubr.f32.gmra.mrb[0].mxu0 %v6614
        %v6881 = vpop.f32.mrb[0].mxu0
        %v6882 = vadd.f32 0.0, %v6881
        %v6883 = vpop.f32.mrb[0].mxu0
        %6884 = vmatprep.mubr.f32.mxu0 %v6660
        %6885 = vmatmul.mubr.f32.gmra.mrb[0].mxu0 %v6616
        %v6886 = vpop.f32.mrb[0].mxu0
        %v6887 = vadd.f32 0.0, %v6886
        %v6888 = vpop.f32.mrb[0].mxu0
        %6889 = vmatprep.mubr.f32.mxu0 %v6663
        %6890 = vmatmul.mubr.f32.gmra.mrb[0].mxu0 %v6618
        %v6891 = vpop.f32.mrb[0].mxu0
        %v6892 = vadd.f32 0.0, %v6891
        %v6893 = vpop.f32.mrb[0].mxu0
        %6894 = vdwg.mxu0
        %v6895 = vmax.f32 %v6732, %v6857
        %v6896 = vmax.f32 %v6737, %v6862
        %v6897 = vmax.f32 %v6742, %v6867
        %v6898 = vmax.f32 %v6747, %v6872
        %v6899 = vmax.f32 %v6752, %v6877
        %v6900 = vmax.f32 %v6757, %v6882
        %v6901 = vmax.f32 %v6762, %v6887
        %v6902 = vmax.f32 %v6767, %v6892
        %v6903 = vld [vmem:[#allocation16] sm:$0xff]
        %v6904 = vld [vmem:[#allocation16 + $0x8] sm:$0xff]
        %v6905 = vld [vmem:[#allocation16 + $0x10] sm:$0xff]
        %v6906 = vld [vmem:[#allocation16 + $0x18] sm:$0xff]
        %v6908 = vsel %vm4628, %v6903, 0
        %v6911 = vsel %vm4628, %v6904, 0
        %v6914 = vsel %vm4628, %v6905, 0
        %v6917 = vsel %vm4628, %v6906, 0
        %6919 = vmatprep.subr.mxu0 0.0
        %6920 = vmatpush1.msra.mxu0 %v6895
        %6921 = vmatprep.subr.mxu0 0.0
        %6922 = vmatpush1.msra.mxu0 %v6896
        %6923 = vmatprep.subr.mxu0 0.0
        %6924 = vmatpush1.msra.mxu0 %v6897
        %6925 = vmatprep.subr.mxu0 0.0
        %6926 = vmatpush1.msra.mxu0 %v6898
        %6927 = vmatprep.subr.mxu0 0.0
        %6928 = vmatpush1.msra.mxu0 %v6899
        %6929 = vmatprep.subr.mxu0 0.0
        %6930 = vmatpush1.msra.mxu0 %v6900
        %6931 = vmatprep.subr.mxu0 0.0
        %6932 = vmatpush1.msra.mxu0 %v6901
        %6933 = vmatprep.subr.mxu0 0.0
        %6934 = vmatpush1.msra.mxu0 %v6902
        %6935 = vmatprep.subr.mxu0 0.0
        %6936 = vmatpush1.msra.mxu0 0.0
        %6937 = vmatprep.subr.mxu0 0.0
        %6938 = vmatpush1.msra.mxu0 0.0
        %6939 = vmatprep.subr.mxu0 0.0
        %6940 = vmatpush1.msra.mxu0 0.0
        %6941 = vmatprep.subr.mxu0 0.0
        %6942 = vmatpush1.msra.mxu0 0.0
        %6943 = vmatprep.subr.mxu0 0.0
        %6944 = vmatpush1.msra.mxu0 0.0
        %6945 = vmatprep.subr.mxu0 0.0
        %6946 = vmatpush1.msra.mxu0 0.0
        %6947 = vmatprep.subr.mxu0 0.0
        %6948 = vmatpush1.msra.mxu0 0.0
        %6949 = vmatprep.subr.mxu0 0.0
        %6950 = vmatpush1.msra.mxu0 0.0
        %6951 = vmatprep.subr.mxu0 0.0
        %6952 = vmatpush1.msra.mxu0 0.0
        %6953 = vmatprep.subr.mxu0 0.0
        %6954 = vmatpush1.msra.mxu0 0.0
        %6955 = vmatprep.subr.mxu0 0.0
        %6956 = vmatpush1.msra.mxu0 0.0
        %6957 = vmatprep.subr.mxu0 0.0
        %6958 = vmatpush1.msra.mxu0 0.0
        %6959 = vmatprep.subr.mxu0 0.0
        %6960 = vmatpush1.msra.mxu0 0.0
        %6961 = vmatprep.subr.mxu0 0.0
        %6962 = vmatpush1.msra.mxu0 0.0
        %6963 = vmatprep.subr.mxu0 0.0
        %6964 = vmatpush1.msra.mxu0 0.0
        %6965 = vmatprep.subr.mxu0 0.0
        %6966 = vmatpush1.msra.mxu0 0.0
        %6967 = vmatprep.subr.mxu0 0.0
        %6968 = vmatpush1.msra.mxu0 0.0
        %6969 = vmatprep.subr.mxu0 0.0
        %6970 = vmatpush1.msra.mxu0 0.0
        %6971 = vmatprep.subr.mxu0 0.0
        %6972 = vmatpush1.msra.mxu0 0.0
        %6973 = vmatprep.subr.mxu0 0.0
        %6974 = vmatpush1.msra.mxu0 0.0
        %6975 = vmatprep.subr.mxu0 0.0
        %6976 = vmatpush1.msra.mxu0 0.0
        %6977 = vmatprep.subr.mxu0 0.0
        %6978 = vmatpush1.msra.mxu0 0.0
        %6979 = vmatprep.subr.mxu0 0.0
        %6980 = vmatpush1.msra.mxu0 0.0
        %6981 = vmatprep.subr.mxu0 0.0
        %6982 = vmatpush1.msra.mxu0 0.0
        %6983 = vmatprep.mubr.f32.mxu0 0.0
        %6984 = vmatmul.mubr.f32.gmra.mrb[0].mxu0 %v6908
        %v6985 = vpop.f32.mrb[0].mxu0
        %v6986 = vadd.f32 0.0, %v6985
        %v6987 = vpop.f32.mrb[0].mxu0
        %6988 = vmatprep.mubr.f32.mxu0 0.0
        %6989 = vmatmul.mubr.f32.gmra.mrb[0].mxu0 %v6911
        %v6990 = vpop.f32.mrb[0].mxu0
        %v6991 = vadd.f32 0.0, %v6990
        %v6992 = vpop.f32.mrb[0].mxu0
        %6993 = vmatprep.mubr.f32.mxu0 0.0
        %6994 = vmatmul.mubr.f32.gmra.mrb[0].mxu0 %v6914
        %v6995 = vpop.f32.mrb[0].mxu0
        %v6996 = vadd.f32 0.0, %v6995
        %v6997 = vpop.f32.mrb[0].mxu0
        %6998 = vmatprep.mubr.f32.mxu0 0.0
        %6999 = vmatmul.mubr.f32.gmra.mrb[0].mxu0 %v6917
        %v7000 = vpop.f32.mrb[0].mxu0
        %v7001 = vadd.f32 0.0, %v7000
        %v7002 = vpop.f32.mrb[0].mxu0
        %7003 = vdwg.mxu0
        %v7004 = vld [vmem:[#allocation17] sm:$0xff]
        %v7005 = vld [vmem:[#allocation17 + $0x8] sm:$0xff]
        %v7006 = vld [vmem:[#allocation17 + $0x10] sm:$0xff]
        %v7007 = vld [vmem:[#allocation17 + $0x18] sm:$0xff]
        %v7009 = vsel %vm4628, %v7004, 0
        %v7012 = vsel %vm4628, %v7005, 0
        %v7015 = vsel %vm4628, %v7006, 0
        %v7018 = vsel %vm4628, %v7007, 0
        %7020 = vmatprep.subr.mxu0 0.0
        %7021 = vmatpush1.msra.mxu0 %v6895
        %7022 = vmatprep.subr.mxu0 0.0
        %7023 = vmatpush1.msra.mxu0 %v6896
        %7024 = vmatprep.subr.mxu0 0.0
        %7025 = vmatpush1.msra.mxu0 %v6897
        %7026 = vmatprep.subr.mxu0 0.0
        %7027 = vmatpush1.msra.mxu0 %v6898
        %7028 = vmatprep.subr.mxu0 0.0
        %7029 = vmatpush1.msra.mxu0 %v6899
        %7030 = vmatprep.subr.mxu0 0.0
        %7031 = vmatpush1.msra.mxu0 %v6900
        %7032 = vmatprep.subr.mxu0 0.0
        %7033 = vmatpush1.msra.mxu0 %v6901
        %7034 = vmatprep.subr.mxu0 0.0
        %7035 = vmatpush1.msra.mxu0 %v6902
        %7036 = vmatprep.subr.mxu0 0.0
        %7037 = vmatpush1.msra.mxu0 0.0
        %7038 = vmatprep.subr.mxu0 0.0
        %7039 = vmatpush1.msra.mxu0 0.0
        %7040 = vmatprep.subr.mxu0 0.0
        %7041 = vmatpush1.msra.mxu0 0.0
        %7042 = vmatprep.subr.mxu0 0.0
        %7043 = vmatpush1.msra.mxu0 0.0
        %7044 = vmatprep.subr.mxu0 0.0
        %7045 = vmatpush1.msra.mxu0 0.0
        %7046 = vmatprep.subr.mxu0 0.0
        %7047 = vmatpush1.msra.mxu0 0.0
        %7048 = vmatprep.subr.mxu0 0.0
        %7049 = vmatpush1.msra.mxu0 0.0
        %7050 = vmatprep.subr.mxu0 0.0
        %7051 = vmatpush1.msra.mxu0 0.0
        %7052 = vmatprep.subr.mxu0 0.0
        %7053 = vmatpush1.msra.mxu0 0.0
        %7054 = vmatprep.subr.mxu0 0.0
        %7055 = vmatpush1.msra.mxu0 0.0
        %7056 = vmatprep.subr.mxu0 0.0
        %7057 = vmatpush1.msra.mxu0 0.0
        %7058 = vmatprep.subr.mxu0 0.0
        %7059 = vmatpush1.msra.mxu0 0.0
        %7060 = vmatprep.subr.mxu0 0.0
        %7061 = vmatpush1.msra.mxu0 0.0
        %7062 = vmatprep.subr.mxu0 0.0
        %7063 = vmatpush1.msra.mxu0 0.0
        %7064 = vmatprep.subr.mxu0 0.0
        %7065 = vmatpush1.msra.mxu0 0.0
        %7066 = vmatprep.subr.mxu0 0.0
        %7067 = vmatpush1.msra.mxu0 0.0
        %7068 = vmatprep.subr.mxu0 0.0
        %7069 = vmatpush1.msra.mxu0 0.0
        %7070 = vmatprep.subr.mxu0 0.0
        %7071 = vmatpush1.msra.mxu0 0.0
        %7072 = vmatprep.subr.mxu0 0.0
        %7073 = vmatpush1.msra.mxu0 0.0
        %7074 = vmatprep.subr.mxu0 0.0
        %7075 = vmatpush1.msra.mxu0 0.0
        %7076 = vmatprep.subr.mxu0 0.0
        %7077 = vmatpush1.msra.mxu0 0.0
        %7078 = vmatprep.subr.mxu0 0.0
        %7079 = vmatpush1.msra.mxu0 0.0
        %7080 = vmatprep.subr.mxu0 0.0
        %7081 = vmatpush1.msra.mxu0 0.0
        %7082 = vmatprep.subr.mxu0 0.0
        %7083 = vmatpush1.msra.mxu0 0.0
        %7084 = vmatprep.mubr.f32.mxu0 0.0
        %7085 = vmatmul.mubr.f32.gmra.mrb[0].mxu0 %v7009
        %v7086 = vpop.f32.mrb[0].mxu0
        %v7087 = vadd.f32 0.0, %v7086
        %v7088 = vpop.f32.mrb[0].mxu0
        %7089 = vmatprep.mubr.f32.mxu0 0.0
        %7090 = vmatmul.mubr.f32.gmra.mrb[0].mxu0 %v7012
        %v7091 = vpop.f32.mrb[0].mxu0
        %v7092 = vadd.f32 0.0, %v7091
        %v7093 = vpop.f32.mrb[0].mxu0
        %7094 = vmatprep.mubr.f32.mxu0 0.0
        %7095 = vmatmul.mubr.f32.gmra.mrb[0].mxu0 %v7015
        %v7096 = vpop.f32.mrb[0].mxu0
        %v7097 = vadd.f32 0.0, %v7096
        %v7098 = vpop.f32.mrb[0].mxu0
        %7099 = vmatprep.mubr.f32.mxu0 0.0
        %7100 = vmatmul.mubr.f32.gmra.mrb[0].mxu0 %v7018
        %v7101 = vpop.f32.mrb[0].mxu0
        %v7102 = vadd.f32 0.0, %v7101
        %v7103 = vpop.f32.mrb[0].mxu0
        %7104 = vdwg.mxu0
        %v7105 = vmax.f32 %v6986, %v7087
        %v7106 = vmax.f32 %v6991, %v7092
        %v7107 = vmax.f32 %v6996, %v7097
        %v7108 = vmax.f32 %v7001, %v7102
        %v7109 = vmax.f32 %v7105, 0.0
        %v7110 = vmax.f32 %v7106, 0.0
        %v7111 = vmax.f32 %v7107, 0.0
        %v7112 = vmax.f32 %v7108, 0.0
        %v7113 = vld [vmem:[%s17] sm:$0x1]
        %v7114 = vld [vmem:[#allocation19] sm:$0xff]
        %v7116 = vsel %vm6640, %v7114, 0
        %7118 = vmatprep.subr.mxu0 0.0
        %7119 = vmatpush1.msra.mxu0 %v7109
        %7120 = vmatprep.subr.mxu0 0.0
        %7121 = vmatpush1.msra.mxu0 %v7110
        %7122 = vmatprep.subr.mxu0 0.0
        %7123 = vmatpush1.msra.mxu0 %v7111
        %7124 = vmatprep.subr.mxu0 0.0
        %7125 = vmatpush1.msra.mxu0 %v7112
        %7126 = vmatprep.subr.mxu0 0.0
        %7127 = vmatpush1.msra.mxu0 0.0
        %7128 = vmatprep.subr.mxu0 0.0
        %7129 = vmatpush1.msra.mxu0 0.0
        %7130 = vmatprep.subr.mxu0 0.0
        %7131 = vmatpush1.msra.mxu0 0.0
        %7132 = vmatprep.subr.mxu0 0.0
        %7133 = vmatpush1.msra.mxu0 0.0
        %7134 = vmatprep.subr.mxu0 0.0
        %7135 = vmatpush1.msra.mxu0 0.0
        %7136 = vmatprep.subr.mxu0 0.0
        %7137 = vmatpush1.msra.mxu0 0.0
        %7138 = vmatprep.subr.mxu0 0.0
        %7139 = vmatpush1.msra.mxu0 0.0
        %7140 = vmatprep.subr.mxu0 0.0
        %7141 = vmatpush1.msra.mxu0 0.0
        %7142 = vmatprep.subr.mxu0 0.0
        %7143 = vmatpush1.msra.mxu0 0.0
        %7144 = vmatprep.subr.mxu0 0.0
        %7145 = vmatpush1.msra.mxu0 0.0
        %7146 = vmatprep.subr.mxu0 0.0
        %7147 = vmatpush1.msra.mxu0 0.0
        %7148 = vmatprep.subr.mxu0 0.0
        %7149 = vmatpush1.msra.mxu0 0.0
        %7150 = vmatprep.subr.mxu0 0.0
        %7151 = vmatpush1.msra.mxu0 0.0
        %7152 = vmatprep.subr.mxu0 0.0
        %7153 = vmatpush1.msra.mxu0 0.0
        %7154 = vmatprep.subr.mxu0 0.0
        %7155 = vmatpush1.msra.mxu0 0.0
        %7156 = vmatprep.subr.mxu0 0.0
        %7157 = vmatpush1.msra.mxu0 0.0
        %7158 = vmatprep.subr.mxu0 0.0
        %7159 = vmatpush1.msra.mxu0 0.0
        %7160 = vmatprep.subr.mxu0 0.0
        %7161 = vmatpush1.msra.mxu0 0.0
        %7162 = vmatprep.subr.mxu0 0.0
        %7163 = vmatpush1.msra.mxu0 0.0
        %7164 = vmatprep.subr.mxu0 0.0
        %7165 = vmatpush1.msra.mxu0 0.0
        %7166 = vmatprep.subr.mxu0 0.0
        %7167 = vmatpush1.msra.mxu0 0.0
        %7168 = vmatprep.subr.mxu0 0.0
        %7169 = vmatpush1.msra.mxu0 0.0
        %7170 = vmatprep.subr.mxu0 0.0
        %7171 = vmatpush1.msra.mxu0 0.0
        %7172 = vmatprep.subr.mxu0 0.0
        %7173 = vmatpush1.msra.mxu0 0.0
        %7174 = vmatprep.subr.mxu0 0.0
        %7175 = vmatpush1.msra.mxu0 0.0
        %7176 = vmatprep.subr.mxu0 0.0
        %7177 = vmatpush1.msra.mxu0 0.0
        %7178 = vmatprep.subr.mxu0 0.0
        %7179 = vmatpush1.msra.mxu0 0.0
        %7180 = vmatprep.subr.mxu0 0.0
        %7181 = vmatpush1.msra.mxu0 0.0
        %7182 = vmatprep.mubr.f32.mxu0 0.0
        %7183 = vmatmul.mubr.f32.gmra.mrb[0].mxu0 %v7116
        %v7184 = vpop.f32.mrb[0].mxu0
        %v7185 = vadd.f32 0.0, %v7184
        %v7186 = vpop.f32.mrb[0].mxu0
        %7187 = vdwg.mxu0
        %v7188 = vld [vmem:[%s16] sm:$0xff]
        %v7189 = vld [vmem:[%s16 + $0x8] sm:$0xff]
        %v7190 = vld [vmem:[%s16 + $0x10] sm:$0xff]
        %v7191 = vld [vmem:[%s16 + $0x18] sm:$0xff]
        %v7192 = vld [vmem:[%s16 + $0x20] sm:$0xff]
        %v7193 = vld [vmem:[%s16 + $0x28] sm:$0xff]
        %v7194 = vld [vmem:[%s16 + $0x30] sm:$0xff]
        %v7195 = vld [vmem:[%s16 + $0x38] sm:$0xff]
        %v7196 = vld [vmem:[%s16 + $0x40] sm:$0xff]
        %v7197 = vld [vmem:[%s16 + $0x48] sm:$0xff]
        %vm7198 = vcmask 654336
        %v7200 = vsel %vm7198, %v7185, 0
        %7202 = vmatprep.subr.mxu0 0.0
        %7203 = vmatpush1.msra.mxu0 %v7188
        %7204 = vmatprep.subr.mxu0 0.0
        %7205 = vmatpush1.msra.mxu0 %v7189
        %7206 = vmatprep.subr.mxu0 0.0
        %7207 = vmatpush1.msra.mxu0 %v7190
        %7208 = vmatprep.subr.mxu0 0.0
        %7209 = vmatpush1.msra.mxu0 %v7191
        %7210 = vmatprep.subr.mxu0 0.0
        %7211 = vmatpush1.msra.mxu0 %v7192
        %7212 = vmatprep.subr.mxu0 0.0
        %7213 = vmatpush1.msra.mxu0 %v7193
        %7214 = vmatprep.subr.mxu0 0.0
        %7215 = vmatpush1.msra.mxu0 %v7194
        %7216 = vmatprep.subr.mxu0 0.0
        %7217 = vmatpush1.msra.mxu0 %v7195
        %7218 = vmatprep.subr.mxu0 0.0
        %7219 = vmatpush1.msra.mxu0 %v7196
        %7220 = vmatprep.subr.mxu0 0.0
        %7221 = vmatpush1.msra.mxu0 %v7197
        %7222 = vmatprep.subr.mxu0 0.0
        %7223 = vmatpush1.msra.mxu0 0.0
        %7224 = vmatprep.subr.mxu0 0.0
        %7225 = vmatpush1.msra.mxu0 0.0
        %7226 = vmatprep.subr.mxu0 0.0
        %7227 = vmatpush1.msra.mxu0 0.0
        %7228 = vmatprep.subr.mxu0 0.0
        %7229 = vmatpush1.msra.mxu0 0.0
        %7230 = vmatprep.subr.mxu0 0.0
        %7231 = vmatpush1.msra.mxu0 0.0
        %7232 = vmatprep.subr.mxu0 0.0
        %7233 = vmatpush1.msra.mxu0 0.0
        %7234 = vmatprep.subr.mxu0 0.0
        %7235 = vmatpush1.msra.mxu0 0.0
        %7236 = vmatprep.subr.mxu0 0.0
        %7237 = vmatpush1.msra.mxu0 0.0
        %7238 = vmatprep.subr.mxu0 0.0
        %7239 = vmatpush1.msra.mxu0 0.0
        %7240 = vmatprep.subr.mxu0 0.0
        %7241 = vmatpush1.msra.mxu0 0.0
        %7242 = vmatprep.subr.mxu0 0.0
        %7243 = vmatpush1.msra.mxu0 0.0
        %7244 = vmatprep.subr.mxu0 0.0
        %7245 = vmatpush1.msra.mxu0 0.0
        %7246 = vmatprep.subr.mxu0 0.0
        %7247 = vmatpush1.msra.mxu0 0.0
        %7248 = vmatprep.subr.mxu0 0.0
        %7249 = vmatpush1.msra.mxu0 0.0
        %7250 = vmatprep.subr.mxu0 0.0
        %7251 = vmatpush1.msra.mxu0 0.0
        %7252 = vmatprep.subr.mxu0 0.0
        %7253 = vmatpush1.msra.mxu0 0.0
        %7254 = vmatprep.subr.mxu0 0.0
        %7255 = vmatpush1.msra.mxu0 0.0
        %7256 = vmatprep.subr.mxu0 0.0
        %7257 = vmatpush1.msra.mxu0 0.0
        %7258 = vmatprep.subr.mxu0 0.0
        %7259 = vmatpush1.msra.mxu0 0.0
        %7260 = vmatprep.subr.mxu0 0.0
        %7261 = vmatpush1.msra.mxu0 0.0
        %7262 = vmatprep.subr.mxu0 0.0
        %7263 = vmatpush1.msra.mxu0 0.0
        %7264 = vmatprep.subr.mxu0 0.0
        %7265 = vmatpush1.msra.mxu0 0.0
        %7266 = vmatprep.mubr.f32.mxu0 0.0
        %7267 = vmatmul.mubr.f32.gmra.mrb[0].mxu0 %v7200
        %v7268 = vpop.f32.mrb[0].mxu0
        %v7269 = vadd.f32 0.0, %v7268
        %v7270 = vpop.f32.mrb[0].mxu0
        %7271 = vdwg.mxu0
        %v7273 = vlaneseq
        %v7274 = vshrl.u32 %v7273, 7
        %v7275 = vsub.s32 0, %v7274
        %v7276 = vrot.slane %v7113, %v7275
        %v7278 = vadd.f32 %v7276, %v7269
        %s7279 = scalar_lea.vmem [#allocation19], 8
        %v7280 = vld [vmem:[%s7279] sm:$0xff]
        %v7282 = vsel %vm6640, %v7280, 0
        %7284 = vmatprep.subr.mxu0 0.0
        %7285 = vmatpush1.msra.mxu0 %v7109
        %7286 = vmatprep.subr.mxu0 0.0
        %7287 = vmatpush1.msra.mxu0 %v7110
        %7288 = vmatprep.subr.mxu0 0.0
        %7289 = vmatpush1.msra.mxu0 %v7111
        %7290 = vmatprep.subr.mxu0 0.0
        %7291 = vmatpush1.msra.mxu0 %v7112
        %7292 = vmatprep.subr.mxu0 0.0
        %7293 = vmatpush1.msra.mxu0 0.0
        %7294 = vmatprep.subr.mxu0 0.0
        %7295 = vmatpush1.msra.mxu0 0.0
        %7296 = vmatprep.subr.mxu0 0.0
        %7297 = vmatpush1.msra.mxu0 0.0
        %7298 = vmatprep.subr.mxu0 0.0
        %7299 = vmatpush1.msra.mxu0 0.0
        %7300 = vmatprep.subr.mxu0 0.0
        %7301 = vmatpush1.msra.mxu0 0.0
        %7302 = vmatprep.subr.mxu0 0.0
        %7303 = vmatpush1.msra.mxu0 0.0
        %7304 = vmatprep.subr.mxu0 0.0
        %7305 = vmatpush1.msra.mxu0 0.0
        %7306 = vmatprep.subr.mxu0 0.0
        %7307 = vmatpush1.msra.mxu0 0.0
        %7308 = vmatprep.subr.mxu0 0.0
        %7309 = vmatpush1.msra.mxu0 0.0
        %7310 = vmatprep.subr.mxu0 0.0
        %7311 = vmatpush1.msra.mxu0 0.0
        %7312 = vmatprep.subr.mxu0 0.0
        %7313 = vmatpush1.msra.mxu0 0.0
        %7314 = vmatprep.subr.mxu0 0.0
        %7315 = vmatpush1.msra.mxu0 0.0
        %7316 = vmatprep.subr.mxu0 0.0
        %7317 = vmatpush1.msra.mxu0 0.0
        %7318 = vmatprep.subr.mxu0 0.0
        %7319 = vmatpush1.msra.mxu0 0.0
        %7320 = vmatprep.subr.mxu0 0.0
        %7321 = vmatpush1.msra.mxu0 0.0
        %7322 = vmatprep.subr.mxu0 0.0
        %7323 = vmatpush1.msra.mxu0 0.0
        %7324 = vmatprep.subr.mxu0 0.0
        %7325 = vmatpush1.msra.mxu0 0.0
        %7326 = vmatprep.subr.mxu0 0.0
        %7327 = vmatpush1.msra.mxu0 0.0
        %7328 = vmatprep.subr.mxu0 0.0
        %7329 = vmatpush1.msra.mxu0 0.0
        %7330 = vmatprep.subr.mxu0 0.0
        %7331 = vmatpush1.msra.mxu0 0.0
        %7332 = vmatprep.subr.mxu0 0.0
        %7333 = vmatpush1.msra.mxu0 0.0
        %7334 = vmatprep.subr.mxu0 0.0
        %7335 = vmatpush1.msra.mxu0 0.0
        %7336 = vmatprep.subr.mxu0 0.0
        %7337 = vmatpush1.msra.mxu0 0.0
        %7338 = vmatprep.subr.mxu0 0.0
        %7339 = vmatpush1.msra.mxu0 0.0
        %7340 = vmatprep.subr.mxu0 0.0
        %7341 = vmatpush1.msra.mxu0 0.0
        %7342 = vmatprep.subr.mxu0 0.0
        %7343 = vmatpush1.msra.mxu0 0.0
        %7344 = vmatprep.subr.mxu0 0.0
        %7345 = vmatpush1.msra.mxu0 0.0
        %7346 = vmatprep.subr.mxu0 0.0
        %7347 = vmatpush1.msra.mxu0 0.0
        %7348 = vmatprep.mubr.f32.mxu0 0.0
        %7349 = vmatmul.mubr.f32.gmra.mrb[0].mxu0 %v7282
        %v7350 = vpop.f32.mrb[0].mxu0
        %v7351 = vadd.f32 0.0, %v7350
        %v7352 = vpop.f32.mrb[0].mxu0
        %7353 = vdwg.mxu0
        %s7354 = scalar_lea.vmem %s16, 80
        %v7355 = vld [vmem:[%s7354] sm:$0xff]
        %v7356 = vld [vmem:[%s7354 + $0x8] sm:$0xff]
        %v7357 = vld [vmem:[%s7354 + $0x10] sm:$0xff]
        %v7358 = vld [vmem:[%s7354 + $0x18] sm:$0xff]
        %v7359 = vld [vmem:[%s7354 + $0x20] sm:$0xff]
        %v7360 = vld [vmem:[%s7354 + $0x28] sm:$0xff]
        %v7361 = vld [vmem:[%s7354 + $0x30] sm:$0xff]
        %v7362 = vld [vmem:[%s7354 + $0x38] sm:$0xff]
        %v7363 = vld [vmem:[%s7354 + $0x40] sm:$0xff]
        %v7364 = vld [vmem:[%s7354 + $0x48] sm:$0xff]
        %v7366 = vsel %vm7198, %v7351, 0
        %7368 = vmatprep.subr.mxu0 0.0
        %7369 = vmatpush1.msra.mxu0 %v7355
        %7370 = vmatprep.subr.mxu0 0.0
        %7371 = vmatpush1.msra.mxu0 %v7356
        %7372 = vmatprep.subr.mxu0 0.0
        %7373 = vmatpush1.msra.mxu0 %v7357
        %7374 = vmatprep.subr.mxu0 0.0
        %7375 = vmatpush1.msra.mxu0 %v7358
        %7376 = vmatprep.subr.mxu0 0.0
        %7377 = vmatpush1.msra.mxu0 %v7359
        %7378 = vmatprep.subr.mxu0 0.0
        %7379 = vmatpush1.msra.mxu0 %v7360
        %7380 = vmatprep.subr.mxu0 0.0
        %7381 = vmatpush1.msra.mxu0 %v7361
        %7382 = vmatprep.subr.mxu0 0.0
        %7383 = vmatpush1.msra.mxu0 %v7362
        %7384 = vmatprep.subr.mxu0 0.0
        %7385 = vmatpush1.msra.mxu0 %v7363
        %7386 = vmatprep.subr.mxu0 0.0
        %7387 = vmatpush1.msra.mxu0 %v7364
        %7388 = vmatprep.subr.mxu0 0.0
        %7389 = vmatpush1.msra.mxu0 0.0
        %7390 = vmatprep.subr.mxu0 0.0
        %7391 = vmatpush1.msra.mxu0 0.0
        %7392 = vmatprep.subr.mxu0 0.0
        %7393 = vmatpush1.msra.mxu0 0.0
        %7394 = vmatprep.subr.mxu0 0.0
        %7395 = vmatpush1.msra.mxu0 0.0
        %7396 = vmatprep.subr.mxu0 0.0
        %7397 = vmatpush1.msra.mxu0 0.0
        %7398 = vmatprep.subr.mxu0 0.0
        %7399 = vmatpush1.msra.mxu0 0.0
        %7400 = vmatprep.subr.mxu0 0.0
        %7401 = vmatpush1.msra.mxu0 0.0
        %7402 = vmatprep.subr.mxu0 0.0
        %7403 = vmatpush1.msra.mxu0 0.0
        %7404 = vmatprep.subr.mxu0 0.0
        %7405 = vmatpush1.msra.mxu0 0.0
        %7406 = vmatprep.subr.mxu0 0.0
        %7407 = vmatpush1.msra.mxu0 0.0
        %7408 = vmatprep.subr.mxu0 0.0
        %7409 = vmatpush1.msra.mxu0 0.0
        %7410 = vmatprep.subr.mxu0 0.0
        %7411 = vmatpush1.msra.mxu0 0.0
        %7412 = vmatprep.subr.mxu0 0.0
        %7413 = vmatpush1.msra.mxu0 0.0
        %7414 = vmatprep.subr.mxu0 0.0
        %7415 = vmatpush1.msra.mxu0 0.0
        %7416 = vmatprep.subr.mxu0 0.0
        %7417 = vmatpush1.msra.mxu0 0.0
        %7418 = vmatprep.subr.mxu0 0.0
        %7419 = vmatpush1.msra.mxu0 0.0
        %7420 = vmatprep.subr.mxu0 0.0
        %7421 = vmatpush1.msra.mxu0 0.0
        %7422 = vmatprep.subr.mxu0 0.0
        %7423 = vmatpush1.msra.mxu0 0.0
        %7424 = vmatprep.subr.mxu0 0.0
        %7425 = vmatpush1.msra.mxu0 0.0
        %7426 = vmatprep.subr.mxu0 0.0
        %7427 = vmatpush1.msra.mxu0 0.0
        %7428 = vmatprep.subr.mxu0 0.0
        %7429 = vmatpush1.msra.mxu0 0.0
        %7430 = vmatprep.subr.mxu0 0.0
        %7431 = vmatpush1.msra.mxu0 0.0
        %7432 = vmatprep.mubr.f32.mxu0 0.0
        %7433 = vmatmul.mubr.f32.gmra.mrb[0].mxu0 %v7366
        %v7434 = vpop.f32.mrb[0].mxu0
        %v7435 = vadd.f32 0.0, %v7434
        %v7436 = vpop.f32.mrb[0].mxu0
        %7437 = vdwg.mxu0
        %v7438 = vadd.f32 %v7278, %v7435
        %s7439 = scalar_lea.vmem [#allocation19], 16
        %v7440 = vld [vmem:[%s7439] sm:$0xff]
        %v7442 = vsel %vm6640, %v7440, 0
        %7444 = vmatprep.subr.mxu0 0.0
        %7445 = vmatpush1.msra.mxu0 %v7109
        %7446 = vmatprep.subr.mxu0 0.0
        %7447 = vmatpush1.msra.mxu0 %v7110
        %7448 = vmatprep.subr.mxu0 0.0
        %7449 = vmatpush1.msra.mxu0 %v7111
        %7450 = vmatprep.subr.mxu0 0.0
        %7451 = vmatpush1.msra.mxu0 %v7112
        %7452 = vmatprep.subr.mxu0 0.0
        %7453 = vmatpush1.msra.mxu0 0.0
        %7454 = vmatprep.subr.mxu0 0.0
        %7455 = vmatpush1.msra.mxu0 0.0
        %7456 = vmatprep.subr.mxu0 0.0
        %7457 = vmatpush1.msra.mxu0 0.0
        %7458 = vmatprep.subr.mxu0 0.0
        %7459 = vmatpush1.msra.mxu0 0.0
        %7460 = vmatprep.subr.mxu0 0.0
        %7461 = vmatpush1.msra.mxu0 0.0
        %7462 = vmatprep.subr.mxu0 0.0
        %7463 = vmatpush1.msra.mxu0 0.0
        %7464 = vmatprep.subr.mxu0 0.0
        %7465 = vmatpush1.msra.mxu0 0.0
        %7466 = vmatprep.subr.mxu0 0.0
        %7467 = vmatpush1.msra.mxu0 0.0
        %7468 = vmatprep.subr.mxu0 0.0
        %7469 = vmatpush1.msra.mxu0 0.0
        %7470 = vmatprep.subr.mxu0 0.0
        %7471 = vmatpush1.msra.mxu0 0.0
        %7472 = vmatprep.subr.mxu0 0.0
        %7473 = vmatpush1.msra.mxu0 0.0
        %7474 = vmatprep.subr.mxu0 0.0
        %7475 = vmatpush1.msra.mxu0 0.0
        %7476 = vmatprep.subr.mxu0 0.0
        %7477 = vmatpush1.msra.mxu0 0.0
        %7478 = vmatprep.subr.mxu0 0.0
        %7479 = vmatpush1.msra.mxu0 0.0
        %7480 = vmatprep.subr.mxu0 0.0
        %7481 = vmatpush1.msra.mxu0 0.0
        %7482 = vmatprep.subr.mxu0 0.0
        %7483 = vmatpush1.msra.mxu0 0.0
        %7484 = vmatprep.subr.mxu0 0.0
        %7485 = vmatpush1.msra.mxu0 0.0
        %7486 = vmatprep.subr.mxu0 0.0
        %7487 = vmatpush1.msra.mxu0 0.0
        %7488 = vmatprep.subr.mxu0 0.0
        %7489 = vmatpush1.msra.mxu0 0.0
        %7490 = vmatprep.subr.mxu0 0.0
        %7491 = vmatpush1.msra.mxu0 0.0
        %7492 = vmatprep.subr.mxu0 0.0
        %7493 = vmatpush1.msra.mxu0 0.0
        %7494 = vmatprep.subr.mxu0 0.0
        %7495 = vmatpush1.msra.mxu0 0.0
        %7496 = vmatprep.subr.mxu0 0.0
        %7497 = vmatpush1.msra.mxu0 0.0
        %7498 = vmatprep.subr.mxu0 0.0
        %7499 = vmatpush1.msra.mxu0 0.0
        %7500 = vmatprep.subr.mxu0 0.0
        %7501 = vmatpush1.msra.mxu0 0.0
        %7502 = vmatprep.subr.mxu0 0.0
        %7503 = vmatpush1.msra.mxu0 0.0
        %7504 = vmatprep.subr.mxu0 0.0
        %7505 = vmatpush1.msra.mxu0 0.0
        %7506 = vmatprep.subr.mxu0 0.0
        %7507 = vmatpush1.msra.mxu0 0.0
        %7508 = vmatprep.mubr.f32.mxu0 0.0
        %7509 = vmatmul.mubr.f32.gmra.mrb[0].mxu0 %v7442
        %v7510 = vpop.f32.mrb[0].mxu0
        %v7511 = vadd.f32 0.0, %v7510
        %v7512 = vpop.f32.mrb[0].mxu0
        %7513 = vdwg.mxu0
        %s7514 = scalar_lea.vmem %s16, 160
        %v7515 = vld [vmem:[%s7514] sm:$0xff]
        %v7516 = vld [vmem:[%s7514 + $0x8] sm:$0xff]
        %v7517 = vld [vmem:[%s7514 + $0x10] sm:$0xff]
        %v7518 = vld [vmem:[%s7514 + $0x18] sm:$0xff]
        %v7519 = vld [vmem:[%s7514 + $0x20] sm:$0xff]
        %v7520 = vld [vmem:[%s7514 + $0x28] sm:$0xff]
        %v7521 = vld [vmem:[%s7514 + $0x30] sm:$0xff]
        %v7522 = vld [vmem:[%s7514 + $0x38] sm:$0xff]
        %v7523 = vld [vmem:[%s7514 + $0x40] sm:$0xff]
        %v7524 = vld [vmem:[%s7514 + $0x48] sm:$0xff]
        %v7526 = vsel %vm7198, %v7511, 0
        %7528 = vmatprep.subr.mxu0 0.0
        %7529 = vmatpush1.msra.mxu0 %v7515
        %7530 = vmatprep.subr.mxu0 0.0
        %7531 = vmatpush1.msra.mxu0 %v7516
        %7532 = vmatprep.subr.mxu0 0.0
        %7533 = vmatpush1.msra.mxu0 %v7517
        %7534 = vmatprep.subr.mxu0 0.0
        %7535 = vmatpush1.msra.mxu0 %v7518
        %7536 = vmatprep.subr.mxu0 0.0
        %7537 = vmatpush1.msra.mxu0 %v7519
        %7538 = vmatprep.subr.mxu0 0.0
        %7539 = vmatpush1.msra.mxu0 %v7520
        %7540 = vmatprep.subr.mxu0 0.0
        %7541 = vmatpush1.msra.mxu0 %v7521
        %7542 = vmatprep.subr.mxu0 0.0
        %7543 = vmatpush1.msra.mxu0 %v7522
        %7544 = vmatprep.subr.mxu0 0.0
        %7545 = vmatpush1.msra.mxu0 %v7523
        %7546 = vmatprep.subr.mxu0 0.0
        %7547 = vmatpush1.msra.mxu0 %v7524
        %7548 = vmatprep.subr.mxu0 0.0
        %7549 = vmatpush1.msra.mxu0 0.0
        %7550 = vmatprep.subr.mxu0 0.0
        %7551 = vmatpush1.msra.mxu0 0.0
        %7552 = vmatprep.subr.mxu0 0.0
        %7553 = vmatpush1.msra.mxu0 0.0
        %7554 = vmatprep.subr.mxu0 0.0
        %7555 = vmatpush1.msra.mxu0 0.0
        %7556 = vmatprep.subr.mxu0 0.0
        %7557 = vmatpush1.msra.mxu0 0.0
        %7558 = vmatprep.subr.mxu0 0.0
        %7559 = vmatpush1.msra.mxu0 0.0
        %7560 = vmatprep.subr.mxu0 0.0
        %7561 = vmatpush1.msra.mxu0 0.0
        %7562 = vmatprep.subr.mxu0 0.0
        %7563 = vmatpush1.msra.mxu0 0.0
        %7564 = vmatprep.subr.mxu0 0.0
        %7565 = vmatpush1.msra.mxu0 0.0
        %7566 = vmatprep.subr.mxu0 0.0
        %7567 = vmatpush1.msra.mxu0 0.0
        %7568 = vmatprep.subr.mxu0 0.0
        %7569 = vmatpush1.msra.mxu0 0.0
        %7570 = vmatprep.subr.mxu0 0.0
        %7571 = vmatpush1.msra.mxu0 0.0
        %7572 = vmatprep.subr.mxu0 0.0
        %7573 = vmatpush1.msra.mxu0 0.0
        %7574 = vmatprep.subr.mxu0 0.0
        %7575 = vmatpush1.msra.mxu0 0.0
        %7576 = vmatprep.subr.mxu0 0.0
        %7577 = vmatpush1.msra.mxu0 0.0
        %7578 = vmatprep.subr.mxu0 0.0
        %7579 = vmatpush1.msra.mxu0 0.0
        %7580 = vmatprep.subr.mxu0 0.0
        %7581 = vmatpush1.msra.mxu0 0.0
        %7582 = vmatprep.subr.mxu0 0.0
        %7583 = vmatpush1.msra.mxu0 0.0
        %7584 = vmatprep.subr.mxu0 0.0
        %7585 = vmatpush1.msra.mxu0 0.0
        %7586 = vmatprep.subr.mxu0 0.0
        %7587 = vmatpush1.msra.mxu0 0.0
        %7588 = vmatprep.subr.mxu0 0.0
        %7589 = vmatpush1.msra.mxu0 0.0
        %7590 = vmatprep.subr.mxu0 0.0
        %7591 = vmatpush1.msra.mxu0 0.0
        %7592 = vmatprep.mubr.f32.mxu0 0.0
        %7593 = vmatmul.mubr.f32.gmra.mrb[0].mxu0 %v7526
        %v7594 = vpop.f32.mrb[0].mxu0
        %v7595 = vadd.f32 0.0, %v7594
        %v7596 = vpop.f32.mrb[0].mxu0
        %7597 = vdwg.mxu0
        %v7598 = vadd.f32 %v7438, %v7595
        %s7599 = scalar_lea.vmem [#allocation19], 24
        %v7600 = vld [vmem:[%s7599] sm:$0xff]
        %v7602 = vsel %vm6640, %v7600, 0
        %7604 = vmatprep.subr.mxu0 0.0
        %7605 = vmatpush1.msra.mxu0 %v7109
        %7606 = vmatprep.subr.mxu0 0.0
        %7607 = vmatpush1.msra.mxu0 %v7110
        %7608 = vmatprep.subr.mxu0 0.0
        %7609 = vmatpush1.msra.mxu0 %v7111
        %7610 = vmatprep.subr.mxu0 0.0
        %7611 = vmatpush1.msra.mxu0 %v7112
        %7612 = vmatprep.subr.mxu0 0.0
        %7613 = vmatpush1.msra.mxu0 0.0
        %7614 = vmatprep.subr.mxu0 0.0
        %7615 = vmatpush1.msra.mxu0 0.0
        %7616 = vmatprep.subr.mxu0 0.0
        %7617 = vmatpush1.msra.mxu0 0.0
        %7618 = vmatprep.subr.mxu0 0.0
        %7619 = vmatpush1.msra.mxu0 0.0
        %7620 = vmatprep.subr.mxu0 0.0
        %7621 = vmatpush1.msra.mxu0 0.0
        %7622 = vmatprep.subr.mxu0 0.0
        %7623 = vmatpush1.msra.mxu0 0.0
        %7624 = vmatprep.subr.mxu0 0.0
        %7625 = vmatpush1.msra.mxu0 0.0
        %7626 = vmatprep.subr.mxu0 0.0
        %7627 = vmatpush1.msra.mxu0 0.0
        %7628 = vmatprep.subr.mxu0 0.0
        %7629 = vmatpush1.msra.mxu0 0.0
        %7630 = vmatprep.subr.mxu0 0.0
        %7631 = vmatpush1.msra.mxu0 0.0
        %7632 = vmatprep.subr.mxu0 0.0
        %7633 = vmatpush1.msra.mxu0 0.0
        %7634 = vmatprep.subr.mxu0 0.0
        %7635 = vmatpush1.msra.mxu0 0.0
        %7636 = vmatprep.subr.mxu0 0.0
        %7637 = vmatpush1.msra.mxu0 0.0
        %7638 = vmatprep.subr.mxu0 0.0
        %7639 = vmatpush1.msra.mxu0 0.0
        %7640 = vmatprep.subr.mxu0 0.0
        %7641 = vmatpush1.msra.mxu0 0.0
        %7642 = vmatprep.subr.mxu0 0.0
        %7643 = vmatpush1.msra.mxu0 0.0
        %7644 = vmatprep.subr.mxu0 0.0
        %7645 = vmatpush1.msra.mxu0 0.0
        %7646 = vmatprep.subr.mxu0 0.0
        %7647 = vmatpush1.msra.mxu0 0.0
        %7648 = vmatprep.subr.mxu0 0.0
        %7649 = vmatpush1.msra.mxu0 0.0
        %7650 = vmatprep.subr.mxu0 0.0
        %7651 = vmatpush1.msra.mxu0 0.0
        %7652 = vmatprep.subr.mxu0 0.0
        %7653 = vmatpush1.msra.mxu0 0.0
        %7654 = vmatprep.subr.mxu0 0.0
        %7655 = vmatpush1.msra.mxu0 0.0
        %7656 = vmatprep.subr.mxu0 0.0
        %7657 = vmatpush1.msra.mxu0 0.0
        %7658 = vmatprep.subr.mxu0 0.0
        %7659 = vmatpush1.msra.mxu0 0.0
        %7660 = vmatprep.subr.mxu0 0.0
        %7661 = vmatpush1.msra.mxu0 0.0
        %7662 = vmatprep.subr.mxu0 0.0
        %7663 = vmatpush1.msra.mxu0 0.0
        %7664 = vmatprep.subr.mxu0 0.0
        %7665 = vmatpush1.msra.mxu0 0.0
        %7666 = vmatprep.subr.mxu0 0.0
        %7667 = vmatpush1.msra.mxu0 0.0
        %7668 = vmatprep.mubr.f32.mxu0 0.0
        %7669 = vmatmul.mubr.f32.gmra.mrb[0].mxu0 %v7602
        %v7670 = vpop.f32.mrb[0].mxu0
        %v7671 = vadd.f32 0.0, %v7670
        %v7672 = vpop.f32.mrb[0].mxu0
        %7673 = vdwg.mxu0
        %s7674 = scalar_lea.vmem %s16, 240
        %v7675 = vld [vmem:[%s7674] sm:$0xff]
        %v7676 = vld [vmem:[%s7674 + $0x8] sm:$0xff]
        %v7677 = vld [vmem:[%s7674 + $0x10] sm:$0xff]
        %v7678 = vld [vmem:[%s7674 + $0x18] sm:$0xff]
        %v7679 = vld [vmem:[%s7674 + $0x20] sm:$0xff]
        %v7680 = vld [vmem:[%s7674 + $0x28] sm:$0xff]
        %v7681 = vld [vmem:[%s7674 + $0x30] sm:$0xff]
        %v7682 = vld [vmem:[%s7674 + $0x38] sm:$0xff]
        %v7683 = vld [vmem:[%s7674 + $0x40] sm:$0xff]
        %v7684 = vld [vmem:[%s7674 + $0x48] sm:$0xff]
        %v7686 = vsel %vm7198, %v7671, 0
        %7688 = vmatprep.subr.mxu0 0.0
        %7689 = vmatpush1.msra.mxu0 %v7675
        %7690 = vmatprep.subr.mxu0 0.0
        %7691 = vmatpush1.msra.mxu0 %v7676
        %7692 = vmatprep.subr.mxu0 0.0
        %7693 = vmatpush1.msra.mxu0 %v7677
        %7694 = vmatprep.subr.mxu0 0.0
        %7695 = vmatpush1.msra.mxu0 %v7678
        %7696 = vmatprep.subr.mxu0 0.0
        %7697 = vmatpush1.msra.mxu0 %v7679
        %7698 = vmatprep.subr.mxu0 0.0
        %7699 = vmatpush1.msra.mxu0 %v7680
        %7700 = vmatprep.subr.mxu0 0.0
        %7701 = vmatpush1.msra.mxu0 %v7681
        %7702 = vmatprep.subr.mxu0 0.0
        %7703 = vmatpush1.msra.mxu0 %v7682
        %7704 = vmatprep.subr.mxu0 0.0
        %7705 = vmatpush1.msra.mxu0 %v7683
        %7706 = vmatprep.subr.mxu0 0.0
        %7707 = vmatpush1.msra.mxu0 %v7684
        %7708 = vmatprep.subr.mxu0 0.0
        %7709 = vmatpush1.msra.mxu0 0.0
        %7710 = vmatprep.subr.mxu0 0.0
        %7711 = vmatpush1.msra.mxu0 0.0
        %7712 = vmatprep.subr.mxu0 0.0
        %7713 = vmatpush1.msra.mxu0 0.0
        %7714 = vmatprep.subr.mxu0 0.0
        %7715 = vmatpush1.msra.mxu0 0.0
        %7716 = vmatprep.subr.mxu0 0.0
        %7717 = vmatpush1.msra.mxu0 0.0
        %7718 = vmatprep.subr.mxu0 0.0
        %7719 = vmatpush1.msra.mxu0 0.0
        %7720 = vmatprep.subr.mxu0 0.0
        %7721 = vmatpush1.msra.mxu0 0.0
        %7722 = vmatprep.subr.mxu0 0.0
        %7723 = vmatpush1.msra.mxu0 0.0
        %7724 = vmatprep.subr.mxu0 0.0
        %7725 = vmatpush1.msra.mxu0 0.0
        %7726 = vmatprep.subr.mxu0 0.0
        %7727 = vmatpush1.msra.mxu0 0.0
        %7728 = vmatprep.subr.mxu0 0.0
        %7729 = vmatpush1.msra.mxu0 0.0
        %7730 = vmatprep.subr.mxu0 0.0
        %7731 = vmatpush1.msra.mxu0 0.0
        %7732 = vmatprep.subr.mxu0 0.0
        %7733 = vmatpush1.msra.mxu0 0.0
        %7734 = vmatprep.subr.mxu0 0.0
        %7735 = vmatpush1.msra.mxu0 0.0
        %7736 = vmatprep.subr.mxu0 0.0
        %7737 = vmatpush1.msra.mxu0 0.0
        %7738 = vmatprep.subr.mxu0 0.0
        %7739 = vmatpush1.msra.mxu0 0.0
        %7740 = vmatprep.subr.mxu0 0.0
        %7741 = vmatpush1.msra.mxu0 0.0
        %7742 = vmatprep.subr.mxu0 0.0
        %7743 = vmatpush1.msra.mxu0 0.0
        %7744 = vmatprep.subr.mxu0 0.0
        %7745 = vmatpush1.msra.mxu0 0.0
        %7746 = vmatprep.subr.mxu0 0.0
        %7747 = vmatpush1.msra.mxu0 0.0
        %7748 = vmatprep.subr.mxu0 0.0
        %7749 = vmatpush1.msra.mxu0 0.0
        %7750 = vmatprep.subr.mxu0 0.0
        %7751 = vmatpush1.msra.mxu0 0.0
        %7752 = vmatprep.mubr.f32.mxu0 0.0
        %7753 = vmatmul.mubr.f32.gmra.mrb[0].mxu0 %v7686
        %v7754 = vpop.f32.mrb[0].mxu0
        %v7755 = vadd.f32 0.0, %v7754
        %v7756 = vpop.f32.mrb[0].mxu0
        %7757 = vdwg.mxu0
        %v7758 = vadd.f32 %v7598, %v7755
        %v7759 = vmax.f32 %v7758, 0.0
        %v7760 = vld [vmem:[%s18] sm:$0xff]
        %v7761 = vld [vmem:[%s18 + $0x8] sm:$0xff]
        %v7762 = vld [vmem:[%s18 + $0x10] sm:$0xff]
        %v7763 = vld [vmem:[%s18 + $0x18] sm:$0xff]
        %v7764 = vld [vmem:[%s18 + $0x20] sm:$0xff]
        %v7765 = vld [vmem:[%s18 + $0x28] sm:$0xff]
        %v7766 = vld [vmem:[%s18 + $0x30] sm:$0x3]
        %v7767 = vld [vmem:[%s19] sm:$0x1]
        %v7769 = vlaneseq
        %v7770 = vshrl.u32 %v7769, 7
        %v7771 = vsub.s32 0, %v7770
        %v7772 = vrot.slane %v7767, %v7771
        %vm7774 = vcmask 408576
        %v7776 = vsel %vm7774, %v7759, 0
        %vm7778 = vcmask 1041408
        %v7780 = vsel %vm7778, %v7766, 0
        %7782 = vmatprep.subr.mxu0 0.0
        %7783 = vmatpush1.msra.mxu0 %v7760
        %7784 = vmatprep.subr.mxu0 0.0
        %7785 = vmatpush1.msra.mxu0 %v7761
        %7786 = vmatprep.subr.mxu0 0.0
        %7787 = vmatpush1.msra.mxu0 %v7762
        %7788 = vmatprep.subr.mxu0 0.0
        %7789 = vmatpush1.msra.mxu0 %v7763
        %7790 = vmatprep.subr.mxu0 0.0
        %7791 = vmatpush1.msra.mxu0 %v7764
        %7792 = vmatprep.subr.mxu0 0.0
        %7793 = vmatpush1.msra.mxu0 %v7765
        %7794 = vmatprep.subr.mxu0 0.0
        %7795 = vmatpush1.msra.mxu0 %v7780
        %7796 = vmatprep.subr.mxu0 0.0
        %7797 = vmatpush1.msra.mxu0 0.0
        %7798 = vmatprep.subr.mxu0 0.0
        %7799 = vmatpush1.msra.mxu0 0.0
        %7800 = vmatprep.subr.mxu0 0.0
        %7801 = vmatpush1.msra.mxu0 0.0
        %7802 = vmatprep.subr.mxu0 0.0
        %7803 = vmatpush1.msra.mxu0 0.0
        %7804 = vmatprep.subr.mxu0 0.0
        %7805 = vmatpush1.msra.mxu0 0.0
        %7806 = vmatprep.subr.mxu0 0.0
        %7807 = vmatpush1.msra.mxu0 0.0
        %7808 = vmatprep.subr.mxu0 0.0
        %7809 = vmatpush1.msra.mxu0 0.0
        %7810 = vmatprep.subr.mxu0 0.0
        %7811 = vmatpush1.msra.mxu0 0.0
        %7812 = vmatprep.subr.mxu0 0.0
        %7813 = vmatpush1.msra.mxu0 0.0
        %7814 = vmatprep.subr.mxu0 0.0
        %7815 = vmatpush1.msra.mxu0 0.0
        %7816 = vmatprep.subr.mxu0 0.0
        %7817 = vmatpush1.msra.mxu0 0.0
        %7818 = vmatprep.subr.mxu0 0.0
        %7819 = vmatpush1.msra.mxu0 0.0
        %7820 = vmatprep.subr.mxu0 0.0
        %7821 = vmatpush1.msra.mxu0 0.0
        %7822 = vmatprep.subr.mxu0 0.0
        %7823 = vmatpush1.msra.mxu0 0.0
        %7824 = vmatprep.subr.mxu0 0.0
        %7825 = vmatpush1.msra.mxu0 0.0
        %7826 = vmatprep.subr.mxu0 0.0
        %7827 = vmatpush1.msra.mxu0 0.0
        %7828 = vmatprep.subr.mxu0 0.0
        %7829 = vmatpush1.msra.mxu0 0.0
        %7830 = vmatprep.subr.mxu0 0.0
        %7831 = vmatpush1.msra.mxu0 0.0
        %7832 = vmatprep.subr.mxu0 0.0
        %7833 = vmatpush1.msra.mxu0 0.0
        %7834 = vmatprep.subr.mxu0 0.0
        %7835 = vmatpush1.msra.mxu0 0.0
        %7836 = vmatprep.subr.mxu0 0.0
        %7837 = vmatpush1.msra.mxu0 0.0
        %7838 = vmatprep.subr.mxu0 0.0
        %7839 = vmatpush1.msra.mxu0 0.0
        %7840 = vmatprep.subr.mxu0 0.0
        %7841 = vmatpush1.msra.mxu0 0.0
        %7842 = vmatprep.subr.mxu0 0.0
        %7843 = vmatpush1.msra.mxu0 0.0
        %7844 = vmatprep.subr.mxu0 0.0
        %7845 = vmatpush1.msra.mxu0 0.0
        %7846 = vmatprep.mubr.f32.mxu0 0.0
        %7847 = vmatmul.mubr.f32.gmra.mrb[0].mxu0 %v7776
        %v7848 = vpop.f32.mrb[0].mxu0
        %v7849 = vadd.f32 %v7772, %v7848
        %v7850 = vpop.f32.mrb[0].mxu0
        %7851 = vdwg.mxu0
        %vm7852 = vcmask 80896
        %v7853 = vsel %vm7852, %v7849, -inf
        %7854 = vmax.xlane.f32.xlu0 %v7853
        %v7855 = vpop.xlane.xlu0 %7854
        %v7856 = vsub.f32 %v7849, %v7855
        %v7857 = vmul.f32 %v7856, 1.442695
        %v7858 = vpow.pop %v7857
        %v7859 = vsel %vm7852, %v7858, 0.0
        %7860 = vadd.xlane.f32.xlu0 %v7859
        %v7861 = vpop.xlane.xlu0 %7860
        %v7862 = vlog2.pop %v7861
        %v7863 = vmul.f32 %v7862, 0.6931472
        %v7864 = vadd.f32 %v7855, %v7863
        %v7865 = vsub.f32 %v7849, %v7864
        %7866 = vst.msk [vmem:[%s779] sm:$0xff] %vm7852, %v7865
        %s7867 = sand.u32 %s473, 1
        %s7868 = scalar_lea.sflag [#allocation4], %s7867
        %s7869 = sand.u32 %s473, 1
        %s7870 = smul.addr %s7869, 8
        %s7871 = scalar_lea.vmem [#allocation20], %s7870
        // Predicated region
        $region145: #{tpu_custom_call.1} parent=99 // pred_check
          %p7872 = pneg %p483
        $region146: #{tpu_custom_call.1} parent=99 // pred_check_branch
          %7874 = sbr.rel (%p7872) target = $region148
        $region147: #{tpu_custom_call.1} parent=99 // pred_region
          %s7876 = ssub.s32 128, 128
          %7877 = vsyncadd %s7868, %s7876
          %s7878 = smul.addr %s40, 128
          %s7879 = scalar_lea.hbm %s20, %s7878
          %s7881 = sshll.u32 %s7871, 4
          %s7882 = int_to_ptr.vmem [resolvable:$true] %s7881
          %7884 = dma.vmem_to_hbm [thread:$0]  %s7882, 128, %s7879, %s7868
        $region148: #{tpu_custom_call.1} parent=99 // pred_fallthru
          _
      $region100: #{tpu_custom_call.1} parent=5 // pred_fallthru
        _
      %p7885 = scmp.le.s32.totalorder 2, %s35
      // Predicated region
      $region149: #{tpu_custom_call.1} parent=5 // pred_check
        %p7886 = pneg %p7885
      $region150: #{tpu_custom_call.1} parent=5 // pred_check_branch
        %7888 = sbr.rel (%p7886) target = $region152
      $region151: #{tpu_custom_call.1} parent=5 // pred_region
        %s7889 = ssub.s32 %s35, 2
        // Predicated region
        $region153: #{tpu_custom_call.1} parent=151 // pred_check
          %p7890 = pneg %p489
        $region154: #{tpu_custom_call.1} parent=151 // pred_check_branch
          %7892 = sbr.rel (%p7890) target = $region156
        $region155: #{tpu_custom_call.1} parent=151 // pred_region
          %s7893 = sand.u32 %s474, 1
          %s7894 = scalar_lea.sflag [#allocation4], %s7893
          %s7895 = sand.u32 %s474, 1
          %s7896 = smul.addr %s7895, 8
          %s7897 = scalar_lea.vmem [#allocation20], %s7896
          %7898 = dma.done %s7894, 128
        $region156: #{tpu_custom_call.1} parent=151 // pred_fallthru
          _
      $region152: #{tpu_custom_call.1} parent=5 // pred_fallthru
        _
    $region6: #{tpu_custom_call.1} parent=1 // loop_footer
      %s39 = sadd.s32 1, %s35
    $region7: #{tpu_custom_call.1} parent=1 // loop_footer_branch
      %34 = sbr.rel target = $region3
    $region8: #{tpu_custom_call.1} parent=1 // loop_exit
      _
    %7899 = vsyncpa [#allocation3], 1
    %s7900 = scalar_lea.sflag [#allocation3], 1
    %7901 = vsyncpa %s7900, 1
    %7902 = vsyncpa [#allocation6], 1
    %7903 = vsyncpa [#allocation9], 1
    %7904 = vsyncpa [#allocation12], 1
    %7905 = vsyncpa [#allocation15], 1
    %7906 = vsyncpa [#allocation18], 1
    %7907 = vsyncpa [#allocation4], 1
    %s7908 = scalar_lea.sflag [#allocation4], 1
    %7909 = vsyncpa %s7908, 1

</llo_original>
